<compile_context>
chip_gen: v7x
topology: tpu7x:2x2x1
jax: 0.10.0
libtpu: 0.0.40
codegen_flags: <defaults>
</compile_context>

<pallas_src>
import jax
import jax.numpy as jnp
import numpy as np
from jax.experimental import pallas as pl
from jax.experimental.pallas import tpu as pltpu

KH = KW = 5
PAD = 2
C = 32                    # per-spatial-position channel padding (covers 10 and 20)
H1 = 14                   # conv1 / conv2 output spatial size
H3 = 7                    # conv3 output spatial size
WG = 20                   # padded w-groups of the conv2/conv3 input rows
LPAD = 4                  # left spatial pad in w-groups -> interior lane offset 128
LANES_A = WG * C          # 640: activation-row lane width (a1 / a2 scratches)
LANES_1 = H1 * C          # 448: conv1/conv2 GEMM output lane width
LANES_3 = H3 * C          # 224: conv3 GEMM output lane width
OPAD = 128                # lane-dense logits padding


# ------------------------------ fused kernel ------------------------------ #
def _fused_cnn_kernel(xin_ref, w1_ref, b1_ref, w2_ref, b2_ref, w3_ref, b3_ref,
                      wfc_ref, bfc_ref, out_ref, a1_ref, a2_ref):
    n = out_ref.shape[0]
    f32 = jnp.float32
    bf16 = jnp.bfloat16

    # ---------------- conv1 (stride 2): 5 banded GEMMs over kh ------------- #
    # xin rows (per h-parity) = hh*n + b ; lanes = padded input column (32).
    acc = jnp.broadcast_to(b1_ref[...], (H1 * n, LANES_1))
    for kh in range(KH):
        a, p = kh // 2, kh % 2
        lhs = xin_ref[p, a * n:(a + H1) * n, :]                       # (14n, 32)
        acc = acc + jnp.dot(lhs, w1_ref[kh], preferred_element_type=f32)
    acc = jnp.maximum(acc, 0.0)                                       # (14n, 448)

    # a1 layout: rows = (conv1-out h + 2)*n + b, lanes = (w group, channel).
    # Zero only the halo border; interior is written once below.
    a1_ref[0:2 * n, :] = jnp.zeros((2 * n, LANES_A), bf16)
    a1_ref[16 * n:18 * n, :] = jnp.zeros((2 * n, LANES_A), bf16)
    a1_ref[2 * n:16 * n, 0:LPAD * C] = jnp.zeros((H1 * n, LPAD * C), bf16)
    a1_ref[2 * n:16 * n, (LPAD + H1) * C:LANES_A] = jnp.zeros((H1 * n, 2 * C), bf16)
    a1_ref[2 * n:16 * n, LPAD * C:(LPAD + H1) * C] = acc.astype(bf16)

    # ---------------- conv2 (stride 1): 5 banded GEMMs over kh ------------- #
    acc = jnp.broadcast_to(b2_ref[...], (H1 * n, LANES_1))
    for kh in range(KH):
        lhs = a1_ref[kh * n:(kh + H1) * n, :]                         # (14n, 640)
        acc = acc + jnp.dot(lhs, w2_ref[kh], preferred_element_type=f32)
    acc = jnp.maximum(acc, 0.0)                                       # (14n, 448)

    # a2 layout: h-parity split on the leading (major) axis so conv3's
    # stride-2 row taps are plain contiguous row slices:
    #   a2[p, hh*n + b, :]  holds conv2 output row  2*(hh-1) + p.
    a2_ref[:, 0:n, :] = jnp.zeros((2, n, LANES_A), bf16)
    a2_ref[:, 8 * n:9 * n, :] = jnp.zeros((2, n, LANES_A), bf16)
    a2_ref[:, n:8 * n, 0:LPAD * C] = jnp.zeros((2, 7 * n, LPAD * C), bf16)
    a2_ref[:, n:8 * n, (LPAD + H1) * C:LANES_A] = jnp.zeros((2, 7 * n, 2 * C), bf16)
    o2 = acc.reshape(H1 // 2, 2, n, LANES_1)           # rows oh*n+b, oh = 2*m + q
    for q in range(2):
        a2_ref[q, n:8 * n, LPAD * C:(LPAD + H1) * C] = (
            o2[:, q, :, :].reshape(7 * n, LANES_1).astype(bf16))

    # ---------------- conv3 (stride 2): 5 banded GEMMs over kh ------------- #
    acc = jnp.broadcast_to(b3_ref[...], (H3 * n, LANES_3))
    for kh in range(KH):
        a, p = kh // 2, kh % 2
        lhs = a2_ref[p, a * n:(a + H3) * n, :]                        # (7n, 640)
        acc = acc + jnp.dot(lhs, w3_ref[kh], preferred_element_type=f32)
    acc = jnp.maximum(acc, 0.0)                                       # (7n, 224)

    # ---------------- fc: ONE GEMM over all 980 features ------------------- #
    # Concatenate the 7 output-row groups along lanes -> (n, 1568); the torch
    # NCHW flatten order is folded into the repacked wfc.
    feat = jnp.concatenate([acc[s * n:(s + 1) * n, :] for s in range(H3)], axis=1)
    out = jnp.dot(feat.astype(bf16), wfc_ref[...], preferred_element_type=f32)
    out_ref[...] = out + bfc_ref[...]


def _fused_forward_call(xin, w1, b1, w2, b2, w3, b3, wfc, bfc, n):
    inputs = (xin, w1, b1, w2, b2, w3, b3, wfc, bfc)

    def full_spec(a):
        nd = a.ndim
        return pl.BlockSpec(a.shape, lambda i, _nd=nd: (0,) * _nd)

    flops = 2 * n * (KH * H1 * 32 * LANES_1            # conv1
                     + KH * H1 * LANES_A * LANES_1     # conv2
                     + KH * H3 * LANES_A * LANES_3     # conv3
                     + H3 * LANES_3 * OPAD)            # fc
    bytes_accessed = int(sum(a.size * a.dtype.itemsize for a in inputs)
                         + n * OPAD * 4)

    return pl.pallas_call(
        _fused_cnn_kernel,
        out_shape=jax.ShapeDtypeStruct((n, OPAD), jnp.float32),
        grid=(1,),
        in_specs=[full_spec(a) for a in inputs],
        out_specs=pl.BlockSpec((n, OPAD), lambda i: (0, 0)),
        scratch_shapes=[
            pltpu.VMEM((18 * n, LANES_A), jnp.bfloat16),     # conv1 out (h-padded)
            pltpu.VMEM((2, 9 * n, LANES_A), jnp.bfloat16),   # conv2 out (h-parity split)
        ],
        compiler_params=pltpu.CompilerParams(
            dimension_semantics=("arbitrary",),
            vmem_limit_bytes=32 * 1024 * 1024),
        cost_estimate=pl.CostEstimate(flops=flops, transcendentals=0,
                                      bytes_accessed=bytes_accessed),
    )(*inputs)


# ------------------------------- model setup ------------------------------ #
def build_simple_cnn_params(key, dataset="MNIST", num_layers=3):
    assert num_layers > 0
    if dataset == "MNIST":
        w, h, c = 28, 28, 1
        num_classes, init_channels = 10, 10
    else:
        raise NotImplementedError

    convs = []
    channels = c
    for i in range(num_layers):
        if i == 0:
            out_channels, stride = init_channels, 2
            w, h = (w + 1) // 2, (h + 1) // 2
        else:
            if i % 2 == 0:  # downsample
                out_channels, stride = channels * 2, 2
                w, h = (w + 1) // 2, (h + 1) // 2
            else:
                out_channels, stride = channels, 1
        key, kw_, kb_ = jax.random.split(key, 3)
        cw = 0.1 * jax.random.normal(kw_, (out_channels, channels, KH, KW), jnp.float32)
        cb = 0.05 * jax.random.normal(kb_, (out_channels,), jnp.float32)
        convs.append((cw, cb, stride))
        channels = out_channels

    num_downsamples = (num_layers - 1) // 2
    feature_channels = init_channels * 2 ** num_downsamples
    feature_size = w * h * feature_channels
    out_size = num_classes  # binarize_classes=False
    key, kw_, kb_ = jax.random.split(key, 3)
    fc_w = 0.05 * jax.random.normal(kw_, (out_size, feature_size), jnp.float32)
    fc_b = 0.05 * jax.random.normal(kb_, (out_size,), jnp.float32)
    return {"convs": convs, "fc_w": fc_w, "fc_b": fc_b}


def prepare_params(params):
    """One-time repack of PyTorch-layout weights into block-banded bf16 GEMM
    slabs that fold the kw taps and the w-stride into the weight pattern:
      conv1: (5, 32, 448)    rows = padded input column
      conv2: (5, 640, 448)   rows = (padded w group, in channel)
      conv3: (5, 640, 224)   rows = (padded w group, in channel)
      fc:    (1568, 128)     rows = (oh3, ow3, channel), NCHW flatten folded in
    plus lane-wide f32 biases (bias value repeated per output w position)."""
    (w1, b1, s1), (w2, b2, s2), (w3, b3, s3) = params["convs"]
    assert (s1, s2, s3) == (2, 1, 2)
    assert w1.shape == (10, 1, KH, KW) and w2.shape == (10, 10, KH, KW)
    assert w3.shape == (20, 10, KH, KW)
    fc_w, fc_b = params["fc_w"], params["fc_b"]
    assert fc_w.shape == (10, 20 * H3 * H3)

    w1 = np.asarray(w1); w2 = np.asarray(w2); w3 = np.asarray(w3)
    b1 = np.asarray(b1); b2 = np.asarray(b2); b3 = np.asarray(b3)
    fc_w = np.asarray(fc_w); fc_b = np.asarray(fc_b)

    # conv1: W1[kh, wp, ow*32 + co] = w1[co, 0, kh, wp - 2*ow]
    W1 = np.zeros((KH, 32, LANES_1), np.float32)
    for kh in range(KH):
        for ow in range(H1):
            for kw in range(KW):
                W1[kh, 2 * ow + kw, ow * C:ow * C + 10] = w1[:, 0, kh, kw]

    # conv2: W2[kh, wi*32 + ci, ow*32 + co] = w2[co, ci, kh, wi - ow - 2]
    W2 = np.zeros((KH, LANES_A, LANES_1), np.float32)
    for kh in range(KH):
        for ow in range(H1):
            for kw in range(KW):
                wi = ow + kw + (LPAD - PAD)
                W2[kh, wi * C:wi * C + 10, ow * C:ow * C + 10] = w2[:, :, kh, kw].T

    # conv3: W3[kh, wi*32 + ci, ow3*32 + co] = w3[co, ci, kh, wi - 2*ow3 - 2]
    W3 = np.zeros((KH, LANES_A, LANES_3), np.float32)
    for kh in range(KH):
        for ow in range(H3):
            for kw in range(KW):
                wi = 2 * ow + kw + (LPAD - PAD)
                W3[kh, wi * C:wi * C + 10, ow * C:ow * C + 20] = w3[:, :, kh, kw].T

    # fc: Wfc[oh3*224 + ow3*32 + c, o] = fc_w[o, c*49 + oh3*7 + ow3]
    t = fc_w.reshape(10, 20, H3, H3).transpose(2, 3, 1, 0)           # (oh3, ow3, c, o)
    Wfc = np.zeros((H3, H3, C, OPAD), np.float32)
    Wfc[:, :, :20, :10] = t
    Wfc = Wfc.reshape(H3 * H3 * C, OPAD)

    def widen_bias(b, reps):
        bp = np.zeros(C, np.float32)
        bp[:b.shape[0]] = b
        return jnp.asarray(np.tile(bp, reps).reshape(1, reps * C))

    bfc = np.zeros((1, OPAD), np.float32)
    bfc[0, :10] = fc_b

    return {
        "w1": jnp.asarray(W1, jnp.bfloat16), "b1": widen_bias(b1, H1),
        "w2": jnp.asarray(W2, jnp.bfloat16), "b2": widen_bias(b2, H1),
        "w3": jnp.asarray(W3, jnp.bfloat16), "b3": widen_bias(b3, H3),
        "wfc": jnp.asarray(Wfc, jnp.bfloat16), "bfc": jnp.asarray(bfc),
    }


@jax.jit
def simple_cnn_forward(prep, x):
    """Fused Pallas forward for SimpleCNN('MNIST', num_layers=3). x: (N,1,28,28)."""
    n = x.shape[0]
    assert x.shape[1:] == (1, 28, 28)
    num_classes = 10

    # Only host-side prep: pad the tiny input to 32x32 and split rows by
    # parity (h = 2*hh + p) -> (2, 16*n, 32) with rows hh*n + b, bf16.
    # Everything else (all im2col-equivalent work) runs inside the kernel.
    xp = jnp.pad(x[:, 0], ((0, 0), (PAD, PAD), (PAD, PAD)))           # (n, 32, 32)
    xin = xp.reshape(n, 16, 2, 32).transpose(2, 1, 0, 3)              # (2, 16, n, 32)
    xin = xin.reshape(2, 16 * n, 32).astype(jnp.bfloat16)

    out = _fused_forward_call(xin, prep["w1"], prep["b1"], prep["w2"], prep["b2"],
                              prep["w3"], prep["b3"], prep["wfc"], prep["bfc"], n)
    return out[:, :num_classes]


# ------------------------------ pure-JAX ref ------------------------------ #
def reference_forward(params, x):
    for cw, cb, stride in params["convs"]:
        y = jax.lax.conv_general_dilated(
            x, cw, window_strides=(stride, stride),
            padding=((PAD, PAD), (PAD, PAD)),
            dimension_numbers=("NCHW", "OIHW", "NCHW"))
        x = jax.nn.relu(y + cb.reshape(1, -1, 1, 1))
    flat = x.reshape(x.shape[0], -1)
    return flat @ params["fc_w"].T + params["fc_b"]


if __name__ == "__main__":
    key = jax.random.PRNGKey(0)
    key, kx = jax.random.split(key)
    x = jax.random.normal(kx, (2, 1, 28, 28), jnp.float32)   # NCHW, MNIST-shaped

    params = build_simple_cnn_params(key, dataset="MNIST", num_layers=3)
    prep = prepare_params(params)

    out = jax.block_until_ready(simple_cnn_forward(prep, x))
    ref = jax.block_until_ready(reference_forward(params, x))

    assert out.shape == (2, 10), out.shape
    err = float(jnp.max(jnp.abs(out - ref)))
    # bf16 MXU feed with f32 accumulation -> bf16-appropriate tolerances.
    assert jnp.allclose(out, ref, rtol=2e-2, atol=2e-2), err
    print("KERNEL_OK")
</pallas_src>

<mosaic_0001>
module attributes {stable_mosaic.version = 11 : i64} {
  func.func @_fused_cnn_kernel(%arg0: i32, %arg1: memref<2x32x32xbf16, #tpu.memory_space<vmem>>, %arg2: memref<5x32x448xbf16, #tpu.memory_space<vmem>>, %arg3: memref<1x448xf32, #tpu.memory_space<vmem>>, %arg4: memref<5x640x448xbf16, #tpu.memory_space<vmem>>, %arg5: memref<1x448xf32, #tpu.memory_space<vmem>>, %arg6: memref<5x640x224xbf16, #tpu.memory_space<vmem>>, %arg7: memref<1x224xf32, #tpu.memory_space<vmem>>, %arg8: memref<1568x128xbf16, #tpu.memory_space<vmem>>, %arg9: memref<1x128xf32, #tpu.memory_space<vmem>>, %arg10: memref<2x128xf32, #tpu.memory_space<vmem>>, %arg11: memref<36x640xbf16, #tpu.memory_space<vmem>>, %arg12: memref<2x18x640xbf16, #tpu.memory_space<vmem>>) attributes {dimension_semantics = [#tpu.dimension_semantics<arbitrary>], iteration_bounds = array<i64: 1>, scalar_prefetch = 0 : i64, scratch_operands = 2 : i64, tpu.core_type = #tpu.core_type<tc>, window_params = [{pipeline_mode = #tpu.pipeline_mode<synchronous>, transform_indices = @transform_0, window_bounds = array<i64: 2, 32, 32>}, {pipeline_mode = #tpu.pipeline_mode<synchronous>, transform_indices = @transform_1, window_bounds = array<i64: 5, 32, 448>}, {pipeline_mode = #tpu.pipeline_mode<synchronous>, transform_indices = @transform_2, window_bounds = array<i64: 1, 448>}, {pipeline_mode = #tpu.pipeline_mode<synchronous>, transform_indices = @transform_3, window_bounds = array<i64: 5, 640, 448>}, {pipeline_mode = #tpu.pipeline_mode<synchronous>, transform_indices = @transform_4, window_bounds = array<i64: 1, 448>}, {pipeline_mode = #tpu.pipeline_mode<synchronous>, transform_indices = @transform_5, window_bounds = array<i64: 5, 640, 224>}, {pipeline_mode = #tpu.pipeline_mode<synchronous>, transform_indices = @transform_6, window_bounds = array<i64: 1, 224>}, {pipeline_mode = #tpu.pipeline_mode<synchronous>, transform_indices = @transform_7, window_bounds = array<i64: 1568, 128>}, {pipeline_mode = #tpu.pipeline_mode<synchronous>, transform_indices = @transform_8, window_bounds = array<i64: 1, 128>}, {pipeline_mode = #tpu.pipeline_mode<synchronous>, transform_indices = @transform_9, window_bounds = array<i64: 2, 128>}]} {
    %c0 = arith.constant 0 : index
    %c0_0 = arith.constant 0 : index
    %0 = vector.load %arg3[%c0, %c0_0] : memref<1x448xf32, #tpu.memory_space<vmem>>, vector<1x448xf32>
    %1 = vector.shape_cast %0 : vector<1x448xf32> to vector<1x448xf32>
    %2 = vector.broadcast %1 : vector<1x448xf32> to vector<28x448xf32>
    %c0_1 = arith.constant 0 : index
    %c0_2 = arith.constant 0 : index
    %c0_3 = arith.constant 0 : index
    %3 = vector.load %arg1[%c0_1, %c0_2, %c0_3] : memref<2x32x32xbf16, #tpu.memory_space<vmem>>, vector<1x28x32xbf16>
    %4 = vector.shape_cast %3 : vector<1x28x32xbf16> to vector<28x32xbf16>
    %c0_4 = arith.constant 0 : index
    %c0_5 = arith.constant 0 : index
    %c0_6 = arith.constant 0 : index
    %5 = vector.load %arg2[%c0_4, %c0_5, %c0_6] : memref<5x32x448xbf16, #tpu.memory_space<vmem>>, vector<1x32x448xbf16>
    %6 = vector.shape_cast %5 : vector<1x32x448xbf16> to vector<32x448xbf16>
    %cst = arith.constant dense<0.000000e+00> : vector<28x448xf32>
    %7 = tpu.matmul %4, %6, %cst {dimension_numbers = #tpu.dot_dimension_numbers<[1], [0], [0], [1], [0, 0, 1, 1], [], []>} : vector<28x32xbf16>, vector<32x448xbf16>, vector<28x448xf32> -> vector<28x448xf32>
    %8 = arith.addf %2, %7 : vector<28x448xf32>
    %c1 = arith.constant 1 : index
    %c0_7 = arith.constant 0 : index
    %c0_8 = arith.constant 0 : index
    %9 = vector.load %arg1[%c1, %c0_7, %c0_8] : memref<2x32x32xbf16, #tpu.memory_space<vmem>>, vector<1x28x32xbf16>
    %10 = vector.shape_cast %9 : vector<1x28x32xbf16> to vector<28x32xbf16>
    %c1_9 = arith.constant 1 : index
    %c0_10 = arith.constant 0 : index
    %c0_11 = arith.constant 0 : index
    %11 = vector.load %arg2[%c1_9, %c0_10, %c0_11] : memref<5x32x448xbf16, #tpu.memory_space<vmem>>, vector<1x32x448xbf16>
    %12 = vector.shape_cast %11 : vector<1x32x448xbf16> to vector<32x448xbf16>
    %cst_12 = arith.constant dense<0.000000e+00> : vector<28x448xf32>
    %13 = tpu.matmul %10, %12, %cst_12 {dimension_numbers = #tpu.dot_dimension_numbers<[1], [0], [0], [1], [0, 0, 1, 1], [], []>} : vector<28x32xbf16>, vector<32x448xbf16>, vector<28x448xf32> -> vector<28x448xf32>
    %14 = arith.addf %8, %13 : vector<28x448xf32>
    %c0_13 = arith.constant 0 : index
    %c2 = arith.constant 2 : index
    %c0_14 = arith.constant 0 : index
    %15 = vector.load %arg1[%c0_13, %c2, %c0_14] : memref<2x32x32xbf16, #tpu.memory_space<vmem>>, vector<1x28x32xbf16>
    %16 = vector.shape_cast %15 : vector<1x28x32xbf16> to vector<28x32xbf16>
    %c2_15 = arith.constant 2 : index
    %c0_16 = arith.constant 0 : index
    %c0_17 = arith.constant 0 : index
    %17 = vector.load %arg2[%c2_15, %c0_16, %c0_17] : memref<5x32x448xbf16, #tpu.memory_space<vmem>>, vector<1x32x448xbf16>
    %18 = vector.shape_cast %17 : vector<1x32x448xbf16> to vector<32x448xbf16>
    %cst_18 = arith.constant dense<0.000000e+00> : vector<28x448xf32>
    %19 = tpu.matmul %16, %18, %cst_18 {dimension_numbers = #tpu.dot_dimension_numbers<[1], [0], [0], [1], [0, 0, 1, 1], [], []>} : vector<28x32xbf16>, vector<32x448xbf16>, vector<28x448xf32> -> vector<28x448xf32>
    %20 = arith.addf %14, %19 : vector<28x448xf32>
    %c1_19 = arith.constant 1 : index
    %c2_20 = arith.constant 2 : index
    %c0_21 = arith.constant 0 : index
    %21 = vector.load %arg1[%c1_19, %c2_20, %c0_21] : memref<2x32x32xbf16, #tpu.memory_space<vmem>>, vector<1x28x32xbf16>
    %22 = vector.shape_cast %21 : vector<1x28x32xbf16> to vector<28x32xbf16>
    %c3 = arith.constant 3 : index
    %c0_22 = arith.constant 0 : index
    %c0_23 = arith.constant 0 : index
    %23 = vector.load %arg2[%c3, %c0_22, %c0_23] : memref<5x32x448xbf16, #tpu.memory_space<vmem>>, vector<1x32x448xbf16>
    %24 = vector.shape_cast %23 : vector<1x32x448xbf16> to vector<32x448xbf16>
    %cst_24 = arith.constant dense<0.000000e+00> : vector<28x448xf32>
    %25 = tpu.matmul %22, %24, %cst_24 {dimension_numbers = #tpu.dot_dimension_numbers<[1], [0], [0], [1], [0, 0, 1, 1], [], []>} : vector<28x32xbf16>, vector<32x448xbf16>, vector<28x448xf32> -> vector<28x448xf32>
    %26 = arith.addf %20, %25 : vector<28x448xf32>
    %c0_25 = arith.constant 0 : index
    %c4 = arith.constant 4 : index
    %c0_26 = arith.constant 0 : index
    %27 = vector.load %arg1[%c0_25, %c4, %c0_26] : memref<2x32x32xbf16, #tpu.memory_space<vmem>>, vector<1x28x32xbf16>
    %28 = vector.shape_cast %27 : vector<1x28x32xbf16> to vector<28x32xbf16>
    %c4_27 = arith.constant 4 : index
    %c0_28 = arith.constant 0 : index
    %c0_29 = arith.constant 0 : index
    %29 = vector.load %arg2[%c4_27, %c0_28, %c0_29] : memref<5x32x448xbf16, #tpu.memory_space<vmem>>, vector<1x32x448xbf16>
    %30 = vector.shape_cast %29 : vector<1x32x448xbf16> to vector<32x448xbf16>
    %cst_30 = arith.constant dense<0.000000e+00> : vector<28x448xf32>
    %31 = tpu.matmul %28, %30, %cst_30 {dimension_numbers = #tpu.dot_dimension_numbers<[1], [0], [0], [1], [0, 0, 1, 1], [], []>} : vector<28x32xbf16>, vector<32x448xbf16>, vector<28x448xf32> -> vector<28x448xf32>
    %32 = arith.addf %26, %31 : vector<28x448xf32>
    %cst_31 = arith.constant 0.000000e+00 : f32
    %33 = vector.broadcast %cst_31 : f32 to vector<28x448xf32>
    %34 = arith.maximumf %32, %33 : vector<28x448xf32>
    %cst_32 = arith.constant 0.000000e+00 : bf16
    %35 = vector.broadcast %cst_32 : bf16 to vector<4x640xbf16>
    %c0_33 = arith.constant 0 : index
    %c0_34 = arith.constant 0 : index
    %36 = vector.load %arg11[%c0_33, %c0_34] : memref<36x640xbf16, #tpu.memory_space<vmem>>, vector<4x640xbf16>
    tpu.vector_store %arg11[%c0_33, %c0_34], %35 {strides = array<i32>} : memref<36x640xbf16, #tpu.memory_space<vmem>>, vector<4x640xbf16>,
    %cst_35 = arith.constant 0.000000e+00 : bf16
    %37 = vector.broadcast %cst_35 : bf16 to vector<4x640xbf16>
    %c32 = arith.constant 32 : index
    %c0_36 = arith.constant 0 : index
    %38 = vector.load %arg11[%c32, %c0_36] : memref<36x640xbf16, #tpu.memory_space<vmem>>, vector<4x640xbf16>
    tpu.vector_store %arg11[%c32, %c0_36], %37 {strides = array<i32>} : memref<36x640xbf16, #tpu.memory_space<vmem>>, vector<4x640xbf16>,
    %cst_37 = arith.constant 0.000000e+00 : bf16
    %39 = vector.broadcast %cst_37 : bf16 to vector<28x128xbf16>
    %c4_38 = arith.constant 4 : index
    %c0_39 = arith.constant 0 : index
    %40 = vector.load %arg11[%c4_38, %c0_39] : memref<36x640xbf16, #tpu.memory_space<vmem>>, vector<28x128xbf16>
    tpu.vector_store %arg11[%c4_38, %c0_39], %39 {strides = array<i32>} : memref<36x640xbf16, #tpu.memory_space<vmem>>, vector<28x128xbf16>,
    %cst_40 = arith.constant 0.000000e+00 : bf16
    %41 = vector.broadcast %cst_40 : bf16 to vector<28x64xbf16>
    %c4_41 = arith.constant 4 : index
    %c576 = arith.constant 576 : index
    %42 = vector.load %arg11[%c4_41, %c576] : memref<36x640xbf16, #tpu.memory_space<vmem>>, vector<28x64xbf16>
    tpu.vector_store %arg11[%c4_41, %c576], %41 {strides = array<i32>} : memref<36x640xbf16, #tpu.memory_space<vmem>>, vector<28x64xbf16>,
    %43 = arith.truncf %34 : vector<28x448xf32> to vector<28x448xbf16>
    %c4_42 = arith.constant 4 : index
    %c128 = arith.constant 128 : index
    %44 = vector.load %arg11[%c4_42, %c128] : memref<36x640xbf16, #tpu.memory_space<vmem>>, vector<28x448xbf16>
    tpu.vector_store %arg11[%c4_42, %c128], %43 {strides = array<i32>} : memref<36x640xbf16, #tpu.memory_space<vmem>>, vector<28x448xbf16>,
    %c0_43 = arith.constant 0 : index
    %c0_44 = arith.constant 0 : index
    %45 = vector.load %arg5[%c0_43, %c0_44] : memref<1x448xf32, #tpu.memory_space<vmem>>, vector<1x448xf32>
    %46 = vector.shape_cast %45 : vector<1x448xf32> to vector<1x448xf32>
    %47 = vector.broadcast %46 : vector<1x448xf32> to vector<28x448xf32>
    %c0_45 = arith.constant 0 : index
    %c0_46 = arith.constant 0 : index
    %48 = vector.load %arg11[%c0_45, %c0_46] : memref<36x640xbf16, #tpu.memory_space<vmem>>, vector<28x640xbf16>
    %c0_47 = arith.constant 0 : index
    %c0_48 = arith.constant 0 : index
    %c0_49 = arith.constant 0 : index
    %49 = vector.load %arg4[%c0_47, %c0_48, %c0_49] : memref<5x640x448xbf16, #tpu.memory_space<vmem>>, vector<1x640x448xbf16>
    %50 = vector.shape_cast %49 : vector<1x640x448xbf16> to vector<640x448xbf16>
    %cst_50 = arith.constant dense<0.000000e+00> : vector<28x448xf32>
    %51 = tpu.matmul %48, %50, %cst_50 {dimension_numbers = #tpu.dot_dimension_numbers<[1], [0], [0], [1], [0, 0, 1, 1], [], []>} : vector<28x640xbf16>, vector<640x448xbf16>, vector<28x448xf32> -> vector<28x448xf32>
    %52 = arith.addf %47, %51 : vector<28x448xf32>
    %c2_51 = arith.constant 2 : index
    %c0_52 = arith.constant 0 : index
    %53 = vector.load %arg11[%c2_51, %c0_52] : memref<36x640xbf16, #tpu.memory_space<vmem>>, vector<28x640xbf16>
    %c1_53 = arith.constant 1 : index
    %c0_54 = arith.constant 0 : index
    %c0_55 = arith.constant 0 : index
    %54 = vector.load %arg4[%c1_53, %c0_54, %c0_55] : memref<5x640x448xbf16, #tpu.memory_space<vmem>>, vector<1x640x448xbf16>
    %55 = vector.shape_cast %54 : vector<1x640x448xbf16> to vector<640x448xbf16>
    %cst_56 = arith.constant dense<0.000000e+00> : vector<28x448xf32>
    %56 = tpu.matmul %53, %55, %cst_56 {dimension_numbers = #tpu.dot_dimension_numbers<[1], [0], [0], [1], [0, 0, 1, 1], [], []>} : vector<28x640xbf16>, vector<640x448xbf16>, vector<28x448xf32> -> vector<28x448xf32>
    %57 = arith.addf %52, %56 : vector<28x448xf32>
    %c4_57 = arith.constant 4 : index
    %c0_58 = arith.constant 0 : index
    %58 = vector.load %arg11[%c4_57, %c0_58] : memref<36x640xbf16, #tpu.memory_space<vmem>>, vector<28x640xbf16>
    %c2_59 = arith.constant 2 : index
    %c0_60 = arith.constant 0 : index
    %c0_61 = arith.constant 0 : index
    %59 = vector.load %arg4[%c2_59, %c0_60, %c0_61] : memref<5x640x448xbf16, #tpu.memory_space<vmem>>, vector<1x640x448xbf16>
    %60 = vector.shape_cast %59 : vector<1x640x448xbf16> to vector<640x448xbf16>
    %cst_62 = arith.constant dense<0.000000e+00> : vector<28x448xf32>
    %61 = tpu.matmul %58, %60, %cst_62 {dimension_numbers = #tpu.dot_dimension_numbers<[1], [0], [0], [1], [0, 0, 1, 1], [], []>} : vector<28x640xbf16>, vector<640x448xbf16>, vector<28x448xf32> -> vector<28x448xf32>
    %62 = arith.addf %57, %61 : vector<28x448xf32>
    %c6 = arith.constant 6 : index
    %c0_63 = arith.constant 0 : index
    %63 = vector.load %arg11[%c6, %c0_63] : memref<36x640xbf16, #tpu.memory_space<vmem>>, vector<28x640xbf16>
    %c3_64 = arith.constant 3 : index
    %c0_65 = arith.constant 0 : index
    %c0_66 = arith.constant 0 : index
    %64 = vector.load %arg4[%c3_64, %c0_65, %c0_66] : memref<5x640x448xbf16, #tpu.memory_space<vmem>>, vector<1x640x448xbf16>
    %65 = vector.shape_cast %64 : vector<1x640x448xbf16> to vector<640x448xbf16>
    %cst_67 = arith.constant dense<0.000000e+00> : vector<28x448xf32>
    %66 = tpu.matmul %63, %65, %cst_67 {dimension_numbers = #tpu.dot_dimension_numbers<[1], [0], [0], [1], [0, 0, 1, 1], [], []>} : vector<28x640xbf16>, vector<640x448xbf16>, vector<28x448xf32> -> vector<28x448xf32>
    %67 = arith.addf %62, %66 : vector<28x448xf32>
    %c8 = arith.constant 8 : index
    %c0_68 = arith.constant 0 : index
    %68 = vector.load %arg11[%c8, %c0_68] : memref<36x640xbf16, #tpu.memory_space<vmem>>, vector<28x640xbf16>
    %c4_69 = arith.constant 4 : index
    %c0_70 = arith.constant 0 : index
    %c0_71 = arith.constant 0 : index
    %69 = vector.load %arg4[%c4_69, %c0_70, %c0_71] : memref<5x640x448xbf16, #tpu.memory_space<vmem>>, vector<1x640x448xbf16>
    %70 = vector.shape_cast %69 : vector<1x640x448xbf16> to vector<640x448xbf16>
    %cst_72 = arith.constant dense<0.000000e+00> : vector<28x448xf32>
    %71 = tpu.matmul %68, %70, %cst_72 {dimension_numbers = #tpu.dot_dimension_numbers<[1], [0], [0], [1], [0, 0, 1, 1], [], []>} : vector<28x640xbf16>, vector<640x448xbf16>, vector<28x448xf32> -> vector<28x448xf32>
    %72 = arith.addf %67, %71 : vector<28x448xf32>
    %cst_73 = arith.constant 0.000000e+00 : f32
    %73 = vector.broadcast %cst_73 : f32 to vector<28x448xf32>
    %74 = arith.maximumf %72, %73 : vector<28x448xf32>
    %cst_74 = arith.constant 0.000000e+00 : bf16
    %75 = vector.broadcast %cst_74 : bf16 to vector<2x2x640xbf16>
    %c0_75 = arith.constant 0 : index
    %c0_76 = arith.constant 0 : index
    %c0_77 = arith.constant 0 : index
    %76 = vector.load %arg12[%c0_75, %c0_76, %c0_77] : memref<2x18x640xbf16, #tpu.memory_space<vmem>>, vector<2x2x640xbf16>
    tpu.vector_store %arg12[%c0_75, %c0_76, %c0_77], %75 {strides = array<i32>} : memref<2x18x640xbf16, #tpu.memory_space<vmem>>, vector<2x2x640xbf16>,
    %cst_78 = arith.constant 0.000000e+00 : bf16
    %77 = vector.broadcast %cst_78 : bf16 to vector<2x2x640xbf16>
    %c0_79 = arith.constant 0 : index
    %c16 = arith.constant 16 : index
    %c0_80 = arith.constant 0 : index
    %78 = vector.load %arg12[%c0_79, %c16, %c0_80] : memref<2x18x640xbf16, #tpu.memory_space<vmem>>, vector<2x2x640xbf16>
    tpu.vector_store %arg12[%c0_79, %c16, %c0_80], %77 {strides = array<i32>} : memref<2x18x640xbf16, #tpu.memory_space<vmem>>, vector<2x2x640xbf16>,
    %cst_81 = arith.constant 0.000000e+00 : bf16
    %79 = vector.broadcast %cst_81 : bf16 to vector<2x14x128xbf16>
    %c0_82 = arith.constant 0 : index
    %c2_83 = arith.constant 2 : index
    %c0_84 = arith.constant 0 : index
    %80 = vector.load %arg12[%c0_82, %c2_83, %c0_84] : memref<2x18x640xbf16, #tpu.memory_space<vmem>>, vector<2x14x128xbf16>
    tpu.vector_store %arg12[%c0_82, %c2_83, %c0_84], %79 {strides = array<i32>} : memref<2x18x640xbf16, #tpu.memory_space<vmem>>, vector<2x14x128xbf16>,
    %cst_85 = arith.constant 0.000000e+00 : bf16
    %81 = vector.broadcast %cst_85 : bf16 to vector<2x14x64xbf16>
    %c0_86 = arith.constant 0 : index
    %c2_87 = arith.constant 2 : index
    %c576_88 = arith.constant 576 : index
    %82 = vector.load %arg12[%c0_86, %c2_87, %c576_88] : memref<2x18x640xbf16, #tpu.memory_space<vmem>>, vector<2x14x64xbf16>
    tpu.vector_store %arg12[%c0_86, %c2_87, %c576_88], %81 {strides = array<i32>} : memref<2x18x640xbf16, #tpu.memory_space<vmem>>, vector<2x14x64xbf16>,
    %83 = vector.shape_cast %74 : vector<28x448xf32> to vector<7x2x2x448xf32>
    %84 = vector.extract_strided_slice %83 {offsets = [0, 0, 0, 0], sizes = [7, 1, 2, 448], strides = [1, 1, 1, 1]} : vector<7x2x2x448xf32> to vector<7x1x2x448xf32>
    %85 = vector.shape_cast %84 : vector<7x1x2x448xf32> to vector<7x2x448xf32>
    %86 = vector.shape_cast %85 : vector<7x2x448xf32> to vector<14x448xf32>
    %87 = arith.truncf %86 : vector<14x448xf32> to vector<14x448xbf16>
    %c0_89 = arith.constant 0 : index
    %c2_90 = arith.constant 2 : index
    %c128_91 = arith.constant 128 : index
    %88 = vector.load %arg12[%c0_89, %c2_90, %c128_91] : memref<2x18x640xbf16, #tpu.memory_space<vmem>>, vector<1x14x448xbf16>
    %89 = vector.shape_cast %88 : vector<1x14x448xbf16> to vector<14x448xbf16>
    %90 = vector.shape_cast %87 : vector<14x448xbf16> to vector<1x14x448xbf16>
    tpu.vector_store %arg12[%c0_89, %c2_90, %c128_91], %90 {strides = array<i32>} : memref<2x18x640xbf16, #tpu.memory_space<vmem>>, vector<1x14x448xbf16>,
    %91 = vector.extract_strided_slice %83 {offsets = [0, 1, 0, 0], sizes = [7, 1, 2, 448], strides = [1, 1, 1, 1]} : vector<7x2x2x448xf32> to vector<7x1x2x448xf32>
    %92 = vector.shape_cast %91 : vector<7x1x2x448xf32> to vector<7x2x448xf32>
    %93 = vector.shape_cast %92 : vector<7x2x448xf32> to vector<14x448xf32>
    %94 = arith.truncf %93 : vector<14x448xf32> to vector<14x448xbf16>
    %c1_92 = arith.constant 1 : index
    %c2_93 = arith.constant 2 : index
    %c128_94 = arith.constant 128 : index
    %95 = vector.load %arg12[%c1_92, %c2_93, %c128_94] : memref<2x18x640xbf16, #tpu.memory_space<vmem>>, vector<1x14x448xbf16>
    %96 = vector.shape_cast %95 : vector<1x14x448xbf16> to vector<14x448xbf16>
    %97 = vector.shape_cast %94 : vector<14x448xbf16> to vector<1x14x448xbf16>
    tpu.vector_store %arg12[%c1_92, %c2_93, %c128_94], %97 {strides = array<i32>} : memref<2x18x640xbf16, #tpu.memory_space<vmem>>, vector<1x14x448xbf16>,
    %c0_95 = arith.constant 0 : index
    %c0_96 = arith.constant 0 : index
    %98 = vector.load %arg7[%c0_95, %c0_96] : memref<1x224xf32, #tpu.memory_space<vmem>>, vector<1x224xf32>
    %99 = vector.shape_cast %98 : vector<1x224xf32> to vector<1x224xf32>
    %100 = vector.broadcast %99 : vector<1x224xf32> to vector<14x224xf32>
    %c0_97 = arith.constant 0 : index
    %c0_98 = arith.constant 0 : index
    %c0_99 = arith.constant 0 : index
    %101 = vector.load %arg12[%c0_97, %c0_98, %c0_99] : memref<2x18x640xbf16, #tpu.memory_space<vmem>>, vector<1x14x640xbf16>
    %102 = vector.shape_cast %101 : vector<1x14x640xbf16> to vector<14x640xbf16>
    %c0_100 = arith.constant 0 : index
    %c0_101 = arith.constant 0 : index
    %c0_102 = arith.constant 0 : index
    %103 = vector.load %arg6[%c0_100, %c0_101, %c0_102] : memref<5x640x224xbf16, #tpu.memory_space<vmem>>, vector<1x640x224xbf16>
    %104 = vector.shape_cast %103 : vector<1x640x224xbf16> to vector<640x224xbf16>
    %cst_103 = arith.constant dense<0.000000e+00> : vector<14x224xf32>
    %105 = tpu.matmul %102, %104, %cst_103 {dimension_numbers = #tpu.dot_dimension_numbers<[1], [0], [0], [1], [0, 0, 1, 1], [], []>} : vector<14x640xbf16>, vector<640x224xbf16>, vector<14x224xf32> -> vector<14x224xf32>
    %106 = arith.addf %100, %105 : vector<14x224xf32>
    %c1_104 = arith.constant 1 : index
    %c0_105 = arith.constant 0 : index
    %c0_106 = arith.constant 0 : index
    %107 = vector.load %arg12[%c1_104, %c0_105, %c0_106] : memref<2x18x640xbf16, #tpu.memory_space<vmem>>, vector<1x14x640xbf16>
    %108 = vector.shape_cast %107 : vector<1x14x640xbf16> to vector<14x640xbf16>
    %c1_107 = arith.constant 1 : index
    %c0_108 = arith.constant 0 : index
    %c0_109 = arith.constant 0 : index
    %109 = vector.load %arg6[%c1_107, %c0_108, %c0_109] : memref<5x640x224xbf16, #tpu.memory_space<vmem>>, vector<1x640x224xbf16>
    %110 = vector.shape_cast %109 : vector<1x640x224xbf16> to vector<640x224xbf16>
    %cst_110 = arith.constant dense<0.000000e+00> : vector<14x224xf32>
    %111 = tpu.matmul %108, %110, %cst_110 {dimension_numbers = #tpu.dot_dimension_numbers<[1], [0], [0], [1], [0, 0, 1, 1], [], []>} : vector<14x640xbf16>, vector<640x224xbf16>, vector<14x224xf32> -> vector<14x224xf32>
    %112 = arith.addf %106, %111 : vector<14x224xf32>
    %c0_111 = arith.constant 0 : index
    %c2_112 = arith.constant 2 : index
    %c0_113 = arith.constant 0 : index
    %113 = vector.load %arg12[%c0_111, %c2_112, %c0_113] : memref<2x18x640xbf16, #tpu.memory_space<vmem>>, vector<1x14x640xbf16>
    %114 = vector.shape_cast %113 : vector<1x14x640xbf16> to vector<14x640xbf16>
    %c2_114 = arith.constant 2 : index
    %c0_115 = arith.constant 0 : index
    %c0_116 = arith.constant 0 : index
    %115 = vector.load %arg6[%c2_114, %c0_115, %c0_116] : memref<5x640x224xbf16, #tpu.memory_space<vmem>>, vector<1x640x224xbf16>
    %116 = vector.shape_cast %115 : vector<1x640x224xbf16> to vector<640x224xbf16>
    %cst_117 = arith.constant dense<0.000000e+00> : vector<14x224xf32>
    %117 = tpu.matmul %114, %116, %cst_117 {dimension_numbers = #tpu.dot_dimension_numbers<[1], [0], [0], [1], [0, 0, 1, 1], [], []>} : vector<14x640xbf16>, vector<640x224xbf16>, vector<14x224xf32> -> vector<14x224xf32>
    %118 = arith.addf %112, %117 : vector<14x224xf32>
    %c1_118 = arith.constant 1 : index
    %c2_119 = arith.constant 2 : index
    %c0_120 = arith.constant 0 : index
    %119 = vector.load %arg12[%c1_118, %c2_119, %c0_120] : memref<2x18x640xbf16, #tpu.memory_space<vmem>>, vector<1x14x640xbf16>
    %120 = vector.shape_cast %119 : vector<1x14x640xbf16> to vector<14x640xbf16>
    %c3_121 = arith.constant 3 : index
    %c0_122 = arith.constant 0 : index
    %c0_123 = arith.constant 0 : index
    %121 = vector.load %arg6[%c3_121, %c0_122, %c0_123] : memref<5x640x224xbf16, #tpu.memory_space<vmem>>, vector<1x640x224xbf16>
    %122 = vector.shape_cast %121 : vector<1x640x224xbf16> to vector<640x224xbf16>
    %cst_124 = arith.constant dense<0.000000e+00> : vector<14x224xf32>
    %123 = tpu.matmul %120, %122, %cst_124 {dimension_numbers = #tpu.dot_dimension_numbers<[1], [0], [0], [1], [0, 0, 1, 1], [], []>} : vector<14x640xbf16>, vector<640x224xbf16>, vector<14x224xf32> -> vector<14x224xf32>
    %124 = arith.addf %118, %123 : vector<14x224xf32>
    %c0_125 = arith.constant 0 : index
    %c4_126 = arith.constant 4 : index
    %c0_127 = arith.constant 0 : index
    %125 = vector.load %arg12[%c0_125, %c4_126, %c0_127] : memref<2x18x640xbf16, #tpu.memory_space<vmem>>, vector<1x14x640xbf16>
    %126 = vector.shape_cast %125 : vector<1x14x640xbf16> to vector<14x640xbf16>
    %c4_128 = arith.constant 4 : index
    %c0_129 = arith.constant 0 : index
    %c0_130 = arith.constant 0 : index
    %127 = vector.load %arg6[%c4_128, %c0_129, %c0_130] : memref<5x640x224xbf16, #tpu.memory_space<vmem>>, vector<1x640x224xbf16>
    %128 = vector.shape_cast %127 : vector<1x640x224xbf16> to vector<640x224xbf16>
    %cst_131 = arith.constant dense<0.000000e+00> : vector<14x224xf32>
    %129 = tpu.matmul %126, %128, %cst_131 {dimension_numbers = #tpu.dot_dimension_numbers<[1], [0], [0], [1], [0, 0, 1, 1], [], []>} : vector<14x640xbf16>, vector<640x224xbf16>, vector<14x224xf32> -> vector<14x224xf32>
    %130 = arith.addf %124, %129 : vector<14x224xf32>
    %cst_132 = arith.constant 0.000000e+00 : f32
    %131 = vector.broadcast %cst_132 : f32 to vector<14x224xf32>
    %132 = arith.maximumf %130, %131 : vector<14x224xf32>
    %133 = vector.extract_strided_slice %132 {offsets = [0, 0], sizes = [2, 224], strides = [1, 1]} : vector<14x224xf32> to vector<2x224xf32>
    %134 = vector.extract_strided_slice %132 {offsets = [2, 0], sizes = [2, 224], strides = [1, 1]} : vector<14x224xf32> to vector<2x224xf32>
    %135 = vector.extract_strided_slice %132 {offsets = [4, 0], sizes = [2, 224], strides = [1, 1]} : vector<14x224xf32> to vector<2x224xf32>
    %136 = vector.extract_strided_slice %132 {offsets = [6, 0], sizes = [2, 224], strides = [1, 1]} : vector<14x224xf32> to vector<2x224xf32>
    %137 = vector.extract_strided_slice %132 {offsets = [8, 0], sizes = [2, 224], strides = [1, 1]} : vector<14x224xf32> to vector<2x224xf32>
    %138 = vector.extract_strided_slice %132 {offsets = [10, 0], sizes = [2, 224], strides = [1, 1]} : vector<14x224xf32> to vector<2x224xf32>
    %139 = vector.extract_strided_slice %132 {offsets = [12, 0], sizes = [2, 224], strides = [1, 1]} : vector<14x224xf32> to vector<2x224xf32>
    %140 = tpu.concatenate %133, %134, %135, %136, %137, %138, %139 in 1 : vector<2x224xf32>, vector<2x224xf32>, vector<2x224xf32>, vector<2x224xf32>, vector<2x224xf32>, vector<2x224xf32>, vector<2x224xf32> -> vector<2x1568xf32>
    %141 = arith.truncf %140 : vector<2x1568xf32> to vector<2x1568xbf16>
    %c0_133 = arith.constant 0 : index
    %c0_134 = arith.constant 0 : index
    %142 = vector.load %arg8[%c0_133, %c0_134] : memref<1568x128xbf16, #tpu.memory_space<vmem>>, vector<1568x128xbf16>
    %cst_135 = arith.constant dense<0.000000e+00> : vector<2x128xf32>
    %143 = tpu.matmul %141, %142, %cst_135 {dimension_numbers = #tpu.dot_dimension_numbers<[1], [0], [0], [1], [0, 0, 1, 1], [], []>} : vector<2x1568xbf16>, vector<1568x128xbf16>, vector<2x128xf32> -> vector<2x128xf32>
    %c0_136 = arith.constant 0 : index
    %c0_137 = arith.constant 0 : index
    %144 = vector.load %arg9[%c0_136, %c0_137] : memref<1x128xf32, #tpu.memory_space<vmem>>, vector<1x128xf32>
    %145 = vector.broadcast %144 : vector<1x128xf32> to vector<2x128xf32>
    %146 = arith.addf %143, %145 : vector<2x128xf32>
    %c0_138 = arith.constant 0 : index
    %c0_139 = arith.constant 0 : index
    %147 = vector.load %arg10[%c0_138, %c0_139] : memref<2x128xf32, #tpu.memory_space<vmem>>, vector<2x128xf32>
    tpu.vector_store %arg10[%c0_138, %c0_139], %146 {strides = array<i32>} : memref<2x128xf32, #tpu.memory_space<vmem>>, vector<2x128xf32>,
    return
  }
  func.func @transform_0(%arg0: i32) -> (i32, i32, i32) {
    %c0_i32 = arith.constant 0 : i32
    %c0_i32_0 = arith.constant 0 : i32
    %c0_i32_1 = arith.constant 0 : i32
    %c0_i32_2 = arith.constant 0 : i32
    return %c0_i32, %c0_i32_0, %c0_i32_1 : i32, i32, i32
  }
  func.func @transform_1(%arg0: i32) -> (i32, i32, i32) {
    %c0_i32 = arith.constant 0 : i32
    %c0_i32_0 = arith.constant 0 : i32
    %c0_i32_1 = arith.constant 0 : i32
    %c0_i32_2 = arith.constant 0 : i32
    return %c0_i32, %c0_i32_0, %c0_i32_1 : i32, i32, i32
  }
  func.func @transform_2(%arg0: i32) -> (i32, i32) {
    %c0_i32 = arith.constant 0 : i32
    %c0_i32_0 = arith.constant 0 : i32
    %c0_i32_1 = arith.constant 0 : i32
    return %c0_i32, %c0_i32_0 : i32, i32
  }
  func.func @transform_3(%arg0: i32) -> (i32, i32, i32) {
    %c0_i32 = arith.constant 0 : i32
    %c0_i32_0 = arith.constant 0 : i32
    %c0_i32_1 = arith.constant 0 : i32
    %c0_i32_2 = arith.constant 0 : i32
    return %c0_i32, %c0_i32_0, %c0_i32_1 : i32, i32, i32
  }
  func.func @transform_4(%arg0: i32) -> (i32, i32) {
    %c0_i32 = arith.constant 0 : i32
    %c0_i32_0 = arith.constant 0 : i32
    %c0_i32_1 = arith.constant 0 : i32
    return %c0_i32, %c0_i32_0 : i32, i32
  }
  func.func @transform_5(%arg0: i32) -> (i32, i32, i32) {
    %c0_i32 = arith.constant 0 : i32
    %c0_i32_0 = arith.constant 0 : i32
    %c0_i32_1 = arith.constant 0 : i32
    %c0_i32_2 = arith.constant 0 : i32
    return %c0_i32, %c0_i32_0, %c0_i32_1 : i32, i32, i32
  }
  func.func @transform_6(%arg0: i32) -> (i32, i32) {
    %c0_i32 = arith.constant 0 : i32
    %c0_i32_0 = arith.constant 0 : i32
    %c0_i32_1 = arith.constant 0 : i32
    return %c0_i32, %c0_i32_0 : i32, i32
  }
  func.func @transform_7(%arg0: i32) -> (i32, i32) {
    %c0_i32 = arith.constant 0 : i32
    %c0_i32_0 = arith.constant 0 : i32
    %c0_i32_1 = arith.constant 0 : i32
    return %c0_i32, %c0_i32_0 : i32, i32
  }
  func.func @transform_8(%arg0: i32) -> (i32, i32) {
    %c0_i32 = arith.constant 0 : i32
    %c0_i32_0 = arith.constant 0 : i32
    %c0_i32_1 = arith.constant 0 : i32
    return %c0_i32, %c0_i32_0 : i32, i32
  }
  func.func @transform_9(%arg0: i32) -> (i32, i32) {
    %c0_i32 = arith.constant 0 : i32
    %c0_i32_0 = arith.constant 0 : i32
    %c0_i32_1 = arith.constant 0 : i32
    return %c0_i32, %c0_i32_0 : i32, i32
  }
}

</mosaic_0001>

<llo_original>
// kernel: simple_cnn_forward.1
$region0: #{simple_cnn_forward.1}
  #allocation0 [shape = 'u32[]', space=smem, size = 0x4, offset = 0x4, fixed_abs, tag = 'smem constant byte address 0x4 - core index']
  #allocation1 [shape = 'u32[144,128]{1,0:T(1,128)}', space=vmem, size = 0x12000, scoped, tag = 'internal scratch']
  #allocation2 [shape = 'bf16[36,640]{1,0:T(8,128)(2,1)}', space=vmem, size = 0xc800, scoped, tag = 'scratch operand']
  #allocation3 [shape = 'bf16[2,18,640]{2,1,0:T(8,128)(2,1)}', space=vmem, size = 0xf000, scoped, tag = 'scratch operand']
  %s0 = inlined_call_operand.vmem [shape: bf16[2,32,32], index: 0, kind: input, shape index: {}]
  %s1 = inlined_call_operand.vmem [shape: bf16[5,32,448], index: 1, kind: input, shape index: {}]
  %s2 = inlined_call_operand.vmem [shape: f32[1,448], index: 2, kind: input, shape index: {}]
  %s3 = inlined_call_operand.vmem [shape: bf16[5,640,448], index: 3, kind: input, shape index: {}]
  %s4 = inlined_call_operand.vmem [shape: f32[1,448], index: 4, kind: input, shape index: {}]
  %s5 = inlined_call_operand.vmem [shape: bf16[5,640,224], index: 5, kind: input, shape index: {}]
  %s6 = inlined_call_operand.vmem [shape: f32[1,224], index: 6, kind: input, shape index: {}]
  %s7 = inlined_call_operand.vmem [shape: bf16[1568,128], index: 7, kind: input, shape index: {}]
  %s8 = inlined_call_operand.vmem [shape: f32[1,128], index: 8, kind: input, shape index: {}]
  %s9 = inlined_call_operand.hbm [shape: f32[2,128], index: 9, kind: output, shape index: {}]
  %s10 = sld [smem:[#allocation0]]
  $region46: #{simple_cnn_forward.1} parent=0
    _
  %s12 = ssub.s32 1, %s10
  %s13 = scalar_select 0, %s12, %s10
  $region1: #{simple_cnn_forward.1} parent=0
    #allocation4 [shape = 'u8[1024]{0}', space=vmem, size = 0x400, scoped, tag = 'output window, operand 0, single buffered']
    #allocation5 [shape = 's32[1]{0}', space=sflag, size = 0x4, scoped, tag = 'scoped memory for simple_cnn_forward.1']
    %14 = vsyncpa [#allocation5], 0
    // Predicated region
    $region2: #{simple_cnn_forward.1} parent=1 // pred_check
      _
    $region3: #{simple_cnn_forward.1} parent=1 // pred_check_branch
      %16 = sbr.rel (0) target = $region5
    $region4: #{simple_cnn_forward.1} parent=1 // pred_region
      _
    $region5: #{simple_cnn_forward.1} parent=1 // pred_fallthru
      _
    // Predicated region
    $region6: #{simple_cnn_forward.1} parent=1 // pred_check
      _
    $region7: #{simple_cnn_forward.1} parent=1 // pred_check_branch
      %18 = sbr.rel (0) target = $region9
    $region8: #{simple_cnn_forward.1} parent=1 // pred_region
      _
    $region9: #{simple_cnn_forward.1} parent=1 // pred_fallthru
      _
    // Predicated region
    $region10: #{simple_cnn_forward.1} parent=1 // pred_check
      _
    $region11: #{simple_cnn_forward.1} parent=1 // pred_check_branch
      %20 = sbr.rel (0) target = $region13
    $region12: #{simple_cnn_forward.1} parent=1 // pred_region
      _
    $region13: #{simple_cnn_forward.1} parent=1 // pred_fallthru
      _
    // Predicated region
    $region14: #{simple_cnn_forward.1} parent=1 // pred_check
      _
    $region15: #{simple_cnn_forward.1} parent=1 // pred_check_branch
      %22 = sbr.rel (0) target = $region17
    $region16: #{simple_cnn_forward.1} parent=1 // pred_region
      _
    $region17: #{simple_cnn_forward.1} parent=1 // pred_fallthru
      _
    // Predicated region
    $region18: #{simple_cnn_forward.1} parent=1 // pred_check
      _
    $region19: #{simple_cnn_forward.1} parent=1 // pred_check_branch
      %24 = sbr.rel (0) target = $region21
    $region20: #{simple_cnn_forward.1} parent=1 // pred_region
      _
    $region21: #{simple_cnn_forward.1} parent=1 // pred_fallthru
      _
    // Predicated region
    $region22: #{simple_cnn_forward.1} parent=1 // pred_check
      _
    $region23: #{simple_cnn_forward.1} parent=1 // pred_check_branch
      %26 = sbr.rel (0) target = $region25
    $region24: #{simple_cnn_forward.1} parent=1 // pred_region
      _
    $region25: #{simple_cnn_forward.1} parent=1 // pred_fallthru
      _
    // Predicated region
    $region26: #{simple_cnn_forward.1} parent=1 // pred_check
      _
    $region27: #{simple_cnn_forward.1} parent=1 // pred_check_branch
      %28 = sbr.rel (0) target = $region29
    $region28: #{simple_cnn_forward.1} parent=1 // pred_region
      _
    $region29: #{simple_cnn_forward.1} parent=1 // pred_fallthru
      _
    // Predicated region
    $region30: #{simple_cnn_forward.1} parent=1 // pred_check
      _
    $region31: #{simple_cnn_forward.1} parent=1 // pred_check_branch
      %30 = sbr.rel (0) target = $region33
    $region32: #{simple_cnn_forward.1} parent=1 // pred_region
      _
    $region33: #{simple_cnn_forward.1} parent=1 // pred_fallthru
      _
    // Predicated region
    $region34: #{simple_cnn_forward.1} parent=1 // pred_check
      _
    $region35: #{simple_cnn_forward.1} parent=1 // pred_check_branch
      %32 = sbr.rel (0) target = $region37
    $region36: #{simple_cnn_forward.1} parent=1 // pred_region
      _
    $region37: #{simple_cnn_forward.1} parent=1 // pred_fallthru
      _
    %v34 = vld [vmem:[%s2] sm:$0xf]
    %v36 = vlaneseq
    %v37 = vshrl.u32 %v36, 7
    %v38 = vsub.s32 0, %v37
    %v39 = vrot.slane %v34, %v38
    %v40 = vlaneseq
    %v41 = vshrl.u32 %v40, 7
    %v42 = vsub.s32 1, %v41
    %v43 = vrot.slane %v34, %v42
    %v44 = vlaneseq
    %v45 = vshrl.u32 %v44, 7
    %v46 = vsub.s32 2, %v45
    %v47 = vrot.slane %v34, %v46
    %v48 = vlaneseq
    %v49 = vshrl.u32 %v48, 7
    %v50 = vsub.s32 3, %v49
    %v51 = vrot.slane %v34, %v50
    %v56 = vld [vmem:[%s0] sm:$0xf]
    %v57 = vld [vmem:[%s0 + $0x4] sm:$0xf]
    %v58 = vld [vmem:[%s0 + $0x8] sm:$0xf]
    %v59 = vld [vmem:[%s0 + $0xc] sm:$0x3]
    %v60 = vld [vmem:[%s1] sm:$0xff]
    %v61 = vld [vmem:[%s1 + $0x8] sm:$0xff]
    %v62 = vld [vmem:[%s1 + $0x10] sm:$0xff]
    %v63 = vld [vmem:[%s1 + $0x18] sm:$0xff]
    %v64 = vld [vmem:[%s1 + $0x20] sm:$0xff]
    %v65 = vld [vmem:[%s1 + $0x28] sm:$0xff]
    %v66 = vld [vmem:[%s1 + $0x30] sm:$0xff]
    %v67 = vld [vmem:[%s1 + $0x38] sm:$0xff]
    %v72 = vunpack.c.l.b16 %v56
    %v73 = vunpack.c.l.b16 %v57
    %v74 = vunpack.c.l.b16 %v58
    %v75 = vunpack.c.l.b16 %v59
    %v76 = vpack.c.b16 %v73, %v72
    %v77 = vpack.c.b16 %v75, %v74
    %v86 = vunpack.c.l.b16 %v60
    %v87 = vunpack.c.h.b16 %v60
    %v88 = vunpack.c.l.b16 %v61
    %v89 = vunpack.c.h.b16 %v61
    %v90 = vunpack.c.l.b16 %v62
    %v91 = vunpack.c.h.b16 %v62
    %v92 = vunpack.c.l.b16 %v63
    %v93 = vunpack.c.h.b16 %v63
    %v94 = vunpack.c.l.b16 %v64
    %v95 = vunpack.c.h.b16 %v64
    %v96 = vunpack.c.l.b16 %v65
    %v97 = vunpack.c.h.b16 %v65
    %v98 = vunpack.c.l.b16 %v66
    %v99 = vunpack.c.h.b16 %v66
    %v100 = vunpack.c.l.b16 %v67
    %v101 = vunpack.c.h.b16 %v67
    %v102 = vpack.c.b16 %v90, %v86
    %v103 = vpack.c.b16 %v91, %v87
    %v104 = vpack.c.b16 %v92, %v88
    %v105 = vpack.c.b16 %v93, %v89
    %v106 = vpack.c.b16 %v98, %v94
    %v107 = vpack.c.b16 %v99, %v95
    %v108 = vpack.c.b16 %v100, %v96
    %v109 = vpack.c.b16 %v101, %v97
    %vm118 = vcmask 261120
    %v120 = vsel %vm118, %v76, 0
    %v123 = vsel %vm118, %v77, 0
    %125 = vmatprep.subr.bf16.mxu0 %v103
    %126 = vmatpush1.bf16.msra.mxu0 %v102
    %127 = vmatprep.subr.bf16.mxu0 %v107
    %128 = vmatpush1.bf16.msra.mxu0 %v106
    %129 = vmatprep.subr.bf16.mxu0 0
    %130 = vmatpush1.bf16.msra.mxu0 0
    %131 = vmatprep.subr.bf16.mxu0 0
    %132 = vmatpush1.bf16.msra.mxu0 0
    %133 = vmatprep.subr.bf16.mxu0 0
    %134 = vmatpush1.bf16.msra.mxu0 0
    %135 = vmatprep.subr.bf16.mxu0 0
    %136 = vmatpush1.bf16.msra.mxu0 0
    %137 = vmatprep.subr.bf16.mxu0 0
    %138 = vmatpush1.bf16.msra.mxu0 0
    %139 = vmatprep.subr.bf16.mxu0 0
    %140 = vmatpush1.bf16.msra.mxu0 0
    %141 = vmatprep.subr.bf16.mxu0 0
    %142 = vmatpush1.bf16.msra.mxu0 0
    %143 = vmatprep.subr.bf16.mxu0 0
    %144 = vmatpush1.bf16.msra.mxu0 0
    %145 = vmatprep.subr.bf16.mxu0 0
    %146 = vmatpush1.bf16.msra.mxu0 0
    %147 = vmatprep.subr.bf16.mxu0 0
    %148 = vmatpush1.bf16.msra.mxu0 0
    %149 = vmatprep.subr.bf16.mxu0 0
    %150 = vmatpush1.bf16.msra.mxu0 0
    %151 = vmatprep.subr.bf16.mxu0 0
    %152 = vmatpush1.bf16.msra.mxu0 0
    %153 = vmatprep.subr.bf16.mxu0 0
    %154 = vmatpush1.bf16.msra.mxu0 0
    %155 = vmatprep.subr.bf16.mxu0 0
    %156 = vmatpush1.bf16.msra.mxu0 0
    %157 = vmatprep.mubr.bf16.mxu0 0
    %158 = vmatmul.mubr.bf16.gmra.mrb[0].mxu0 %v120
    %v159 = vpop.f32.mrb[0].mxu0
    %v160 = vadd.f32 0.0, %v159
    %v161 = vpop.f32.mrb[0].mxu0
    %v162 = vadd.f32 0.0, %v161
    %v163 = vpop.f32.mrb[0].mxu0
    %v164 = vadd.f32 0.0, %v163
    %v165 = vpop.f32.mrb[0].mxu0
    %v166 = vadd.f32 0.0, %v165
    %167 = vmatprep.mubr.bf16.mxu0 0
    %168 = vmatmul.mubr.bf16.gmra.mrb[0].mxu0 %v123
    %v169 = vpop.f32.mrb[0].mxu0
    %v170 = vadd.f32 0.0, %v169
    %v171 = vpop.f32.mrb[0].mxu0
    %v172 = vadd.f32 0.0, %v171
    %v173 = vpop.f32.mrb[0].mxu0
    %v174 = vadd.f32 0.0, %v173
    %v175 = vpop.f32.mrb[0].mxu0
    %v176 = vadd.f32 0.0, %v175
    %177 = vdwg.mxu0
    %178 = vmatprep.subr.bf16.mxu0 %v105
    %179 = vmatpush1.bf16.msra.mxu0 %v104
    %180 = vmatprep.subr.bf16.mxu0 %v109
    %181 = vmatpush1.bf16.msra.mxu0 %v108
    %182 = vmatprep.subr.bf16.mxu0 0
    %183 = vmatpush1.bf16.msra.mxu0 0
    %184 = vmatprep.subr.bf16.mxu0 0
    %185 = vmatpush1.bf16.msra.mxu0 0
    %186 = vmatprep.subr.bf16.mxu0 0
    %187 = vmatpush1.bf16.msra.mxu0 0
    %188 = vmatprep.subr.bf16.mxu0 0
    %189 = vmatpush1.bf16.msra.mxu0 0
    %190 = vmatprep.subr.bf16.mxu0 0
    %191 = vmatpush1.bf16.msra.mxu0 0
    %192 = vmatprep.subr.bf16.mxu0 0
    %193 = vmatpush1.bf16.msra.mxu0 0
    %194 = vmatprep.subr.bf16.mxu0 0
    %195 = vmatpush1.bf16.msra.mxu0 0
    %196 = vmatprep.subr.bf16.mxu0 0
    %197 = vmatpush1.bf16.msra.mxu0 0
    %198 = vmatprep.subr.bf16.mxu0 0
    %199 = vmatpush1.bf16.msra.mxu0 0
    %200 = vmatprep.subr.bf16.mxu0 0
    %201 = vmatpush1.bf16.msra.mxu0 0
    %202 = vmatprep.subr.bf16.mxu0 0
    %203 = vmatpush1.bf16.msra.mxu0 0
    %204 = vmatprep.subr.bf16.mxu0 0
    %205 = vmatpush1.bf16.msra.mxu0 0
    %206 = vmatprep.subr.bf16.mxu0 0
    %207 = vmatpush1.bf16.msra.mxu0 0
    %208 = vmatprep.subr.bf16.mxu0 0
    %209 = vmatpush1.bf16.msra.mxu0 0
    %210 = vmatprep.mubr.bf16.mxu0 0
    %211 = vmatmul.mubr.bf16.gmra.mrb[0].mxu0 %v120
    %v212 = vpop.f32.mrb[0].mxu0
    %v213 = vadd.f32 0.0, %v212
    %v214 = vpop.f32.mrb[0].mxu0
    %v215 = vadd.f32 0.0, %v214
    %v216 = vpop.f32.mrb[0].mxu0
    %v217 = vadd.f32 0.0, %v216
    %v218 = vpop.f32.mrb[0].mxu0
    %v219 = vadd.f32 0.0, %v218
    %220 = vmatprep.mubr.bf16.mxu0 0
    %221 = vmatmul.mubr.bf16.gmra.mrb[0].mxu0 %v123
    %v222 = vpop.f32.mrb[0].mxu0
    %v223 = vadd.f32 0.0, %v222
    %v224 = vpop.f32.mrb[0].mxu0
    %v225 = vadd.f32 0.0, %v224
    %v226 = vpop.f32.mrb[0].mxu0
    %v227 = vadd.f32 0.0, %v226
    %v228 = vpop.f32.mrb[0].mxu0
    %v229 = vadd.f32 0.0, %v228
    %230 = vdwg.mxu0
    %v231 = vadd.f32 %v39, %v160
    %v232 = vadd.f32 %v43, %v162
    %v233 = vadd.f32 %v47, %v213
    %v234 = vadd.f32 %v51, %v215
    %v235 = vadd.f32 %v39, %v164
    %v236 = vadd.f32 %v43, %v166
    %v237 = vadd.f32 %v47, %v217
    %v238 = vadd.f32 %v51, %v219
    %v239 = vadd.f32 %v39, %v170
    %v240 = vadd.f32 %v43, %v172
    %v241 = vadd.f32 %v47, %v223
    %v242 = vadd.f32 %v51, %v225
    %v243 = vadd.f32 %v39, %v174
    %v244 = vadd.f32 %v43, %v176
    %v245 = vadd.f32 %v47, %v227
    %v246 = vadd.f32 %v51, %v229
    %s247 = scalar_lea.vmem %s0, 16
    %v248 = vld [vmem:[%s247] sm:$0xf]
    %v249 = vld [vmem:[%s247 + $0x4] sm:$0xf]
    %v250 = vld [vmem:[%s247 + $0x8] sm:$0xf]
    %v251 = vld [vmem:[%s247 + $0xc] sm:$0x3]
    %s252 = scalar_lea.vmem %s1, 64
    %v253 = vld [vmem:[%s252] sm:$0xff]
    %v254 = vld [vmem:[%s252 + $0x8] sm:$0xff]
    %v255 = vld [vmem:[%s252 + $0x10] sm:$0xff]
    %v256 = vld [vmem:[%s252 + $0x18] sm:$0xff]
    %v257 = vld [vmem:[%s252 + $0x20] sm:$0xff]
    %v258 = vld [vmem:[%s252 + $0x28] sm:$0xff]
    %v259 = vld [vmem:[%s252 + $0x30] sm:$0xff]
    %v260 = vld [vmem:[%s252 + $0x38] sm:$0xff]
    %v265 = vunpack.c.l.b16 %v248
    %v266 = vunpack.c.l.b16 %v249
    %v267 = vunpack.c.l.b16 %v250
    %v268 = vunpack.c.l.b16 %v251
    %v269 = vpack.c.b16 %v266, %v265
    %v270 = vpack.c.b16 %v268, %v267
    %v279 = vunpack.c.l.b16 %v253
    %v280 = vunpack.c.h.b16 %v253
    %v281 = vunpack.c.l.b16 %v254
    %v282 = vunpack.c.h.b16 %v254
    %v283 = vunpack.c.l.b16 %v255
    %v284 = vunpack.c.h.b16 %v255
    %v285 = vunpack.c.l.b16 %v256
    %v286 = vunpack.c.h.b16 %v256
    %v287 = vunpack.c.l.b16 %v257
    %v288 = vunpack.c.h.b16 %v257
    %v289 = vunpack.c.l.b16 %v258
    %v290 = vunpack.c.h.b16 %v258
    %v291 = vunpack.c.l.b16 %v259
    %v292 = vunpack.c.h.b16 %v259
    %v293 = vunpack.c.l.b16 %v260
    %v294 = vunpack.c.h.b16 %v260
    %v295 = vpack.c.b16 %v283, %v279
    %v296 = vpack.c.b16 %v284, %v280
    %v297 = vpack.c.b16 %v285, %v281
    %v298 = vpack.c.b16 %v286, %v282
    %v299 = vpack.c.b16 %v291, %v287
    %v300 = vpack.c.b16 %v292, %v288
    %v301 = vpack.c.b16 %v293, %v289
    %v302 = vpack.c.b16 %v294, %v290
    %v312 = vsel %vm118, %v269, 0
    %v315 = vsel %vm118, %v270, 0
    %317 = vmatprep.subr.bf16.mxu0 %v296
    %318 = vmatpush1.bf16.msra.mxu0 %v295
    %319 = vmatprep.subr.bf16.mxu0 %v300
    %320 = vmatpush1.bf16.msra.mxu0 %v299
    %321 = vmatprep.subr.bf16.mxu0 0
    %322 = vmatpush1.bf16.msra.mxu0 0
    %323 = vmatprep.subr.bf16.mxu0 0
    %324 = vmatpush1.bf16.msra.mxu0 0
    %325 = vmatprep.subr.bf16.mxu0 0
    %326 = vmatpush1.bf16.msra.mxu0 0
    %327 = vmatprep.subr.bf16.mxu0 0
    %328 = vmatpush1.bf16.msra.mxu0 0
    %329 = vmatprep.subr.bf16.mxu0 0
    %330 = vmatpush1.bf16.msra.mxu0 0
    %331 = vmatprep.subr.bf16.mxu0 0
    %332 = vmatpush1.bf16.msra.mxu0 0
    %333 = vmatprep.subr.bf16.mxu0 0
    %334 = vmatpush1.bf16.msra.mxu0 0
    %335 = vmatprep.subr.bf16.mxu0 0
    %336 = vmatpush1.bf16.msra.mxu0 0
    %337 = vmatprep.subr.bf16.mxu0 0
    %338 = vmatpush1.bf16.msra.mxu0 0
    %339 = vmatprep.subr.bf16.mxu0 0
    %340 = vmatpush1.bf16.msra.mxu0 0
    %341 = vmatprep.subr.bf16.mxu0 0
    %342 = vmatpush1.bf16.msra.mxu0 0
    %343 = vmatprep.subr.bf16.mxu0 0
    %344 = vmatpush1.bf16.msra.mxu0 0
    %345 = vmatprep.subr.bf16.mxu0 0
    %346 = vmatpush1.bf16.msra.mxu0 0
    %347 = vmatprep.subr.bf16.mxu0 0
    %348 = vmatpush1.bf16.msra.mxu0 0
    %349 = vmatprep.mubr.bf16.mxu0 0
    %350 = vmatmul.mubr.bf16.gmra.mrb[0].mxu0 %v312
    %v351 = vpop.f32.mrb[0].mxu0
    %v352 = vadd.f32 0.0, %v351
    %v353 = vpop.f32.mrb[0].mxu0
    %v354 = vadd.f32 0.0, %v353
    %v355 = vpop.f32.mrb[0].mxu0
    %v356 = vadd.f32 0.0, %v355
    %v357 = vpop.f32.mrb[0].mxu0
    %v358 = vadd.f32 0.0, %v357
    %359 = vmatprep.mubr.bf16.mxu0 0
    %360 = vmatmul.mubr.bf16.gmra.mrb[0].mxu0 %v315
    %v361 = vpop.f32.mrb[0].mxu0
    %v362 = vadd.f32 0.0, %v361
    %v363 = vpop.f32.mrb[0].mxu0
    %v364 = vadd.f32 0.0, %v363
    %v365 = vpop.f32.mrb[0].mxu0
    %v366 = vadd.f32 0.0, %v365
    %v367 = vpop.f32.mrb[0].mxu0
    %v368 = vadd.f32 0.0, %v367
    %369 = vdwg.mxu0
    %370 = vmatprep.subr.bf16.mxu0 %v298
    %371 = vmatpush1.bf16.msra.mxu0 %v297
    %372 = vmatprep.subr.bf16.mxu0 %v302
    %373 = vmatpush1.bf16.msra.mxu0 %v301
    %374 = vmatprep.subr.bf16.mxu0 0
    %375 = vmatpush1.bf16.msra.mxu0 0
    %376 = vmatprep.subr.bf16.mxu0 0
    %377 = vmatpush1.bf16.msra.mxu0 0
    %378 = vmatprep.subr.bf16.mxu0 0
    %379 = vmatpush1.bf16.msra.mxu0 0
    %380 = vmatprep.subr.bf16.mxu0 0
    %381 = vmatpush1.bf16.msra.mxu0 0
    %382 = vmatprep.subr.bf16.mxu0 0
    %383 = vmatpush1.bf16.msra.mxu0 0
    %384 = vmatprep.subr.bf16.mxu0 0
    %385 = vmatpush1.bf16.msra.mxu0 0
    %386 = vmatprep.subr.bf16.mxu0 0
    %387 = vmatpush1.bf16.msra.mxu0 0
    %388 = vmatprep.subr.bf16.mxu0 0
    %389 = vmatpush1.bf16.msra.mxu0 0
    %390 = vmatprep.subr.bf16.mxu0 0
    %391 = vmatpush1.bf16.msra.mxu0 0
    %392 = vmatprep.subr.bf16.mxu0 0
    %393 = vmatpush1.bf16.msra.mxu0 0
    %394 = vmatprep.subr.bf16.mxu0 0
    %395 = vmatpush1.bf16.msra.mxu0 0
    %396 = vmatprep.subr.bf16.mxu0 0
    %397 = vmatpush1.bf16.msra.mxu0 0
    %398 = vmatprep.subr.bf16.mxu0 0
    %399 = vmatpush1.bf16.msra.mxu0 0
    %400 = vmatprep.subr.bf16.mxu0 0
    %401 = vmatpush1.bf16.msra.mxu0 0
    %402 = vmatprep.mubr.bf16.mxu0 0
    %403 = vmatmul.mubr.bf16.gmra.mrb[0].mxu0 %v312
    %v404 = vpop.f32.mrb[0].mxu0
    %v405 = vadd.f32 0.0, %v404
    %v406 = vpop.f32.mrb[0].mxu0
    %v407 = vadd.f32 0.0, %v406
    %v408 = vpop.f32.mrb[0].mxu0
    %v409 = vadd.f32 0.0, %v408
    %v410 = vpop.f32.mrb[0].mxu0
    %v411 = vadd.f32 0.0, %v410
    %412 = vmatprep.mubr.bf16.mxu0 0
    %413 = vmatmul.mubr.bf16.gmra.mrb[0].mxu0 %v315
    %v414 = vpop.f32.mrb[0].mxu0
    %v415 = vadd.f32 0.0, %v414
    %v416 = vpop.f32.mrb[0].mxu0
    %v417 = vadd.f32 0.0, %v416
    %v418 = vpop.f32.mrb[0].mxu0
    %v419 = vadd.f32 0.0, %v418
    %v420 = vpop.f32.mrb[0].mxu0
    %v421 = vadd.f32 0.0, %v420
    %422 = vdwg.mxu0
    %v423 = vadd.f32 %v231, %v352
    %v424 = vadd.f32 %v232, %v354
    %v425 = vadd.f32 %v233, %v405
    %v426 = vadd.f32 %v234, %v407
    %v427 = vadd.f32 %v235, %v356
    %v428 = vadd.f32 %v236, %v358
    %v429 = vadd.f32 %v237, %v409
    %v430 = vadd.f32 %v238, %v411
    %v431 = vadd.f32 %v239, %v362
    %v432 = vadd.f32 %v240, %v364
    %v433 = vadd.f32 %v241, %v415
    %v434 = vadd.f32 %v242, %v417
    %v435 = vadd.f32 %v243, %v366
    %v436 = vadd.f32 %v244, %v368
    %v437 = vadd.f32 %v245, %v419
    %v438 = vadd.f32 %v246, %v421
    %v439 = vld [vmem:[%s0] sm:$0xe]
    %v440 = vld [vmem:[%s0 + $0xc] sm:$0x7]
    %s441 = scalar_lea.vmem %s1, 128
    %v442 = vld [vmem:[%s441] sm:$0xff]
    %v443 = vld [vmem:[%s441 + $0x8] sm:$0xff]
    %v444 = vld [vmem:[%s441 + $0x10] sm:$0xff]
    %v445 = vld [vmem:[%s441 + $0x18] sm:$0xff]
    %v446 = vld [vmem:[%s441 + $0x20] sm:$0xff]
    %v447 = vld [vmem:[%s441 + $0x28] sm:$0xff]
    %v448 = vld [vmem:[%s441 + $0x30] sm:$0xff]
    %v449 = vld [vmem:[%s441 + $0x38] sm:$0xff]
    %v452 = vunpack.c.l.b16 %v439
    %v453 = vunpack.c.l.b16 %v440
    %v454 = vpack.c.b16 %v73, %v452
    %v455 = vpack.c.b16 %v453, %v74
    %vm456 = vcmask 1046528
    %v457 = vrot.slane %v454, 1
    %v458 = vrot.slane %v455, 1
    %v459 = vsel %vm456, %v457, %v458
    %v468 = vunpack.c.l.b16 %v442
    %v469 = vunpack.c.h.b16 %v442
    %v470 = vunpack.c.l.b16 %v443
    %v471 = vunpack.c.h.b16 %v443
    %v472 = vunpack.c.l.b16 %v444
    %v473 = vunpack.c.h.b16 %v444
    %v474 = vunpack.c.l.b16 %v445
    %v475 = vunpack.c.h.b16 %v445
    %v476 = vunpack.c.l.b16 %v446
    %v477 = vunpack.c.h.b16 %v446
    %v478 = vunpack.c.l.b16 %v447
    %v479 = vunpack.c.h.b16 %v447
    %v480 = vunpack.c.l.b16 %v448
    %v481 = vunpack.c.h.b16 %v448
    %v482 = vunpack.c.l.b16 %v449
    %v483 = vunpack.c.h.b16 %v449
    %v484 = vpack.c.b16 %v472, %v468
    %v485 = vpack.c.b16 %v473, %v469
    %v486 = vpack.c.b16 %v474, %v470
    %v487 = vpack.c.b16 %v475, %v471
    %v488 = vpack.c.b16 %v480, %v476
    %v489 = vpack.c.b16 %v481, %v477
    %v490 = vpack.c.b16 %v482, %v478
    %v491 = vpack.c.b16 %v483, %v479
    %v501 = vsel %vm118, %v459, 0
    %v504 = vsel %vm118, %v458, 0
    %506 = vmatprep.subr.bf16.mxu0 %v485
    %507 = vmatpush1.bf16.msra.mxu0 %v484
    %508 = vmatprep.subr.bf16.mxu0 %v489
    %509 = vmatpush1.bf16.msra.mxu0 %v488
    %510 = vmatprep.subr.bf16.mxu0 0
    %511 = vmatpush1.bf16.msra.mxu0 0
    %512 = vmatprep.subr.bf16.mxu0 0
    %513 = vmatpush1.bf16.msra.mxu0 0
    %514 = vmatprep.subr.bf16.mxu0 0
    %515 = vmatpush1.bf16.msra.mxu0 0
    %516 = vmatprep.subr.bf16.mxu0 0
    %517 = vmatpush1.bf16.msra.mxu0 0
    %518 = vmatprep.subr.bf16.mxu0 0
    %519 = vmatpush1.bf16.msra.mxu0 0
    %520 = vmatprep.subr.bf16.mxu0 0
    %521 = vmatpush1.bf16.msra.mxu0 0
    %522 = vmatprep.subr.bf16.mxu0 0
    %523 = vmatpush1.bf16.msra.mxu0 0
    %524 = vmatprep.subr.bf16.mxu0 0
    %525 = vmatpush1.bf16.msra.mxu0 0
    %526 = vmatprep.subr.bf16.mxu0 0
    %527 = vmatpush1.bf16.msra.mxu0 0
    %528 = vmatprep.subr.bf16.mxu0 0
    %529 = vmatpush1.bf16.msra.mxu0 0
    %530 = vmatprep.subr.bf16.mxu0 0
    %531 = vmatpush1.bf16.msra.mxu0 0
    %532 = vmatprep.subr.bf16.mxu0 0
    %533 = vmatpush1.bf16.msra.mxu0 0
    %534 = vmatprep.subr.bf16.mxu0 0
    %535 = vmatpush1.bf16.msra.mxu0 0
    %536 = vmatprep.subr.bf16.mxu0 0
    %537 = vmatpush1.bf16.msra.mxu0 0
    %538 = vmatprep.mubr.bf16.mxu0 0
    %539 = vmatmul.mubr.bf16.gmra.mrb[0].mxu0 %v501
    %v540 = vpop.f32.mrb[0].mxu0
    %v541 = vadd.f32 0.0, %v540
    %v542 = vpop.f32.mrb[0].mxu0
    %v543 = vadd.f32 0.0, %v542
    %v544 = vpop.f32.mrb[0].mxu0
    %v545 = vadd.f32 0.0, %v544
    %v546 = vpop.f32.mrb[0].mxu0
    %v547 = vadd.f32 0.0, %v546
    %548 = vmatprep.mubr.bf16.mxu0 0
    %549 = vmatmul.mubr.bf16.gmra.mrb[0].mxu0 %v504
    %v550 = vpop.f32.mrb[0].mxu0
    %v551 = vadd.f32 0.0, %v550
    %v552 = vpop.f32.mrb[0].mxu0
    %v553 = vadd.f32 0.0, %v552
    %v554 = vpop.f32.mrb[0].mxu0
    %v555 = vadd.f32 0.0, %v554
    %v556 = vpop.f32.mrb[0].mxu0
    %v557 = vadd.f32 0.0, %v556
    %558 = vdwg.mxu0
    %559 = vmatprep.subr.bf16.mxu0 %v487
    %560 = vmatpush1.bf16.msra.mxu0 %v486
    %561 = vmatprep.subr.bf16.mxu0 %v491
    %562 = vmatpush1.bf16.msra.mxu0 %v490
    %563 = vmatprep.subr.bf16.mxu0 0
    %564 = vmatpush1.bf16.msra.mxu0 0
    %565 = vmatprep.subr.bf16.mxu0 0
    %566 = vmatpush1.bf16.msra.mxu0 0
    %567 = vmatprep.subr.bf16.mxu0 0
    %568 = vmatpush1.bf16.msra.mxu0 0
    %569 = vmatprep.subr.bf16.mxu0 0
    %570 = vmatpush1.bf16.msra.mxu0 0
    %571 = vmatprep.subr.bf16.mxu0 0
    %572 = vmatpush1.bf16.msra.mxu0 0
    %573 = vmatprep.subr.bf16.mxu0 0
    %574 = vmatpush1.bf16.msra.mxu0 0
    %575 = vmatprep.subr.bf16.mxu0 0
    %576 = vmatpush1.bf16.msra.mxu0 0
    %577 = vmatprep.subr.bf16.mxu0 0
    %578 = vmatpush1.bf16.msra.mxu0 0
    %579 = vmatprep.subr.bf16.mxu0 0
    %580 = vmatpush1.bf16.msra.mxu0 0
    %581 = vmatprep.subr.bf16.mxu0 0
    %582 = vmatpush1.bf16.msra.mxu0 0
    %583 = vmatprep.subr.bf16.mxu0 0
    %584 = vmatpush1.bf16.msra.mxu0 0
    %585 = vmatprep.subr.bf16.mxu0 0
    %586 = vmatpush1.bf16.msra.mxu0 0
    %587 = vmatprep.subr.bf16.mxu0 0
    %588 = vmatpush1.bf16.msra.mxu0 0
    %589 = vmatprep.subr.bf16.mxu0 0
    %590 = vmatpush1.bf16.msra.mxu0 0
    %591 = vmatprep.mubr.bf16.mxu0 0
    %592 = vmatmul.mubr.bf16.gmra.mrb[0].mxu0 %v501
    %v593 = vpop.f32.mrb[0].mxu0
    %v594 = vadd.f32 0.0, %v593
    %v595 = vpop.f32.mrb[0].mxu0
    %v596 = vadd.f32 0.0, %v595
    %v597 = vpop.f32.mrb[0].mxu0
    %v598 = vadd.f32 0.0, %v597
    %v599 = vpop.f32.mrb[0].mxu0
    %v600 = vadd.f32 0.0, %v599
    %601 = vmatprep.mubr.bf16.mxu0 0
    %602 = vmatmul.mubr.bf16.gmra.mrb[0].mxu0 %v504
    %v603 = vpop.f32.mrb[0].mxu0
    %v604 = vadd.f32 0.0, %v603
    %v605 = vpop.f32.mrb[0].mxu0
    %v606 = vadd.f32 0.0, %v605
    %v607 = vpop.f32.mrb[0].mxu0
    %v608 = vadd.f32 0.0, %v607
    %v609 = vpop.f32.mrb[0].mxu0
    %v610 = vadd.f32 0.0, %v609
    %611 = vdwg.mxu0
    %v612 = vadd.f32 %v423, %v541
    %v613 = vadd.f32 %v424, %v543
    %v614 = vadd.f32 %v425, %v594
    %v615 = vadd.f32 %v426, %v596
    %v616 = vadd.f32 %v427, %v545
    %v617 = vadd.f32 %v428, %v547
    %v618 = vadd.f32 %v429, %v598
    %v619 = vadd.f32 %v430, %v600
    %v620 = vadd.f32 %v431, %v551
    %v621 = vadd.f32 %v432, %v553
    %v622 = vadd.f32 %v433, %v604
    %v623 = vadd.f32 %v434, %v606
    %v624 = vadd.f32 %v435, %v555
    %v625 = vadd.f32 %v436, %v557
    %v626 = vadd.f32 %v437, %v608
    %v627 = vadd.f32 %v438, %v610
    %v628 = vld [vmem:[%s247] sm:$0xe]
    %v629 = vld [vmem:[%s247 + $0xc] sm:$0x7]
    %s630 = scalar_lea.vmem %s1, 192
    %v631 = vld [vmem:[%s630] sm:$0xff]
    %v632 = vld [vmem:[%s630 + $0x8] sm:$0xff]
    %v633 = vld [vmem:[%s630 + $0x10] sm:$0xff]
    %v634 = vld [vmem:[%s630 + $0x18] sm:$0xff]
    %v635 = vld [vmem:[%s630 + $0x20] sm:$0xff]
    %v636 = vld [vmem:[%s630 + $0x28] sm:$0xff]
    %v637 = vld [vmem:[%s630 + $0x30] sm:$0xff]
    %v638 = vld [vmem:[%s630 + $0x38] sm:$0xff]
    %v641 = vunpack.c.l.b16 %v628
    %v642 = vunpack.c.l.b16 %v629
    %v643 = vpack.c.b16 %v266, %v641
    %v644 = vpack.c.b16 %v642, %v267
    %v645 = vrot.slane %v643, 1
    %v646 = vrot.slane %v644, 1
    %v647 = vsel %vm456, %v645, %v646
    %v656 = vunpack.c.l.b16 %v631
    %v657 = vunpack.c.h.b16 %v631
    %v658 = vunpack.c.l.b16 %v632
    %v659 = vunpack.c.h.b16 %v632
    %v660 = vunpack.c.l.b16 %v633
    %v661 = vunpack.c.h.b16 %v633
    %v662 = vunpack.c.l.b16 %v634
    %v663 = vunpack.c.h.b16 %v634
    %v664 = vunpack.c.l.b16 %v635
    %v665 = vunpack.c.h.b16 %v635
    %v666 = vunpack.c.l.b16 %v636
    %v667 = vunpack.c.h.b16 %v636
    %v668 = vunpack.c.l.b16 %v637
    %v669 = vunpack.c.h.b16 %v637
    %v670 = vunpack.c.l.b16 %v638
    %v671 = vunpack.c.h.b16 %v638
    %v672 = vpack.c.b16 %v660, %v656
    %v673 = vpack.c.b16 %v661, %v657
    %v674 = vpack.c.b16 %v662, %v658
    %v675 = vpack.c.b16 %v663, %v659
    %v676 = vpack.c.b16 %v668, %v664
    %v677 = vpack.c.b16 %v669, %v665
    %v678 = vpack.c.b16 %v670, %v666
    %v679 = vpack.c.b16 %v671, %v667
    %v689 = vsel %vm118, %v647, 0
    %v692 = vsel %vm118, %v646, 0
    %694 = vmatprep.subr.bf16.mxu0 %v673
    %695 = vmatpush1.bf16.msra.mxu0 %v672
    %696 = vmatprep.subr.bf16.mxu0 %v677
    %697 = vmatpush1.bf16.msra.mxu0 %v676
    %698 = vmatprep.subr.bf16.mxu0 0
    %699 = vmatpush1.bf16.msra.mxu0 0
    %700 = vmatprep.subr.bf16.mxu0 0
    %701 = vmatpush1.bf16.msra.mxu0 0
    %702 = vmatprep.subr.bf16.mxu0 0
    %703 = vmatpush1.bf16.msra.mxu0 0
    %704 = vmatprep.subr.bf16.mxu0 0
    %705 = vmatpush1.bf16.msra.mxu0 0
    %706 = vmatprep.subr.bf16.mxu0 0
    %707 = vmatpush1.bf16.msra.mxu0 0
    %708 = vmatprep.subr.bf16.mxu0 0
    %709 = vmatpush1.bf16.msra.mxu0 0
    %710 = vmatprep.subr.bf16.mxu0 0
    %711 = vmatpush1.bf16.msra.mxu0 0
    %712 = vmatprep.subr.bf16.mxu0 0
    %713 = vmatpush1.bf16.msra.mxu0 0
    %714 = vmatprep.subr.bf16.mxu0 0
    %715 = vmatpush1.bf16.msra.mxu0 0
    %716 = vmatprep.subr.bf16.mxu0 0
    %717 = vmatpush1.bf16.msra.mxu0 0
    %718 = vmatprep.subr.bf16.mxu0 0
    %719 = vmatpush1.bf16.msra.mxu0 0
    %720 = vmatprep.subr.bf16.mxu0 0
    %721 = vmatpush1.bf16.msra.mxu0 0
    %722 = vmatprep.subr.bf16.mxu0 0
    %723 = vmatpush1.bf16.msra.mxu0 0
    %724 = vmatprep.subr.bf16.mxu0 0
    %725 = vmatpush1.bf16.msra.mxu0 0
    %726 = vmatprep.mubr.bf16.mxu0 0
    %727 = vmatmul.mubr.bf16.gmra.mrb[0].mxu0 %v689
    %v728 = vpop.f32.mrb[0].mxu0
    %v729 = vadd.f32 0.0, %v728
    %v730 = vpop.f32.mrb[0].mxu0
    %v731 = vadd.f32 0.0, %v730
    %v732 = vpop.f32.mrb[0].mxu0
    %v733 = vadd.f32 0.0, %v732
    %v734 = vpop.f32.mrb[0].mxu0
    %v735 = vadd.f32 0.0, %v734
    %736 = vmatprep.mubr.bf16.mxu0 0
    %737 = vmatmul.mubr.bf16.gmra.mrb[0].mxu0 %v692
    %v738 = vpop.f32.mrb[0].mxu0
    %v739 = vadd.f32 0.0, %v738
    %v740 = vpop.f32.mrb[0].mxu0
    %v741 = vadd.f32 0.0, %v740
    %v742 = vpop.f32.mrb[0].mxu0
    %v743 = vadd.f32 0.0, %v742
    %v744 = vpop.f32.mrb[0].mxu0
    %v745 = vadd.f32 0.0, %v744
    %746 = vdwg.mxu0
    %747 = vmatprep.subr.bf16.mxu0 %v675
    %748 = vmatpush1.bf16.msra.mxu0 %v674
    %749 = vmatprep.subr.bf16.mxu0 %v679
    %750 = vmatpush1.bf16.msra.mxu0 %v678
    %751 = vmatprep.subr.bf16.mxu0 0
    %752 = vmatpush1.bf16.msra.mxu0 0
    %753 = vmatprep.subr.bf16.mxu0 0
    %754 = vmatpush1.bf16.msra.mxu0 0
    %755 = vmatprep.subr.bf16.mxu0 0
    %756 = vmatpush1.bf16.msra.mxu0 0
    %757 = vmatprep.subr.bf16.mxu0 0
    %758 = vmatpush1.bf16.msra.mxu0 0
    %759 = vmatprep.subr.bf16.mxu0 0
    %760 = vmatpush1.bf16.msra.mxu0 0
    %761 = vmatprep.subr.bf16.mxu0 0
    %762 = vmatpush1.bf16.msra.mxu0 0
    %763 = vmatprep.subr.bf16.mxu0 0
    %764 = vmatpush1.bf16.msra.mxu0 0
    %765 = vmatprep.subr.bf16.mxu0 0
    %766 = vmatpush1.bf16.msra.mxu0 0
    %767 = vmatprep.subr.bf16.mxu0 0
    %768 = vmatpush1.bf16.msra.mxu0 0
    %769 = vmatprep.subr.bf16.mxu0 0
    %770 = vmatpush1.bf16.msra.mxu0 0
    %771 = vmatprep.subr.bf16.mxu0 0
    %772 = vmatpush1.bf16.msra.mxu0 0
    %773 = vmatprep.subr.bf16.mxu0 0
    %774 = vmatpush1.bf16.msra.mxu0 0
    %775 = vmatprep.subr.bf16.mxu0 0
    %776 = vmatpush1.bf16.msra.mxu0 0
    %777 = vmatprep.subr.bf16.mxu0 0
    %778 = vmatpush1.bf16.msra.mxu0 0
    %779 = vmatprep.mubr.bf16.mxu0 0
    %780 = vmatmul.mubr.bf16.gmra.mrb[0].mxu0 %v689
    %v781 = vpop.f32.mrb[0].mxu0
    %v782 = vadd.f32 0.0, %v781
    %v783 = vpop.f32.mrb[0].mxu0
    %v784 = vadd.f32 0.0, %v783
    %v785 = vpop.f32.mrb[0].mxu0
    %v786 = vadd.f32 0.0, %v785
    %v787 = vpop.f32.mrb[0].mxu0
    %v788 = vadd.f32 0.0, %v787
    %789 = vmatprep.mubr.bf16.mxu0 0
    %790 = vmatmul.mubr.bf16.gmra.mrb[0].mxu0 %v692
    %v791 = vpop.f32.mrb[0].mxu0
    %v792 = vadd.f32 0.0, %v791
    %v793 = vpop.f32.mrb[0].mxu0
    %v794 = vadd.f32 0.0, %v793
    %v795 = vpop.f32.mrb[0].mxu0
    %v796 = vadd.f32 0.0, %v795
    %v797 = vpop.f32.mrb[0].mxu0
    %v798 = vadd.f32 0.0, %v797
    %799 = vdwg.mxu0
    %v800 = vadd.f32 %v612, %v729
    %v801 = vadd.f32 %v613, %v731
    %v802 = vadd.f32 %v614, %v782
    %v803 = vadd.f32 %v615, %v784
    %v804 = vadd.f32 %v616, %v733
    %v805 = vadd.f32 %v617, %v735
    %v806 = vadd.f32 %v618, %v786
    %v807 = vadd.f32 %v619, %v788
    %v808 = vadd.f32 %v620, %v739
    %v809 = vadd.f32 %v621, %v741
    %v810 = vadd.f32 %v622, %v792
    %v811 = vadd.f32 %v623, %v794
    %v812 = vadd.f32 %v624, %v743
    %v813 = vadd.f32 %v625, %v745
    %v814 = vadd.f32 %v626, %v796
    %v815 = vadd.f32 %v627, %v798
    %v816 = vld [vmem:[%s0] sm:$0xc]
    %v817 = vld [vmem:[%s0 + $0xc] sm:$0xf]
    %s818 = scalar_lea.vmem %s1, 256
    %v819 = vld [vmem:[%s818] sm:$0xff]
    %v820 = vld [vmem:[%s818 + $0x8] sm:$0xff]
    %v821 = vld [vmem:[%s818 + $0x10] sm:$0xff]
    %v822 = vld [vmem:[%s818 + $0x18] sm:$0xff]
    %v823 = vld [vmem:[%s818 + $0x20] sm:$0xff]
    %v824 = vld [vmem:[%s818 + $0x28] sm:$0xff]
    %v825 = vld [vmem:[%s818 + $0x30] sm:$0xff]
    %v826 = vld [vmem:[%s818 + $0x38] sm:$0xff]
    %v829 = vunpack.c.l.b16 %v816
    %v830 = vunpack.c.l.b16 %v817
    %v831 = vpack.c.b16 %v73, %v829
    %v832 = vpack.c.b16 %v830, %v74
    %vm833 = vcmask 1045504
    %v834 = vrot.slane %v831, 2
    %v835 = vrot.slane %v832, 2
    %v836 = vsel %vm833, %v834, %v835
    %v845 = vunpack.c.l.b16 %v819
    %v846 = vunpack.c.h.b16 %v819
    %v847 = vunpack.c.l.b16 %v820
    %v848 = vunpack.c.h.b16 %v820
    %v849 = vunpack.c.l.b16 %v821
    %v850 = vunpack.c.h.b16 %v821
    %v851 = vunpack.c.l.b16 %v822
    %v852 = vunpack.c.h.b16 %v822
    %v853 = vunpack.c.l.b16 %v823
    %v854 = vunpack.c.h.b16 %v823
    %v855 = vunpack.c.l.b16 %v824
    %v856 = vunpack.c.h.b16 %v824
    %v857 = vunpack.c.l.b16 %v825
    %v858 = vunpack.c.h.b16 %v825
    %v859 = vunpack.c.l.b16 %v826
    %v860 = vunpack.c.h.b16 %v826
    %v861 = vpack.c.b16 %v849, %v845
    %v862 = vpack.c.b16 %v850, %v846
    %v863 = vpack.c.b16 %v851, %v847
    %v864 = vpack.c.b16 %v852, %v848
    %v865 = vpack.c.b16 %v857, %v853
    %v866 = vpack.c.b16 %v858, %v854
    %v867 = vpack.c.b16 %v859, %v855
    %v868 = vpack.c.b16 %v860, %v856
    %v878 = vsel %vm118, %v836, 0
    %v881 = vsel %vm118, %v835, 0
    %883 = vmatprep.subr.bf16.mxu0 %v862
    %884 = vmatpush1.bf16.msra.mxu0 %v861
    %885 = vmatprep.subr.bf16.mxu0 %v866
    %886 = vmatpush1.bf16.msra.mxu0 %v865
    %887 = vmatprep.subr.bf16.mxu0 0
    %888 = vmatpush1.bf16.msra.mxu0 0
    %889 = vmatprep.subr.bf16.mxu0 0
    %890 = vmatpush1.bf16.msra.mxu0 0
    %891 = vmatprep.subr.bf16.mxu0 0
    %892 = vmatpush1.bf16.msra.mxu0 0
    %893 = vmatprep.subr.bf16.mxu0 0
    %894 = vmatpush1.bf16.msra.mxu0 0
    %895 = vmatprep.subr.bf16.mxu0 0
    %896 = vmatpush1.bf16.msra.mxu0 0
    %897 = vmatprep.subr.bf16.mxu0 0
    %898 = vmatpush1.bf16.msra.mxu0 0
    %899 = vmatprep.subr.bf16.mxu0 0
    %900 = vmatpush1.bf16.msra.mxu0 0
    %901 = vmatprep.subr.bf16.mxu0 0
    %902 = vmatpush1.bf16.msra.mxu0 0
    %903 = vmatprep.subr.bf16.mxu0 0
    %904 = vmatpush1.bf16.msra.mxu0 0
    %905 = vmatprep.subr.bf16.mxu0 0
    %906 = vmatpush1.bf16.msra.mxu0 0
    %907 = vmatprep.subr.bf16.mxu0 0
    %908 = vmatpush1.bf16.msra.mxu0 0
    %909 = vmatprep.subr.bf16.mxu0 0
    %910 = vmatpush1.bf16.msra.mxu0 0
    %911 = vmatprep.subr.bf16.mxu0 0
    %912 = vmatpush1.bf16.msra.mxu0 0
    %913 = vmatprep.subr.bf16.mxu0 0
    %914 = vmatpush1.bf16.msra.mxu0 0
    %915 = vmatprep.mubr.bf16.mxu0 0
    %916 = vmatmul.mubr.bf16.gmra.mrb[0].mxu0 %v878
    %v917 = vpop.f32.mrb[0].mxu0
    %v918 = vadd.f32 0.0, %v917
    %v919 = vpop.f32.mrb[0].mxu0
    %v920 = vadd.f32 0.0, %v919
    %v921 = vpop.f32.mrb[0].mxu0
    %v922 = vadd.f32 0.0, %v921
    %v923 = vpop.f32.mrb[0].mxu0
    %v924 = vadd.f32 0.0, %v923
    %925 = vmatprep.mubr.bf16.mxu0 0
    %926 = vmatmul.mubr.bf16.gmra.mrb[0].mxu0 %v881
    %v927 = vpop.f32.mrb[0].mxu0
    %v928 = vadd.f32 0.0, %v927
    %v929 = vpop.f32.mrb[0].mxu0
    %v930 = vadd.f32 0.0, %v929
    %v931 = vpop.f32.mrb[0].mxu0
    %v932 = vadd.f32 0.0, %v931
    %v933 = vpop.f32.mrb[0].mxu0
    %v934 = vadd.f32 0.0, %v933
    %935 = vdwg.mxu0
    %936 = vmatprep.subr.bf16.mxu0 %v864
    %937 = vmatpush1.bf16.msra.mxu0 %v863
    %938 = vmatprep.subr.bf16.mxu0 %v868
    %939 = vmatpush1.bf16.msra.mxu0 %v867
    %940 = vmatprep.subr.bf16.mxu0 0
    %941 = vmatpush1.bf16.msra.mxu0 0
    %942 = vmatprep.subr.bf16.mxu0 0
    %943 = vmatpush1.bf16.msra.mxu0 0
    %944 = vmatprep.subr.bf16.mxu0 0
    %945 = vmatpush1.bf16.msra.mxu0 0
    %946 = vmatprep.subr.bf16.mxu0 0
    %947 = vmatpush1.bf16.msra.mxu0 0
    %948 = vmatprep.subr.bf16.mxu0 0
    %949 = vmatpush1.bf16.msra.mxu0 0
    %950 = vmatprep.subr.bf16.mxu0 0
    %951 = vmatpush1.bf16.msra.mxu0 0
    %952 = vmatprep.subr.bf16.mxu0 0
    %953 = vmatpush1.bf16.msra.mxu0 0
    %954 = vmatprep.subr.bf16.mxu0 0
    %955 = vmatpush1.bf16.msra.mxu0 0
    %956 = vmatprep.subr.bf16.mxu0 0
    %957 = vmatpush1.bf16.msra.mxu0 0
    %958 = vmatprep.subr.bf16.mxu0 0
    %959 = vmatpush1.bf16.msra.mxu0 0
    %960 = vmatprep.subr.bf16.mxu0 0
    %961 = vmatpush1.bf16.msra.mxu0 0
    %962 = vmatprep.subr.bf16.mxu0 0
    %963 = vmatpush1.bf16.msra.mxu0 0
    %964 = vmatprep.subr.bf16.mxu0 0
    %965 = vmatpush1.bf16.msra.mxu0 0
    %966 = vmatprep.subr.bf16.mxu0 0
    %967 = vmatpush1.bf16.msra.mxu0 0
    %968 = vmatprep.mubr.bf16.mxu0 0
    %969 = vmatmul.mubr.bf16.gmra.mrb[0].mxu0 %v878
    %v970 = vpop.f32.mrb[0].mxu0
    %v971 = vadd.f32 0.0, %v970
    %v972 = vpop.f32.mrb[0].mxu0
    %v973 = vadd.f32 0.0, %v972
    %v974 = vpop.f32.mrb[0].mxu0
    %v975 = vadd.f32 0.0, %v974
    %v976 = vpop.f32.mrb[0].mxu0
    %v977 = vadd.f32 0.0, %v976
    %978 = vmatprep.mubr.bf16.mxu0 0
    %979 = vmatmul.mubr.bf16.gmra.mrb[0].mxu0 %v881
    %v980 = vpop.f32.mrb[0].mxu0
    %v981 = vadd.f32 0.0, %v980
    %v982 = vpop.f32.mrb[0].mxu0
    %v983 = vadd.f32 0.0, %v982
    %v984 = vpop.f32.mrb[0].mxu0
    %v985 = vadd.f32 0.0, %v984
    %v986 = vpop.f32.mrb[0].mxu0
    %v987 = vadd.f32 0.0, %v986
    %988 = vdwg.mxu0
    %v989 = vadd.f32 %v800, %v918
    %v990 = vadd.f32 %v801, %v920
    %v991 = vadd.f32 %v802, %v971
    %v992 = vadd.f32 %v803, %v973
    %v993 = vadd.f32 %v804, %v922
    %v994 = vadd.f32 %v805, %v924
    %v995 = vadd.f32 %v806, %v975
    %v996 = vadd.f32 %v807, %v977
    %v997 = vadd.f32 %v808, %v928
    %v998 = vadd.f32 %v809, %v930
    %v999 = vadd.f32 %v810, %v981
    %v1000 = vadd.f32 %v811, %v983
    %v1001 = vadd.f32 %v812, %v932
    %v1002 = vadd.f32 %v813, %v934
    %v1003 = vadd.f32 %v814, %v985
    %v1004 = vadd.f32 %v815, %v987
    %v1005 = vmax.f32 %v989, 0.0
    %v1006 = vmax.f32 %v990, 0.0
    %v1007 = vmax.f32 %v991, 0.0
    %v1008 = vmax.f32 %v992, 0.0
    %v1009 = vmax.f32 %v993, 0.0
    %v1010 = vmax.f32 %v994, 0.0
    %v1011 = vmax.f32 %v995, 0.0
    %v1012 = vmax.f32 %v996, 0.0
    %v1013 = vmax.f32 %v997, 0.0
    %v1014 = vmax.f32 %v998, 0.0
    %v1015 = vmax.f32 %v999, 0.0
    %v1016 = vmax.f32 %v1000, 0.0
    %v1017 = vmax.f32 %v1001, 0.0
    %v1018 = vmax.f32 %v1002, 0.0
    %v1019 = vmax.f32 %v1003, 0.0
    %v1020 = vmax.f32 %v1004, 0.0
    %1021 = vst [vmem:[#allocation2] sm:$0x33] 0
    %1022 = vst [vmem:[#allocation2 + $0x8] sm:$0x33] 0
    %1023 = vst [vmem:[#allocation2 + $0x10] sm:$0x3] 0
    %1024 = vst [vmem:[#allocation2 + $0x50] sm:$0x33] 0
    %1025 = vst [vmem:[#allocation2 + $0x58] sm:$0x33] 0
    %1026 = vst [vmem:[#allocation2 + $0x60] sm:$0x3] 0
    %1027 = vst [vmem:[#allocation2] sm:$0xc] 0
    %1028 = vst [vmem:[#allocation2 + $0x14] sm:$0xf] 0
    %1029 = vst [vmem:[#allocation2 + $0x28] sm:$0xf] 0
    %1030 = vst [vmem:[#allocation2 + $0x3c] sm:$0xf] 0
    %vm1031 = vcmask 1043970
    %1032 = vst.msk [vmem:[#allocation2 + $0x10] sm:$0xc] %vm1031, 0
    %vm1033 = vcmask 1043968
    %1034 = vst.msk [vmem:[#allocation2 + $0x24] sm:$0xf] %vm1033, 0
    %1035 = vst.msk [vmem:[#allocation2 + $0x38] sm:$0xf] %vm1033, 0
    %1036 = vst.msk [vmem:[#allocation2 + $0x4c] sm:$0xf] %vm1033, 0
    %v1037 = vpack.c.bf16 %v1009, %v1005
    %v1038 = vpack.c.bf16 %v1010, %v1006
    %v1039 = vpack.c.bf16 %v1011, %v1007
    %v1040 = vpack.c.bf16 %v1012, %v1008
    %v1041 = vpack.c.bf16 %v1017, %v1013
    %v1042 = vpack.c.bf16 %v1018, %v1014
    %v1043 = vpack.c.bf16 %v1019, %v1015
    %v1044 = vpack.c.bf16 %v1020, %v1016
    %v1053 = vunpack.c.l.b16 %v1037
    %v1054 = vunpack.c.l.b16 %v1038
    %v1055 = vunpack.c.l.b16 %v1039
    %v1056 = vunpack.c.l.b16 %v1040
    %v1057 = vunpack.c.h.b16 %v1037
    %v1058 = vunpack.c.h.b16 %v1038
    %v1059 = vunpack.c.h.b16 %v1039
    %v1060 = vunpack.c.h.b16 %v1040
    %v1061 = vunpack.c.l.b16 %v1041
    %v1062 = vunpack.c.l.b16 %v1042
    %v1063 = vunpack.c.l.b16 %v1043
    %v1064 = vunpack.c.l.b16 %v1044
    %v1065 = vunpack.c.h.b16 %v1041
    %v1066 = vunpack.c.h.b16 %v1042
    %v1067 = vunpack.c.h.b16 %v1043
    %v1068 = vunpack.c.h.b16 %v1044
    %v1069 = vpack.c.b16 %v1054, %v1053
    %v1070 = vpack.c.b16 %v1056, %v1055
    %v1071 = vpack.c.b16 %v1058, %v1057
    %v1072 = vpack.c.b16 %v1060, %v1059
    %v1073 = vpack.c.b16 %v1062, %v1061
    %v1074 = vpack.c.b16 %v1064, %v1063
    %v1075 = vpack.c.b16 %v1066, %v1065
    %v1076 = vpack.c.b16 %v1068, %v1067
    %vm1077 = vcmask 1041408
    %vm1078 = vcmask 1045508
    %vm1079 = vmor %vm1077, %vm1078
    %v1080 = vrot.slane %v1069, 6
    %v1081 = vrot.slane %v1070, 6
    %v1082 = vrot.slane %v1080, 4
    %v1083 = vrot.slane %v1071, 6
    %v1084 = vsel %vm1079, %v1082, %v1083
    %v1085 = vrot.slane %v1081, 4
    %v1086 = vrot.slane %v1072, 6
    %v1087 = vsel %vm1079, %v1085, %v1086
    %v1088 = vrot.slane %v1083, 4
    %v1089 = vrot.slane %v1073, 6
    %v1090 = vsel %vm1079, %v1088, %v1089
    %v1091 = vrot.slane %v1086, 4
    %v1092 = vrot.slane %v1074, 6
    %v1093 = vsel %vm1079, %v1091, %v1092
    %v1094 = vrot.slane %v1089, 4
    %v1095 = vrot.slane %v1075, 6
    %v1096 = vsel %vm1079, %v1094, %v1095
    %v1097 = vrot.slane %v1092, 4
    %v1098 = vrot.slane %v1076, 6
    %v1099 = vsel %vm1079, %v1097, %v1098
    %1108 = vst [vmem:[#allocation2 + $0x4] sm:$0xcc] %v1080
    %vm1109 = vcmask 1043458
    %vm1110 = vcmask 523270
    %vm1111 = vmor %vm1110, %vm1109
    %1112 = vst.msk [vmem:[#allocation2 + $0xc] sm:$0xcc] %vm1111, %v1081
    %1113 = vst [vmem:[#allocation2 + $0x18] sm:$0xff] %v1084
    %vm1114 = vcmask 1043456
    %vm1115 = vcmask 523268
    %vm1116 = vmor %vm1115, %vm1114
    %1117 = vst.msk [vmem:[#allocation2 + $0x20] sm:$0xff] %vm1116, %v1087
    %1118 = vst [vmem:[#allocation2 + $0x2c] sm:$0xff] %v1090
    %1119 = vst.msk [vmem:[#allocation2 + $0x34] sm:$0xff] %vm1116, %v1093
    %1120 = vst [vmem:[#allocation2 + $0x40] sm:$0xff] %v1096
    %1121 = vst.msk [vmem:[#allocation2 + $0x48] sm:$0xff] %vm1116, %v1099
    %v1122 = vld [vmem:[%s4] sm:$0xf]
    %v1124 = vlaneseq
    %v1125 = vshrl.u32 %v1124, 7
    %v1126 = vsub.s32 0, %v1125
    %v1127 = vrot.slane %v1122, %v1126
    %v1128 = vlaneseq
    %v1129 = vshrl.u32 %v1128, 7
    %v1130 = vsub.s32 1, %v1129
    %v1131 = vrot.slane %v1122, %v1130
    %v1132 = vlaneseq
    %v1133 = vshrl.u32 %v1132, 7
    %v1134 = vsub.s32 2, %v1133
    %v1135 = vrot.slane %v1122, %v1134
    %v1136 = vlaneseq
    %v1137 = vshrl.u32 %v1136, 7
    %v1138 = vsub.s32 3, %v1137
    %v1139 = vrot.slane %v1122, %v1138
    %v1144 = vld [vmem:[#allocation2] sm:$0xff]
    %v1145 = vld [vmem:[#allocation2 + $0x8] sm:$0xff]
    %v1146 = vld [vmem:[#allocation2 + $0x10] sm:$0xf]
    %v1147 = vld [vmem:[#allocation2 + $0x14] sm:$0xff]
    %v1148 = vld [vmem:[#allocation2 + $0x1c] sm:$0xff]
    %v1149 = vld [vmem:[#allocation2 + $0x24] sm:$0xf]
    %v1150 = vld [vmem:[#allocation2 + $0x28] sm:$0xff]
    %v1151 = vld [vmem:[#allocation2 + $0x30] sm:$0xff]
    %v1152 = vld [vmem:[#allocation2 + $0x38] sm:$0xf]
    %v1153 = vld [vmem:[#allocation2 + $0x3c] sm:$0x33]
    %v1154 = vld [vmem:[#allocation2 + $0x44] sm:$0x33]
    %v1155 = vld [vmem:[#allocation2 + $0x4c] sm:$0x3]
    %v1156 = vld [vmem:[%s3] sm:$0xff]
    %v1157 = vld [vmem:[%s3 + $0x8] sm:$0xff]
    %v1158 = vld [vmem:[%s3 + $0x10] sm:$0xff]
    %v1159 = vld [vmem:[%s3 + $0x18] sm:$0xff]
    %v1160 = vld [vmem:[%s3 + $0x20] sm:$0xff]
    %v1161 = vld [vmem:[%s3 + $0x28] sm:$0xff]
    %v1162 = vld [vmem:[%s3 + $0x30] sm:$0xff]
    %v1163 = vld [vmem:[%s3 + $0x38] sm:$0xff]
    %v1164 = vld [vmem:[%s3 + $0x40] sm:$0xff]
    %v1165 = vld [vmem:[%s3 + $0x48] sm:$0xff]
    %v1166 = vld [vmem:[%s3 + $0x50] sm:$0xff]
    %v1167 = vld [vmem:[%s3 + $0x58] sm:$0xff]
    %v1168 = vld [vmem:[%s3 + $0x60] sm:$0xff]
    %v1169 = vld [vmem:[%s3 + $0x68] sm:$0xff]
    %v1170 = vld [vmem:[%s3 + $0x70] sm:$0xff]
    %v1171 = vld [vmem:[%s3 + $0x78] sm:$0xff]
    %v1172 = vld [vmem:[%s3 + $0x80] sm:$0xff]
    %v1173 = vld [vmem:[%s3 + $0x88] sm:$0xff]
    %v1174 = vld [vmem:[%s3 + $0x90] sm:$0xff]
    %v1175 = vld [vmem:[%s3 + $0x98] sm:$0xff]
    %v1176 = vld [vmem:[%s3 + $0xa0] sm:$0xff]
    %v1177 = vld [vmem:[%s3 + $0xa8] sm:$0xff]
    %v1178 = vld [vmem:[%s3 + $0xb0] sm:$0xff]
    %v1179 = vld [vmem:[%s3 + $0xb8] sm:$0xff]
    %v1180 = vld [vmem:[%s3 + $0xc0] sm:$0xff]
    %v1181 = vld [vmem:[%s3 + $0xc8] sm:$0xff]
    %v1182 = vld [vmem:[%s3 + $0xd0] sm:$0xff]
    %v1183 = vld [vmem:[%s3 + $0xd8] sm:$0xff]
    %v1184 = vld [vmem:[%s3 + $0xe0] sm:$0xff]
    %v1185 = vld [vmem:[%s3 + $0xe8] sm:$0xff]
    %v1186 = vld [vmem:[%s3 + $0xf0] sm:$0xff]
    %v1187 = vld [vmem:[%s3 + $0xf8] sm:$0xff]
    %v1188 = vld [vmem:[%s3 + $0x100] sm:$0xff]
    %v1189 = vld [vmem:[%s3 + $0x108] sm:$0xff]
    %v1190 = vld [vmem:[%s3 + $0x110] sm:$0xff]
    %v1191 = vld [vmem:[%s3 + $0x118] sm:$0xff]
    %v1192 = vld [vmem:[%s3 + $0x120] sm:$0xff]
    %v1193 = vld [vmem:[%s3 + $0x128] sm:$0xff]
    %v1194 = vld [vmem:[%s3 + $0x130] sm:$0xff]
    %v1195 = vld [vmem:[%s3 + $0x138] sm:$0xff]
    %v1196 = vld [vmem:[%s3 + $0x140] sm:$0xff]
    %v1197 = vld [vmem:[%s3 + $0x148] sm:$0xff]
    %v1198 = vld [vmem:[%s3 + $0x150] sm:$0xff]
    %v1199 = vld [vmem:[%s3 + $0x158] sm:$0xff]
    %v1200 = vld [vmem:[%s3 + $0x160] sm:$0xff]
    %v1201 = vld [vmem:[%s3 + $0x168] sm:$0xff]
    %v1202 = vld [vmem:[%s3 + $0x170] sm:$0xff]
    %v1203 = vld [vmem:[%s3 + $0x178] sm:$0xff]
    %v1204 = vld [vmem:[%s3 + $0x180] sm:$0xff]
    %v1205 = vld [vmem:[%s3 + $0x188] sm:$0xff]
    %v1206 = vld [vmem:[%s3 + $0x190] sm:$0xff]
    %v1207 = vld [vmem:[%s3 + $0x198] sm:$0xff]
    %v1208 = vld [vmem:[%s3 + $0x1a0] sm:$0xff]
    %v1209 = vld [vmem:[%s3 + $0x1a8] sm:$0xff]
    %v1210 = vld [vmem:[%s3 + $0x1b0] sm:$0xff]
    %v1211 = vld [vmem:[%s3 + $0x1b8] sm:$0xff]
    %v1212 = vld [vmem:[%s3 + $0x1c0] sm:$0xff]
    %v1213 = vld [vmem:[%s3 + $0x1c8] sm:$0xff]
    %v1214 = vld [vmem:[%s3 + $0x1d0] sm:$0xff]
    %v1215 = vld [vmem:[%s3 + $0x1d8] sm:$0xff]
    %v1216 = vld [vmem:[%s3 + $0x1e0] sm:$0xff]
    %v1217 = vld [vmem:[%s3 + $0x1e8] sm:$0xff]
    %v1218 = vld [vmem:[%s3 + $0x1f0] sm:$0xff]
    %v1219 = vld [vmem:[%s3 + $0x1f8] sm:$0xff]
    %v1220 = vld [vmem:[%s3 + $0x200] sm:$0xff]
    %v1221 = vld [vmem:[%s3 + $0x208] sm:$0xff]
    %v1222 = vld [vmem:[%s3 + $0x210] sm:$0xff]
    %v1223 = vld [vmem:[%s3 + $0x218] sm:$0xff]
    %v1224 = vld [vmem:[%s3 + $0x220] sm:$0xff]
    %v1225 = vld [vmem:[%s3 + $0x228] sm:$0xff]
    %v1226 = vld [vmem:[%s3 + $0x230] sm:$0xff]
    %v1227 = vld [vmem:[%s3 + $0x238] sm:$0xff]
    %v1228 = vld [vmem:[%s3 + $0x240] sm:$0xff]
    %v1229 = vld [vmem:[%s3 + $0x248] sm:$0xff]
    %v1230 = vld [vmem:[%s3 + $0x250] sm:$0xff]
    %v1231 = vld [vmem:[%s3 + $0x258] sm:$0xff]
    %v1232 = vld [vmem:[%s3 + $0x260] sm:$0xff]
    %v1233 = vld [vmem:[%s3 + $0x268] sm:$0xff]
    %v1234 = vld [vmem:[%s3 + $0x270] sm:$0xff]
    %v1235 = vld [vmem:[%s3 + $0x278] sm:$0xff]
    %v1236 = vld [vmem:[%s3 + $0x280] sm:$0xff]
    %v1237 = vld [vmem:[%s3 + $0x288] sm:$0xff]
    %v1238 = vld [vmem:[%s3 + $0x290] sm:$0xff]
    %v1239 = vld [vmem:[%s3 + $0x298] sm:$0xff]
    %v1240 = vld [vmem:[%s3 + $0x2a0] sm:$0xff]
    %v1241 = vld [vmem:[%s3 + $0x2a8] sm:$0xff]
    %v1242 = vld [vmem:[%s3 + $0x2b0] sm:$0xff]
    %v1243 = vld [vmem:[%s3 + $0x2b8] sm:$0xff]
    %v1244 = vld [vmem:[%s3 + $0x2c0] sm:$0xff]
    %v1245 = vld [vmem:[%s3 + $0x2c8] sm:$0xff]
    %v1246 = vld [vmem:[%s3 + $0x2d0] sm:$0xff]
    %v1247 = vld [vmem:[%s3 + $0x2d8] sm:$0xff]
    %v1248 = vld [vmem:[%s3 + $0x2e0] sm:$0xff]
    %v1249 = vld [vmem:[%s3 + $0x2e8] sm:$0xff]
    %v1250 = vld [vmem:[%s3 + $0x2f0] sm:$0xff]
    %v1251 = vld [vmem:[%s3 + $0x2f8] sm:$0xff]
    %v1252 = vld [vmem:[%s3 + $0x300] sm:$0xff]
    %v1253 = vld [vmem:[%s3 + $0x308] sm:$0xff]
    %v1254 = vld [vmem:[%s3 + $0x310] sm:$0xff]
    %v1255 = vld [vmem:[%s3 + $0x318] sm:$0xff]
    %v1256 = vld [vmem:[%s3 + $0x320] sm:$0xff]
    %v1257 = vld [vmem:[%s3 + $0x328] sm:$0xff]
    %v1258 = vld [vmem:[%s3 + $0x330] sm:$0xff]
    %v1259 = vld [vmem:[%s3 + $0x338] sm:$0xff]
    %v1260 = vld [vmem:[%s3 + $0x340] sm:$0xff]
    %v1261 = vld [vmem:[%s3 + $0x348] sm:$0xff]
    %v1262 = vld [vmem:[%s3 + $0x350] sm:$0xff]
    %v1263 = vld [vmem:[%s3 + $0x358] sm:$0xff]
    %v1264 = vld [vmem:[%s3 + $0x360] sm:$0xff]
    %v1265 = vld [vmem:[%s3 + $0x368] sm:$0xff]
    %v1266 = vld [vmem:[%s3 + $0x370] sm:$0xff]
    %v1267 = vld [vmem:[%s3 + $0x378] sm:$0xff]
    %v1268 = vld [vmem:[%s3 + $0x380] sm:$0xff]
    %v1269 = vld [vmem:[%s3 + $0x388] sm:$0xff]
    %v1270 = vld [vmem:[%s3 + $0x390] sm:$0xff]
    %v1271 = vld [vmem:[%s3 + $0x398] sm:$0xff]
    %v1272 = vld [vmem:[%s3 + $0x3a0] sm:$0xff]
    %v1273 = vld [vmem:[%s3 + $0x3a8] sm:$0xff]
    %v1274 = vld [vmem:[%s3 + $0x3b0] sm:$0xff]
    %v1275 = vld [vmem:[%s3 + $0x3b8] sm:$0xff]
    %v1276 = vld [vmem:[%s3 + $0x3c0] sm:$0xff]
    %v1277 = vld [vmem:[%s3 + $0x3c8] sm:$0xff]
    %v1278 = vld [vmem:[%s3 + $0x3d0] sm:$0xff]
    %v1279 = vld [vmem:[%s3 + $0x3d8] sm:$0xff]
    %v1280 = vld [vmem:[%s3 + $0x3e0] sm:$0xff]
    %v1281 = vld [vmem:[%s3 + $0x3e8] sm:$0xff]
    %v1282 = vld [vmem:[%s3 + $0x3f0] sm:$0xff]
    %v1283 = vld [vmem:[%s3 + $0x3f8] sm:$0xff]
    %v1284 = vld [vmem:[%s3 + $0x400] sm:$0xff]
    %v1285 = vld [vmem:[%s3 + $0x408] sm:$0xff]
    %v1286 = vld [vmem:[%s3 + $0x410] sm:$0xff]
    %v1287 = vld [vmem:[%s3 + $0x418] sm:$0xff]
    %v1288 = vld [vmem:[%s3 + $0x420] sm:$0xff]
    %v1289 = vld [vmem:[%s3 + $0x428] sm:$0xff]
    %v1290 = vld [vmem:[%s3 + $0x430] sm:$0xff]
    %v1291 = vld [vmem:[%s3 + $0x438] sm:$0xff]
    %v1292 = vld [vmem:[%s3 + $0x440] sm:$0xff]
    %v1293 = vld [vmem:[%s3 + $0x448] sm:$0xff]
    %v1294 = vld [vmem:[%s3 + $0x450] sm:$0xff]
    %v1295 = vld [vmem:[%s3 + $0x458] sm:$0xff]
    %v1296 = vld [vmem:[%s3 + $0x460] sm:$0xff]
    %v1297 = vld [vmem:[%s3 + $0x468] sm:$0xff]
    %v1298 = vld [vmem:[%s3 + $0x470] sm:$0xff]
    %v1299 = vld [vmem:[%s3 + $0x478] sm:$0xff]
    %v1300 = vld [vmem:[%s3 + $0x480] sm:$0xff]
    %v1301 = vld [vmem:[%s3 + $0x488] sm:$0xff]
    %v1302 = vld [vmem:[%s3 + $0x490] sm:$0xff]
    %v1303 = vld [vmem:[%s3 + $0x498] sm:$0xff]
    %v1304 = vld [vmem:[%s3 + $0x4a0] sm:$0xff]
    %v1305 = vld [vmem:[%s3 + $0x4a8] sm:$0xff]
    %v1306 = vld [vmem:[%s3 + $0x4b0] sm:$0xff]
    %v1307 = vld [vmem:[%s3 + $0x4b8] sm:$0xff]
    %v1308 = vld [vmem:[%s3 + $0x4c0] sm:$0xff]
    %v1309 = vld [vmem:[%s3 + $0x4c8] sm:$0xff]
    %v1310 = vld [vmem:[%s3 + $0x4d0] sm:$0xff]
    %v1311 = vld [vmem:[%s3 + $0x4d8] sm:$0xff]
    %v1312 = vld [vmem:[%s3 + $0x4e0] sm:$0xff]
    %v1313 = vld [vmem:[%s3 + $0x4e8] sm:$0xff]
    %v1314 = vld [vmem:[%s3 + $0x4f0] sm:$0xff]
    %v1315 = vld [vmem:[%s3 + $0x4f8] sm:$0xff]
    %v1328 = vunpack.c.l.b16 %v1144
    %v1329 = vunpack.c.h.b16 %v1144
    %v1330 = vunpack.c.l.b16 %v1145
    %v1331 = vunpack.c.h.b16 %v1145
    %v1332 = vunpack.c.l.b16 %v1146
    %v1333 = vunpack.c.l.b16 %v1147
    %v1334 = vunpack.c.h.b16 %v1147
    %v1335 = vunpack.c.l.b16 %v1148
    %v1336 = vunpack.c.h.b16 %v1148
    %v1337 = vunpack.c.l.b16 %v1149
    %v1338 = vunpack.c.l.b16 %v1150
    %v1339 = vunpack.c.h.b16 %v1150
    %v1340 = vunpack.c.l.b16 %v1151
    %v1341 = vunpack.c.h.b16 %v1151
    %v1342 = vunpack.c.l.b16 %v1152
    %v1343 = vunpack.c.l.b16 %v1153
    %v1344 = vunpack.c.h.b16 %v1153
    %v1345 = vunpack.c.l.b16 %v1154
    %v1346 = vunpack.c.h.b16 %v1154
    %v1347 = vunpack.c.l.b16 %v1155
    %v1348 = vpack.c.b16 %v1333, %v1328
    %v1349 = vpack.c.b16 %v1334, %v1329
    %v1350 = vpack.c.b16 %v1335, %v1330
    %v1351 = vpack.c.b16 %v1336, %v1331
    %v1352 = vpack.c.b16 %v1337, %v1332
    %v1353 = vpack.c.b16 %v1343, %v1338
    %v1354 = vpack.c.b16 %v1344, %v1339
    %v1355 = vpack.c.b16 %v1345, %v1340
    %v1356 = vpack.c.b16 %v1346, %v1341
    %v1357 = vpack.c.b16 %v1347, %v1342
    %v1528 = vunpack.c.l.b16 %v1156
    %v1529 = vunpack.c.h.b16 %v1156
    %v1530 = vunpack.c.l.b16 %v1157
    %v1531 = vunpack.c.h.b16 %v1157
    %v1532 = vunpack.c.l.b16 %v1158
    %v1533 = vunpack.c.h.b16 %v1158
    %v1534 = vunpack.c.l.b16 %v1159
    %v1535 = vunpack.c.h.b16 %v1159
    %v1536 = vunpack.c.l.b16 %v1160
    %v1537 = vunpack.c.h.b16 %v1160
    %v1538 = vunpack.c.l.b16 %v1161
    %v1539 = vunpack.c.h.b16 %v1161
    %v1540 = vunpack.c.l.b16 %v1162
    %v1541 = vunpack.c.h.b16 %v1162
    %v1542 = vunpack.c.l.b16 %v1163
    %v1543 = vunpack.c.h.b16 %v1163
    %v1544 = vunpack.c.l.b16 %v1164
    %v1545 = vunpack.c.h.b16 %v1164
    %v1546 = vunpack.c.l.b16 %v1165
    %v1547 = vunpack.c.h.b16 %v1165
    %v1548 = vunpack.c.l.b16 %v1166
    %v1549 = vunpack.c.h.b16 %v1166
    %v1550 = vunpack.c.l.b16 %v1167
    %v1551 = vunpack.c.h.b16 %v1167
    %v1552 = vunpack.c.l.b16 %v1168
    %v1553 = vunpack.c.h.b16 %v1168
    %v1554 = vunpack.c.l.b16 %v1169
    %v1555 = vunpack.c.h.b16 %v1169
    %v1556 = vunpack.c.l.b16 %v1170
    %v1557 = vunpack.c.h.b16 %v1170
    %v1558 = vunpack.c.l.b16 %v1171
    %v1559 = vunpack.c.h.b16 %v1171
    %v1560 = vunpack.c.l.b16 %v1172
    %v1561 = vunpack.c.h.b16 %v1172
    %v1562 = vunpack.c.l.b16 %v1173
    %v1563 = vunpack.c.h.b16 %v1173
    %v1564 = vunpack.c.l.b16 %v1174
    %v1565 = vunpack.c.h.b16 %v1174
    %v1566 = vunpack.c.l.b16 %v1175
    %v1567 = vunpack.c.h.b16 %v1175
    %v1568 = vunpack.c.l.b16 %v1176
    %v1569 = vunpack.c.h.b16 %v1176
    %v1570 = vunpack.c.l.b16 %v1177
    %v1571 = vunpack.c.h.b16 %v1177
    %v1572 = vunpack.c.l.b16 %v1178
    %v1573 = vunpack.c.h.b16 %v1178
    %v1574 = vunpack.c.l.b16 %v1179
    %v1575 = vunpack.c.h.b16 %v1179
    %v1576 = vunpack.c.l.b16 %v1180
    %v1577 = vunpack.c.h.b16 %v1180
    %v1578 = vunpack.c.l.b16 %v1181
    %v1579 = vunpack.c.h.b16 %v1181
    %v1580 = vunpack.c.l.b16 %v1182
    %v1581 = vunpack.c.h.b16 %v1182
    %v1582 = vunpack.c.l.b16 %v1183
    %v1583 = vunpack.c.h.b16 %v1183
    %v1584 = vunpack.c.l.b16 %v1184
    %v1585 = vunpack.c.h.b16 %v1184
    %v1586 = vunpack.c.l.b16 %v1185
    %v1587 = vunpack.c.h.b16 %v1185
    %v1588 = vunpack.c.l.b16 %v1186
    %v1589 = vunpack.c.h.b16 %v1186
    %v1590 = vunpack.c.l.b16 %v1187
    %v1591 = vunpack.c.h.b16 %v1187
    %v1592 = vunpack.c.l.b16 %v1188
    %v1593 = vunpack.c.h.b16 %v1188
    %v1594 = vunpack.c.l.b16 %v1189
    %v1595 = vunpack.c.h.b16 %v1189
    %v1596 = vunpack.c.l.b16 %v1190
    %v1597 = vunpack.c.h.b16 %v1190
    %v1598 = vunpack.c.l.b16 %v1191
    %v1599 = vunpack.c.h.b16 %v1191
    %v1600 = vunpack.c.l.b16 %v1192
    %v1601 = vunpack.c.h.b16 %v1192
    %v1602 = vunpack.c.l.b16 %v1193
    %v1603 = vunpack.c.h.b16 %v1193
    %v1604 = vunpack.c.l.b16 %v1194
    %v1605 = vunpack.c.h.b16 %v1194
    %v1606 = vunpack.c.l.b16 %v1195
    %v1607 = vunpack.c.h.b16 %v1195
    %v1608 = vunpack.c.l.b16 %v1196
    %v1609 = vunpack.c.h.b16 %v1196
    %v1610 = vunpack.c.l.b16 %v1197
    %v1611 = vunpack.c.h.b16 %v1197
    %v1612 = vunpack.c.l.b16 %v1198
    %v1613 = vunpack.c.h.b16 %v1198
    %v1614 = vunpack.c.l.b16 %v1199
    %v1615 = vunpack.c.h.b16 %v1199
    %v1616 = vunpack.c.l.b16 %v1200
    %v1617 = vunpack.c.h.b16 %v1200
    %v1618 = vunpack.c.l.b16 %v1201
    %v1619 = vunpack.c.h.b16 %v1201
    %v1620 = vunpack.c.l.b16 %v1202
    %v1621 = vunpack.c.h.b16 %v1202
    %v1622 = vunpack.c.l.b16 %v1203
    %v1623 = vunpack.c.h.b16 %v1203
    %v1624 = vunpack.c.l.b16 %v1204
    %v1625 = vunpack.c.h.b16 %v1204
    %v1626 = vunpack.c.l.b16 %v1205
    %v1627 = vunpack.c.h.b16 %v1205
    %v1628 = vunpack.c.l.b16 %v1206
    %v1629 = vunpack.c.h.b16 %v1206
    %v1630 = vunpack.c.l.b16 %v1207
    %v1631 = vunpack.c.h.b16 %v1207
    %v1632 = vunpack.c.l.b16 %v1208
    %v1633 = vunpack.c.h.b16 %v1208
    %v1634 = vunpack.c.l.b16 %v1209
    %v1635 = vunpack.c.h.b16 %v1209
    %v1636 = vunpack.c.l.b16 %v1210
    %v1637 = vunpack.c.h.b16 %v1210
    %v1638 = vunpack.c.l.b16 %v1211
    %v1639 = vunpack.c.h.b16 %v1211
    %v1640 = vunpack.c.l.b16 %v1212
    %v1641 = vunpack.c.h.b16 %v1212
    %v1642 = vunpack.c.l.b16 %v1213
    %v1643 = vunpack.c.h.b16 %v1213
    %v1644 = vunpack.c.l.b16 %v1214
    %v1645 = vunpack.c.h.b16 %v1214
    %v1646 = vunpack.c.l.b16 %v1215
    %v1647 = vunpack.c.h.b16 %v1215
    %v1648 = vunpack.c.l.b16 %v1216
    %v1649 = vunpack.c.h.b16 %v1216
    %v1650 = vunpack.c.l.b16 %v1217
    %v1651 = vunpack.c.h.b16 %v1217
    %v1652 = vunpack.c.l.b16 %v1218
    %v1653 = vunpack.c.h.b16 %v1218
    %v1654 = vunpack.c.l.b16 %v1219
    %v1655 = vunpack.c.h.b16 %v1219
    %v1656 = vunpack.c.l.b16 %v1220
    %v1657 = vunpack.c.h.b16 %v1220
    %v1658 = vunpack.c.l.b16 %v1221
    %v1659 = vunpack.c.h.b16 %v1221
    %v1660 = vunpack.c.l.b16 %v1222
    %v1661 = vunpack.c.h.b16 %v1222
    %v1662 = vunpack.c.l.b16 %v1223
    %v1663 = vunpack.c.h.b16 %v1223
    %v1664 = vunpack.c.l.b16 %v1224
    %v1665 = vunpack.c.h.b16 %v1224
    %v1666 = vunpack.c.l.b16 %v1225
    %v1667 = vunpack.c.h.b16 %v1225
    %v1668 = vunpack.c.l.b16 %v1226
    %v1669 = vunpack.c.h.b16 %v1226
    %v1670 = vunpack.c.l.b16 %v1227
    %v1671 = vunpack.c.h.b16 %v1227
    %v1672 = vunpack.c.l.b16 %v1228
    %v1673 = vunpack.c.h.b16 %v1228
    %v1674 = vunpack.c.l.b16 %v1229
    %v1675 = vunpack.c.h.b16 %v1229
    %v1676 = vunpack.c.l.b16 %v1230
    %v1677 = vunpack.c.h.b16 %v1230
    %v1678 = vunpack.c.l.b16 %v1231
    %v1679 = vunpack.c.h.b16 %v1231
    %v1680 = vunpack.c.l.b16 %v1232
    %v1681 = vunpack.c.h.b16 %v1232
    %v1682 = vunpack.c.l.b16 %v1233
    %v1683 = vunpack.c.h.b16 %v1233
    %v1684 = vunpack.c.l.b16 %v1234
    %v1685 = vunpack.c.h.b16 %v1234
    %v1686 = vunpack.c.l.b16 %v1235
    %v1687 = vunpack.c.h.b16 %v1235
    %v1688 = vunpack.c.l.b16 %v1236
    %v1689 = vunpack.c.h.b16 %v1236
    %v1690 = vunpack.c.l.b16 %v1237
    %v1691 = vunpack.c.h.b16 %v1237
    %v1692 = vunpack.c.l.b16 %v1238
    %v1693 = vunpack.c.h.b16 %v1238
    %v1694 = vunpack.c.l.b16 %v1239
    %v1695 = vunpack.c.h.b16 %v1239
    %v1696 = vunpack.c.l.b16 %v1240
    %v1697 = vunpack.c.h.b16 %v1240
    %v1698 = vunpack.c.l.b16 %v1241
    %v1699 = vunpack.c.h.b16 %v1241
    %v1700 = vunpack.c.l.b16 %v1242
    %v1701 = vunpack.c.h.b16 %v1242
    %v1702 = vunpack.c.l.b16 %v1243
    %v1703 = vunpack.c.h.b16 %v1243
    %v1704 = vunpack.c.l.b16 %v1244
    %v1705 = vunpack.c.h.b16 %v1244
    %v1706 = vunpack.c.l.b16 %v1245
    %v1707 = vunpack.c.h.b16 %v1245
    %v1708 = vunpack.c.l.b16 %v1246
    %v1709 = vunpack.c.h.b16 %v1246
    %v1710 = vunpack.c.l.b16 %v1247
    %v1711 = vunpack.c.h.b16 %v1247
    %v1712 = vunpack.c.l.b16 %v1248
    %v1713 = vunpack.c.h.b16 %v1248
    %v1714 = vunpack.c.l.b16 %v1249
    %v1715 = vunpack.c.h.b16 %v1249
    %v1716 = vunpack.c.l.b16 %v1250
    %v1717 = vunpack.c.h.b16 %v1250
    %v1718 = vunpack.c.l.b16 %v1251
    %v1719 = vunpack.c.h.b16 %v1251
    %v1720 = vunpack.c.l.b16 %v1252
    %v1721 = vunpack.c.h.b16 %v1252
    %v1722 = vunpack.c.l.b16 %v1253
    %v1723 = vunpack.c.h.b16 %v1253
    %v1724 = vunpack.c.l.b16 %v1254
    %v1725 = vunpack.c.h.b16 %v1254
    %v1726 = vunpack.c.l.b16 %v1255
    %v1727 = vunpack.c.h.b16 %v1255
    %v1728 = vunpack.c.l.b16 %v1256
    %v1729 = vunpack.c.h.b16 %v1256
    %v1730 = vunpack.c.l.b16 %v1257
    %v1731 = vunpack.c.h.b16 %v1257
    %v1732 = vunpack.c.l.b16 %v1258
    %v1733 = vunpack.c.h.b16 %v1258
    %v1734 = vunpack.c.l.b16 %v1259
    %v1735 = vunpack.c.h.b16 %v1259
    %v1736 = vunpack.c.l.b16 %v1260
    %v1737 = vunpack.c.h.b16 %v1260
    %v1738 = vunpack.c.l.b16 %v1261
    %v1739 = vunpack.c.h.b16 %v1261
    %v1740 = vunpack.c.l.b16 %v1262
    %v1741 = vunpack.c.h.b16 %v1262
    %v1742 = vunpack.c.l.b16 %v1263
    %v1743 = vunpack.c.h.b16 %v1263
    %v1744 = vunpack.c.l.b16 %v1264
    %v1745 = vunpack.c.h.b16 %v1264
    %v1746 = vunpack.c.l.b16 %v1265
    %v1747 = vunpack.c.h.b16 %v1265
    %v1748 = vunpack.c.l.b16 %v1266
    %v1749 = vunpack.c.h.b16 %v1266
    %v1750 = vunpack.c.l.b16 %v1267
    %v1751 = vunpack.c.h.b16 %v1267
    %v1752 = vunpack.c.l.b16 %v1268
    %v1753 = vunpack.c.h.b16 %v1268
    %v1754 = vunpack.c.l.b16 %v1269
    %v1755 = vunpack.c.h.b16 %v1269
    %v1756 = vunpack.c.l.b16 %v1270
    %v1757 = vunpack.c.h.b16 %v1270
    %v1758 = vunpack.c.l.b16 %v1271
    %v1759 = vunpack.c.h.b16 %v1271
    %v1760 = vunpack.c.l.b16 %v1272
    %v1761 = vunpack.c.h.b16 %v1272
    %v1762 = vunpack.c.l.b16 %v1273
    %v1763 = vunpack.c.h.b16 %v1273
    %v1764 = vunpack.c.l.b16 %v1274
    %v1765 = vunpack.c.h.b16 %v1274
    %v1766 = vunpack.c.l.b16 %v1275
    %v1767 = vunpack.c.h.b16 %v1275
    %v1768 = vunpack.c.l.b16 %v1276
    %v1769 = vunpack.c.h.b16 %v1276
    %v1770 = vunpack.c.l.b16 %v1277
    %v1771 = vunpack.c.h.b16 %v1277
    %v1772 = vunpack.c.l.b16 %v1278
    %v1773 = vunpack.c.h.b16 %v1278
    %v1774 = vunpack.c.l.b16 %v1279
    %v1775 = vunpack.c.h.b16 %v1279
    %v1776 = vunpack.c.l.b16 %v1280
    %v1777 = vunpack.c.h.b16 %v1280
    %v1778 = vunpack.c.l.b16 %v1281
    %v1779 = vunpack.c.h.b16 %v1281
    %v1780 = vunpack.c.l.b16 %v1282
    %v1781 = vunpack.c.h.b16 %v1282
    %v1782 = vunpack.c.l.b16 %v1283
    %v1783 = vunpack.c.h.b16 %v1283
    %v1784 = vunpack.c.l.b16 %v1284
    %v1785 = vunpack.c.h.b16 %v1284
    %v1786 = vunpack.c.l.b16 %v1285
    %v1787 = vunpack.c.h.b16 %v1285
    %v1788 = vunpack.c.l.b16 %v1286
    %v1789 = vunpack.c.h.b16 %v1286
    %v1790 = vunpack.c.l.b16 %v1287
    %v1791 = vunpack.c.h.b16 %v1287
    %v1792 = vunpack.c.l.b16 %v1288
    %v1793 = vunpack.c.h.b16 %v1288
    %v1794 = vunpack.c.l.b16 %v1289
    %v1795 = vunpack.c.h.b16 %v1289
    %v1796 = vunpack.c.l.b16 %v1290
    %v1797 = vunpack.c.h.b16 %v1290
    %v1798 = vunpack.c.l.b16 %v1291
    %v1799 = vunpack.c.h.b16 %v1291
    %v1800 = vunpack.c.l.b16 %v1292
    %v1801 = vunpack.c.h.b16 %v1292
    %v1802 = vunpack.c.l.b16 %v1293
    %v1803 = vunpack.c.h.b16 %v1293
    %v1804 = vunpack.c.l.b16 %v1294
    %v1805 = vunpack.c.h.b16 %v1294
    %v1806 = vunpack.c.l.b16 %v1295
    %v1807 = vunpack.c.h.b16 %v1295
    %v1808 = vunpack.c.l.b16 %v1296
    %v1809 = vunpack.c.h.b16 %v1296
    %v1810 = vunpack.c.l.b16 %v1297
    %v1811 = vunpack.c.h.b16 %v1297
    %v1812 = vunpack.c.l.b16 %v1298
    %v1813 = vunpack.c.h.b16 %v1298
    %v1814 = vunpack.c.l.b16 %v1299
    %v1815 = vunpack.c.h.b16 %v1299
    %v1816 = vunpack.c.l.b16 %v1300
    %v1817 = vunpack.c.h.b16 %v1300
    %v1818 = vunpack.c.l.b16 %v1301
    %v1819 = vunpack.c.h.b16 %v1301
    %v1820 = vunpack.c.l.b16 %v1302
    %v1821 = vunpack.c.h.b16 %v1302
    %v1822 = vunpack.c.l.b16 %v1303
    %v1823 = vunpack.c.h.b16 %v1303
    %v1824 = vunpack.c.l.b16 %v1304
    %v1825 = vunpack.c.h.b16 %v1304
    %v1826 = vunpack.c.l.b16 %v1305
    %v1827 = vunpack.c.h.b16 %v1305
    %v1828 = vunpack.c.l.b16 %v1306
    %v1829 = vunpack.c.h.b16 %v1306
    %v1830 = vunpack.c.l.b16 %v1307
    %v1831 = vunpack.c.h.b16 %v1307
    %v1832 = vunpack.c.l.b16 %v1308
    %v1833 = vunpack.c.h.b16 %v1308
    %v1834 = vunpack.c.l.b16 %v1309
    %v1835 = vunpack.c.h.b16 %v1309
    %v1836 = vunpack.c.l.b16 %v1310
    %v1837 = vunpack.c.h.b16 %v1310
    %v1838 = vunpack.c.l.b16 %v1311
    %v1839 = vunpack.c.h.b16 %v1311
    %v1840 = vunpack.c.l.b16 %v1312
    %v1841 = vunpack.c.h.b16 %v1312
    %v1842 = vunpack.c.l.b16 %v1313
    %v1843 = vunpack.c.h.b16 %v1313
    %v1844 = vunpack.c.l.b16 %v1314
    %v1845 = vunpack.c.h.b16 %v1314
    %v1846 = vunpack.c.l.b16 %v1315
    %v1847 = vunpack.c.h.b16 %v1315
    %v1848 = vpack.c.b16 %v1532, %v1528
    %v1849 = vpack.c.b16 %v1533, %v1529
    %v1850 = vpack.c.b16 %v1534, %v1530
    %v1851 = vpack.c.b16 %v1535, %v1531
    %v1852 = vpack.c.b16 %v1540, %v1536
    %v1853 = vpack.c.b16 %v1541, %v1537
    %v1854 = vpack.c.b16 %v1542, %v1538
    %v1855 = vpack.c.b16 %v1543, %v1539
    %v1856 = vpack.c.b16 %v1548, %v1544
    %v1857 = vpack.c.b16 %v1549, %v1545
    %v1858 = vpack.c.b16 %v1550, %v1546
    %v1859 = vpack.c.b16 %v1551, %v1547
    %v1860 = vpack.c.b16 %v1556, %v1552
    %v1861 = vpack.c.b16 %v1557, %v1553
    %v1862 = vpack.c.b16 %v1558, %v1554
    %v1863 = vpack.c.b16 %v1559, %v1555
    %v1864 = vpack.c.b16 %v1564, %v1560
    %v1865 = vpack.c.b16 %v1565, %v1561
    %v1866 = vpack.c.b16 %v1566, %v1562
    %v1867 = vpack.c.b16 %v1567, %v1563
    %v1868 = vpack.c.b16 %v1572, %v1568
    %v1869 = vpack.c.b16 %v1573, %v1569
    %v1870 = vpack.c.b16 %v1574, %v1570
    %v1871 = vpack.c.b16 %v1575, %v1571
    %v1872 = vpack.c.b16 %v1580, %v1576
    %v1873 = vpack.c.b16 %v1581, %v1577
    %v1874 = vpack.c.b16 %v1582, %v1578
    %v1875 = vpack.c.b16 %v1583, %v1579
    %v1876 = vpack.c.b16 %v1588, %v1584
    %v1877 = vpack.c.b16 %v1589, %v1585
    %v1878 = vpack.c.b16 %v1590, %v1586
    %v1879 = vpack.c.b16 %v1591, %v1587
    %v1880 = vpack.c.b16 %v1596, %v1592
    %v1881 = vpack.c.b16 %v1597, %v1593
    %v1882 = vpack.c.b16 %v1598, %v1594
    %v1883 = vpack.c.b16 %v1599, %v1595
    %v1884 = vpack.c.b16 %v1604, %v1600
    %v1885 = vpack.c.b16 %v1605, %v1601
    %v1886 = vpack.c.b16 %v1606, %v1602
    %v1887 = vpack.c.b16 %v1607, %v1603
    %v1888 = vpack.c.b16 %v1612, %v1608
    %v1889 = vpack.c.b16 %v1613, %v1609
    %v1890 = vpack.c.b16 %v1614, %v1610
    %v1891 = vpack.c.b16 %v1615, %v1611
    %v1892 = vpack.c.b16 %v1620, %v1616
    %v1893 = vpack.c.b16 %v1621, %v1617
    %v1894 = vpack.c.b16 %v1622, %v1618
    %v1895 = vpack.c.b16 %v1623, %v1619
    %v1896 = vpack.c.b16 %v1628, %v1624
    %v1897 = vpack.c.b16 %v1629, %v1625
    %v1898 = vpack.c.b16 %v1630, %v1626
    %v1899 = vpack.c.b16 %v1631, %v1627
    %v1900 = vpack.c.b16 %v1636, %v1632
    %v1901 = vpack.c.b16 %v1637, %v1633
    %v1902 = vpack.c.b16 %v1638, %v1634
    %v1903 = vpack.c.b16 %v1639, %v1635
    %v1904 = vpack.c.b16 %v1644, %v1640
    %v1905 = vpack.c.b16 %v1645, %v1641
    %v1906 = vpack.c.b16 %v1646, %v1642
    %v1907 = vpack.c.b16 %v1647, %v1643
    %v1908 = vpack.c.b16 %v1652, %v1648
    %v1909 = vpack.c.b16 %v1653, %v1649
    %v1910 = vpack.c.b16 %v1654, %v1650
    %v1911 = vpack.c.b16 %v1655, %v1651
    %v1912 = vpack.c.b16 %v1660, %v1656
    %v1913 = vpack.c.b16 %v1661, %v1657
    %v1914 = vpack.c.b16 %v1662, %v1658
    %v1915 = vpack.c.b16 %v1663, %v1659
    %v1916 = vpack.c.b16 %v1668, %v1664
    %v1917 = vpack.c.b16 %v1669, %v1665
    %v1918 = vpack.c.b16 %v1670, %v1666
    %v1919 = vpack.c.b16 %v1671, %v1667
    %v1920 = vpack.c.b16 %v1676, %v1672
    %v1921 = vpack.c.b16 %v1677, %v1673
    %v1922 = vpack.c.b16 %v1678, %v1674
    %v1923 = vpack.c.b16 %v1679, %v1675
    %v1924 = vpack.c.b16 %v1684, %v1680
    %v1925 = vpack.c.b16 %v1685, %v1681
    %v1926 = vpack.c.b16 %v1686, %v1682
    %v1927 = vpack.c.b16 %v1687, %v1683
    %v1928 = vpack.c.b16 %v1692, %v1688
    %v1929 = vpack.c.b16 %v1693, %v1689
    %v1930 = vpack.c.b16 %v1694, %v1690
    %v1931 = vpack.c.b16 %v1695, %v1691
    %v1932 = vpack.c.b16 %v1700, %v1696
    %v1933 = vpack.c.b16 %v1701, %v1697
    %v1934 = vpack.c.b16 %v1702, %v1698
    %v1935 = vpack.c.b16 %v1703, %v1699
    %v1936 = vpack.c.b16 %v1708, %v1704
    %v1937 = vpack.c.b16 %v1709, %v1705
    %v1938 = vpack.c.b16 %v1710, %v1706
    %v1939 = vpack.c.b16 %v1711, %v1707
    %v1940 = vpack.c.b16 %v1716, %v1712
    %v1941 = vpack.c.b16 %v1717, %v1713
    %v1942 = vpack.c.b16 %v1718, %v1714
    %v1943 = vpack.c.b16 %v1719, %v1715
    %v1944 = vpack.c.b16 %v1724, %v1720
    %v1945 = vpack.c.b16 %v1725, %v1721
    %v1946 = vpack.c.b16 %v1726, %v1722
    %v1947 = vpack.c.b16 %v1727, %v1723
    %v1948 = vpack.c.b16 %v1732, %v1728
    %v1949 = vpack.c.b16 %v1733, %v1729
    %v1950 = vpack.c.b16 %v1734, %v1730
    %v1951 = vpack.c.b16 %v1735, %v1731
    %v1952 = vpack.c.b16 %v1740, %v1736
    %v1953 = vpack.c.b16 %v1741, %v1737
    %v1954 = vpack.c.b16 %v1742, %v1738
    %v1955 = vpack.c.b16 %v1743, %v1739
    %v1956 = vpack.c.b16 %v1748, %v1744
    %v1957 = vpack.c.b16 %v1749, %v1745
    %v1958 = vpack.c.b16 %v1750, %v1746
    %v1959 = vpack.c.b16 %v1751, %v1747
    %v1960 = vpack.c.b16 %v1756, %v1752
    %v1961 = vpack.c.b16 %v1757, %v1753
    %v1962 = vpack.c.b16 %v1758, %v1754
    %v1963 = vpack.c.b16 %v1759, %v1755
    %v1964 = vpack.c.b16 %v1764, %v1760
    %v1965 = vpack.c.b16 %v1765, %v1761
    %v1966 = vpack.c.b16 %v1766, %v1762
    %v1967 = vpack.c.b16 %v1767, %v1763
    %v1968 = vpack.c.b16 %v1772, %v1768
    %v1969 = vpack.c.b16 %v1773, %v1769
    %v1970 = vpack.c.b16 %v1774, %v1770
    %v1971 = vpack.c.b16 %v1775, %v1771
    %v1972 = vpack.c.b16 %v1780, %v1776
    %v1973 = vpack.c.b16 %v1781, %v1777
    %v1974 = vpack.c.b16 %v1782, %v1778
    %v1975 = vpack.c.b16 %v1783, %v1779
    %v1976 = vpack.c.b16 %v1788, %v1784
    %v1977 = vpack.c.b16 %v1789, %v1785
    %v1978 = vpack.c.b16 %v1790, %v1786
    %v1979 = vpack.c.b16 %v1791, %v1787
    %v1980 = vpack.c.b16 %v1796, %v1792
    %v1981 = vpack.c.b16 %v1797, %v1793
    %v1982 = vpack.c.b16 %v1798, %v1794
    %v1983 = vpack.c.b16 %v1799, %v1795
    %v1984 = vpack.c.b16 %v1804, %v1800
    %v1985 = vpack.c.b16 %v1805, %v1801
    %v1986 = vpack.c.b16 %v1806, %v1802
    %v1987 = vpack.c.b16 %v1807, %v1803
    %v1988 = vpack.c.b16 %v1812, %v1808
    %v1989 = vpack.c.b16 %v1813, %v1809
    %v1990 = vpack.c.b16 %v1814, %v1810
    %v1991 = vpack.c.b16 %v1815, %v1811
    %v1992 = vpack.c.b16 %v1820, %v1816
    %v1993 = vpack.c.b16 %v1821, %v1817
    %v1994 = vpack.c.b16 %v1822, %v1818
    %v1995 = vpack.c.b16 %v1823, %v1819
    %v1996 = vpack.c.b16 %v1828, %v1824
    %v1997 = vpack.c.b16 %v1829, %v1825
    %v1998 = vpack.c.b16 %v1830, %v1826
    %v1999 = vpack.c.b16 %v1831, %v1827
    %v2000 = vpack.c.b16 %v1836, %v1832
    %v2001 = vpack.c.b16 %v1837, %v1833
    %v2002 = vpack.c.b16 %v1838, %v1834
    %v2003 = vpack.c.b16 %v1839, %v1835
    %v2004 = vpack.c.b16 %v1844, %v1840
    %v2005 = vpack.c.b16 %v1845, %v1841
    %v2006 = vpack.c.b16 %v1846, %v1842
    %v2007 = vpack.c.b16 %v1847, %v1843
    %2168 = vmatprep.subr.bf16.mxu0 %v1849
    %2169 = vmatpush1.bf16.msra.mxu0 %v1848
    %2170 = vmatprep.subr.bf16.mxu0 %v1853
    %2171 = vmatpush1.bf16.msra.mxu0 %v1852
    %2172 = vmatprep.subr.bf16.mxu0 %v1857
    %2173 = vmatpush1.bf16.msra.mxu0 %v1856
    %2174 = vmatprep.subr.bf16.mxu0 %v1861
    %2175 = vmatpush1.bf16.msra.mxu0 %v1860
    %2176 = vmatprep.subr.bf16.mxu0 %v1865
    %2177 = vmatpush1.bf16.msra.mxu0 %v1864
    %2178 = vmatprep.subr.bf16.mxu0 %v1869
    %2179 = vmatpush1.bf16.msra.mxu0 %v1868
    %2180 = vmatprep.subr.bf16.mxu0 %v1873
    %2181 = vmatpush1.bf16.msra.mxu0 %v1872
    %2182 = vmatprep.subr.bf16.mxu0 %v1877
    %2183 = vmatpush1.bf16.msra.mxu0 %v1876
    %2184 = vmatprep.subr.bf16.mxu0 %v1881
    %2185 = vmatpush1.bf16.msra.mxu0 %v1880
    %2186 = vmatprep.subr.bf16.mxu0 %v1885
    %2187 = vmatpush1.bf16.msra.mxu0 %v1884
    %2188 = vmatprep.subr.bf16.mxu0 %v1889
    %2189 = vmatpush1.bf16.msra.mxu0 %v1888
    %2190 = vmatprep.subr.bf16.mxu0 %v1893
    %2191 = vmatpush1.bf16.msra.mxu0 %v1892
    %2192 = vmatprep.subr.bf16.mxu0 %v1897
    %2193 = vmatpush1.bf16.msra.mxu0 %v1896
    %2194 = vmatprep.subr.bf16.mxu0 %v1901
    %2195 = vmatpush1.bf16.msra.mxu0 %v1900
    %2196 = vmatprep.subr.bf16.mxu0 %v1905
    %2197 = vmatpush1.bf16.msra.mxu0 %v1904
    %2198 = vmatprep.subr.bf16.mxu0 %v1909
    %2199 = vmatpush1.bf16.msra.mxu0 %v1908
    %2200 = vmatprep.mubr.bf16.mxu0 %v1349
    %2201 = vmatmul.mubr.bf16.gmra.mrb[0].mxu0 %v1348
    %v2202 = vpop.f32.mrb[0].mxu0
    %v2203 = vadd.f32 0.0, %v2202
    %v2204 = vpop.f32.mrb[0].mxu0
    %v2205 = vadd.f32 0.0, %v2204
    %v2206 = vpop.f32.mrb[0].mxu0
    %v2207 = vadd.f32 0.0, %v2206
    %v2208 = vpop.f32.mrb[0].mxu0
    %v2209 = vadd.f32 0.0, %v2208
    %2210 = vmatprep.mubr.bf16.mxu0 %v1354
    %2211 = vmatmul.mubr.bf16.gmra.mrb[0].mxu0 %v1353
    %v2212 = vpop.f32.mrb[0].mxu0
    %v2213 = vadd.f32 0.0, %v2212
    %v2214 = vpop.f32.mrb[0].mxu0
    %v2215 = vadd.f32 0.0, %v2214
    %v2216 = vpop.f32.mrb[0].mxu0
    %v2217 = vadd.f32 0.0, %v2216
    %v2218 = vpop.f32.mrb[0].mxu0
    %v2219 = vadd.f32 0.0, %v2218
    %2220 = vdwg.mxu0
    %2221 = vmatprep.subr.bf16.mxu0 %v1913
    %2222 = vmatpush1.bf16.msra.mxu0 %v1912
    %2223 = vmatprep.subr.bf16.mxu0 %v1917
    %2224 = vmatpush1.bf16.msra.mxu0 %v1916
    %2225 = vmatprep.subr.bf16.mxu0 %v1921
    %2226 = vmatpush1.bf16.msra.mxu0 %v1920
    %2227 = vmatprep.subr.bf16.mxu0 %v1925
    %2228 = vmatpush1.bf16.msra.mxu0 %v1924
    %2229 = vmatprep.subr.bf16.mxu0 %v1929
    %2230 = vmatpush1.bf16.msra.mxu0 %v1928
    %2231 = vmatprep.subr.bf16.mxu0 %v1933
    %2232 = vmatpush1.bf16.msra.mxu0 %v1932
    %2233 = vmatprep.subr.bf16.mxu0 %v1937
    %2234 = vmatpush1.bf16.msra.mxu0 %v1936
    %2235 = vmatprep.subr.bf16.mxu0 %v1941
    %2236 = vmatpush1.bf16.msra.mxu0 %v1940
    %2237 = vmatprep.subr.bf16.mxu0 %v1945
    %2238 = vmatpush1.bf16.msra.mxu0 %v1944
    %2239 = vmatprep.subr.bf16.mxu0 %v1949
    %2240 = vmatpush1.bf16.msra.mxu0 %v1948
    %2241 = vmatprep.subr.bf16.mxu0 %v1953
    %2242 = vmatpush1.bf16.msra.mxu0 %v1952
    %2243 = vmatprep.subr.bf16.mxu0 %v1957
    %2244 = vmatpush1.bf16.msra.mxu0 %v1956
    %2245 = vmatprep.subr.bf16.mxu0 %v1961
    %2246 = vmatpush1.bf16.msra.mxu0 %v1960
    %2247 = vmatprep.subr.bf16.mxu0 %v1965
    %2248 = vmatpush1.bf16.msra.mxu0 %v1964
    %2249 = vmatprep.subr.bf16.mxu0 %v1969
    %2250 = vmatpush1.bf16.msra.mxu0 %v1968
    %2251 = vmatprep.subr.bf16.mxu0 %v1973
    %2252 = vmatpush1.bf16.msra.mxu0 %v1972
    %2253 = vmatprep.mubr.bf16.mxu0 %v1351
    %2254 = vmatmul.mubr.bf16.gmra.mrb[0].mxu0 %v1350
    %v2255 = vpop.f32.mrb[0].mxu0
    %v2256 = vadd.f32 %v2203, %v2255
    %v2257 = vpop.f32.mrb[0].mxu0
    %v2258 = vadd.f32 %v2205, %v2257
    %v2259 = vpop.f32.mrb[0].mxu0
    %v2260 = vadd.f32 %v2207, %v2259
    %v2261 = vpop.f32.mrb[0].mxu0
    %v2262 = vadd.f32 %v2209, %v2261
    %2263 = vmatprep.mubr.bf16.mxu0 %v1356
    %2264 = vmatmul.mubr.bf16.gmra.mrb[0].mxu0 %v1355
    %v2265 = vpop.f32.mrb[0].mxu0
    %v2266 = vadd.f32 %v2213, %v2265
    %v2267 = vpop.f32.mrb[0].mxu0
    %v2268 = vadd.f32 %v2215, %v2267
    %v2269 = vpop.f32.mrb[0].mxu0
    %v2270 = vadd.f32 %v2217, %v2269
    %v2271 = vpop.f32.mrb[0].mxu0
    %v2272 = vadd.f32 %v2219, %v2271
    %2273 = vdwg.mxu0
    %2274 = vmatprep.subr.bf16.mxu0 %v1977
    %2275 = vmatpush1.bf16.msra.mxu0 %v1976
    %2276 = vmatprep.subr.bf16.mxu0 %v1981
    %2277 = vmatpush1.bf16.msra.mxu0 %v1980
    %2278 = vmatprep.subr.bf16.mxu0 %v1985
    %2279 = vmatpush1.bf16.msra.mxu0 %v1984
    %2280 = vmatprep.subr.bf16.mxu0 %v1989
    %2281 = vmatpush1.bf16.msra.mxu0 %v1988
    %2282 = vmatprep.subr.bf16.mxu0 %v1993
    %2283 = vmatpush1.bf16.msra.mxu0 %v1992
    %2284 = vmatprep.subr.bf16.mxu0 %v1997
    %2285 = vmatpush1.bf16.msra.mxu0 %v1996
    %2286 = vmatprep.subr.bf16.mxu0 %v2001
    %2287 = vmatpush1.bf16.msra.mxu0 %v2000
    %2288 = vmatprep.subr.bf16.mxu0 %v2005
    %2289 = vmatpush1.bf16.msra.mxu0 %v2004
    %2290 = vmatprep.subr.bf16.mxu0 0
    %2291 = vmatpush1.bf16.msra.mxu0 0
    %2292 = vmatprep.subr.bf16.mxu0 0
    %2293 = vmatpush1.bf16.msra.mxu0 0
    %2294 = vmatprep.subr.bf16.mxu0 0
    %2295 = vmatpush1.bf16.msra.mxu0 0
    %2296 = vmatprep.subr.bf16.mxu0 0
    %2297 = vmatpush1.bf16.msra.mxu0 0
    %2298 = vmatprep.subr.bf16.mxu0 0
    %2299 = vmatpush1.bf16.msra.mxu0 0
    %2300 = vmatprep.subr.bf16.mxu0 0
    %2301 = vmatpush1.bf16.msra.mxu0 0
    %2302 = vmatprep.subr.bf16.mxu0 0
    %2303 = vmatpush1.bf16.msra.mxu0 0
    %2304 = vmatprep.subr.bf16.mxu0 0
    %2305 = vmatpush1.bf16.msra.mxu0 0
    %2306 = vmatprep.mubr.bf16.mxu0 0
    %2307 = vmatmul.mubr.bf16.gmra.mrb[0].mxu0 %v1352
    %v2308 = vpop.f32.mrb[0].mxu0
    %v2309 = vadd.f32 %v2256, %v2308
    %v2310 = vpop.f32.mrb[0].mxu0
    %v2311 = vadd.f32 %v2258, %v2310
    %v2312 = vpop.f32.mrb[0].mxu0
    %v2313 = vadd.f32 %v2260, %v2312
    %v2314 = vpop.f32.mrb[0].mxu0
    %v2315 = vadd.f32 %v2262, %v2314
    %2316 = vmatprep.mubr.bf16.mxu0 0
    %2317 = vmatmul.mubr.bf16.gmra.mrb[0].mxu0 %v1357
    %v2318 = vpop.f32.mrb[0].mxu0
    %v2319 = vadd.f32 %v2266, %v2318
    %v2320 = vpop.f32.mrb[0].mxu0
    %v2321 = vadd.f32 %v2268, %v2320
    %v2322 = vpop.f32.mrb[0].mxu0
    %v2323 = vadd.f32 %v2270, %v2322
    %v2324 = vpop.f32.mrb[0].mxu0
    %v2325 = vadd.f32 %v2272, %v2324
    %2326 = vdwg.mxu0
    %2327 = vmatprep.subr.bf16.mxu0 %v1851
    %2328 = vmatpush1.bf16.msra.mxu0 %v1850
    %2329 = vmatprep.subr.bf16.mxu0 %v1855
    %2330 = vmatpush1.bf16.msra.mxu0 %v1854
    %2331 = vmatprep.subr.bf16.mxu0 %v1859
    %2332 = vmatpush1.bf16.msra.mxu0 %v1858
    %2333 = vmatprep.subr.bf16.mxu0 %v1863
    %2334 = vmatpush1.bf16.msra.mxu0 %v1862
    %2335 = vmatprep.subr.bf16.mxu0 %v1867
    %2336 = vmatpush1.bf16.msra.mxu0 %v1866
    %2337 = vmatprep.subr.bf16.mxu0 %v1871
    %2338 = vmatpush1.bf16.msra.mxu0 %v1870
    %2339 = vmatprep.subr.bf16.mxu0 %v1875
    %2340 = vmatpush1.bf16.msra.mxu0 %v1874
    %2341 = vmatprep.subr.bf16.mxu0 %v1879
    %2342 = vmatpush1.bf16.msra.mxu0 %v1878
    %2343 = vmatprep.subr.bf16.mxu0 %v1883
    %2344 = vmatpush1.bf16.msra.mxu0 %v1882
    %2345 = vmatprep.subr.bf16.mxu0 %v1887
    %2346 = vmatpush1.bf16.msra.mxu0 %v1886
    %2347 = vmatprep.subr.bf16.mxu0 %v1891
    %2348 = vmatpush1.bf16.msra.mxu0 %v1890
    %2349 = vmatprep.subr.bf16.mxu0 %v1895
    %2350 = vmatpush1.bf16.msra.mxu0 %v1894
    %2351 = vmatprep.subr.bf16.mxu0 %v1899
    %2352 = vmatpush1.bf16.msra.mxu0 %v1898
    %2353 = vmatprep.subr.bf16.mxu0 %v1903
    %2354 = vmatpush1.bf16.msra.mxu0 %v1902
    %2355 = vmatprep.subr.bf16.mxu0 %v1907
    %2356 = vmatpush1.bf16.msra.mxu0 %v1906
    %2357 = vmatprep.subr.bf16.mxu0 %v1911
    %2358 = vmatpush1.bf16.msra.mxu0 %v1910
    %2359 = vmatprep.mubr.bf16.mxu0 %v1349
    %2360 = vmatmul.mubr.bf16.gmra.mrb[0].mxu0 %v1348
    %v2361 = vpop.f32.mrb[0].mxu0
    %v2362 = vadd.f32 0.0, %v2361
    %v2363 = vpop.f32.mrb[0].mxu0
    %v2364 = vadd.f32 0.0, %v2363
    %v2365 = vpop.f32.mrb[0].mxu0
    %v2366 = vadd.f32 0.0, %v2365
    %v2367 = vpop.f32.mrb[0].mxu0
    %v2368 = vadd.f32 0.0, %v2367
    %2369 = vmatprep.mubr.bf16.mxu0 %v1354
    %2370 = vmatmul.mubr.bf16.gmra.mrb[0].mxu0 %v1353
    %v2371 = vpop.f32.mrb[0].mxu0
    %v2372 = vadd.f32 0.0, %v2371
    %v2373 = vpop.f32.mrb[0].mxu0
    %v2374 = vadd.f32 0.0, %v2373
    %v2375 = vpop.f32.mrb[0].mxu0
    %v2376 = vadd.f32 0.0, %v2375
    %v2377 = vpop.f32.mrb[0].mxu0
    %v2378 = vadd.f32 0.0, %v2377
    %2379 = vdwg.mxu0
    %2380 = vmatprep.subr.bf16.mxu0 %v1915
    %2381 = vmatpush1.bf16.msra.mxu0 %v1914
    %2382 = vmatprep.subr.bf16.mxu0 %v1919
    %2383 = vmatpush1.bf16.msra.mxu0 %v1918
    %2384 = vmatprep.subr.bf16.mxu0 %v1923
    %2385 = vmatpush1.bf16.msra.mxu0 %v1922
    %2386 = vmatprep.subr.bf16.mxu0 %v1927
    %2387 = vmatpush1.bf16.msra.mxu0 %v1926
    %2388 = vmatprep.subr.bf16.mxu0 %v1931
    %2389 = vmatpush1.bf16.msra.mxu0 %v1930
    %2390 = vmatprep.subr.bf16.mxu0 %v1935
    %2391 = vmatpush1.bf16.msra.mxu0 %v1934
    %2392 = vmatprep.subr.bf16.mxu0 %v1939
    %2393 = vmatpush1.bf16.msra.mxu0 %v1938
    %2394 = vmatprep.subr.bf16.mxu0 %v1943
    %2395 = vmatpush1.bf16.msra.mxu0 %v1942
    %2396 = vmatprep.subr.bf16.mxu0 %v1947
    %2397 = vmatpush1.bf16.msra.mxu0 %v1946
    %2398 = vmatprep.subr.bf16.mxu0 %v1951
    %2399 = vmatpush1.bf16.msra.mxu0 %v1950
    %2400 = vmatprep.subr.bf16.mxu0 %v1955
    %2401 = vmatpush1.bf16.msra.mxu0 %v1954
    %2402 = vmatprep.subr.bf16.mxu0 %v1959
    %2403 = vmatpush1.bf16.msra.mxu0 %v1958
    %2404 = vmatprep.subr.bf16.mxu0 %v1963
    %2405 = vmatpush1.bf16.msra.mxu0 %v1962
    %2406 = vmatprep.subr.bf16.mxu0 %v1967
    %2407 = vmatpush1.bf16.msra.mxu0 %v1966
    %2408 = vmatprep.subr.bf16.mxu0 %v1971
    %2409 = vmatpush1.bf16.msra.mxu0 %v1970
    %2410 = vmatprep.subr.bf16.mxu0 %v1975
    %2411 = vmatpush1.bf16.msra.mxu0 %v1974
    %2412 = vmatprep.mubr.bf16.mxu0 %v1351
    %2413 = vmatmul.mubr.bf16.gmra.mrb[0].mxu0 %v1350
    %v2414 = vpop.f32.mrb[0].mxu0
    %v2415 = vadd.f32 %v2362, %v2414
    %v2416 = vpop.f32.mrb[0].mxu0
    %v2417 = vadd.f32 %v2364, %v2416
    %v2418 = vpop.f32.mrb[0].mxu0
    %v2419 = vadd.f32 %v2366, %v2418
    %v2420 = vpop.f32.mrb[0].mxu0
    %v2421 = vadd.f32 %v2368, %v2420
    %2422 = vmatprep.mubr.bf16.mxu0 %v1356
    %2423 = vmatmul.mubr.bf16.gmra.mrb[0].mxu0 %v1355
    %v2424 = vpop.f32.mrb[0].mxu0
    %v2425 = vadd.f32 %v2372, %v2424
    %v2426 = vpop.f32.mrb[0].mxu0
    %v2427 = vadd.f32 %v2374, %v2426
    %v2428 = vpop.f32.mrb[0].mxu0
    %v2429 = vadd.f32 %v2376, %v2428
    %v2430 = vpop.f32.mrb[0].mxu0
    %v2431 = vadd.f32 %v2378, %v2430
    %2432 = vdwg.mxu0
    %2433 = vmatprep.subr.bf16.mxu0 %v1979
    %2434 = vmatpush1.bf16.msra.mxu0 %v1978
    %2435 = vmatprep.subr.bf16.mxu0 %v1983
    %2436 = vmatpush1.bf16.msra.mxu0 %v1982
    %2437 = vmatprep.subr.bf16.mxu0 %v1987
    %2438 = vmatpush1.bf16.msra.mxu0 %v1986
    %2439 = vmatprep.subr.bf16.mxu0 %v1991
    %2440 = vmatpush1.bf16.msra.mxu0 %v1990
    %2441 = vmatprep.subr.bf16.mxu0 %v1995
    %2442 = vmatpush1.bf16.msra.mxu0 %v1994
    %2443 = vmatprep.subr.bf16.mxu0 %v1999
    %2444 = vmatpush1.bf16.msra.mxu0 %v1998
    %2445 = vmatprep.subr.bf16.mxu0 %v2003
    %2446 = vmatpush1.bf16.msra.mxu0 %v2002
    %2447 = vmatprep.subr.bf16.mxu0 %v2007
    %2448 = vmatpush1.bf16.msra.mxu0 %v2006
    %2449 = vmatprep.subr.bf16.mxu0 0
    %2450 = vmatpush1.bf16.msra.mxu0 0
    %2451 = vmatprep.subr.bf16.mxu0 0
    %2452 = vmatpush1.bf16.msra.mxu0 0
    %2453 = vmatprep.subr.bf16.mxu0 0
    %2454 = vmatpush1.bf16.msra.mxu0 0
    %2455 = vmatprep.subr.bf16.mxu0 0
    %2456 = vmatpush1.bf16.msra.mxu0 0
    %2457 = vmatprep.subr.bf16.mxu0 0
    %2458 = vmatpush1.bf16.msra.mxu0 0
    %2459 = vmatprep.subr.bf16.mxu0 0
    %2460 = vmatpush1.bf16.msra.mxu0 0
    %2461 = vmatprep.subr.bf16.mxu0 0
    %2462 = vmatpush1.bf16.msra.mxu0 0
    %2463 = vmatprep.subr.bf16.mxu0 0
    %2464 = vmatpush1.bf16.msra.mxu0 0
    %2465 = vmatprep.mubr.bf16.mxu0 0
    %2466 = vmatmul.mubr.bf16.gmra.mrb[0].mxu0 %v1352
    %v2467 = vpop.f32.mrb[0].mxu0
    %v2468 = vadd.f32 %v2415, %v2467
    %v2469 = vpop.f32.mrb[0].mxu0
    %v2470 = vadd.f32 %v2417, %v2469
    %v2471 = vpop.f32.mrb[0].mxu0
    %v2472 = vadd.f32 %v2419, %v2471
    %v2473 = vpop.f32.mrb[0].mxu0
    %v2474 = vadd.f32 %v2421, %v2473
    %2475 = vmatprep.mubr.bf16.mxu0 0
    %2476 = vmatmul.mubr.bf16.gmra.mrb[0].mxu0 %v1357
    %v2477 = vpop.f32.mrb[0].mxu0
    %v2478 = vadd.f32 %v2425, %v2477
    %v2479 = vpop.f32.mrb[0].mxu0
    %v2480 = vadd.f32 %v2427, %v2479
    %v2481 = vpop.f32.mrb[0].mxu0
    %v2482 = vadd.f32 %v2429, %v2481
    %v2483 = vpop.f32.mrb[0].mxu0
    %v2484 = vadd.f32 %v2431, %v2483
    %2485 = vdwg.mxu0
    %v2486 = vadd.f32 %v1127, %v2309
    %v2487 = vadd.f32 %v1131, %v2311
    %v2488 = vadd.f32 %v1135, %v2468
    %v2489 = vadd.f32 %v1139, %v2470
    %v2490 = vadd.f32 %v1127, %v2313
    %v2491 = vadd.f32 %v1131, %v2315
    %v2492 = vadd.f32 %v1135, %v2472
    %v2493 = vadd.f32 %v1139, %v2474
    %v2494 = vadd.f32 %v1127, %v2319
    %v2495 = vadd.f32 %v1131, %v2321
    %v2496 = vadd.f32 %v1135, %v2478
    %v2497 = vadd.f32 %v1139, %v2480
    %v2498 = vadd.f32 %v1127, %v2323
    %v2499 = vadd.f32 %v1131, %v2325
    %v2500 = vadd.f32 %v1135, %v2482
    %v2501 = vadd.f32 %v1139, %v2484
    %v2502 = vld [vmem:[#allocation2] sm:$0xee]
    %v2503 = vld [vmem:[#allocation2 + $0x8] sm:$0xee]
    %v2504 = vld [vmem:[#allocation2 + $0x10] sm:$0xe]
    %v2505 = vld [vmem:[#allocation2 + $0x3c] sm:$0x77]
    %v2506 = vld [vmem:[#allocation2 + $0x44] sm:$0x77]
    %v2507 = vld [vmem:[#allocation2 + $0x4c] sm:$0x7]
    %s2508 = scalar_lea.vmem %s3, 1280
    %v2509 = vld [vmem:[%s2508] sm:$0xff]
    %v2510 = vld [vmem:[%s2508 + $0x8] sm:$0xff]
    %v2511 = vld [vmem:[%s2508 + $0x10] sm:$0xff]
    %v2512 = vld [vmem:[%s2508 + $0x18] sm:$0xff]
    %v2513 = vld [vmem:[%s2508 + $0x20] sm:$0xff]
    %v2514 = vld [vmem:[%s2508 + $0x28] sm:$0xff]
    %v2515 = vld [vmem:[%s2508 + $0x30] sm:$0xff]
    %v2516 = vld [vmem:[%s2508 + $0x38] sm:$0xff]
    %v2517 = vld [vmem:[%s2508 + $0x40] sm:$0xff]
    %v2518 = vld [vmem:[%s2508 + $0x48] sm:$0xff]
    %v2519 = vld [vmem:[%s2508 + $0x50] sm:$0xff]
    %v2520 = vld [vmem:[%s2508 + $0x58] sm:$0xff]
    %v2521 = vld [vmem:[%s2508 + $0x60] sm:$0xff]
    %v2522 = vld [vmem:[%s2508 + $0x68] sm:$0xff]
    %v2523 = vld [vmem:[%s2508 + $0x70] sm:$0xff]
    %v2524 = vld [vmem:[%s2508 + $0x78] sm:$0xff]
    %v2525 = vld [vmem:[%s2508 + $0x80] sm:$0xff]
    %v2526 = vld [vmem:[%s2508 + $0x88] sm:$0xff]
    %v2527 = vld [vmem:[%s2508 + $0x90] sm:$0xff]
    %v2528 = vld [vmem:[%s2508 + $0x98] sm:$0xff]
    %v2529 = vld [vmem:[%s2508 + $0xa0] sm:$0xff]
    %v2530 = vld [vmem:[%s2508 + $0xa8] sm:$0xff]
    %v2531 = vld [vmem:[%s2508 + $0xb0] sm:$0xff]
    %v2532 = vld [vmem:[%s2508 + $0xb8] sm:$0xff]
    %v2533 = vld [vmem:[%s2508 + $0xc0] sm:$0xff]
    %v2534 = vld [vmem:[%s2508 + $0xc8] sm:$0xff]
    %v2535 = vld [vmem:[%s2508 + $0xd0] sm:$0xff]
    %v2536 = vld [vmem:[%s2508 + $0xd8] sm:$0xff]
    %v2537 = vld [vmem:[%s2508 + $0xe0] sm:$0xff]
    %v2538 = vld [vmem:[%s2508 + $0xe8] sm:$0xff]
    %v2539 = vld [vmem:[%s2508 + $0xf0] sm:$0xff]
    %v2540 = vld [vmem:[%s2508 + $0xf8] sm:$0xff]
    %v2541 = vld [vmem:[%s2508 + $0x100] sm:$0xff]
    %v2542 = vld [vmem:[%s2508 + $0x108] sm:$0xff]
    %v2543 = vld [vmem:[%s2508 + $0x110] sm:$0xff]
    %v2544 = vld [vmem:[%s2508 + $0x118] sm:$0xff]
    %v2545 = vld [vmem:[%s2508 + $0x120] sm:$0xff]
    %v2546 = vld [vmem:[%s2508 + $0x128] sm:$0xff]
    %v2547 = vld [vmem:[%s2508 + $0x130] sm:$0xff]
    %v2548 = vld [vmem:[%s2508 + $0x138] sm:$0xff]
    %v2549 = vld [vmem:[%s2508 + $0x140] sm:$0xff]
    %v2550 = vld [vmem:[%s2508 + $0x148] sm:$0xff]
    %v2551 = vld [vmem:[%s2508 + $0x150] sm:$0xff]
    %v2552 = vld [vmem:[%s2508 + $0x158] sm:$0xff]
    %v2553 = vld [vmem:[%s2508 + $0x160] sm:$0xff]
    %v2554 = vld [vmem:[%s2508 + $0x168] sm:$0xff]
    %v2555 = vld [vmem:[%s2508 + $0x170] sm:$0xff]
    %v2556 = vld [vmem:[%s2508 + $0x178] sm:$0xff]
    %v2557 = vld [vmem:[%s2508 + $0x180] sm:$0xff]
    %v2558 = vld [vmem:[%s2508 + $0x188] sm:$0xff]
    %v2559 = vld [vmem:[%s2508 + $0x190] sm:$0xff]
    %v2560 = vld [vmem:[%s2508 + $0x198] sm:$0xff]
    %v2561 = vld [vmem:[%s2508 + $0x1a0] sm:$0xff]
    %v2562 = vld [vmem:[%s2508 + $0x1a8] sm:$0xff]
    %v2563 = vld [vmem:[%s2508 + $0x1b0] sm:$0xff]
    %v2564 = vld [vmem:[%s2508 + $0x1b8] sm:$0xff]
    %v2565 = vld [vmem:[%s2508 + $0x1c0] sm:$0xff]
    %v2566 = vld [vmem:[%s2508 + $0x1c8] sm:$0xff]
    %v2567 = vld [vmem:[%s2508 + $0x1d0] sm:$0xff]
    %v2568 = vld [vmem:[%s2508 + $0x1d8] sm:$0xff]
    %v2569 = vld [vmem:[%s2508 + $0x1e0] sm:$0xff]
    %v2570 = vld [vmem:[%s2508 + $0x1e8] sm:$0xff]
    %v2571 = vld [vmem:[%s2508 + $0x1f0] sm:$0xff]
    %v2572 = vld [vmem:[%s2508 + $0x1f8] sm:$0xff]
    %v2573 = vld [vmem:[%s2508 + $0x200] sm:$0xff]
    %v2574 = vld [vmem:[%s2508 + $0x208] sm:$0xff]
    %v2575 = vld [vmem:[%s2508 + $0x210] sm:$0xff]
    %v2576 = vld [vmem:[%s2508 + $0x218] sm:$0xff]
    %v2577 = vld [vmem:[%s2508 + $0x220] sm:$0xff]
    %v2578 = vld [vmem:[%s2508 + $0x228] sm:$0xff]
    %v2579 = vld [vmem:[%s2508 + $0x230] sm:$0xff]
    %v2580 = vld [vmem:[%s2508 + $0x238] sm:$0xff]
    %v2581 = vld [vmem:[%s2508 + $0x240] sm:$0xff]
    %v2582 = vld [vmem:[%s2508 + $0x248] sm:$0xff]
    %v2583 = vld [vmem:[%s2508 + $0x250] sm:$0xff]
    %v2584 = vld [vmem:[%s2508 + $0x258] sm:$0xff]
    %v2585 = vld [vmem:[%s2508 + $0x260] sm:$0xff]
    %v2586 = vld [vmem:[%s2508 + $0x268] sm:$0xff]
    %v2587 = vld [vmem:[%s2508 + $0x270] sm:$0xff]
    %v2588 = vld [vmem:[%s2508 + $0x278] sm:$0xff]
    %v2589 = vld [vmem:[%s2508 + $0x280] sm:$0xff]
    %v2590 = vld [vmem:[%s2508 + $0x288] sm:$0xff]
    %v2591 = vld [vmem:[%s2508 + $0x290] sm:$0xff]
    %v2592 = vld [vmem:[%s2508 + $0x298] sm:$0xff]
    %v2593 = vld [vmem:[%s2508 + $0x2a0] sm:$0xff]
    %v2594 = vld [vmem:[%s2508 + $0x2a8] sm:$0xff]
    %v2595 = vld [vmem:[%s2508 + $0x2b0] sm:$0xff]
    %v2596 = vld [vmem:[%s2508 + $0x2b8] sm:$0xff]
    %v2597 = vld [vmem:[%s2508 + $0x2c0] sm:$0xff]
    %v2598 = vld [vmem:[%s2508 + $0x2c8] sm:$0xff]
    %v2599 = vld [vmem:[%s2508 + $0x2d0] sm:$0xff]
    %v2600 = vld [vmem:[%s2508 + $0x2d8] sm:$0xff]
    %v2601 = vld [vmem:[%s2508 + $0x2e0] sm:$0xff]
    %v2602 = vld [vmem:[%s2508 + $0x2e8] sm:$0xff]
    %v2603 = vld [vmem:[%s2508 + $0x2f0] sm:$0xff]
    %v2604 = vld [vmem:[%s2508 + $0x2f8] sm:$0xff]
    %v2605 = vld [vmem:[%s2508 + $0x300] sm:$0xff]
    %v2606 = vld [vmem:[%s2508 + $0x308] sm:$0xff]
    %v2607 = vld [vmem:[%s2508 + $0x310] sm:$0xff]
    %v2608 = vld [vmem:[%s2508 + $0x318] sm:$0xff]
    %v2609 = vld [vmem:[%s2508 + $0x320] sm:$0xff]
    %v2610 = vld [vmem:[%s2508 + $0x328] sm:$0xff]
    %v2611 = vld [vmem:[%s2508 + $0x330] sm:$0xff]
    %v2612 = vld [vmem:[%s2508 + $0x338] sm:$0xff]
    %v2613 = vld [vmem:[%s2508 + $0x340] sm:$0xff]
    %v2614 = vld [vmem:[%s2508 + $0x348] sm:$0xff]
    %v2615 = vld [vmem:[%s2508 + $0x350] sm:$0xff]
    %v2616 = vld [vmem:[%s2508 + $0x358] sm:$0xff]
    %v2617 = vld [vmem:[%s2508 + $0x360] sm:$0xff]
    %v2618 = vld [vmem:[%s2508 + $0x368] sm:$0xff]
    %v2619 = vld [vmem:[%s2508 + $0x370] sm:$0xff]
    %v2620 = vld [vmem:[%s2508 + $0x378] sm:$0xff]
    %v2621 = vld [vmem:[%s2508 + $0x380] sm:$0xff]
    %v2622 = vld [vmem:[%s2508 + $0x388] sm:$0xff]
    %v2623 = vld [vmem:[%s2508 + $0x390] sm:$0xff]
    %v2624 = vld [vmem:[%s2508 + $0x398] sm:$0xff]
    %v2625 = vld [vmem:[%s2508 + $0x3a0] sm:$0xff]
    %v2626 = vld [vmem:[%s2508 + $0x3a8] sm:$0xff]
    %v2627 = vld [vmem:[%s2508 + $0x3b0] sm:$0xff]
    %v2628 = vld [vmem:[%s2508 + $0x3b8] sm:$0xff]
    %v2629 = vld [vmem:[%s2508 + $0x3c0] sm:$0xff]
    %v2630 = vld [vmem:[%s2508 + $0x3c8] sm:$0xff]
    %v2631 = vld [vmem:[%s2508 + $0x3d0] sm:$0xff]
    %v2632 = vld [vmem:[%s2508 + $0x3d8] sm:$0xff]
    %v2633 = vld [vmem:[%s2508 + $0x3e0] sm:$0xff]
    %v2634 = vld [vmem:[%s2508 + $0x3e8] sm:$0xff]
    %v2635 = vld [vmem:[%s2508 + $0x3f0] sm:$0xff]
    %v2636 = vld [vmem:[%s2508 + $0x3f8] sm:$0xff]
    %v2637 = vld [vmem:[%s2508 + $0x400] sm:$0xff]
    %v2638 = vld [vmem:[%s2508 + $0x408] sm:$0xff]
    %v2639 = vld [vmem:[%s2508 + $0x410] sm:$0xff]
    %v2640 = vld [vmem:[%s2508 + $0x418] sm:$0xff]
    %v2641 = vld [vmem:[%s2508 + $0x420] sm:$0xff]
    %v2642 = vld [vmem:[%s2508 + $0x428] sm:$0xff]
    %v2643 = vld [vmem:[%s2508 + $0x430] sm:$0xff]
    %v2644 = vld [vmem:[%s2508 + $0x438] sm:$0xff]
    %v2645 = vld [vmem:[%s2508 + $0x440] sm:$0xff]
    %v2646 = vld [vmem:[%s2508 + $0x448] sm:$0xff]
    %v2647 = vld [vmem:[%s2508 + $0x450] sm:$0xff]
    %v2648 = vld [vmem:[%s2508 + $0x458] sm:$0xff]
    %v2649 = vld [vmem:[%s2508 + $0x460] sm:$0xff]
    %v2650 = vld [vmem:[%s2508 + $0x468] sm:$0xff]
    %v2651 = vld [vmem:[%s2508 + $0x470] sm:$0xff]
    %v2652 = vld [vmem:[%s2508 + $0x478] sm:$0xff]
    %v2653 = vld [vmem:[%s2508 + $0x480] sm:$0xff]
    %v2654 = vld [vmem:[%s2508 + $0x488] sm:$0xff]
    %v2655 = vld [vmem:[%s2508 + $0x490] sm:$0xff]
    %v2656 = vld [vmem:[%s2508 + $0x498] sm:$0xff]
    %v2657 = vld [vmem:[%s2508 + $0x4a0] sm:$0xff]
    %v2658 = vld [vmem:[%s2508 + $0x4a8] sm:$0xff]
    %v2659 = vld [vmem:[%s2508 + $0x4b0] sm:$0xff]
    %v2660 = vld [vmem:[%s2508 + $0x4b8] sm:$0xff]
    %v2661 = vld [vmem:[%s2508 + $0x4c0] sm:$0xff]
    %v2662 = vld [vmem:[%s2508 + $0x4c8] sm:$0xff]
    %v2663 = vld [vmem:[%s2508 + $0x4d0] sm:$0xff]
    %v2664 = vld [vmem:[%s2508 + $0x4d8] sm:$0xff]
    %v2665 = vld [vmem:[%s2508 + $0x4e0] sm:$0xff]
    %v2666 = vld [vmem:[%s2508 + $0x4e8] sm:$0xff]
    %v2667 = vld [vmem:[%s2508 + $0x4f0] sm:$0xff]
    %v2668 = vld [vmem:[%s2508 + $0x4f8] sm:$0xff]
    %v2675 = vunpack.c.l.b16 %v2502
    %v2676 = vunpack.c.h.b16 %v2502
    %v2677 = vunpack.c.l.b16 %v2503
    %v2678 = vunpack.c.h.b16 %v2503
    %v2679 = vunpack.c.l.b16 %v2504
    %v2680 = vunpack.c.l.b16 %v2505
    %v2681 = vunpack.c.h.b16 %v2505
    %v2682 = vunpack.c.l.b16 %v2506
    %v2683 = vunpack.c.h.b16 %v2506
    %v2684 = vunpack.c.l.b16 %v2507
    %v2685 = vpack.c.b16 %v1333, %v2675
    %v2686 = vpack.c.b16 %v1334, %v2676
    %v2687 = vpack.c.b16 %v1335, %v2677
    %v2688 = vpack.c.b16 %v1336, %v2678
    %v2689 = vpack.c.b16 %v1337, %v2679
    %v2690 = vpack.c.b16 %v2680, %v1338
    %v2691 = vpack.c.b16 %v2681, %v1339
    %v2692 = vpack.c.b16 %v2682, %v1340
    %v2693 = vpack.c.b16 %v2683, %v1341
    %v2694 = vpack.c.b16 %v2684, %v1342
    %v2695 = vrot.slane %v2685, 1
    %v2696 = vrot.slane %v2690, 1
    %v2697 = vsel %vm456, %v2695, %v2696
    %v2698 = vrot.slane %v2686, 1
    %v2699 = vrot.slane %v2691, 1
    %v2700 = vsel %vm456, %v2698, %v2699
    %v2701 = vrot.slane %v2687, 1
    %v2702 = vrot.slane %v2692, 1
    %v2703 = vsel %vm456, %v2701, %v2702
    %v2704 = vrot.slane %v2688, 1
    %v2705 = vrot.slane %v2693, 1
    %v2706 = vsel %vm456, %v2704, %v2705
    %v2707 = vrot.slane %v2689, 1
    %v2708 = vrot.slane %v2694, 1
    %v2709 = vsel %vm456, %v2707, %v2708
    %v2880 = vunpack.c.l.b16 %v2509
    %v2881 = vunpack.c.h.b16 %v2509
    %v2882 = vunpack.c.l.b16 %v2510
    %v2883 = vunpack.c.h.b16 %v2510
    %v2884 = vunpack.c.l.b16 %v2511
    %v2885 = vunpack.c.h.b16 %v2511
    %v2886 = vunpack.c.l.b16 %v2512
    %v2887 = vunpack.c.h.b16 %v2512
    %v2888 = vunpack.c.l.b16 %v2513
    %v2889 = vunpack.c.h.b16 %v2513
    %v2890 = vunpack.c.l.b16 %v2514
    %v2891 = vunpack.c.h.b16 %v2514
    %v2892 = vunpack.c.l.b16 %v2515
    %v2893 = vunpack.c.h.b16 %v2515
    %v2894 = vunpack.c.l.b16 %v2516
    %v2895 = vunpack.c.h.b16 %v2516
    %v2896 = vunpack.c.l.b16 %v2517
    %v2897 = vunpack.c.h.b16 %v2517
    %v2898 = vunpack.c.l.b16 %v2518
    %v2899 = vunpack.c.h.b16 %v2518
    %v2900 = vunpack.c.l.b16 %v2519
    %v2901 = vunpack.c.h.b16 %v2519
    %v2902 = vunpack.c.l.b16 %v2520
    %v2903 = vunpack.c.h.b16 %v2520
    %v2904 = vunpack.c.l.b16 %v2521
    %v2905 = vunpack.c.h.b16 %v2521
    %v2906 = vunpack.c.l.b16 %v2522
    %v2907 = vunpack.c.h.b16 %v2522
    %v2908 = vunpack.c.l.b16 %v2523
    %v2909 = vunpack.c.h.b16 %v2523
    %v2910 = vunpack.c.l.b16 %v2524
    %v2911 = vunpack.c.h.b16 %v2524
    %v2912 = vunpack.c.l.b16 %v2525
    %v2913 = vunpack.c.h.b16 %v2525
    %v2914 = vunpack.c.l.b16 %v2526
    %v2915 = vunpack.c.h.b16 %v2526
    %v2916 = vunpack.c.l.b16 %v2527
    %v2917 = vunpack.c.h.b16 %v2527
    %v2918 = vunpack.c.l.b16 %v2528
    %v2919 = vunpack.c.h.b16 %v2528
    %v2920 = vunpack.c.l.b16 %v2529
    %v2921 = vunpack.c.h.b16 %v2529
    %v2922 = vunpack.c.l.b16 %v2530
    %v2923 = vunpack.c.h.b16 %v2530
    %v2924 = vunpack.c.l.b16 %v2531
    %v2925 = vunpack.c.h.b16 %v2531
    %v2926 = vunpack.c.l.b16 %v2532
    %v2927 = vunpack.c.h.b16 %v2532
    %v2928 = vunpack.c.l.b16 %v2533
    %v2929 = vunpack.c.h.b16 %v2533
    %v2930 = vunpack.c.l.b16 %v2534
    %v2931 = vunpack.c.h.b16 %v2534
    %v2932 = vunpack.c.l.b16 %v2535
    %v2933 = vunpack.c.h.b16 %v2535
    %v2934 = vunpack.c.l.b16 %v2536
    %v2935 = vunpack.c.h.b16 %v2536
    %v2936 = vunpack.c.l.b16 %v2537
    %v2937 = vunpack.c.h.b16 %v2537
    %v2938 = vunpack.c.l.b16 %v2538
    %v2939 = vunpack.c.h.b16 %v2538
    %v2940 = vunpack.c.l.b16 %v2539
    %v2941 = vunpack.c.h.b16 %v2539
    %v2942 = vunpack.c.l.b16 %v2540
    %v2943 = vunpack.c.h.b16 %v2540
    %v2944 = vunpack.c.l.b16 %v2541
    %v2945 = vunpack.c.h.b16 %v2541
    %v2946 = vunpack.c.l.b16 %v2542
    %v2947 = vunpack.c.h.b16 %v2542
    %v2948 = vunpack.c.l.b16 %v2543
    %v2949 = vunpack.c.h.b16 %v2543
    %v2950 = vunpack.c.l.b16 %v2544
    %v2951 = vunpack.c.h.b16 %v2544
    %v2952 = vunpack.c.l.b16 %v2545
    %v2953 = vunpack.c.h.b16 %v2545
    %v2954 = vunpack.c.l.b16 %v2546
    %v2955 = vunpack.c.h.b16 %v2546
    %v2956 = vunpack.c.l.b16 %v2547
    %v2957 = vunpack.c.h.b16 %v2547
    %v2958 = vunpack.c.l.b16 %v2548
    %v2959 = vunpack.c.h.b16 %v2548
    %v2960 = vunpack.c.l.b16 %v2549
    %v2961 = vunpack.c.h.b16 %v2549
    %v2962 = vunpack.c.l.b16 %v2550
    %v2963 = vunpack.c.h.b16 %v2550
    %v2964 = vunpack.c.l.b16 %v2551
    %v2965 = vunpack.c.h.b16 %v2551
    %v2966 = vunpack.c.l.b16 %v2552
    %v2967 = vunpack.c.h.b16 %v2552
    %v2968 = vunpack.c.l.b16 %v2553
    %v2969 = vunpack.c.h.b16 %v2553
    %v2970 = vunpack.c.l.b16 %v2554
    %v2971 = vunpack.c.h.b16 %v2554
    %v2972 = vunpack.c.l.b16 %v2555
    %v2973 = vunpack.c.h.b16 %v2555
    %v2974 = vunpack.c.l.b16 %v2556
    %v2975 = vunpack.c.h.b16 %v2556
    %v2976 = vunpack.c.l.b16 %v2557
    %v2977 = vunpack.c.h.b16 %v2557
    %v2978 = vunpack.c.l.b16 %v2558
    %v2979 = vunpack.c.h.b16 %v2558
    %v2980 = vunpack.c.l.b16 %v2559
    %v2981 = vunpack.c.h.b16 %v2559
    %v2982 = vunpack.c.l.b16 %v2560
    %v2983 = vunpack.c.h.b16 %v2560
    %v2984 = vunpack.c.l.b16 %v2561
    %v2985 = vunpack.c.h.b16 %v2561
    %v2986 = vunpack.c.l.b16 %v2562
    %v2987 = vunpack.c.h.b16 %v2562
    %v2988 = vunpack.c.l.b16 %v2563
    %v2989 = vunpack.c.h.b16 %v2563
    %v2990 = vunpack.c.l.b16 %v2564
    %v2991 = vunpack.c.h.b16 %v2564
    %v2992 = vunpack.c.l.b16 %v2565
    %v2993 = vunpack.c.h.b16 %v2565
    %v2994 = vunpack.c.l.b16 %v2566
    %v2995 = vunpack.c.h.b16 %v2566
    %v2996 = vunpack.c.l.b16 %v2567
    %v2997 = vunpack.c.h.b16 %v2567
    %v2998 = vunpack.c.l.b16 %v2568
    %v2999 = vunpack.c.h.b16 %v2568
    %v3000 = vunpack.c.l.b16 %v2569
    %v3001 = vunpack.c.h.b16 %v2569
    %v3002 = vunpack.c.l.b16 %v2570
    %v3003 = vunpack.c.h.b16 %v2570
    %v3004 = vunpack.c.l.b16 %v2571
    %v3005 = vunpack.c.h.b16 %v2571
    %v3006 = vunpack.c.l.b16 %v2572
    %v3007 = vunpack.c.h.b16 %v2572
    %v3008 = vunpack.c.l.b16 %v2573
    %v3009 = vunpack.c.h.b16 %v2573
    %v3010 = vunpack.c.l.b16 %v2574
    %v3011 = vunpack.c.h.b16 %v2574
    %v3012 = vunpack.c.l.b16 %v2575
    %v3013 = vunpack.c.h.b16 %v2575
    %v3014 = vunpack.c.l.b16 %v2576
    %v3015 = vunpack.c.h.b16 %v2576
    %v3016 = vunpack.c.l.b16 %v2577
    %v3017 = vunpack.c.h.b16 %v2577
    %v3018 = vunpack.c.l.b16 %v2578
    %v3019 = vunpack.c.h.b16 %v2578
    %v3020 = vunpack.c.l.b16 %v2579
    %v3021 = vunpack.c.h.b16 %v2579
    %v3022 = vunpack.c.l.b16 %v2580
    %v3023 = vunpack.c.h.b16 %v2580
    %v3024 = vunpack.c.l.b16 %v2581
    %v3025 = vunpack.c.h.b16 %v2581
    %v3026 = vunpack.c.l.b16 %v2582
    %v3027 = vunpack.c.h.b16 %v2582
    %v3028 = vunpack.c.l.b16 %v2583
    %v3029 = vunpack.c.h.b16 %v2583
    %v3030 = vunpack.c.l.b16 %v2584
    %v3031 = vunpack.c.h.b16 %v2584
    %v3032 = vunpack.c.l.b16 %v2585
    %v3033 = vunpack.c.h.b16 %v2585
    %v3034 = vunpack.c.l.b16 %v2586
    %v3035 = vunpack.c.h.b16 %v2586
    %v3036 = vunpack.c.l.b16 %v2587
    %v3037 = vunpack.c.h.b16 %v2587
    %v3038 = vunpack.c.l.b16 %v2588
    %v3039 = vunpack.c.h.b16 %v2588
    %v3040 = vunpack.c.l.b16 %v2589
    %v3041 = vunpack.c.h.b16 %v2589
    %v3042 = vunpack.c.l.b16 %v2590
    %v3043 = vunpack.c.h.b16 %v2590
    %v3044 = vunpack.c.l.b16 %v2591
    %v3045 = vunpack.c.h.b16 %v2591
    %v3046 = vunpack.c.l.b16 %v2592
    %v3047 = vunpack.c.h.b16 %v2592
    %v3048 = vunpack.c.l.b16 %v2593
    %v3049 = vunpack.c.h.b16 %v2593
    %v3050 = vunpack.c.l.b16 %v2594
    %v3051 = vunpack.c.h.b16 %v2594
    %v3052 = vunpack.c.l.b16 %v2595
    %v3053 = vunpack.c.h.b16 %v2595
    %v3054 = vunpack.c.l.b16 %v2596
    %v3055 = vunpack.c.h.b16 %v2596
    %v3056 = vunpack.c.l.b16 %v2597
    %v3057 = vunpack.c.h.b16 %v2597
    %v3058 = vunpack.c.l.b16 %v2598
    %v3059 = vunpack.c.h.b16 %v2598
    %v3060 = vunpack.c.l.b16 %v2599
    %v3061 = vunpack.c.h.b16 %v2599
    %v3062 = vunpack.c.l.b16 %v2600
    %v3063 = vunpack.c.h.b16 %v2600
    %v3064 = vunpack.c.l.b16 %v2601
    %v3065 = vunpack.c.h.b16 %v2601
    %v3066 = vunpack.c.l.b16 %v2602
    %v3067 = vunpack.c.h.b16 %v2602
    %v3068 = vunpack.c.l.b16 %v2603
    %v3069 = vunpack.c.h.b16 %v2603
    %v3070 = vunpack.c.l.b16 %v2604
    %v3071 = vunpack.c.h.b16 %v2604
    %v3072 = vunpack.c.l.b16 %v2605
    %v3073 = vunpack.c.h.b16 %v2605
    %v3074 = vunpack.c.l.b16 %v2606
    %v3075 = vunpack.c.h.b16 %v2606
    %v3076 = vunpack.c.l.b16 %v2607
    %v3077 = vunpack.c.h.b16 %v2607
    %v3078 = vunpack.c.l.b16 %v2608
    %v3079 = vunpack.c.h.b16 %v2608
    %v3080 = vunpack.c.l.b16 %v2609
    %v3081 = vunpack.c.h.b16 %v2609
    %v3082 = vunpack.c.l.b16 %v2610
    %v3083 = vunpack.c.h.b16 %v2610
    %v3084 = vunpack.c.l.b16 %v2611
    %v3085 = vunpack.c.h.b16 %v2611
    %v3086 = vunpack.c.l.b16 %v2612
    %v3087 = vunpack.c.h.b16 %v2612
    %v3088 = vunpack.c.l.b16 %v2613
    %v3089 = vunpack.c.h.b16 %v2613
    %v3090 = vunpack.c.l.b16 %v2614
    %v3091 = vunpack.c.h.b16 %v2614
    %v3092 = vunpack.c.l.b16 %v2615
    %v3093 = vunpack.c.h.b16 %v2615
    %v3094 = vunpack.c.l.b16 %v2616
    %v3095 = vunpack.c.h.b16 %v2616
    %v3096 = vunpack.c.l.b16 %v2617
    %v3097 = vunpack.c.h.b16 %v2617
    %v3098 = vunpack.c.l.b16 %v2618
    %v3099 = vunpack.c.h.b16 %v2618
    %v3100 = vunpack.c.l.b16 %v2619
    %v3101 = vunpack.c.h.b16 %v2619
    %v3102 = vunpack.c.l.b16 %v2620
    %v3103 = vunpack.c.h.b16 %v2620
    %v3104 = vunpack.c.l.b16 %v2621
    %v3105 = vunpack.c.h.b16 %v2621
    %v3106 = vunpack.c.l.b16 %v2622
    %v3107 = vunpack.c.h.b16 %v2622
    %v3108 = vunpack.c.l.b16 %v2623
    %v3109 = vunpack.c.h.b16 %v2623
    %v3110 = vunpack.c.l.b16 %v2624
    %v3111 = vunpack.c.h.b16 %v2624
    %v3112 = vunpack.c.l.b16 %v2625
    %v3113 = vunpack.c.h.b16 %v2625
    %v3114 = vunpack.c.l.b16 %v2626
    %v3115 = vunpack.c.h.b16 %v2626
    %v3116 = vunpack.c.l.b16 %v2627
    %v3117 = vunpack.c.h.b16 %v2627
    %v3118 = vunpack.c.l.b16 %v2628
    %v3119 = vunpack.c.h.b16 %v2628
    %v3120 = vunpack.c.l.b16 %v2629
    %v3121 = vunpack.c.h.b16 %v2629
    %v3122 = vunpack.c.l.b16 %v2630
    %v3123 = vunpack.c.h.b16 %v2630
    %v3124 = vunpack.c.l.b16 %v2631
    %v3125 = vunpack.c.h.b16 %v2631
    %v3126 = vunpack.c.l.b16 %v2632
    %v3127 = vunpack.c.h.b16 %v2632
    %v3128 = vunpack.c.l.b16 %v2633
    %v3129 = vunpack.c.h.b16 %v2633
    %v3130 = vunpack.c.l.b16 %v2634
    %v3131 = vunpack.c.h.b16 %v2634
    %v3132 = vunpack.c.l.b16 %v2635
    %v3133 = vunpack.c.h.b16 %v2635
    %v3134 = vunpack.c.l.b16 %v2636
    %v3135 = vunpack.c.h.b16 %v2636
    %v3136 = vunpack.c.l.b16 %v2637
    %v3137 = vunpack.c.h.b16 %v2637
    %v3138 = vunpack.c.l.b16 %v2638
    %v3139 = vunpack.c.h.b16 %v2638
    %v3140 = vunpack.c.l.b16 %v2639
    %v3141 = vunpack.c.h.b16 %v2639
    %v3142 = vunpack.c.l.b16 %v2640
    %v3143 = vunpack.c.h.b16 %v2640
    %v3144 = vunpack.c.l.b16 %v2641
    %v3145 = vunpack.c.h.b16 %v2641
    %v3146 = vunpack.c.l.b16 %v2642
    %v3147 = vunpack.c.h.b16 %v2642
    %v3148 = vunpack.c.l.b16 %v2643
    %v3149 = vunpack.c.h.b16 %v2643
    %v3150 = vunpack.c.l.b16 %v2644
    %v3151 = vunpack.c.h.b16 %v2644
    %v3152 = vunpack.c.l.b16 %v2645
    %v3153 = vunpack.c.h.b16 %v2645
    %v3154 = vunpack.c.l.b16 %v2646
    %v3155 = vunpack.c.h.b16 %v2646
    %v3156 = vunpack.c.l.b16 %v2647
    %v3157 = vunpack.c.h.b16 %v2647
    %v3158 = vunpack.c.l.b16 %v2648
    %v3159 = vunpack.c.h.b16 %v2648
    %v3160 = vunpack.c.l.b16 %v2649
    %v3161 = vunpack.c.h.b16 %v2649
    %v3162 = vunpack.c.l.b16 %v2650
    %v3163 = vunpack.c.h.b16 %v2650
    %v3164 = vunpack.c.l.b16 %v2651
    %v3165 = vunpack.c.h.b16 %v2651
    %v3166 = vunpack.c.l.b16 %v2652
    %v3167 = vunpack.c.h.b16 %v2652
    %v3168 = vunpack.c.l.b16 %v2653
    %v3169 = vunpack.c.h.b16 %v2653
    %v3170 = vunpack.c.l.b16 %v2654
    %v3171 = vunpack.c.h.b16 %v2654
    %v3172 = vunpack.c.l.b16 %v2655
    %v3173 = vunpack.c.h.b16 %v2655
    %v3174 = vunpack.c.l.b16 %v2656
    %v3175 = vunpack.c.h.b16 %v2656
    %v3176 = vunpack.c.l.b16 %v2657
    %v3177 = vunpack.c.h.b16 %v2657
    %v3178 = vunpack.c.l.b16 %v2658
    %v3179 = vunpack.c.h.b16 %v2658
    %v3180 = vunpack.c.l.b16 %v2659
    %v3181 = vunpack.c.h.b16 %v2659
    %v3182 = vunpack.c.l.b16 %v2660
    %v3183 = vunpack.c.h.b16 %v2660
    %v3184 = vunpack.c.l.b16 %v2661
    %v3185 = vunpack.c.h.b16 %v2661
    %v3186 = vunpack.c.l.b16 %v2662
    %v3187 = vunpack.c.h.b16 %v2662
    %v3188 = vunpack.c.l.b16 %v2663
    %v3189 = vunpack.c.h.b16 %v2663
    %v3190 = vunpack.c.l.b16 %v2664
    %v3191 = vunpack.c.h.b16 %v2664
    %v3192 = vunpack.c.l.b16 %v2665
    %v3193 = vunpack.c.h.b16 %v2665
    %v3194 = vunpack.c.l.b16 %v2666
    %v3195 = vunpack.c.h.b16 %v2666
    %v3196 = vunpack.c.l.b16 %v2667
    %v3197 = vunpack.c.h.b16 %v2667
    %v3198 = vunpack.c.l.b16 %v2668
    %v3199 = vunpack.c.h.b16 %v2668
    %v3200 = vpack.c.b16 %v2884, %v2880
    %v3201 = vpack.c.b16 %v2885, %v2881
    %v3202 = vpack.c.b16 %v2886, %v2882
    %v3203 = vpack.c.b16 %v2887, %v2883
    %v3204 = vpack.c.b16 %v2892, %v2888
    %v3205 = vpack.c.b16 %v2893, %v2889
    %v3206 = vpack.c.b16 %v2894, %v2890
    %v3207 = vpack.c.b16 %v2895, %v2891
    %v3208 = vpack.c.b16 %v2900, %v2896
    %v3209 = vpack.c.b16 %v2901, %v2897
    %v3210 = vpack.c.b16 %v2902, %v2898
    %v3211 = vpack.c.b16 %v2903, %v2899
    %v3212 = vpack.c.b16 %v2908, %v2904
    %v3213 = vpack.c.b16 %v2909, %v2905
    %v3214 = vpack.c.b16 %v2910, %v2906
    %v3215 = vpack.c.b16 %v2911, %v2907
    %v3216 = vpack.c.b16 %v2916, %v2912
    %v3217 = vpack.c.b16 %v2917, %v2913
    %v3218 = vpack.c.b16 %v2918, %v2914
    %v3219 = vpack.c.b16 %v2919, %v2915
    %v3220 = vpack.c.b16 %v2924, %v2920
    %v3221 = vpack.c.b16 %v2925, %v2921
    %v3222 = vpack.c.b16 %v2926, %v2922
    %v3223 = vpack.c.b16 %v2927, %v2923
    %v3224 = vpack.c.b16 %v2932, %v2928
    %v3225 = vpack.c.b16 %v2933, %v2929
    %v3226 = vpack.c.b16 %v2934, %v2930
    %v3227 = vpack.c.b16 %v2935, %v2931
    %v3228 = vpack.c.b16 %v2940, %v2936
    %v3229 = vpack.c.b16 %v2941, %v2937
    %v3230 = vpack.c.b16 %v2942, %v2938
    %v3231 = vpack.c.b16 %v2943, %v2939
    %v3232 = vpack.c.b16 %v2948, %v2944
    %v3233 = vpack.c.b16 %v2949, %v2945
    %v3234 = vpack.c.b16 %v2950, %v2946
    %v3235 = vpack.c.b16 %v2951, %v2947
    %v3236 = vpack.c.b16 %v2956, %v2952
    %v3237 = vpack.c.b16 %v2957, %v2953
    %v3238 = vpack.c.b16 %v2958, %v2954
    %v3239 = vpack.c.b16 %v2959, %v2955
    %v3240 = vpack.c.b16 %v2964, %v2960
    %v3241 = vpack.c.b16 %v2965, %v2961
    %v3242 = vpack.c.b16 %v2966, %v2962
    %v3243 = vpack.c.b16 %v2967, %v2963
    %v3244 = vpack.c.b16 %v2972, %v2968
    %v3245 = vpack.c.b16 %v2973, %v2969
    %v3246 = vpack.c.b16 %v2974, %v2970
    %v3247 = vpack.c.b16 %v2975, %v2971
    %v3248 = vpack.c.b16 %v2980, %v2976
    %v3249 = vpack.c.b16 %v2981, %v2977
    %v3250 = vpack.c.b16 %v2982, %v2978
    %v3251 = vpack.c.b16 %v2983, %v2979
    %v3252 = vpack.c.b16 %v2988, %v2984
    %v3253 = vpack.c.b16 %v2989, %v2985
    %v3254 = vpack.c.b16 %v2990, %v2986
    %v3255 = vpack.c.b16 %v2991, %v2987
    %v3256 = vpack.c.b16 %v2996, %v2992
    %v3257 = vpack.c.b16 %v2997, %v2993
    %v3258 = vpack.c.b16 %v2998, %v2994
    %v3259 = vpack.c.b16 %v2999, %v2995
    %v3260 = vpack.c.b16 %v3004, %v3000
    %v3261 = vpack.c.b16 %v3005, %v3001
    %v3262 = vpack.c.b16 %v3006, %v3002
    %v3263 = vpack.c.b16 %v3007, %v3003
    %v3264 = vpack.c.b16 %v3012, %v3008
    %v3265 = vpack.c.b16 %v3013, %v3009
    %v3266 = vpack.c.b16 %v3014, %v3010
    %v3267 = vpack.c.b16 %v3015, %v3011
    %v3268 = vpack.c.b16 %v3020, %v3016
    %v3269 = vpack.c.b16 %v3021, %v3017
    %v3270 = vpack.c.b16 %v3022, %v3018
    %v3271 = vpack.c.b16 %v3023, %v3019
    %v3272 = vpack.c.b16 %v3028, %v3024
    %v3273 = vpack.c.b16 %v3029, %v3025
    %v3274 = vpack.c.b16 %v3030, %v3026
    %v3275 = vpack.c.b16 %v3031, %v3027
    %v3276 = vpack.c.b16 %v3036, %v3032
    %v3277 = vpack.c.b16 %v3037, %v3033
    %v3278 = vpack.c.b16 %v3038, %v3034
    %v3279 = vpack.c.b16 %v3039, %v3035
    %v3280 = vpack.c.b16 %v3044, %v3040
    %v3281 = vpack.c.b16 %v3045, %v3041
    %v3282 = vpack.c.b16 %v3046, %v3042
    %v3283 = vpack.c.b16 %v3047, %v3043
    %v3284 = vpack.c.b16 %v3052, %v3048
    %v3285 = vpack.c.b16 %v3053, %v3049
    %v3286 = vpack.c.b16 %v3054, %v3050
    %v3287 = vpack.c.b16 %v3055, %v3051
    %v3288 = vpack.c.b16 %v3060, %v3056
    %v3289 = vpack.c.b16 %v3061, %v3057
    %v3290 = vpack.c.b16 %v3062, %v3058
    %v3291 = vpack.c.b16 %v3063, %v3059
    %v3292 = vpack.c.b16 %v3068, %v3064
    %v3293 = vpack.c.b16 %v3069, %v3065
    %v3294 = vpack.c.b16 %v3070, %v3066
    %v3295 = vpack.c.b16 %v3071, %v3067
    %v3296 = vpack.c.b16 %v3076, %v3072
    %v3297 = vpack.c.b16 %v3077, %v3073
    %v3298 = vpack.c.b16 %v3078, %v3074
    %v3299 = vpack.c.b16 %v3079, %v3075
    %v3300 = vpack.c.b16 %v3084, %v3080
    %v3301 = vpack.c.b16 %v3085, %v3081
    %v3302 = vpack.c.b16 %v3086, %v3082
    %v3303 = vpack.c.b16 %v3087, %v3083
    %v3304 = vpack.c.b16 %v3092, %v3088
    %v3305 = vpack.c.b16 %v3093, %v3089
    %v3306 = vpack.c.b16 %v3094, %v3090
    %v3307 = vpack.c.b16 %v3095, %v3091
    %v3308 = vpack.c.b16 %v3100, %v3096
    %v3309 = vpack.c.b16 %v3101, %v3097
    %v3310 = vpack.c.b16 %v3102, %v3098
    %v3311 = vpack.c.b16 %v3103, %v3099
    %v3312 = vpack.c.b16 %v3108, %v3104
    %v3313 = vpack.c.b16 %v3109, %v3105
    %v3314 = vpack.c.b16 %v3110, %v3106
    %v3315 = vpack.c.b16 %v3111, %v3107
    %v3316 = vpack.c.b16 %v3116, %v3112
    %v3317 = vpack.c.b16 %v3117, %v3113
    %v3318 = vpack.c.b16 %v3118, %v3114
    %v3319 = vpack.c.b16 %v3119, %v3115
    %v3320 = vpack.c.b16 %v3124, %v3120
    %v3321 = vpack.c.b16 %v3125, %v3121
    %v3322 = vpack.c.b16 %v3126, %v3122
    %v3323 = vpack.c.b16 %v3127, %v3123
    %v3324 = vpack.c.b16 %v3132, %v3128
    %v3325 = vpack.c.b16 %v3133, %v3129
    %v3326 = vpack.c.b16 %v3134, %v3130
    %v3327 = vpack.c.b16 %v3135, %v3131
    %v3328 = vpack.c.b16 %v3140, %v3136
    %v3329 = vpack.c.b16 %v3141, %v3137
    %v3330 = vpack.c.b16 %v3142, %v3138
    %v3331 = vpack.c.b16 %v3143, %v3139
    %v3332 = vpack.c.b16 %v3148, %v3144
    %v3333 = vpack.c.b16 %v3149, %v3145
    %v3334 = vpack.c.b16 %v3150, %v3146
    %v3335 = vpack.c.b16 %v3151, %v3147
    %v3336 = vpack.c.b16 %v3156, %v3152
    %v3337 = vpack.c.b16 %v3157, %v3153
    %v3338 = vpack.c.b16 %v3158, %v3154
    %v3339 = vpack.c.b16 %v3159, %v3155
    %v3340 = vpack.c.b16 %v3164, %v3160
    %v3341 = vpack.c.b16 %v3165, %v3161
    %v3342 = vpack.c.b16 %v3166, %v3162
    %v3343 = vpack.c.b16 %v3167, %v3163
    %v3344 = vpack.c.b16 %v3172, %v3168
    %v3345 = vpack.c.b16 %v3173, %v3169
    %v3346 = vpack.c.b16 %v3174, %v3170
    %v3347 = vpack.c.b16 %v3175, %v3171
    %v3348 = vpack.c.b16 %v3180, %v3176
    %v3349 = vpack.c.b16 %v3181, %v3177
    %v3350 = vpack.c.b16 %v3182, %v3178
    %v3351 = vpack.c.b16 %v3183, %v3179
    %v3352 = vpack.c.b16 %v3188, %v3184
    %v3353 = vpack.c.b16 %v3189, %v3185
    %v3354 = vpack.c.b16 %v3190, %v3186
    %v3355 = vpack.c.b16 %v3191, %v3187
    %v3356 = vpack.c.b16 %v3196, %v3192
    %v3357 = vpack.c.b16 %v3197, %v3193
    %v3358 = vpack.c.b16 %v3198, %v3194
    %v3359 = vpack.c.b16 %v3199, %v3195
    %3520 = vmatprep.subr.bf16.mxu0 %v3201
    %3521 = vmatpush1.bf16.msra.mxu0 %v3200
    %3522 = vmatprep.subr.bf16.mxu0 %v3205
    %3523 = vmatpush1.bf16.msra.mxu0 %v3204
    %3524 = vmatprep.subr.bf16.mxu0 %v3209
    %3525 = vmatpush1.bf16.msra.mxu0 %v3208
    %3526 = vmatprep.subr.bf16.mxu0 %v3213
    %3527 = vmatpush1.bf16.msra.mxu0 %v3212
    %3528 = vmatprep.subr.bf16.mxu0 %v3217
    %3529 = vmatpush1.bf16.msra.mxu0 %v3216
    %3530 = vmatprep.subr.bf16.mxu0 %v3221
    %3531 = vmatpush1.bf16.msra.mxu0 %v3220
    %3532 = vmatprep.subr.bf16.mxu0 %v3225
    %3533 = vmatpush1.bf16.msra.mxu0 %v3224
    %3534 = vmatprep.subr.bf16.mxu0 %v3229
    %3535 = vmatpush1.bf16.msra.mxu0 %v3228
    %3536 = vmatprep.subr.bf16.mxu0 %v3233
    %3537 = vmatpush1.bf16.msra.mxu0 %v3232
    %3538 = vmatprep.subr.bf16.mxu0 %v3237
    %3539 = vmatpush1.bf16.msra.mxu0 %v3236
    %3540 = vmatprep.subr.bf16.mxu0 %v3241
    %3541 = vmatpush1.bf16.msra.mxu0 %v3240
    %3542 = vmatprep.subr.bf16.mxu0 %v3245
    %3543 = vmatpush1.bf16.msra.mxu0 %v3244
    %3544 = vmatprep.subr.bf16.mxu0 %v3249
    %3545 = vmatpush1.bf16.msra.mxu0 %v3248
    %3546 = vmatprep.subr.bf16.mxu0 %v3253
    %3547 = vmatpush1.bf16.msra.mxu0 %v3252
    %3548 = vmatprep.subr.bf16.mxu0 %v3257
    %3549 = vmatpush1.bf16.msra.mxu0 %v3256
    %3550 = vmatprep.subr.bf16.mxu0 %v3261
    %3551 = vmatpush1.bf16.msra.mxu0 %v3260
    %3552 = vmatprep.mubr.bf16.mxu0 %v2700
    %3553 = vmatmul.mubr.bf16.gmra.mrb[0].mxu0 %v2697
    %v3554 = vpop.f32.mrb[0].mxu0
    %v3555 = vadd.f32 0.0, %v3554
    %v3556 = vpop.f32.mrb[0].mxu0
    %v3557 = vadd.f32 0.0, %v3556
    %v3558 = vpop.f32.mrb[0].mxu0
    %v3559 = vadd.f32 0.0, %v3558
    %v3560 = vpop.f32.mrb[0].mxu0
    %v3561 = vadd.f32 0.0, %v3560
    %3562 = vmatprep.mubr.bf16.mxu0 %v2699
    %3563 = vmatmul.mubr.bf16.gmra.mrb[0].mxu0 %v2696
    %v3564 = vpop.f32.mrb[0].mxu0
    %v3565 = vadd.f32 0.0, %v3564
    %v3566 = vpop.f32.mrb[0].mxu0
    %v3567 = vadd.f32 0.0, %v3566
    %v3568 = vpop.f32.mrb[0].mxu0
    %v3569 = vadd.f32 0.0, %v3568
    %v3570 = vpop.f32.mrb[0].mxu0
    %v3571 = vadd.f32 0.0, %v3570
    %3572 = vdwg.mxu0
    %3573 = vmatprep.subr.bf16.mxu0 %v3265
    %3574 = vmatpush1.bf16.msra.mxu0 %v3264
    %3575 = vmatprep.subr.bf16.mxu0 %v3269
    %3576 = vmatpush1.bf16.msra.mxu0 %v3268
    %3577 = vmatprep.subr.bf16.mxu0 %v3273
    %3578 = vmatpush1.bf16.msra.mxu0 %v3272
    %3579 = vmatprep.subr.bf16.mxu0 %v3277
    %3580 = vmatpush1.bf16.msra.mxu0 %v3276
    %3581 = vmatprep.subr.bf16.mxu0 %v3281
    %3582 = vmatpush1.bf16.msra.mxu0 %v3280
    %3583 = vmatprep.subr.bf16.mxu0 %v3285
    %3584 = vmatpush1.bf16.msra.mxu0 %v3284
    %3585 = vmatprep.subr.bf16.mxu0 %v3289
    %3586 = vmatpush1.bf16.msra.mxu0 %v3288
    %3587 = vmatprep.subr.bf16.mxu0 %v3293
    %3588 = vmatpush1.bf16.msra.mxu0 %v3292
    %3589 = vmatprep.subr.bf16.mxu0 %v3297
    %3590 = vmatpush1.bf16.msra.mxu0 %v3296
    %3591 = vmatprep.subr.bf16.mxu0 %v3301
    %3592 = vmatpush1.bf16.msra.mxu0 %v3300
    %3593 = vmatprep.subr.bf16.mxu0 %v3305
    %3594 = vmatpush1.bf16.msra.mxu0 %v3304
    %3595 = vmatprep.subr.bf16.mxu0 %v3309
    %3596 = vmatpush1.bf16.msra.mxu0 %v3308
    %3597 = vmatprep.subr.bf16.mxu0 %v3313
    %3598 = vmatpush1.bf16.msra.mxu0 %v3312
    %3599 = vmatprep.subr.bf16.mxu0 %v3317
    %3600 = vmatpush1.bf16.msra.mxu0 %v3316
    %3601 = vmatprep.subr.bf16.mxu0 %v3321
    %3602 = vmatpush1.bf16.msra.mxu0 %v3320
    %3603 = vmatprep.subr.bf16.mxu0 %v3325
    %3604 = vmatpush1.bf16.msra.mxu0 %v3324
    %3605 = vmatprep.mubr.bf16.mxu0 %v2706
    %3606 = vmatmul.mubr.bf16.gmra.mrb[0].mxu0 %v2703
    %v3607 = vpop.f32.mrb[0].mxu0
    %v3608 = vadd.f32 %v3555, %v3607
    %v3609 = vpop.f32.mrb[0].mxu0
    %v3610 = vadd.f32 %v3557, %v3609
    %v3611 = vpop.f32.mrb[0].mxu0
    %v3612 = vadd.f32 %v3559, %v3611
    %v3613 = vpop.f32.mrb[0].mxu0
    %v3614 = vadd.f32 %v3561, %v3613
    %3615 = vmatprep.mubr.bf16.mxu0 %v2705
    %3616 = vmatmul.mubr.bf16.gmra.mrb[0].mxu0 %v2702
    %v3617 = vpop.f32.mrb[0].mxu0
    %v3618 = vadd.f32 %v3565, %v3617
    %v3619 = vpop.f32.mrb[0].mxu0
    %v3620 = vadd.f32 %v3567, %v3619
    %v3621 = vpop.f32.mrb[0].mxu0
    %v3622 = vadd.f32 %v3569, %v3621
    %v3623 = vpop.f32.mrb[0].mxu0
    %v3624 = vadd.f32 %v3571, %v3623
    %3625 = vdwg.mxu0
    %3626 = vmatprep.subr.bf16.mxu0 %v3329
    %3627 = vmatpush1.bf16.msra.mxu0 %v3328
    %3628 = vmatprep.subr.bf16.mxu0 %v3333
    %3629 = vmatpush1.bf16.msra.mxu0 %v3332
    %3630 = vmatprep.subr.bf16.mxu0 %v3337
    %3631 = vmatpush1.bf16.msra.mxu0 %v3336
    %3632 = vmatprep.subr.bf16.mxu0 %v3341
    %3633 = vmatpush1.bf16.msra.mxu0 %v3340
    %3634 = vmatprep.subr.bf16.mxu0 %v3345
    %3635 = vmatpush1.bf16.msra.mxu0 %v3344
    %3636 = vmatprep.subr.bf16.mxu0 %v3349
    %3637 = vmatpush1.bf16.msra.mxu0 %v3348
    %3638 = vmatprep.subr.bf16.mxu0 %v3353
    %3639 = vmatpush1.bf16.msra.mxu0 %v3352
    %3640 = vmatprep.subr.bf16.mxu0 %v3357
    %3641 = vmatpush1.bf16.msra.mxu0 %v3356
    %3642 = vmatprep.subr.bf16.mxu0 0
    %3643 = vmatpush1.bf16.msra.mxu0 0
    %3644 = vmatprep.subr.bf16.mxu0 0
    %3645 = vmatpush1.bf16.msra.mxu0 0
    %3646 = vmatprep.subr.bf16.mxu0 0
    %3647 = vmatpush1.bf16.msra.mxu0 0
    %3648 = vmatprep.subr.bf16.mxu0 0
    %3649 = vmatpush1.bf16.msra.mxu0 0
    %3650 = vmatprep.subr.bf16.mxu0 0
    %3651 = vmatpush1.bf16.msra.mxu0 0
    %3652 = vmatprep.subr.bf16.mxu0 0
    %3653 = vmatpush1.bf16.msra.mxu0 0
    %3654 = vmatprep.subr.bf16.mxu0 0
    %3655 = vmatpush1.bf16.msra.mxu0 0
    %3656 = vmatprep.subr.bf16.mxu0 0
    %3657 = vmatpush1.bf16.msra.mxu0 0
    %3658 = vmatprep.mubr.bf16.mxu0 0
    %3659 = vmatmul.mubr.bf16.gmra.mrb[0].mxu0 %v2709
    %v3660 = vpop.f32.mrb[0].mxu0
    %v3661 = vadd.f32 %v3608, %v3660
    %v3662 = vpop.f32.mrb[0].mxu0
    %v3663 = vadd.f32 %v3610, %v3662
    %v3664 = vpop.f32.mrb[0].mxu0
    %v3665 = vadd.f32 %v3612, %v3664
    %v3666 = vpop.f32.mrb[0].mxu0
    %v3667 = vadd.f32 %v3614, %v3666
    %3668 = vmatprep.mubr.bf16.mxu0 0
    %3669 = vmatmul.mubr.bf16.gmra.mrb[0].mxu0 %v2708
    %v3670 = vpop.f32.mrb[0].mxu0
    %v3671 = vadd.f32 %v3618, %v3670
    %v3672 = vpop.f32.mrb[0].mxu0
    %v3673 = vadd.f32 %v3620, %v3672
    %v3674 = vpop.f32.mrb[0].mxu0
    %v3675 = vadd.f32 %v3622, %v3674
    %v3676 = vpop.f32.mrb[0].mxu0
    %v3677 = vadd.f32 %v3624, %v3676
    %3678 = vdwg.mxu0
    %3679 = vmatprep.subr.bf16.mxu0 %v3203
    %3680 = vmatpush1.bf16.msra.mxu0 %v3202
    %3681 = vmatprep.subr.bf16.mxu0 %v3207
    %3682 = vmatpush1.bf16.msra.mxu0 %v3206
    %3683 = vmatprep.subr.bf16.mxu0 %v3211
    %3684 = vmatpush1.bf16.msra.mxu0 %v3210
    %3685 = vmatprep.subr.bf16.mxu0 %v3215
    %3686 = vmatpush1.bf16.msra.mxu0 %v3214
    %3687 = vmatprep.subr.bf16.mxu0 %v3219
    %3688 = vmatpush1.bf16.msra.mxu0 %v3218
    %3689 = vmatprep.subr.bf16.mxu0 %v3223
    %3690 = vmatpush1.bf16.msra.mxu0 %v3222
    %3691 = vmatprep.subr.bf16.mxu0 %v3227
    %3692 = vmatpush1.bf16.msra.mxu0 %v3226
    %3693 = vmatprep.subr.bf16.mxu0 %v3231
    %3694 = vmatpush1.bf16.msra.mxu0 %v3230
    %3695 = vmatprep.subr.bf16.mxu0 %v3235
    %3696 = vmatpush1.bf16.msra.mxu0 %v3234
    %3697 = vmatprep.subr.bf16.mxu0 %v3239
    %3698 = vmatpush1.bf16.msra.mxu0 %v3238
    %3699 = vmatprep.subr.bf16.mxu0 %v3243
    %3700 = vmatpush1.bf16.msra.mxu0 %v3242
    %3701 = vmatprep.subr.bf16.mxu0 %v3247
    %3702 = vmatpush1.bf16.msra.mxu0 %v3246
    %3703 = vmatprep.subr.bf16.mxu0 %v3251
    %3704 = vmatpush1.bf16.msra.mxu0 %v3250
    %3705 = vmatprep.subr.bf16.mxu0 %v3255
    %3706 = vmatpush1.bf16.msra.mxu0 %v3254
    %3707 = vmatprep.subr.bf16.mxu0 %v3259
    %3708 = vmatpush1.bf16.msra.mxu0 %v3258
    %3709 = vmatprep.subr.bf16.mxu0 %v3263
    %3710 = vmatpush1.bf16.msra.mxu0 %v3262
    %3711 = vmatprep.mubr.bf16.mxu0 %v2700
    %3712 = vmatmul.mubr.bf16.gmra.mrb[0].mxu0 %v2697
    %v3713 = vpop.f32.mrb[0].mxu0
    %v3714 = vadd.f32 0.0, %v3713
    %v3715 = vpop.f32.mrb[0].mxu0
    %v3716 = vadd.f32 0.0, %v3715
    %v3717 = vpop.f32.mrb[0].mxu0
    %v3718 = vadd.f32 0.0, %v3717
    %v3719 = vpop.f32.mrb[0].mxu0
    %v3720 = vadd.f32 0.0, %v3719
    %3721 = vmatprep.mubr.bf16.mxu0 %v2699
    %3722 = vmatmul.mubr.bf16.gmra.mrb[0].mxu0 %v2696
    %v3723 = vpop.f32.mrb[0].mxu0
    %v3724 = vadd.f32 0.0, %v3723
    %v3725 = vpop.f32.mrb[0].mxu0
    %v3726 = vadd.f32 0.0, %v3725
    %v3727 = vpop.f32.mrb[0].mxu0
    %v3728 = vadd.f32 0.0, %v3727
    %v3729 = vpop.f32.mrb[0].mxu0
    %v3730 = vadd.f32 0.0, %v3729
    %3731 = vdwg.mxu0
    %3732 = vmatprep.subr.bf16.mxu0 %v3267
    %3733 = vmatpush1.bf16.msra.mxu0 %v3266
    %3734 = vmatprep.subr.bf16.mxu0 %v3271
    %3735 = vmatpush1.bf16.msra.mxu0 %v3270
    %3736 = vmatprep.subr.bf16.mxu0 %v3275
    %3737 = vmatpush1.bf16.msra.mxu0 %v3274
    %3738 = vmatprep.subr.bf16.mxu0 %v3279
    %3739 = vmatpush1.bf16.msra.mxu0 %v3278
    %3740 = vmatprep.subr.bf16.mxu0 %v3283
    %3741 = vmatpush1.bf16.msra.mxu0 %v3282
    %3742 = vmatprep.subr.bf16.mxu0 %v3287
    %3743 = vmatpush1.bf16.msra.mxu0 %v3286
    %3744 = vmatprep.subr.bf16.mxu0 %v3291
    %3745 = vmatpush1.bf16.msra.mxu0 %v3290
    %3746 = vmatprep.subr.bf16.mxu0 %v3295
    %3747 = vmatpush1.bf16.msra.mxu0 %v3294
    %3748 = vmatprep.subr.bf16.mxu0 %v3299
    %3749 = vmatpush1.bf16.msra.mxu0 %v3298
    %3750 = vmatprep.subr.bf16.mxu0 %v3303
    %3751 = vmatpush1.bf16.msra.mxu0 %v3302
    %3752 = vmatprep.subr.bf16.mxu0 %v3307
    %3753 = vmatpush1.bf16.msra.mxu0 %v3306
    %3754 = vmatprep.subr.bf16.mxu0 %v3311
    %3755 = vmatpush1.bf16.msra.mxu0 %v3310
    %3756 = vmatprep.subr.bf16.mxu0 %v3315
    %3757 = vmatpush1.bf16.msra.mxu0 %v3314
    %3758 = vmatprep.subr.bf16.mxu0 %v3319
    %3759 = vmatpush1.bf16.msra.mxu0 %v3318
    %3760 = vmatprep.subr.bf16.mxu0 %v3323
    %3761 = vmatpush1.bf16.msra.mxu0 %v3322
    %3762 = vmatprep.subr.bf16.mxu0 %v3327
    %3763 = vmatpush1.bf16.msra.mxu0 %v3326
    %3764 = vmatprep.mubr.bf16.mxu0 %v2706
    %3765 = vmatmul.mubr.bf16.gmra.mrb[0].mxu0 %v2703
    %v3766 = vpop.f32.mrb[0].mxu0
    %v3767 = vadd.f32 %v3714, %v3766
    %v3768 = vpop.f32.mrb[0].mxu0
    %v3769 = vadd.f32 %v3716, %v3768
    %v3770 = vpop.f32.mrb[0].mxu0
    %v3771 = vadd.f32 %v3718, %v3770
    %v3772 = vpop.f32.mrb[0].mxu0
    %v3773 = vadd.f32 %v3720, %v3772
    %3774 = vmatprep.mubr.bf16.mxu0 %v2705
    %3775 = vmatmul.mubr.bf16.gmra.mrb[0].mxu0 %v2702
    %v3776 = vpop.f32.mrb[0].mxu0
    %v3777 = vadd.f32 %v3724, %v3776
    %v3778 = vpop.f32.mrb[0].mxu0
    %v3779 = vadd.f32 %v3726, %v3778
    %v3780 = vpop.f32.mrb[0].mxu0
    %v3781 = vadd.f32 %v3728, %v3780
    %v3782 = vpop.f32.mrb[0].mxu0
    %v3783 = vadd.f32 %v3730, %v3782
    %3784 = vdwg.mxu0
    %3785 = vmatprep.subr.bf16.mxu0 %v3331
    %3786 = vmatpush1.bf16.msra.mxu0 %v3330
    %3787 = vmatprep.subr.bf16.mxu0 %v3335
    %3788 = vmatpush1.bf16.msra.mxu0 %v3334
    %3789 = vmatprep.subr.bf16.mxu0 %v3339
    %3790 = vmatpush1.bf16.msra.mxu0 %v3338
    %3791 = vmatprep.subr.bf16.mxu0 %v3343
    %3792 = vmatpush1.bf16.msra.mxu0 %v3342
    %3793 = vmatprep.subr.bf16.mxu0 %v3347
    %3794 = vmatpush1.bf16.msra.mxu0 %v3346
    %3795 = vmatprep.subr.bf16.mxu0 %v3351
    %3796 = vmatpush1.bf16.msra.mxu0 %v3350
    %3797 = vmatprep.subr.bf16.mxu0 %v3355
    %3798 = vmatpush1.bf16.msra.mxu0 %v3354
    %3799 = vmatprep.subr.bf16.mxu0 %v3359
    %3800 = vmatpush1.bf16.msra.mxu0 %v3358
    %3801 = vmatprep.subr.bf16.mxu0 0
    %3802 = vmatpush1.bf16.msra.mxu0 0
    %3803 = vmatprep.subr.bf16.mxu0 0
    %3804 = vmatpush1.bf16.msra.mxu0 0
    %3805 = vmatprep.subr.bf16.mxu0 0
    %3806 = vmatpush1.bf16.msra.mxu0 0
    %3807 = vmatprep.subr.bf16.mxu0 0
    %3808 = vmatpush1.bf16.msra.mxu0 0
    %3809 = vmatprep.subr.bf16.mxu0 0
    %3810 = vmatpush1.bf16.msra.mxu0 0
    %3811 = vmatprep.subr.bf16.mxu0 0
    %3812 = vmatpush1.bf16.msra.mxu0 0
    %3813 = vmatprep.subr.bf16.mxu0 0
    %3814 = vmatpush1.bf16.msra.mxu0 0
    %3815 = vmatprep.subr.bf16.mxu0 0
    %3816 = vmatpush1.bf16.msra.mxu0 0
    %3817 = vmatprep.mubr.bf16.mxu0 0
    %3818 = vmatmul.mubr.bf16.gmra.mrb[0].mxu0 %v2709
    %v3819 = vpop.f32.mrb[0].mxu0
    %v3820 = vadd.f32 %v3767, %v3819
    %v3821 = vpop.f32.mrb[0].mxu0
    %v3822 = vadd.f32 %v3769, %v3821
    %v3823 = vpop.f32.mrb[0].mxu0
    %v3824 = vadd.f32 %v3771, %v3823
    %v3825 = vpop.f32.mrb[0].mxu0
    %v3826 = vadd.f32 %v3773, %v3825
    %3827 = vmatprep.mubr.bf16.mxu0 0
    %3828 = vmatmul.mubr.bf16.gmra.mrb[0].mxu0 %v2708
    %v3829 = vpop.f32.mrb[0].mxu0
    %v3830 = vadd.f32 %v3777, %v3829
    %v3831 = vpop.f32.mrb[0].mxu0
    %v3832 = vadd.f32 %v3779, %v3831
    %v3833 = vpop.f32.mrb[0].mxu0
    %v3834 = vadd.f32 %v3781, %v3833
    %v3835 = vpop.f32.mrb[0].mxu0
    %v3836 = vadd.f32 %v3783, %v3835
    %3837 = vdwg.mxu0
    %v3838 = vadd.f32 %v2486, %v3661
    %v3839 = vadd.f32 %v2487, %v3663
    %v3840 = vadd.f32 %v2488, %v3820
    %v3841 = vadd.f32 %v2489, %v3822
    %v3842 = vadd.f32 %v2490, %v3665
    %v3843 = vadd.f32 %v2491, %v3667
    %v3844 = vadd.f32 %v2492, %v3824
    %v3845 = vadd.f32 %v2493, %v3826
    %v3846 = vadd.f32 %v2494, %v3671
    %v3847 = vadd.f32 %v2495, %v3673
    %v3848 = vadd.f32 %v2496, %v3830
    %v3849 = vadd.f32 %v2497, %v3832
    %v3850 = vadd.f32 %v2498, %v3675
    %v3851 = vadd.f32 %v2499, %v3677
    %v3852 = vadd.f32 %v2500, %v3834
    %v3853 = vadd.f32 %v2501, %v3836
    %v3854 = vld [vmem:[#allocation2] sm:$0xcc]
    %v3855 = vld [vmem:[#allocation2 + $0x8] sm:$0xcc]
    %v3856 = vld [vmem:[#allocation2 + $0x10] sm:$0xc]
    %v3857 = vld [vmem:[#allocation2 + $0x3c] sm:$0xff]
    %v3858 = vld [vmem:[#allocation2 + $0x44] sm:$0xff]
    %v3859 = vld [vmem:[#allocation2 + $0x4c] sm:$0xf]
    %s3860 = scalar_lea.vmem %s3, 2560
    %v3861 = vld [vmem:[%s3860] sm:$0xff]
    %v3862 = vld [vmem:[%s3860 + $0x8] sm:$0xff]
    %v3863 = vld [vmem:[%s3860 + $0x10] sm:$0xff]
    %v3864 = vld [vmem:[%s3860 + $0x18] sm:$0xff]
    %v3865 = vld [vmem:[%s3860 + $0x20] sm:$0xff]
    %v3866 = vld [vmem:[%s3860 + $0x28] sm:$0xff]
    %v3867 = vld [vmem:[%s3860 + $0x30] sm:$0xff]
    %v3868 = vld [vmem:[%s3860 + $0x38] sm:$0xff]
    %v3869 = vld [vmem:[%s3860 + $0x40] sm:$0xff]
    %v3870 = vld [vmem:[%s3860 + $0x48] sm:$0xff]
    %v3871 = vld [vmem:[%s3860 + $0x50] sm:$0xff]
    %v3872 = vld [vmem:[%s3860 + $0x58] sm:$0xff]
    %v3873 = vld [vmem:[%s3860 + $0x60] sm:$0xff]
    %v3874 = vld [vmem:[%s3860 + $0x68] sm:$0xff]
    %v3875 = vld [vmem:[%s3860 + $0x70] sm:$0xff]
    %v3876 = vld [vmem:[%s3860 + $0x78] sm:$0xff]
    %v3877 = vld [vmem:[%s3860 + $0x80] sm:$0xff]
    %v3878 = vld [vmem:[%s3860 + $0x88] sm:$0xff]
    %v3879 = vld [vmem:[%s3860 + $0x90] sm:$0xff]
    %v3880 = vld [vmem:[%s3860 + $0x98] sm:$0xff]
    %v3881 = vld [vmem:[%s3860 + $0xa0] sm:$0xff]
    %v3882 = vld [vmem:[%s3860 + $0xa8] sm:$0xff]
    %v3883 = vld [vmem:[%s3860 + $0xb0] sm:$0xff]
    %v3884 = vld [vmem:[%s3860 + $0xb8] sm:$0xff]
    %v3885 = vld [vmem:[%s3860 + $0xc0] sm:$0xff]
    %v3886 = vld [vmem:[%s3860 + $0xc8] sm:$0xff]
    %v3887 = vld [vmem:[%s3860 + $0xd0] sm:$0xff]
    %v3888 = vld [vmem:[%s3860 + $0xd8] sm:$0xff]
    %v3889 = vld [vmem:[%s3860 + $0xe0] sm:$0xff]
    %v3890 = vld [vmem:[%s3860 + $0xe8] sm:$0xff]
    %v3891 = vld [vmem:[%s3860 + $0xf0] sm:$0xff]
    %v3892 = vld [vmem:[%s3860 + $0xf8] sm:$0xff]
    %v3893 = vld [vmem:[%s3860 + $0x100] sm:$0xff]
    %v3894 = vld [vmem:[%s3860 + $0x108] sm:$0xff]
    %v3895 = vld [vmem:[%s3860 + $0x110] sm:$0xff]
    %v3896 = vld [vmem:[%s3860 + $0x118] sm:$0xff]
    %v3897 = vld [vmem:[%s3860 + $0x120] sm:$0xff]
    %v3898 = vld [vmem:[%s3860 + $0x128] sm:$0xff]
    %v3899 = vld [vmem:[%s3860 + $0x130] sm:$0xff]
    %v3900 = vld [vmem:[%s3860 + $0x138] sm:$0xff]
    %v3901 = vld [vmem:[%s3860 + $0x140] sm:$0xff]
    %v3902 = vld [vmem:[%s3860 + $0x148] sm:$0xff]
    %v3903 = vld [vmem:[%s3860 + $0x150] sm:$0xff]
    %v3904 = vld [vmem:[%s3860 + $0x158] sm:$0xff]
    %v3905 = vld [vmem:[%s3860 + $0x160] sm:$0xff]
    %v3906 = vld [vmem:[%s3860 + $0x168] sm:$0xff]
    %v3907 = vld [vmem:[%s3860 + $0x170] sm:$0xff]
    %v3908 = vld [vmem:[%s3860 + $0x178] sm:$0xff]
    %v3909 = vld [vmem:[%s3860 + $0x180] sm:$0xff]
    %v3910 = vld [vmem:[%s3860 + $0x188] sm:$0xff]
    %v3911 = vld [vmem:[%s3860 + $0x190] sm:$0xff]
    %v3912 = vld [vmem:[%s3860 + $0x198] sm:$0xff]
    %v3913 = vld [vmem:[%s3860 + $0x1a0] sm:$0xff]
    %v3914 = vld [vmem:[%s3860 + $0x1a8] sm:$0xff]
    %v3915 = vld [vmem:[%s3860 + $0x1b0] sm:$0xff]
    %v3916 = vld [vmem:[%s3860 + $0x1b8] sm:$0xff]
    %v3917 = vld [vmem:[%s3860 + $0x1c0] sm:$0xff]
    %v3918 = vld [vmem:[%s3860 + $0x1c8] sm:$0xff]
    %v3919 = vld [vmem:[%s3860 + $0x1d0] sm:$0xff]
    %v3920 = vld [vmem:[%s3860 + $0x1d8] sm:$0xff]
    %v3921 = vld [vmem:[%s3860 + $0x1e0] sm:$0xff]
    %v3922 = vld [vmem:[%s3860 + $0x1e8] sm:$0xff]
    %v3923 = vld [vmem:[%s3860 + $0x1f0] sm:$0xff]
    %v3924 = vld [vmem:[%s3860 + $0x1f8] sm:$0xff]
    %v3925 = vld [vmem:[%s3860 + $0x200] sm:$0xff]
    %v3926 = vld [vmem:[%s3860 + $0x208] sm:$0xff]
    %v3927 = vld [vmem:[%s3860 + $0x210] sm:$0xff]
    %v3928 = vld [vmem:[%s3860 + $0x218] sm:$0xff]
    %v3929 = vld [vmem:[%s3860 + $0x220] sm:$0xff]
    %v3930 = vld [vmem:[%s3860 + $0x228] sm:$0xff]
    %v3931 = vld [vmem:[%s3860 + $0x230] sm:$0xff]
    %v3932 = vld [vmem:[%s3860 + $0x238] sm:$0xff]
    %v3933 = vld [vmem:[%s3860 + $0x240] sm:$0xff]
    %v3934 = vld [vmem:[%s3860 + $0x248] sm:$0xff]
    %v3935 = vld [vmem:[%s3860 + $0x250] sm:$0xff]
    %v3936 = vld [vmem:[%s3860 + $0x258] sm:$0xff]
    %v3937 = vld [vmem:[%s3860 + $0x260] sm:$0xff]
    %v3938 = vld [vmem:[%s3860 + $0x268] sm:$0xff]
    %v3939 = vld [vmem:[%s3860 + $0x270] sm:$0xff]
    %v3940 = vld [vmem:[%s3860 + $0x278] sm:$0xff]
    %v3941 = vld [vmem:[%s3860 + $0x280] sm:$0xff]
    %v3942 = vld [vmem:[%s3860 + $0x288] sm:$0xff]
    %v3943 = vld [vmem:[%s3860 + $0x290] sm:$0xff]
    %v3944 = vld [vmem:[%s3860 + $0x298] sm:$0xff]
    %v3945 = vld [vmem:[%s3860 + $0x2a0] sm:$0xff]
    %v3946 = vld [vmem:[%s3860 + $0x2a8] sm:$0xff]
    %v3947 = vld [vmem:[%s3860 + $0x2b0] sm:$0xff]
    %v3948 = vld [vmem:[%s3860 + $0x2b8] sm:$0xff]
    %v3949 = vld [vmem:[%s3860 + $0x2c0] sm:$0xff]
    %v3950 = vld [vmem:[%s3860 + $0x2c8] sm:$0xff]
    %v3951 = vld [vmem:[%s3860 + $0x2d0] sm:$0xff]
    %v3952 = vld [vmem:[%s3860 + $0x2d8] sm:$0xff]
    %v3953 = vld [vmem:[%s3860 + $0x2e0] sm:$0xff]
    %v3954 = vld [vmem:[%s3860 + $0x2e8] sm:$0xff]
    %v3955 = vld [vmem:[%s3860 + $0x2f0] sm:$0xff]
    %v3956 = vld [vmem:[%s3860 + $0x2f8] sm:$0xff]
    %v3957 = vld [vmem:[%s3860 + $0x300] sm:$0xff]
    %v3958 = vld [vmem:[%s3860 + $0x308] sm:$0xff]
    %v3959 = vld [vmem:[%s3860 + $0x310] sm:$0xff]
    %v3960 = vld [vmem:[%s3860 + $0x318] sm:$0xff]
    %v3961 = vld [vmem:[%s3860 + $0x320] sm:$0xff]
    %v3962 = vld [vmem:[%s3860 + $0x328] sm:$0xff]
    %v3963 = vld [vmem:[%s3860 + $0x330] sm:$0xff]
    %v3964 = vld [vmem:[%s3860 + $0x338] sm:$0xff]
    %v3965 = vld [vmem:[%s3860 + $0x340] sm:$0xff]
    %v3966 = vld [vmem:[%s3860 + $0x348] sm:$0xff]
    %v3967 = vld [vmem:[%s3860 + $0x350] sm:$0xff]
    %v3968 = vld [vmem:[%s3860 + $0x358] sm:$0xff]
    %v3969 = vld [vmem:[%s3860 + $0x360] sm:$0xff]
    %v3970 = vld [vmem:[%s3860 + $0x368] sm:$0xff]
    %v3971 = vld [vmem:[%s3860 + $0x370] sm:$0xff]
    %v3972 = vld [vmem:[%s3860 + $0x378] sm:$0xff]
    %v3973 = vld [vmem:[%s3860 + $0x380] sm:$0xff]
    %v3974 = vld [vmem:[%s3860 + $0x388] sm:$0xff]
    %v3975 = vld [vmem:[%s3860 + $0x390] sm:$0xff]
    %v3976 = vld [vmem:[%s3860 + $0x398] sm:$0xff]
    %v3977 = vld [vmem:[%s3860 + $0x3a0] sm:$0xff]
    %v3978 = vld [vmem:[%s3860 + $0x3a8] sm:$0xff]
    %v3979 = vld [vmem:[%s3860 + $0x3b0] sm:$0xff]
    %v3980 = vld [vmem:[%s3860 + $0x3b8] sm:$0xff]
    %v3981 = vld [vmem:[%s3860 + $0x3c0] sm:$0xff]
    %v3982 = vld [vmem:[%s3860 + $0x3c8] sm:$0xff]
    %v3983 = vld [vmem:[%s3860 + $0x3d0] sm:$0xff]
    %v3984 = vld [vmem:[%s3860 + $0x3d8] sm:$0xff]
    %v3985 = vld [vmem:[%s3860 + $0x3e0] sm:$0xff]
    %v3986 = vld [vmem:[%s3860 + $0x3e8] sm:$0xff]
    %v3987 = vld [vmem:[%s3860 + $0x3f0] sm:$0xff]
    %v3988 = vld [vmem:[%s3860 + $0x3f8] sm:$0xff]
    %v3989 = vld [vmem:[%s3860 + $0x400] sm:$0xff]
    %v3990 = vld [vmem:[%s3860 + $0x408] sm:$0xff]
    %v3991 = vld [vmem:[%s3860 + $0x410] sm:$0xff]
    %v3992 = vld [vmem:[%s3860 + $0x418] sm:$0xff]
    %v3993 = vld [vmem:[%s3860 + $0x420] sm:$0xff]
    %v3994 = vld [vmem:[%s3860 + $0x428] sm:$0xff]
    %v3995 = vld [vmem:[%s3860 + $0x430] sm:$0xff]
    %v3996 = vld [vmem:[%s3860 + $0x438] sm:$0xff]
    %v3997 = vld [vmem:[%s3860 + $0x440] sm:$0xff]
    %v3998 = vld [vmem:[%s3860 + $0x448] sm:$0xff]
    %v3999 = vld [vmem:[%s3860 + $0x450] sm:$0xff]
    %v4000 = vld [vmem:[%s3860 + $0x458] sm:$0xff]
    %v4001 = vld [vmem:[%s3860 + $0x460] sm:$0xff]
    %v4002 = vld [vmem:[%s3860 + $0x468] sm:$0xff]
    %v4003 = vld [vmem:[%s3860 + $0x470] sm:$0xff]
    %v4004 = vld [vmem:[%s3860 + $0x478] sm:$0xff]
    %v4005 = vld [vmem:[%s3860 + $0x480] sm:$0xff]
    %v4006 = vld [vmem:[%s3860 + $0x488] sm:$0xff]
    %v4007 = vld [vmem:[%s3860 + $0x490] sm:$0xff]
    %v4008 = vld [vmem:[%s3860 + $0x498] sm:$0xff]
    %v4009 = vld [vmem:[%s3860 + $0x4a0] sm:$0xff]
    %v4010 = vld [vmem:[%s3860 + $0x4a8] sm:$0xff]
    %v4011 = vld [vmem:[%s3860 + $0x4b0] sm:$0xff]
    %v4012 = vld [vmem:[%s3860 + $0x4b8] sm:$0xff]
    %v4013 = vld [vmem:[%s3860 + $0x4c0] sm:$0xff]
    %v4014 = vld [vmem:[%s3860 + $0x4c8] sm:$0xff]
    %v4015 = vld [vmem:[%s3860 + $0x4d0] sm:$0xff]
    %v4016 = vld [vmem:[%s3860 + $0x4d8] sm:$0xff]
    %v4017 = vld [vmem:[%s3860 + $0x4e0] sm:$0xff]
    %v4018 = vld [vmem:[%s3860 + $0x4e8] sm:$0xff]
    %v4019 = vld [vmem:[%s3860 + $0x4f0] sm:$0xff]
    %v4020 = vld [vmem:[%s3860 + $0x4f8] sm:$0xff]
    %v4027 = vunpack.c.l.b16 %v3854
    %v4028 = vunpack.c.h.b16 %v3854
    %v4029 = vunpack.c.l.b16 %v3855
    %v4030 = vunpack.c.h.b16 %v3855
    %v4031 = vunpack.c.l.b16 %v3856
    %v4032 = vunpack.c.l.b16 %v3857
    %v4033 = vunpack.c.h.b16 %v3857
    %v4034 = vunpack.c.l.b16 %v3858
    %v4035 = vunpack.c.h.b16 %v3858
    %v4036 = vunpack.c.l.b16 %v3859
    %v4037 = vpack.c.b16 %v1333, %v4027
    %v4038 = vpack.c.b16 %v1334, %v4028
    %v4039 = vpack.c.b16 %v1335, %v4029
    %v4040 = vpack.c.b16 %v1336, %v4030
    %v4041 = vpack.c.b16 %v1337, %v4031
    %v4042 = vpack.c.b16 %v4032, %v1338
    %v4043 = vpack.c.b16 %v4033, %v1339
    %v4044 = vpack.c.b16 %v4034, %v1340
    %v4045 = vpack.c.b16 %v4035, %v1341
    %v4046 = vpack.c.b16 %v4036, %v1342
    %v4047 = vrot.slane %v4037, 2
    %v4048 = vrot.slane %v4042, 2
    %v4049 = vsel %vm833, %v4047, %v4048
    %v4050 = vrot.slane %v4038, 2
    %v4051 = vrot.slane %v4043, 2
    %v4052 = vsel %vm833, %v4050, %v4051
    %v4053 = vrot.slane %v4039, 2
    %v4054 = vrot.slane %v4044, 2
    %v4055 = vsel %vm833, %v4053, %v4054
    %v4056 = vrot.slane %v4040, 2
    %v4057 = vrot.slane %v4045, 2
    %v4058 = vsel %vm833, %v4056, %v4057
    %v4059 = vrot.slane %v4041, 2
    %v4060 = vrot.slane %v4046, 2
    %v4061 = vsel %vm833, %v4059, %v4060
    %v4232 = vunpack.c.l.b16 %v3861
    %v4233 = vunpack.c.h.b16 %v3861
    %v4234 = vunpack.c.l.b16 %v3862
    %v4235 = vunpack.c.h.b16 %v3862
    %v4236 = vunpack.c.l.b16 %v3863
    %v4237 = vunpack.c.h.b16 %v3863
    %v4238 = vunpack.c.l.b16 %v3864
    %v4239 = vunpack.c.h.b16 %v3864
    %v4240 = vunpack.c.l.b16 %v3865
    %v4241 = vunpack.c.h.b16 %v3865
    %v4242 = vunpack.c.l.b16 %v3866
    %v4243 = vunpack.c.h.b16 %v3866
    %v4244 = vunpack.c.l.b16 %v3867
    %v4245 = vunpack.c.h.b16 %v3867
    %v4246 = vunpack.c.l.b16 %v3868
    %v4247 = vunpack.c.h.b16 %v3868
    %v4248 = vunpack.c.l.b16 %v3869
    %v4249 = vunpack.c.h.b16 %v3869
    %v4250 = vunpack.c.l.b16 %v3870
    %v4251 = vunpack.c.h.b16 %v3870
    %v4252 = vunpack.c.l.b16 %v3871
    %v4253 = vunpack.c.h.b16 %v3871
    %v4254 = vunpack.c.l.b16 %v3872
    %v4255 = vunpack.c.h.b16 %v3872
    %v4256 = vunpack.c.l.b16 %v3873
    %v4257 = vunpack.c.h.b16 %v3873
    %v4258 = vunpack.c.l.b16 %v3874
    %v4259 = vunpack.c.h.b16 %v3874
    %v4260 = vunpack.c.l.b16 %v3875
    %v4261 = vunpack.c.h.b16 %v3875
    %v4262 = vunpack.c.l.b16 %v3876
    %v4263 = vunpack.c.h.b16 %v3876
    %v4264 = vunpack.c.l.b16 %v3877
    %v4265 = vunpack.c.h.b16 %v3877
    %v4266 = vunpack.c.l.b16 %v3878
    %v4267 = vunpack.c.h.b16 %v3878
    %v4268 = vunpack.c.l.b16 %v3879
    %v4269 = vunpack.c.h.b16 %v3879
    %v4270 = vunpack.c.l.b16 %v3880
    %v4271 = vunpack.c.h.b16 %v3880
    %v4272 = vunpack.c.l.b16 %v3881
    %v4273 = vunpack.c.h.b16 %v3881
    %v4274 = vunpack.c.l.b16 %v3882
    %v4275 = vunpack.c.h.b16 %v3882
    %v4276 = vunpack.c.l.b16 %v3883
    %v4277 = vunpack.c.h.b16 %v3883
    %v4278 = vunpack.c.l.b16 %v3884
    %v4279 = vunpack.c.h.b16 %v3884
    %v4280 = vunpack.c.l.b16 %v3885
    %v4281 = vunpack.c.h.b16 %v3885
    %v4282 = vunpack.c.l.b16 %v3886
    %v4283 = vunpack.c.h.b16 %v3886
    %v4284 = vunpack.c.l.b16 %v3887
    %v4285 = vunpack.c.h.b16 %v3887
    %v4286 = vunpack.c.l.b16 %v3888
    %v4287 = vunpack.c.h.b16 %v3888
    %v4288 = vunpack.c.l.b16 %v3889
    %v4289 = vunpack.c.h.b16 %v3889
    %v4290 = vunpack.c.l.b16 %v3890
    %v4291 = vunpack.c.h.b16 %v3890
    %v4292 = vunpack.c.l.b16 %v3891
    %v4293 = vunpack.c.h.b16 %v3891
    %v4294 = vunpack.c.l.b16 %v3892
    %v4295 = vunpack.c.h.b16 %v3892
    %v4296 = vunpack.c.l.b16 %v3893
    %v4297 = vunpack.c.h.b16 %v3893
    %v4298 = vunpack.c.l.b16 %v3894
    %v4299 = vunpack.c.h.b16 %v3894
    %v4300 = vunpack.c.l.b16 %v3895
    %v4301 = vunpack.c.h.b16 %v3895
    %v4302 = vunpack.c.l.b16 %v3896
    %v4303 = vunpack.c.h.b16 %v3896
    %v4304 = vunpack.c.l.b16 %v3897
    %v4305 = vunpack.c.h.b16 %v3897
    %v4306 = vunpack.c.l.b16 %v3898
    %v4307 = vunpack.c.h.b16 %v3898
    %v4308 = vunpack.c.l.b16 %v3899
    %v4309 = vunpack.c.h.b16 %v3899
    %v4310 = vunpack.c.l.b16 %v3900
    %v4311 = vunpack.c.h.b16 %v3900
    %v4312 = vunpack.c.l.b16 %v3901
    %v4313 = vunpack.c.h.b16 %v3901
    %v4314 = vunpack.c.l.b16 %v3902
    %v4315 = vunpack.c.h.b16 %v3902
    %v4316 = vunpack.c.l.b16 %v3903
    %v4317 = vunpack.c.h.b16 %v3903
    %v4318 = vunpack.c.l.b16 %v3904
    %v4319 = vunpack.c.h.b16 %v3904
    %v4320 = vunpack.c.l.b16 %v3905
    %v4321 = vunpack.c.h.b16 %v3905
    %v4322 = vunpack.c.l.b16 %v3906
    %v4323 = vunpack.c.h.b16 %v3906
    %v4324 = vunpack.c.l.b16 %v3907
    %v4325 = vunpack.c.h.b16 %v3907
    %v4326 = vunpack.c.l.b16 %v3908
    %v4327 = vunpack.c.h.b16 %v3908
    %v4328 = vunpack.c.l.b16 %v3909
    %v4329 = vunpack.c.h.b16 %v3909
    %v4330 = vunpack.c.l.b16 %v3910
    %v4331 = vunpack.c.h.b16 %v3910
    %v4332 = vunpack.c.l.b16 %v3911
    %v4333 = vunpack.c.h.b16 %v3911
    %v4334 = vunpack.c.l.b16 %v3912
    %v4335 = vunpack.c.h.b16 %v3912
    %v4336 = vunpack.c.l.b16 %v3913
    %v4337 = vunpack.c.h.b16 %v3913
    %v4338 = vunpack.c.l.b16 %v3914
    %v4339 = vunpack.c.h.b16 %v3914
    %v4340 = vunpack.c.l.b16 %v3915
    %v4341 = vunpack.c.h.b16 %v3915
    %v4342 = vunpack.c.l.b16 %v3916
    %v4343 = vunpack.c.h.b16 %v3916
    %v4344 = vunpack.c.l.b16 %v3917
    %v4345 = vunpack.c.h.b16 %v3917
    %v4346 = vunpack.c.l.b16 %v3918
    %v4347 = vunpack.c.h.b16 %v3918
    %v4348 = vunpack.c.l.b16 %v3919
    %v4349 = vunpack.c.h.b16 %v3919
    %v4350 = vunpack.c.l.b16 %v3920
    %v4351 = vunpack.c.h.b16 %v3920
    %v4352 = vunpack.c.l.b16 %v3921
    %v4353 = vunpack.c.h.b16 %v3921
    %v4354 = vunpack.c.l.b16 %v3922
    %v4355 = vunpack.c.h.b16 %v3922
    %v4356 = vunpack.c.l.b16 %v3923
    %v4357 = vunpack.c.h.b16 %v3923
    %v4358 = vunpack.c.l.b16 %v3924
    %v4359 = vunpack.c.h.b16 %v3924
    %v4360 = vunpack.c.l.b16 %v3925
    %v4361 = vunpack.c.h.b16 %v3925
    %v4362 = vunpack.c.l.b16 %v3926
    %v4363 = vunpack.c.h.b16 %v3926
    %v4364 = vunpack.c.l.b16 %v3927
    %v4365 = vunpack.c.h.b16 %v3927
    %v4366 = vunpack.c.l.b16 %v3928
    %v4367 = vunpack.c.h.b16 %v3928
    %v4368 = vunpack.c.l.b16 %v3929
    %v4369 = vunpack.c.h.b16 %v3929
    %v4370 = vunpack.c.l.b16 %v3930
    %v4371 = vunpack.c.h.b16 %v3930
    %v4372 = vunpack.c.l.b16 %v3931
    %v4373 = vunpack.c.h.b16 %v3931
    %v4374 = vunpack.c.l.b16 %v3932
    %v4375 = vunpack.c.h.b16 %v3932
    %v4376 = vunpack.c.l.b16 %v3933
    %v4377 = vunpack.c.h.b16 %v3933
    %v4378 = vunpack.c.l.b16 %v3934
    %v4379 = vunpack.c.h.b16 %v3934
    %v4380 = vunpack.c.l.b16 %v3935
    %v4381 = vunpack.c.h.b16 %v3935
    %v4382 = vunpack.c.l.b16 %v3936
    %v4383 = vunpack.c.h.b16 %v3936
    %v4384 = vunpack.c.l.b16 %v3937
    %v4385 = vunpack.c.h.b16 %v3937
    %v4386 = vunpack.c.l.b16 %v3938
    %v4387 = vunpack.c.h.b16 %v3938
    %v4388 = vunpack.c.l.b16 %v3939
    %v4389 = vunpack.c.h.b16 %v3939
    %v4390 = vunpack.c.l.b16 %v3940
    %v4391 = vunpack.c.h.b16 %v3940
    %v4392 = vunpack.c.l.b16 %v3941
    %v4393 = vunpack.c.h.b16 %v3941
    %v4394 = vunpack.c.l.b16 %v3942
    %v4395 = vunpack.c.h.b16 %v3942
    %v4396 = vunpack.c.l.b16 %v3943
    %v4397 = vunpack.c.h.b16 %v3943
    %v4398 = vunpack.c.l.b16 %v3944
    %v4399 = vunpack.c.h.b16 %v3944
    %v4400 = vunpack.c.l.b16 %v3945
    %v4401 = vunpack.c.h.b16 %v3945
    %v4402 = vunpack.c.l.b16 %v3946
    %v4403 = vunpack.c.h.b16 %v3946
    %v4404 = vunpack.c.l.b16 %v3947
    %v4405 = vunpack.c.h.b16 %v3947
    %v4406 = vunpack.c.l.b16 %v3948
    %v4407 = vunpack.c.h.b16 %v3948
    %v4408 = vunpack.c.l.b16 %v3949
    %v4409 = vunpack.c.h.b16 %v3949
    %v4410 = vunpack.c.l.b16 %v3950
    %v4411 = vunpack.c.h.b16 %v3950
    %v4412 = vunpack.c.l.b16 %v3951
    %v4413 = vunpack.c.h.b16 %v3951
    %v4414 = vunpack.c.l.b16 %v3952
    %v4415 = vunpack.c.h.b16 %v3952
    %v4416 = vunpack.c.l.b16 %v3953
    %v4417 = vunpack.c.h.b16 %v3953
    %v4418 = vunpack.c.l.b16 %v3954
    %v4419 = vunpack.c.h.b16 %v3954
    %v4420 = vunpack.c.l.b16 %v3955
    %v4421 = vunpack.c.h.b16 %v3955
    %v4422 = vunpack.c.l.b16 %v3956
    %v4423 = vunpack.c.h.b16 %v3956
    %v4424 = vunpack.c.l.b16 %v3957
    %v4425 = vunpack.c.h.b16 %v3957
    %v4426 = vunpack.c.l.b16 %v3958
    %v4427 = vunpack.c.h.b16 %v3958
    %v4428 = vunpack.c.l.b16 %v3959
    %v4429 = vunpack.c.h.b16 %v3959
    %v4430 = vunpack.c.l.b16 %v3960
    %v4431 = vunpack.c.h.b16 %v3960
    %v4432 = vunpack.c.l.b16 %v3961
    %v4433 = vunpack.c.h.b16 %v3961
    %v4434 = vunpack.c.l.b16 %v3962
    %v4435 = vunpack.c.h.b16 %v3962
    %v4436 = vunpack.c.l.b16 %v3963
    %v4437 = vunpack.c.h.b16 %v3963
    %v4438 = vunpack.c.l.b16 %v3964
    %v4439 = vunpack.c.h.b16 %v3964
    %v4440 = vunpack.c.l.b16 %v3965
    %v4441 = vunpack.c.h.b16 %v3965
    %v4442 = vunpack.c.l.b16 %v3966
    %v4443 = vunpack.c.h.b16 %v3966
    %v4444 = vunpack.c.l.b16 %v3967
    %v4445 = vunpack.c.h.b16 %v3967
    %v4446 = vunpack.c.l.b16 %v3968
    %v4447 = vunpack.c.h.b16 %v3968
    %v4448 = vunpack.c.l.b16 %v3969
    %v4449 = vunpack.c.h.b16 %v3969
    %v4450 = vunpack.c.l.b16 %v3970
    %v4451 = vunpack.c.h.b16 %v3970
    %v4452 = vunpack.c.l.b16 %v3971
    %v4453 = vunpack.c.h.b16 %v3971
    %v4454 = vunpack.c.l.b16 %v3972
    %v4455 = vunpack.c.h.b16 %v3972
    %v4456 = vunpack.c.l.b16 %v3973
    %v4457 = vunpack.c.h.b16 %v3973
    %v4458 = vunpack.c.l.b16 %v3974
    %v4459 = vunpack.c.h.b16 %v3974
    %v4460 = vunpack.c.l.b16 %v3975
    %v4461 = vunpack.c.h.b16 %v3975
    %v4462 = vunpack.c.l.b16 %v3976
    %v4463 = vunpack.c.h.b16 %v3976
    %v4464 = vunpack.c.l.b16 %v3977
    %v4465 = vunpack.c.h.b16 %v3977
    %v4466 = vunpack.c.l.b16 %v3978
    %v4467 = vunpack.c.h.b16 %v3978
    %v4468 = vunpack.c.l.b16 %v3979
    %v4469 = vunpack.c.h.b16 %v3979
    %v4470 = vunpack.c.l.b16 %v3980
    %v4471 = vunpack.c.h.b16 %v3980
    %v4472 = vunpack.c.l.b16 %v3981
    %v4473 = vunpack.c.h.b16 %v3981
    %v4474 = vunpack.c.l.b16 %v3982
    %v4475 = vunpack.c.h.b16 %v3982
    %v4476 = vunpack.c.l.b16 %v3983
    %v4477 = vunpack.c.h.b16 %v3983
    %v4478 = vunpack.c.l.b16 %v3984
    %v4479 = vunpack.c.h.b16 %v3984
    %v4480 = vunpack.c.l.b16 %v3985
    %v4481 = vunpack.c.h.b16 %v3985
    %v4482 = vunpack.c.l.b16 %v3986
    %v4483 = vunpack.c.h.b16 %v3986
    %v4484 = vunpack.c.l.b16 %v3987
    %v4485 = vunpack.c.h.b16 %v3987
    %v4486 = vunpack.c.l.b16 %v3988
    %v4487 = vunpack.c.h.b16 %v3988
    %v4488 = vunpack.c.l.b16 %v3989
    %v4489 = vunpack.c.h.b16 %v3989
    %v4490 = vunpack.c.l.b16 %v3990
    %v4491 = vunpack.c.h.b16 %v3990
    %v4492 = vunpack.c.l.b16 %v3991
    %v4493 = vunpack.c.h.b16 %v3991
    %v4494 = vunpack.c.l.b16 %v3992
    %v4495 = vunpack.c.h.b16 %v3992
    %v4496 = vunpack.c.l.b16 %v3993
    %v4497 = vunpack.c.h.b16 %v3993
    %v4498 = vunpack.c.l.b16 %v3994
    %v4499 = vunpack.c.h.b16 %v3994
    %v4500 = vunpack.c.l.b16 %v3995
    %v4501 = vunpack.c.h.b16 %v3995
    %v4502 = vunpack.c.l.b16 %v3996
    %v4503 = vunpack.c.h.b16 %v3996
    %v4504 = vunpack.c.l.b16 %v3997
    %v4505 = vunpack.c.h.b16 %v3997
    %v4506 = vunpack.c.l.b16 %v3998
    %v4507 = vunpack.c.h.b16 %v3998
    %v4508 = vunpack.c.l.b16 %v3999
    %v4509 = vunpack.c.h.b16 %v3999
    %v4510 = vunpack.c.l.b16 %v4000
    %v4511 = vunpack.c.h.b16 %v4000
    %v4512 = vunpack.c.l.b16 %v4001
    %v4513 = vunpack.c.h.b16 %v4001
    %v4514 = vunpack.c.l.b16 %v4002
    %v4515 = vunpack.c.h.b16 %v4002
    %v4516 = vunpack.c.l.b16 %v4003
    %v4517 = vunpack.c.h.b16 %v4003
    %v4518 = vunpack.c.l.b16 %v4004
    %v4519 = vunpack.c.h.b16 %v4004
    %v4520 = vunpack.c.l.b16 %v4005
    %v4521 = vunpack.c.h.b16 %v4005
    %v4522 = vunpack.c.l.b16 %v4006
    %v4523 = vunpack.c.h.b16 %v4006
    %v4524 = vunpack.c.l.b16 %v4007
    %v4525 = vunpack.c.h.b16 %v4007
    %v4526 = vunpack.c.l.b16 %v4008
    %v4527 = vunpack.c.h.b16 %v4008
    %v4528 = vunpack.c.l.b16 %v4009
    %v4529 = vunpack.c.h.b16 %v4009
    %v4530 = vunpack.c.l.b16 %v4010
    %v4531 = vunpack.c.h.b16 %v4010
    %v4532 = vunpack.c.l.b16 %v4011
    %v4533 = vunpack.c.h.b16 %v4011
    %v4534 = vunpack.c.l.b16 %v4012
    %v4535 = vunpack.c.h.b16 %v4012
    %v4536 = vunpack.c.l.b16 %v4013
    %v4537 = vunpack.c.h.b16 %v4013
    %v4538 = vunpack.c.l.b16 %v4014
    %v4539 = vunpack.c.h.b16 %v4014
    %v4540 = vunpack.c.l.b16 %v4015
    %v4541 = vunpack.c.h.b16 %v4015
    %v4542 = vunpack.c.l.b16 %v4016
    %v4543 = vunpack.c.h.b16 %v4016
    %v4544 = vunpack.c.l.b16 %v4017
    %v4545 = vunpack.c.h.b16 %v4017
    %v4546 = vunpack.c.l.b16 %v4018
    %v4547 = vunpack.c.h.b16 %v4018
    %v4548 = vunpack.c.l.b16 %v4019
    %v4549 = vunpack.c.h.b16 %v4019
    %v4550 = vunpack.c.l.b16 %v4020
    %v4551 = vunpack.c.h.b16 %v4020
    %v4552 = vpack.c.b16 %v4236, %v4232
    %v4553 = vpack.c.b16 %v4237, %v4233
    %v4554 = vpack.c.b16 %v4238, %v4234
    %v4555 = vpack.c.b16 %v4239, %v4235
    %v4556 = vpack.c.b16 %v4244, %v4240
    %v4557 = vpack.c.b16 %v4245, %v4241
    %v4558 = vpack.c.b16 %v4246, %v4242
    %v4559 = vpack.c.b16 %v4247, %v4243
    %v4560 = vpack.c.b16 %v4252, %v4248
    %v4561 = vpack.c.b16 %v4253, %v4249
    %v4562 = vpack.c.b16 %v4254, %v4250
    %v4563 = vpack.c.b16 %v4255, %v4251
    %v4564 = vpack.c.b16 %v4260, %v4256
    %v4565 = vpack.c.b16 %v4261, %v4257
    %v4566 = vpack.c.b16 %v4262, %v4258
    %v4567 = vpack.c.b16 %v4263, %v4259
    %v4568 = vpack.c.b16 %v4268, %v4264
    %v4569 = vpack.c.b16 %v4269, %v4265
    %v4570 = vpack.c.b16 %v4270, %v4266
    %v4571 = vpack.c.b16 %v4271, %v4267
    %v4572 = vpack.c.b16 %v4276, %v4272
    %v4573 = vpack.c.b16 %v4277, %v4273
    %v4574 = vpack.c.b16 %v4278, %v4274
    %v4575 = vpack.c.b16 %v4279, %v4275
    %v4576 = vpack.c.b16 %v4284, %v4280
    %v4577 = vpack.c.b16 %v4285, %v4281
    %v4578 = vpack.c.b16 %v4286, %v4282
    %v4579 = vpack.c.b16 %v4287, %v4283
    %v4580 = vpack.c.b16 %v4292, %v4288
    %v4581 = vpack.c.b16 %v4293, %v4289
    %v4582 = vpack.c.b16 %v4294, %v4290
    %v4583 = vpack.c.b16 %v4295, %v4291
    %v4584 = vpack.c.b16 %v4300, %v4296
    %v4585 = vpack.c.b16 %v4301, %v4297
    %v4586 = vpack.c.b16 %v4302, %v4298
    %v4587 = vpack.c.b16 %v4303, %v4299
    %v4588 = vpack.c.b16 %v4308, %v4304
    %v4589 = vpack.c.b16 %v4309, %v4305
    %v4590 = vpack.c.b16 %v4310, %v4306
    %v4591 = vpack.c.b16 %v4311, %v4307
    %v4592 = vpack.c.b16 %v4316, %v4312
    %v4593 = vpack.c.b16 %v4317, %v4313
    %v4594 = vpack.c.b16 %v4318, %v4314
    %v4595 = vpack.c.b16 %v4319, %v4315
    %v4596 = vpack.c.b16 %v4324, %v4320
    %v4597 = vpack.c.b16 %v4325, %v4321
    %v4598 = vpack.c.b16 %v4326, %v4322
    %v4599 = vpack.c.b16 %v4327, %v4323
    %v4600 = vpack.c.b16 %v4332, %v4328
    %v4601 = vpack.c.b16 %v4333, %v4329
    %v4602 = vpack.c.b16 %v4334, %v4330
    %v4603 = vpack.c.b16 %v4335, %v4331
    %v4604 = vpack.c.b16 %v4340, %v4336
    %v4605 = vpack.c.b16 %v4341, %v4337
    %v4606 = vpack.c.b16 %v4342, %v4338
    %v4607 = vpack.c.b16 %v4343, %v4339
    %v4608 = vpack.c.b16 %v4348, %v4344
    %v4609 = vpack.c.b16 %v4349, %v4345
    %v4610 = vpack.c.b16 %v4350, %v4346
    %v4611 = vpack.c.b16 %v4351, %v4347
    %v4612 = vpack.c.b16 %v4356, %v4352
    %v4613 = vpack.c.b16 %v4357, %v4353
    %v4614 = vpack.c.b16 %v4358, %v4354
    %v4615 = vpack.c.b16 %v4359, %v4355
    %v4616 = vpack.c.b16 %v4364, %v4360
    %v4617 = vpack.c.b16 %v4365, %v4361
    %v4618 = vpack.c.b16 %v4366, %v4362
    %v4619 = vpack.c.b16 %v4367, %v4363
    %v4620 = vpack.c.b16 %v4372, %v4368
    %v4621 = vpack.c.b16 %v4373, %v4369
    %v4622 = vpack.c.b16 %v4374, %v4370
    %v4623 = vpack.c.b16 %v4375, %v4371
    %v4624 = vpack.c.b16 %v4380, %v4376
    %v4625 = vpack.c.b16 %v4381, %v4377
    %v4626 = vpack.c.b16 %v4382, %v4378
    %v4627 = vpack.c.b16 %v4383, %v4379
    %v4628 = vpack.c.b16 %v4388, %v4384
    %v4629 = vpack.c.b16 %v4389, %v4385
    %v4630 = vpack.c.b16 %v4390, %v4386
    %v4631 = vpack.c.b16 %v4391, %v4387
    %v4632 = vpack.c.b16 %v4396, %v4392
    %v4633 = vpack.c.b16 %v4397, %v4393
    %v4634 = vpack.c.b16 %v4398, %v4394
    %v4635 = vpack.c.b16 %v4399, %v4395
    %v4636 = vpack.c.b16 %v4404, %v4400
    %v4637 = vpack.c.b16 %v4405, %v4401
    %v4638 = vpack.c.b16 %v4406, %v4402
    %v4639 = vpack.c.b16 %v4407, %v4403
    %v4640 = vpack.c.b16 %v4412, %v4408
    %v4641 = vpack.c.b16 %v4413, %v4409
    %v4642 = vpack.c.b16 %v4414, %v4410
    %v4643 = vpack.c.b16 %v4415, %v4411
    %v4644 = vpack.c.b16 %v4420, %v4416
    %v4645 = vpack.c.b16 %v4421, %v4417
    %v4646 = vpack.c.b16 %v4422, %v4418
    %v4647 = vpack.c.b16 %v4423, %v4419
    %v4648 = vpack.c.b16 %v4428, %v4424
    %v4649 = vpack.c.b16 %v4429, %v4425
    %v4650 = vpack.c.b16 %v4430, %v4426
    %v4651 = vpack.c.b16 %v4431, %v4427
    %v4652 = vpack.c.b16 %v4436, %v4432
    %v4653 = vpack.c.b16 %v4437, %v4433
    %v4654 = vpack.c.b16 %v4438, %v4434
    %v4655 = vpack.c.b16 %v4439, %v4435
    %v4656 = vpack.c.b16 %v4444, %v4440
    %v4657 = vpack.c.b16 %v4445, %v4441
    %v4658 = vpack.c.b16 %v4446, %v4442
    %v4659 = vpack.c.b16 %v4447, %v4443
    %v4660 = vpack.c.b16 %v4452, %v4448
    %v4661 = vpack.c.b16 %v4453, %v4449
    %v4662 = vpack.c.b16 %v4454, %v4450
    %v4663 = vpack.c.b16 %v4455, %v4451
    %v4664 = vpack.c.b16 %v4460, %v4456
    %v4665 = vpack.c.b16 %v4461, %v4457
    %v4666 = vpack.c.b16 %v4462, %v4458
    %v4667 = vpack.c.b16 %v4463, %v4459
    %v4668 = vpack.c.b16 %v4468, %v4464
    %v4669 = vpack.c.b16 %v4469, %v4465
    %v4670 = vpack.c.b16 %v4470, %v4466
    %v4671 = vpack.c.b16 %v4471, %v4467
    %v4672 = vpack.c.b16 %v4476, %v4472
    %v4673 = vpack.c.b16 %v4477, %v4473
    %v4674 = vpack.c.b16 %v4478, %v4474
    %v4675 = vpack.c.b16 %v4479, %v4475
    %v4676 = vpack.c.b16 %v4484, %v4480
    %v4677 = vpack.c.b16 %v4485, %v4481
    %v4678 = vpack.c.b16 %v4486, %v4482
    %v4679 = vpack.c.b16 %v4487, %v4483
    %v4680 = vpack.c.b16 %v4492, %v4488
    %v4681 = vpack.c.b16 %v4493, %v4489
    %v4682 = vpack.c.b16 %v4494, %v4490
    %v4683 = vpack.c.b16 %v4495, %v4491
    %v4684 = vpack.c.b16 %v4500, %v4496
    %v4685 = vpack.c.b16 %v4501, %v4497
    %v4686 = vpack.c.b16 %v4502, %v4498
    %v4687 = vpack.c.b16 %v4503, %v4499
    %v4688 = vpack.c.b16 %v4508, %v4504
    %v4689 = vpack.c.b16 %v4509, %v4505
    %v4690 = vpack.c.b16 %v4510, %v4506
    %v4691 = vpack.c.b16 %v4511, %v4507
    %v4692 = vpack.c.b16 %v4516, %v4512
    %v4693 = vpack.c.b16 %v4517, %v4513
    %v4694 = vpack.c.b16 %v4518, %v4514
    %v4695 = vpack.c.b16 %v4519, %v4515
    %v4696 = vpack.c.b16 %v4524, %v4520
    %v4697 = vpack.c.b16 %v4525, %v4521
    %v4698 = vpack.c.b16 %v4526, %v4522
    %v4699 = vpack.c.b16 %v4527, %v4523
    %v4700 = vpack.c.b16 %v4532, %v4528
    %v4701 = vpack.c.b16 %v4533, %v4529
    %v4702 = vpack.c.b16 %v4534, %v4530
    %v4703 = vpack.c.b16 %v4535, %v4531
    %v4704 = vpack.c.b16 %v4540, %v4536
    %v4705 = vpack.c.b16 %v4541, %v4537
    %v4706 = vpack.c.b16 %v4542, %v4538
    %v4707 = vpack.c.b16 %v4543, %v4539
    %v4708 = vpack.c.b16 %v4548, %v4544
    %v4709 = vpack.c.b16 %v4549, %v4545
    %v4710 = vpack.c.b16 %v4550, %v4546
    %v4711 = vpack.c.b16 %v4551, %v4547
    %4872 = vmatprep.subr.bf16.mxu0 %v4553
    %4873 = vmatpush1.bf16.msra.mxu0 %v4552
    %4874 = vmatprep.subr.bf16.mxu0 %v4557
    %4875 = vmatpush1.bf16.msra.mxu0 %v4556
    %4876 = vmatprep.subr.bf16.mxu0 %v4561
    %4877 = vmatpush1.bf16.msra.mxu0 %v4560
    %4878 = vmatprep.subr.bf16.mxu0 %v4565
    %4879 = vmatpush1.bf16.msra.mxu0 %v4564
    %4880 = vmatprep.subr.bf16.mxu0 %v4569
    %4881 = vmatpush1.bf16.msra.mxu0 %v4568
    %4882 = vmatprep.subr.bf16.mxu0 %v4573
    %4883 = vmatpush1.bf16.msra.mxu0 %v4572
    %4884 = vmatprep.subr.bf16.mxu0 %v4577
    %4885 = vmatpush1.bf16.msra.mxu0 %v4576
    %4886 = vmatprep.subr.bf16.mxu0 %v4581
    %4887 = vmatpush1.bf16.msra.mxu0 %v4580
    %4888 = vmatprep.subr.bf16.mxu0 %v4585
    %4889 = vmatpush1.bf16.msra.mxu0 %v4584
    %4890 = vmatprep.subr.bf16.mxu0 %v4589
    %4891 = vmatpush1.bf16.msra.mxu0 %v4588
    %4892 = vmatprep.subr.bf16.mxu0 %v4593
    %4893 = vmatpush1.bf16.msra.mxu0 %v4592
    %4894 = vmatprep.subr.bf16.mxu0 %v4597
    %4895 = vmatpush1.bf16.msra.mxu0 %v4596
    %4896 = vmatprep.subr.bf16.mxu0 %v4601
    %4897 = vmatpush1.bf16.msra.mxu0 %v4600
    %4898 = vmatprep.subr.bf16.mxu0 %v4605
    %4899 = vmatpush1.bf16.msra.mxu0 %v4604
    %4900 = vmatprep.subr.bf16.mxu0 %v4609
    %4901 = vmatpush1.bf16.msra.mxu0 %v4608
    %4902 = vmatprep.subr.bf16.mxu0 %v4613
    %4903 = vmatpush1.bf16.msra.mxu0 %v4612
    %4904 = vmatprep.mubr.bf16.mxu0 %v4052
    %4905 = vmatmul.mubr.bf16.gmra.mrb[0].mxu0 %v4049
    %v4906 = vpop.f32.mrb[0].mxu0
    %v4907 = vadd.f32 0.0, %v4906
    %v4908 = vpop.f32.mrb[0].mxu0
    %v4909 = vadd.f32 0.0, %v4908
    %v4910 = vpop.f32.mrb[0].mxu0
    %v4911 = vadd.f32 0.0, %v4910
    %v4912 = vpop.f32.mrb[0].mxu0
    %v4913 = vadd.f32 0.0, %v4912
    %4914 = vmatprep.mubr.bf16.mxu0 %v4051
    %4915 = vmatmul.mubr.bf16.gmra.mrb[0].mxu0 %v4048
    %v4916 = vpop.f32.mrb[0].mxu0
    %v4917 = vadd.f32 0.0, %v4916
    %v4918 = vpop.f32.mrb[0].mxu0
    %v4919 = vadd.f32 0.0, %v4918
    %v4920 = vpop.f32.mrb[0].mxu0
    %v4921 = vadd.f32 0.0, %v4920
    %v4922 = vpop.f32.mrb[0].mxu0
    %v4923 = vadd.f32 0.0, %v4922
    %4924 = vdwg.mxu0
    %4925 = vmatprep.subr.bf16.mxu0 %v4617
    %4926 = vmatpush1.bf16.msra.mxu0 %v4616
    %4927 = vmatprep.subr.bf16.mxu0 %v4621
    %4928 = vmatpush1.bf16.msra.mxu0 %v4620
    %4929 = vmatprep.subr.bf16.mxu0 %v4625
    %4930 = vmatpush1.bf16.msra.mxu0 %v4624
    %4931 = vmatprep.subr.bf16.mxu0 %v4629
    %4932 = vmatpush1.bf16.msra.mxu0 %v4628
    %4933 = vmatprep.subr.bf16.mxu0 %v4633
    %4934 = vmatpush1.bf16.msra.mxu0 %v4632
    %4935 = vmatprep.subr.bf16.mxu0 %v4637
    %4936 = vmatpush1.bf16.msra.mxu0 %v4636
    %4937 = vmatprep.subr.bf16.mxu0 %v4641
    %4938 = vmatpush1.bf16.msra.mxu0 %v4640
    %4939 = vmatprep.subr.bf16.mxu0 %v4645
    %4940 = vmatpush1.bf16.msra.mxu0 %v4644
    %4941 = vmatprep.subr.bf16.mxu0 %v4649
    %4942 = vmatpush1.bf16.msra.mxu0 %v4648
    %4943 = vmatprep.subr.bf16.mxu0 %v4653
    %4944 = vmatpush1.bf16.msra.mxu0 %v4652
    %4945 = vmatprep.subr.bf16.mxu0 %v4657
    %4946 = vmatpush1.bf16.msra.mxu0 %v4656
    %4947 = vmatprep.subr.bf16.mxu0 %v4661
    %4948 = vmatpush1.bf16.msra.mxu0 %v4660
    %4949 = vmatprep.subr.bf16.mxu0 %v4665
    %4950 = vmatpush1.bf16.msra.mxu0 %v4664
    %4951 = vmatprep.subr.bf16.mxu0 %v4669
    %4952 = vmatpush1.bf16.msra.mxu0 %v4668
    %4953 = vmatprep.subr.bf16.mxu0 %v4673
    %4954 = vmatpush1.bf16.msra.mxu0 %v4672
    %4955 = vmatprep.subr.bf16.mxu0 %v4677
    %4956 = vmatpush1.bf16.msra.mxu0 %v4676
    %4957 = vmatprep.mubr.bf16.mxu0 %v4058
    %4958 = vmatmul.mubr.bf16.gmra.mrb[0].mxu0 %v4055
    %v4959 = vpop.f32.mrb[0].mxu0
    %v4960 = vadd.f32 %v4907, %v4959
    %v4961 = vpop.f32.mrb[0].mxu0
    %v4962 = vadd.f32 %v4909, %v4961
    %v4963 = vpop.f32.mrb[0].mxu0
    %v4964 = vadd.f32 %v4911, %v4963
    %v4965 = vpop.f32.mrb[0].mxu0
    %v4966 = vadd.f32 %v4913, %v4965
    %4967 = vmatprep.mubr.bf16.mxu0 %v4057
    %4968 = vmatmul.mubr.bf16.gmra.mrb[0].mxu0 %v4054
    %v4969 = vpop.f32.mrb[0].mxu0
    %v4970 = vadd.f32 %v4917, %v4969
    %v4971 = vpop.f32.mrb[0].mxu0
    %v4972 = vadd.f32 %v4919, %v4971
    %v4973 = vpop.f32.mrb[0].mxu0
    %v4974 = vadd.f32 %v4921, %v4973
    %v4975 = vpop.f32.mrb[0].mxu0
    %v4976 = vadd.f32 %v4923, %v4975
    %4977 = vdwg.mxu0
    %4978 = vmatprep.subr.bf16.mxu0 %v4681
    %4979 = vmatpush1.bf16.msra.mxu0 %v4680
    %4980 = vmatprep.subr.bf16.mxu0 %v4685
    %4981 = vmatpush1.bf16.msra.mxu0 %v4684
    %4982 = vmatprep.subr.bf16.mxu0 %v4689
    %4983 = vmatpush1.bf16.msra.mxu0 %v4688
    %4984 = vmatprep.subr.bf16.mxu0 %v4693
    %4985 = vmatpush1.bf16.msra.mxu0 %v4692
    %4986 = vmatprep.subr.bf16.mxu0 %v4697
    %4987 = vmatpush1.bf16.msra.mxu0 %v4696
    %4988 = vmatprep.subr.bf16.mxu0 %v4701
    %4989 = vmatpush1.bf16.msra.mxu0 %v4700
    %4990 = vmatprep.subr.bf16.mxu0 %v4705
    %4991 = vmatpush1.bf16.msra.mxu0 %v4704
    %4992 = vmatprep.subr.bf16.mxu0 %v4709
    %4993 = vmatpush1.bf16.msra.mxu0 %v4708
    %4994 = vmatprep.subr.bf16.mxu0 0
    %4995 = vmatpush1.bf16.msra.mxu0 0
    %4996 = vmatprep.subr.bf16.mxu0 0
    %4997 = vmatpush1.bf16.msra.mxu0 0
    %4998 = vmatprep.subr.bf16.mxu0 0
    %4999 = vmatpush1.bf16.msra.mxu0 0
    %5000 = vmatprep.subr.bf16.mxu0 0
    %5001 = vmatpush1.bf16.msra.mxu0 0
    %5002 = vmatprep.subr.bf16.mxu0 0
    %5003 = vmatpush1.bf16.msra.mxu0 0
    %5004 = vmatprep.subr.bf16.mxu0 0
    %5005 = vmatpush1.bf16.msra.mxu0 0
    %5006 = vmatprep.subr.bf16.mxu0 0
    %5007 = vmatpush1.bf16.msra.mxu0 0
    %5008 = vmatprep.subr.bf16.mxu0 0
    %5009 = vmatpush1.bf16.msra.mxu0 0
    %5010 = vmatprep.mubr.bf16.mxu0 0
    %5011 = vmatmul.mubr.bf16.gmra.mrb[0].mxu0 %v4061
    %v5012 = vpop.f32.mrb[0].mxu0
    %v5013 = vadd.f32 %v4960, %v5012
    %v5014 = vpop.f32.mrb[0].mxu0
    %v5015 = vadd.f32 %v4962, %v5014
    %v5016 = vpop.f32.mrb[0].mxu0
    %v5017 = vadd.f32 %v4964, %v5016
    %v5018 = vpop.f32.mrb[0].mxu0
    %v5019 = vadd.f32 %v4966, %v5018
    %5020 = vmatprep.mubr.bf16.mxu0 0
    %5021 = vmatmul.mubr.bf16.gmra.mrb[0].mxu0 %v4060
    %v5022 = vpop.f32.mrb[0].mxu0
    %v5023 = vadd.f32 %v4970, %v5022
    %v5024 = vpop.f32.mrb[0].mxu0
    %v5025 = vadd.f32 %v4972, %v5024
    %v5026 = vpop.f32.mrb[0].mxu0
    %v5027 = vadd.f32 %v4974, %v5026
    %v5028 = vpop.f32.mrb[0].mxu0
    %v5029 = vadd.f32 %v4976, %v5028
    %5030 = vdwg.mxu0
    %5031 = vmatprep.subr.bf16.mxu0 %v4555
    %5032 = vmatpush1.bf16.msra.mxu0 %v4554
    %5033 = vmatprep.subr.bf16.mxu0 %v4559
    %5034 = vmatpush1.bf16.msra.mxu0 %v4558
    %5035 = vmatprep.subr.bf16.mxu0 %v4563
    %5036 = vmatpush1.bf16.msra.mxu0 %v4562
    %5037 = vmatprep.subr.bf16.mxu0 %v4567
    %5038 = vmatpush1.bf16.msra.mxu0 %v4566
    %5039 = vmatprep.subr.bf16.mxu0 %v4571
    %5040 = vmatpush1.bf16.msra.mxu0 %v4570
    %5041 = vmatprep.subr.bf16.mxu0 %v4575
    %5042 = vmatpush1.bf16.msra.mxu0 %v4574
    %5043 = vmatprep.subr.bf16.mxu0 %v4579
    %5044 = vmatpush1.bf16.msra.mxu0 %v4578
    %5045 = vmatprep.subr.bf16.mxu0 %v4583
    %5046 = vmatpush1.bf16.msra.mxu0 %v4582
    %5047 = vmatprep.subr.bf16.mxu0 %v4587
    %5048 = vmatpush1.bf16.msra.mxu0 %v4586
    %5049 = vmatprep.subr.bf16.mxu0 %v4591
    %5050 = vmatpush1.bf16.msra.mxu0 %v4590
    %5051 = vmatprep.subr.bf16.mxu0 %v4595
    %5052 = vmatpush1.bf16.msra.mxu0 %v4594
    %5053 = vmatprep.subr.bf16.mxu0 %v4599
    %5054 = vmatpush1.bf16.msra.mxu0 %v4598
    %5055 = vmatprep.subr.bf16.mxu0 %v4603
    %5056 = vmatpush1.bf16.msra.mxu0 %v4602
    %5057 = vmatprep.subr.bf16.mxu0 %v4607
    %5058 = vmatpush1.bf16.msra.mxu0 %v4606
    %5059 = vmatprep.subr.bf16.mxu0 %v4611
    %5060 = vmatpush1.bf16.msra.mxu0 %v4610
    %5061 = vmatprep.subr.bf16.mxu0 %v4615
    %5062 = vmatpush1.bf16.msra.mxu0 %v4614
    %5063 = vmatprep.mubr.bf16.mxu0 %v4052
    %5064 = vmatmul.mubr.bf16.gmra.mrb[0].mxu0 %v4049
    %v5065 = vpop.f32.mrb[0].mxu0
    %v5066 = vadd.f32 0.0, %v5065
    %v5067 = vpop.f32.mrb[0].mxu0
    %v5068 = vadd.f32 0.0, %v5067
    %v5069 = vpop.f32.mrb[0].mxu0
    %v5070 = vadd.f32 0.0, %v5069
    %v5071 = vpop.f32.mrb[0].mxu0
    %v5072 = vadd.f32 0.0, %v5071
    %5073 = vmatprep.mubr.bf16.mxu0 %v4051
    %5074 = vmatmul.mubr.bf16.gmra.mrb[0].mxu0 %v4048
    %v5075 = vpop.f32.mrb[0].mxu0
    %v5076 = vadd.f32 0.0, %v5075
    %v5077 = vpop.f32.mrb[0].mxu0
    %v5078 = vadd.f32 0.0, %v5077
    %v5079 = vpop.f32.mrb[0].mxu0
    %v5080 = vadd.f32 0.0, %v5079
    %v5081 = vpop.f32.mrb[0].mxu0
    %v5082 = vadd.f32 0.0, %v5081
    %5083 = vdwg.mxu0
    %5084 = vmatprep.subr.bf16.mxu0 %v4619
    %5085 = vmatpush1.bf16.msra.mxu0 %v4618
    %5086 = vmatprep.subr.bf16.mxu0 %v4623
    %5087 = vmatpush1.bf16.msra.mxu0 %v4622
    %5088 = vmatprep.subr.bf16.mxu0 %v4627
    %5089 = vmatpush1.bf16.msra.mxu0 %v4626
    %5090 = vmatprep.subr.bf16.mxu0 %v4631
    %5091 = vmatpush1.bf16.msra.mxu0 %v4630
    %5092 = vmatprep.subr.bf16.mxu0 %v4635
    %5093 = vmatpush1.bf16.msra.mxu0 %v4634
    %5094 = vmatprep.subr.bf16.mxu0 %v4639
    %5095 = vmatpush1.bf16.msra.mxu0 %v4638
    %5096 = vmatprep.subr.bf16.mxu0 %v4643
    %5097 = vmatpush1.bf16.msra.mxu0 %v4642
    %5098 = vmatprep.subr.bf16.mxu0 %v4647
    %5099 = vmatpush1.bf16.msra.mxu0 %v4646
    %5100 = vmatprep.subr.bf16.mxu0 %v4651
    %5101 = vmatpush1.bf16.msra.mxu0 %v4650
    %5102 = vmatprep.subr.bf16.mxu0 %v4655
    %5103 = vmatpush1.bf16.msra.mxu0 %v4654
    %5104 = vmatprep.subr.bf16.mxu0 %v4659
    %5105 = vmatpush1.bf16.msra.mxu0 %v4658
    %5106 = vmatprep.subr.bf16.mxu0 %v4663
    %5107 = vmatpush1.bf16.msra.mxu0 %v4662
    %5108 = vmatprep.subr.bf16.mxu0 %v4667
    %5109 = vmatpush1.bf16.msra.mxu0 %v4666
    %5110 = vmatprep.subr.bf16.mxu0 %v4671
    %5111 = vmatpush1.bf16.msra.mxu0 %v4670
    %5112 = vmatprep.subr.bf16.mxu0 %v4675
    %5113 = vmatpush1.bf16.msra.mxu0 %v4674
    %5114 = vmatprep.subr.bf16.mxu0 %v4679
    %5115 = vmatpush1.bf16.msra.mxu0 %v4678
    %5116 = vmatprep.mubr.bf16.mxu0 %v4058
    %5117 = vmatmul.mubr.bf16.gmra.mrb[0].mxu0 %v4055
    %v5118 = vpop.f32.mrb[0].mxu0
    %v5119 = vadd.f32 %v5066, %v5118
    %v5120 = vpop.f32.mrb[0].mxu0
    %v5121 = vadd.f32 %v5068, %v5120
    %v5122 = vpop.f32.mrb[0].mxu0
    %v5123 = vadd.f32 %v5070, %v5122
    %v5124 = vpop.f32.mrb[0].mxu0
    %v5125 = vadd.f32 %v5072, %v5124
    %5126 = vmatprep.mubr.bf16.mxu0 %v4057
    %5127 = vmatmul.mubr.bf16.gmra.mrb[0].mxu0 %v4054
    %v5128 = vpop.f32.mrb[0].mxu0
    %v5129 = vadd.f32 %v5076, %v5128
    %v5130 = vpop.f32.mrb[0].mxu0
    %v5131 = vadd.f32 %v5078, %v5130
    %v5132 = vpop.f32.mrb[0].mxu0
    %v5133 = vadd.f32 %v5080, %v5132
    %v5134 = vpop.f32.mrb[0].mxu0
    %v5135 = vadd.f32 %v5082, %v5134
    %5136 = vdwg.mxu0
    %5137 = vmatprep.subr.bf16.mxu0 %v4683
    %5138 = vmatpush1.bf16.msra.mxu0 %v4682
    %5139 = vmatprep.subr.bf16.mxu0 %v4687
    %5140 = vmatpush1.bf16.msra.mxu0 %v4686
    %5141 = vmatprep.subr.bf16.mxu0 %v4691
    %5142 = vmatpush1.bf16.msra.mxu0 %v4690
    %5143 = vmatprep.subr.bf16.mxu0 %v4695
    %5144 = vmatpush1.bf16.msra.mxu0 %v4694
    %5145 = vmatprep.subr.bf16.mxu0 %v4699
    %5146 = vmatpush1.bf16.msra.mxu0 %v4698
    %5147 = vmatprep.subr.bf16.mxu0 %v4703
    %5148 = vmatpush1.bf16.msra.mxu0 %v4702
    %5149 = vmatprep.subr.bf16.mxu0 %v4707
    %5150 = vmatpush1.bf16.msra.mxu0 %v4706
    %5151 = vmatprep.subr.bf16.mxu0 %v4711
    %5152 = vmatpush1.bf16.msra.mxu0 %v4710
    %5153 = vmatprep.subr.bf16.mxu0 0
    %5154 = vmatpush1.bf16.msra.mxu0 0
    %5155 = vmatprep.subr.bf16.mxu0 0
    %5156 = vmatpush1.bf16.msra.mxu0 0
    %5157 = vmatprep.subr.bf16.mxu0 0
    %5158 = vmatpush1.bf16.msra.mxu0 0
    %5159 = vmatprep.subr.bf16.mxu0 0
    %5160 = vmatpush1.bf16.msra.mxu0 0
    %5161 = vmatprep.subr.bf16.mxu0 0
    %5162 = vmatpush1.bf16.msra.mxu0 0
    %5163 = vmatprep.subr.bf16.mxu0 0
    %5164 = vmatpush1.bf16.msra.mxu0 0
    %5165 = vmatprep.subr.bf16.mxu0 0
    %5166 = vmatpush1.bf16.msra.mxu0 0
    %5167 = vmatprep.subr.bf16.mxu0 0
    %5168 = vmatpush1.bf16.msra.mxu0 0
    %5169 = vmatprep.mubr.bf16.mxu0 0
    %5170 = vmatmul.mubr.bf16.gmra.mrb[0].mxu0 %v4061
    %v5171 = vpop.f32.mrb[0].mxu0
    %v5172 = vadd.f32 %v5119, %v5171
    %v5173 = vpop.f32.mrb[0].mxu0
    %v5174 = vadd.f32 %v5121, %v5173
    %v5175 = vpop.f32.mrb[0].mxu0
    %v5176 = vadd.f32 %v5123, %v5175
    %v5177 = vpop.f32.mrb[0].mxu0
    %v5178 = vadd.f32 %v5125, %v5177
    %5179 = vmatprep.mubr.bf16.mxu0 0
    %5180 = vmatmul.mubr.bf16.gmra.mrb[0].mxu0 %v4060
    %v5181 = vpop.f32.mrb[0].mxu0
    %v5182 = vadd.f32 %v5129, %v5181
    %v5183 = vpop.f32.mrb[0].mxu0
    %v5184 = vadd.f32 %v5131, %v5183
    %v5185 = vpop.f32.mrb[0].mxu0
    %v5186 = vadd.f32 %v5133, %v5185
    %v5187 = vpop.f32.mrb[0].mxu0
    %v5188 = vadd.f32 %v5135, %v5187
    %5189 = vdwg.mxu0
    %v5190 = vadd.f32 %v3838, %v5013
    %v5191 = vadd.f32 %v3839, %v5015
    %v5192 = vadd.f32 %v3840, %v5172
    %v5193 = vadd.f32 %v3841, %v5174
    %v5194 = vadd.f32 %v3842, %v5017
    %v5195 = vadd.f32 %v3843, %v5019
    %v5196 = vadd.f32 %v3844, %v5176
    %v5197 = vadd.f32 %v3845, %v5178
    %v5198 = vadd.f32 %v3846, %v5023
    %v5199 = vadd.f32 %v3847, %v5025
    %v5200 = vadd.f32 %v3848, %v5182
    %v5201 = vadd.f32 %v3849, %v5184
    %v5202 = vadd.f32 %v3850, %v5027
    %v5203 = vadd.f32 %v3851, %v5029
    %v5204 = vadd.f32 %v3852, %v5186
    %v5205 = vadd.f32 %v3853, %v5188
    %v5206 = vld [vmem:[#allocation2] sm:$0x88]
    %v5207 = vld [vmem:[#allocation2 + $0x8] sm:$0x88]
    %v5208 = vld [vmem:[#allocation2 + $0x10] sm:$0x8]
    %v5209 = vld [vmem:[#allocation2 + $0x14] sm:$0xff]
    %v5210 = vld [vmem:[#allocation2 + $0x1c] sm:$0xff]
    %v5211 = vld [vmem:[#allocation2 + $0x24] sm:$0xf]
    %v5212 = vld [vmem:[#allocation2 + $0x28] sm:$0xff]
    %v5213 = vld [vmem:[#allocation2 + $0x30] sm:$0xff]
    %v5214 = vld [vmem:[#allocation2 + $0x38] sm:$0xf]
    %v5215 = vld [vmem:[#allocation2 + $0x3c] sm:$0xff]
    %v5216 = vld [vmem:[#allocation2 + $0x44] sm:$0xff]
    %v5217 = vld [vmem:[#allocation2 + $0x4c] sm:$0xf]
    %v5218 = vld [vmem:[#allocation2 + $0x50] sm:$0x11]
    %v5219 = vld [vmem:[#allocation2 + $0x58] sm:$0x11]
    %v5220 = vld [vmem:[#allocation2 + $0x60] sm:$0x1]
    %s5221 = scalar_lea.vmem %s3, 3840
    %v5222 = vld [vmem:[%s5221] sm:$0xff]
    %v5223 = vld [vmem:[%s5221 + $0x8] sm:$0xff]
    %v5224 = vld [vmem:[%s5221 + $0x10] sm:$0xff]
    %v5225 = vld [vmem:[%s5221 + $0x18] sm:$0xff]
    %v5226 = vld [vmem:[%s5221 + $0x20] sm:$0xff]
    %v5227 = vld [vmem:[%s5221 + $0x28] sm:$0xff]
    %v5228 = vld [vmem:[%s5221 + $0x30] sm:$0xff]
    %v5229 = vld [vmem:[%s5221 + $0x38] sm:$0xff]
    %v5230 = vld [vmem:[%s5221 + $0x40] sm:$0xff]
    %v5231 = vld [vmem:[%s5221 + $0x48] sm:$0xff]
    %v5232 = vld [vmem:[%s5221 + $0x50] sm:$0xff]
    %v5233 = vld [vmem:[%s5221 + $0x58] sm:$0xff]
    %v5234 = vld [vmem:[%s5221 + $0x60] sm:$0xff]
    %v5235 = vld [vmem:[%s5221 + $0x68] sm:$0xff]
    %v5236 = vld [vmem:[%s5221 + $0x70] sm:$0xff]
    %v5237 = vld [vmem:[%s5221 + $0x78] sm:$0xff]
    %v5238 = vld [vmem:[%s5221 + $0x80] sm:$0xff]
    %v5239 = vld [vmem:[%s5221 + $0x88] sm:$0xff]
    %v5240 = vld [vmem:[%s5221 + $0x90] sm:$0xff]
    %v5241 = vld [vmem:[%s5221 + $0x98] sm:$0xff]
    %v5242 = vld [vmem:[%s5221 + $0xa0] sm:$0xff]
    %v5243 = vld [vmem:[%s5221 + $0xa8] sm:$0xff]
    %v5244 = vld [vmem:[%s5221 + $0xb0] sm:$0xff]
    %v5245 = vld [vmem:[%s5221 + $0xb8] sm:$0xff]
    %v5246 = vld [vmem:[%s5221 + $0xc0] sm:$0xff]
    %v5247 = vld [vmem:[%s5221 + $0xc8] sm:$0xff]
    %v5248 = vld [vmem:[%s5221 + $0xd0] sm:$0xff]
    %v5249 = vld [vmem:[%s5221 + $0xd8] sm:$0xff]
    %v5250 = vld [vmem:[%s5221 + $0xe0] sm:$0xff]
    %v5251 = vld [vmem:[%s5221 + $0xe8] sm:$0xff]
    %v5252 = vld [vmem:[%s5221 + $0xf0] sm:$0xff]
    %v5253 = vld [vmem:[%s5221 + $0xf8] sm:$0xff]
    %v5254 = vld [vmem:[%s5221 + $0x100] sm:$0xff]
    %v5255 = vld [vmem:[%s5221 + $0x108] sm:$0xff]
    %v5256 = vld [vmem:[%s5221 + $0x110] sm:$0xff]
    %v5257 = vld [vmem:[%s5221 + $0x118] sm:$0xff]
    %v5258 = vld [vmem:[%s5221 + $0x120] sm:$0xff]
    %v5259 = vld [vmem:[%s5221 + $0x128] sm:$0xff]
    %v5260 = vld [vmem:[%s5221 + $0x130] sm:$0xff]
    %v5261 = vld [vmem:[%s5221 + $0x138] sm:$0xff]
    %v5262 = vld [vmem:[%s5221 + $0x140] sm:$0xff]
    %v5263 = vld [vmem:[%s5221 + $0x148] sm:$0xff]
    %v5264 = vld [vmem:[%s5221 + $0x150] sm:$0xff]
    %v5265 = vld [vmem:[%s5221 + $0x158] sm:$0xff]
    %v5266 = vld [vmem:[%s5221 + $0x160] sm:$0xff]
    %v5267 = vld [vmem:[%s5221 + $0x168] sm:$0xff]
    %v5268 = vld [vmem:[%s5221 + $0x170] sm:$0xff]
    %v5269 = vld [vmem:[%s5221 + $0x178] sm:$0xff]
    %v5270 = vld [vmem:[%s5221 + $0x180] sm:$0xff]
    %v5271 = vld [vmem:[%s5221 + $0x188] sm:$0xff]
    %v5272 = vld [vmem:[%s5221 + $0x190] sm:$0xff]
    %v5273 = vld [vmem:[%s5221 + $0x198] sm:$0xff]
    %v5274 = vld [vmem:[%s5221 + $0x1a0] sm:$0xff]
    %v5275 = vld [vmem:[%s5221 + $0x1a8] sm:$0xff]
    %v5276 = vld [vmem:[%s5221 + $0x1b0] sm:$0xff]
    %v5277 = vld [vmem:[%s5221 + $0x1b8] sm:$0xff]
    %v5278 = vld [vmem:[%s5221 + $0x1c0] sm:$0xff]
    %v5279 = vld [vmem:[%s5221 + $0x1c8] sm:$0xff]
    %v5280 = vld [vmem:[%s5221 + $0x1d0] sm:$0xff]
    %v5281 = vld [vmem:[%s5221 + $0x1d8] sm:$0xff]
    %v5282 = vld [vmem:[%s5221 + $0x1e0] sm:$0xff]
    %v5283 = vld [vmem:[%s5221 + $0x1e8] sm:$0xff]
    %v5284 = vld [vmem:[%s5221 + $0x1f0] sm:$0xff]
    %v5285 = vld [vmem:[%s5221 + $0x1f8] sm:$0xff]
    %v5286 = vld [vmem:[%s5221 + $0x200] sm:$0xff]
    %v5287 = vld [vmem:[%s5221 + $0x208] sm:$0xff]
    %v5288 = vld [vmem:[%s5221 + $0x210] sm:$0xff]
    %v5289 = vld [vmem:[%s5221 + $0x218] sm:$0xff]
    %v5290 = vld [vmem:[%s5221 + $0x220] sm:$0xff]
    %v5291 = vld [vmem:[%s5221 + $0x228] sm:$0xff]
    %v5292 = vld [vmem:[%s5221 + $0x230] sm:$0xff]
    %v5293 = vld [vmem:[%s5221 + $0x238] sm:$0xff]
    %v5294 = vld [vmem:[%s5221 + $0x240] sm:$0xff]
    %v5295 = vld [vmem:[%s5221 + $0x248] sm:$0xff]
    %v5296 = vld [vmem:[%s5221 + $0x250] sm:$0xff]
    %v5297 = vld [vmem:[%s5221 + $0x258] sm:$0xff]
    %v5298 = vld [vmem:[%s5221 + $0x260] sm:$0xff]
    %v5299 = vld [vmem:[%s5221 + $0x268] sm:$0xff]
    %v5300 = vld [vmem:[%s5221 + $0x270] sm:$0xff]
    %v5301 = vld [vmem:[%s5221 + $0x278] sm:$0xff]
    %v5302 = vld [vmem:[%s5221 + $0x280] sm:$0xff]
    %v5303 = vld [vmem:[%s5221 + $0x288] sm:$0xff]
    %v5304 = vld [vmem:[%s5221 + $0x290] sm:$0xff]
    %v5305 = vld [vmem:[%s5221 + $0x298] sm:$0xff]
    %v5306 = vld [vmem:[%s5221 + $0x2a0] sm:$0xff]
    %v5307 = vld [vmem:[%s5221 + $0x2a8] sm:$0xff]
    %v5308 = vld [vmem:[%s5221 + $0x2b0] sm:$0xff]
    %v5309 = vld [vmem:[%s5221 + $0x2b8] sm:$0xff]
    %v5310 = vld [vmem:[%s5221 + $0x2c0] sm:$0xff]
    %v5311 = vld [vmem:[%s5221 + $0x2c8] sm:$0xff]
    %v5312 = vld [vmem:[%s5221 + $0x2d0] sm:$0xff]
    %v5313 = vld [vmem:[%s5221 + $0x2d8] sm:$0xff]
    %v5314 = vld [vmem:[%s5221 + $0x2e0] sm:$0xff]
    %v5315 = vld [vmem:[%s5221 + $0x2e8] sm:$0xff]
    %v5316 = vld [vmem:[%s5221 + $0x2f0] sm:$0xff]
    %v5317 = vld [vmem:[%s5221 + $0x2f8] sm:$0xff]
    %v5318 = vld [vmem:[%s5221 + $0x300] sm:$0xff]
    %v5319 = vld [vmem:[%s5221 + $0x308] sm:$0xff]
    %v5320 = vld [vmem:[%s5221 + $0x310] sm:$0xff]
    %v5321 = vld [vmem:[%s5221 + $0x318] sm:$0xff]
    %v5322 = vld [vmem:[%s5221 + $0x320] sm:$0xff]
    %v5323 = vld [vmem:[%s5221 + $0x328] sm:$0xff]
    %v5324 = vld [vmem:[%s5221 + $0x330] sm:$0xff]
    %v5325 = vld [vmem:[%s5221 + $0x338] sm:$0xff]
    %v5326 = vld [vmem:[%s5221 + $0x340] sm:$0xff]
    %v5327 = vld [vmem:[%s5221 + $0x348] sm:$0xff]
    %v5328 = vld [vmem:[%s5221 + $0x350] sm:$0xff]
    %v5329 = vld [vmem:[%s5221 + $0x358] sm:$0xff]
    %v5330 = vld [vmem:[%s5221 + $0x360] sm:$0xff]
    %v5331 = vld [vmem:[%s5221 + $0x368] sm:$0xff]
    %v5332 = vld [vmem:[%s5221 + $0x370] sm:$0xff]
    %v5333 = vld [vmem:[%s5221 + $0x378] sm:$0xff]
    %v5334 = vld [vmem:[%s5221 + $0x380] sm:$0xff]
    %v5335 = vld [vmem:[%s5221 + $0x388] sm:$0xff]
    %v5336 = vld [vmem:[%s5221 + $0x390] sm:$0xff]
    %v5337 = vld [vmem:[%s5221 + $0x398] sm:$0xff]
    %v5338 = vld [vmem:[%s5221 + $0x3a0] sm:$0xff]
    %v5339 = vld [vmem:[%s5221 + $0x3a8] sm:$0xff]
    %v5340 = vld [vmem:[%s5221 + $0x3b0] sm:$0xff]
    %v5341 = vld [vmem:[%s5221 + $0x3b8] sm:$0xff]
    %v5342 = vld [vmem:[%s5221 + $0x3c0] sm:$0xff]
    %v5343 = vld [vmem:[%s5221 + $0x3c8] sm:$0xff]
    %v5344 = vld [vmem:[%s5221 + $0x3d0] sm:$0xff]
    %v5345 = vld [vmem:[%s5221 + $0x3d8] sm:$0xff]
    %v5346 = vld [vmem:[%s5221 + $0x3e0] sm:$0xff]
    %v5347 = vld [vmem:[%s5221 + $0x3e8] sm:$0xff]
    %v5348 = vld [vmem:[%s5221 + $0x3f0] sm:$0xff]
    %v5349 = vld [vmem:[%s5221 + $0x3f8] sm:$0xff]
    %v5350 = vld [vmem:[%s5221 + $0x400] sm:$0xff]
    %v5351 = vld [vmem:[%s5221 + $0x408] sm:$0xff]
    %v5352 = vld [vmem:[%s5221 + $0x410] sm:$0xff]
    %v5353 = vld [vmem:[%s5221 + $0x418] sm:$0xff]
    %v5354 = vld [vmem:[%s5221 + $0x420] sm:$0xff]
    %v5355 = vld [vmem:[%s5221 + $0x428] sm:$0xff]
    %v5356 = vld [vmem:[%s5221 + $0x430] sm:$0xff]
    %v5357 = vld [vmem:[%s5221 + $0x438] sm:$0xff]
    %v5358 = vld [vmem:[%s5221 + $0x440] sm:$0xff]
    %v5359 = vld [vmem:[%s5221 + $0x448] sm:$0xff]
    %v5360 = vld [vmem:[%s5221 + $0x450] sm:$0xff]
    %v5361 = vld [vmem:[%s5221 + $0x458] sm:$0xff]
    %v5362 = vld [vmem:[%s5221 + $0x460] sm:$0xff]
    %v5363 = vld [vmem:[%s5221 + $0x468] sm:$0xff]
    %v5364 = vld [vmem:[%s5221 + $0x470] sm:$0xff]
    %v5365 = vld [vmem:[%s5221 + $0x478] sm:$0xff]
    %v5366 = vld [vmem:[%s5221 + $0x480] sm:$0xff]
    %v5367 = vld [vmem:[%s5221 + $0x488] sm:$0xff]
    %v5368 = vld [vmem:[%s5221 + $0x490] sm:$0xff]
    %v5369 = vld [vmem:[%s5221 + $0x498] sm:$0xff]
    %v5370 = vld [vmem:[%s5221 + $0x4a0] sm:$0xff]
    %v5371 = vld [vmem:[%s5221 + $0x4a8] sm:$0xff]
    %v5372 = vld [vmem:[%s5221 + $0x4b0] sm:$0xff]
    %v5373 = vld [vmem:[%s5221 + $0x4b8] sm:$0xff]
    %v5374 = vld [vmem:[%s5221 + $0x4c0] sm:$0xff]
    %v5375 = vld [vmem:[%s5221 + $0x4c8] sm:$0xff]
    %v5376 = vld [vmem:[%s5221 + $0x4d0] sm:$0xff]
    %v5377 = vld [vmem:[%s5221 + $0x4d8] sm:$0xff]
    %v5378 = vld [vmem:[%s5221 + $0x4e0] sm:$0xff]
    %v5379 = vld [vmem:[%s5221 + $0x4e8] sm:$0xff]
    %v5380 = vld [vmem:[%s5221 + $0x4f0] sm:$0xff]
    %v5381 = vld [vmem:[%s5221 + $0x4f8] sm:$0xff]
    %v5397 = vunpack.c.l.b16 %v5206
    %v5398 = vunpack.c.h.b16 %v5206
    %v5399 = vunpack.c.l.b16 %v5207
    %v5400 = vunpack.c.h.b16 %v5207
    %v5401 = vunpack.c.l.b16 %v5208
    %v5402 = vunpack.c.l.b16 %v5209
    %v5403 = vunpack.c.h.b16 %v5209
    %v5404 = vunpack.c.l.b16 %v5210
    %v5405 = vunpack.c.h.b16 %v5210
    %v5406 = vunpack.c.l.b16 %v5211
    %v5407 = vunpack.c.l.b16 %v5212
    %v5408 = vunpack.c.h.b16 %v5212
    %v5409 = vunpack.c.l.b16 %v5213
    %v5410 = vunpack.c.h.b16 %v5213
    %v5411 = vunpack.c.l.b16 %v5214
    %v5412 = vunpack.c.l.b16 %v5215
    %v5413 = vunpack.c.h.b16 %v5215
    %v5414 = vunpack.c.l.b16 %v5216
    %v5415 = vunpack.c.h.b16 %v5216
    %v5416 = vunpack.c.l.b16 %v5217
    %v5417 = vunpack.c.l.b16 %v5218
    %v5418 = vunpack.c.h.b16 %v5218
    %v5419 = vunpack.c.l.b16 %v5219
    %v5420 = vunpack.c.h.b16 %v5219
    %v5421 = vunpack.c.l.b16 %v5220
    %v5422 = vpack.c.b16 %v5402, %v5397
    %v5423 = vpack.c.b16 %v5403, %v5398
    %v5424 = vpack.c.b16 %v5404, %v5399
    %v5425 = vpack.c.b16 %v5405, %v5400
    %v5426 = vpack.c.b16 %v5406, %v5401
    %v5427 = vpack.c.b16 %v5412, %v5407
    %v5428 = vpack.c.b16 %v5413, %v5408
    %v5429 = vpack.c.b16 %v5414, %v5409
    %v5430 = vpack.c.b16 %v5415, %v5410
    %v5431 = vpack.c.b16 %v5416, %v5411
    %v5432 = vpack.c.b16 %v5417, %v5417
    %v5433 = vpack.c.b16 %v5418, %v5418
    %v5434 = vpack.c.b16 %v5419, %v5419
    %v5435 = vpack.c.b16 %v5420, %v5420
    %v5436 = vpack.c.b16 %v5421, %v5421
    %vm5437 = vcmask 1044480
    %v5438 = vrot.slane %v5422, 3
    %v5439 = vrot.slane %v5427, 3
    %v5440 = vsel %vm5437, %v5438, %v5439
    %v5441 = vrot.slane %v5423, 3
    %v5442 = vrot.slane %v5428, 3
    %v5443 = vsel %vm5437, %v5441, %v5442
    %v5444 = vrot.slane %v5424, 3
    %v5445 = vrot.slane %v5429, 3
    %v5446 = vsel %vm5437, %v5444, %v5445
    %v5447 = vrot.slane %v5425, 3
    %v5448 = vrot.slane %v5430, 3
    %v5449 = vsel %vm5437, %v5447, %v5448
    %v5450 = vrot.slane %v5426, 3
    %v5451 = vrot.slane %v5431, 3
    %v5452 = vsel %vm5437, %v5450, %v5451
    %v5453 = vrot.slane %v5432, 3
    %v5454 = vsel %vm5437, %v5439, %v5453
    %v5455 = vrot.slane %v5433, 3
    %v5456 = vsel %vm5437, %v5442, %v5455
    %v5457 = vrot.slane %v5434, 3
    %v5458 = vsel %vm5437, %v5445, %v5457
    %v5459 = vrot.slane %v5435, 3
    %v5460 = vsel %vm5437, %v5448, %v5459
    %v5461 = vrot.slane %v5436, 3
    %v5462 = vsel %vm5437, %v5451, %v5461
    %v5633 = vunpack.c.l.b16 %v5222
    %v5634 = vunpack.c.h.b16 %v5222
    %v5635 = vunpack.c.l.b16 %v5223
    %v5636 = vunpack.c.h.b16 %v5223
    %v5637 = vunpack.c.l.b16 %v5224
    %v5638 = vunpack.c.h.b16 %v5224
    %v5639 = vunpack.c.l.b16 %v5225
    %v5640 = vunpack.c.h.b16 %v5225
    %v5641 = vunpack.c.l.b16 %v5226
    %v5642 = vunpack.c.h.b16 %v5226
    %v5643 = vunpack.c.l.b16 %v5227
    %v5644 = vunpack.c.h.b16 %v5227
    %v5645 = vunpack.c.l.b16 %v5228
    %v5646 = vunpack.c.h.b16 %v5228
    %v5647 = vunpack.c.l.b16 %v5229
    %v5648 = vunpack.c.h.b16 %v5229
    %v5649 = vunpack.c.l.b16 %v5230
    %v5650 = vunpack.c.h.b16 %v5230
    %v5651 = vunpack.c.l.b16 %v5231
    %v5652 = vunpack.c.h.b16 %v5231
    %v5653 = vunpack.c.l.b16 %v5232
    %v5654 = vunpack.c.h.b16 %v5232
    %v5655 = vunpack.c.l.b16 %v5233
    %v5656 = vunpack.c.h.b16 %v5233
    %v5657 = vunpack.c.l.b16 %v5234
    %v5658 = vunpack.c.h.b16 %v5234
    %v5659 = vunpack.c.l.b16 %v5235
    %v5660 = vunpack.c.h.b16 %v5235
    %v5661 = vunpack.c.l.b16 %v5236
    %v5662 = vunpack.c.h.b16 %v5236
    %v5663 = vunpack.c.l.b16 %v5237
    %v5664 = vunpack.c.h.b16 %v5237
    %v5665 = vunpack.c.l.b16 %v5238
    %v5666 = vunpack.c.h.b16 %v5238
    %v5667 = vunpack.c.l.b16 %v5239
    %v5668 = vunpack.c.h.b16 %v5239
    %v5669 = vunpack.c.l.b16 %v5240
    %v5670 = vunpack.c.h.b16 %v5240
    %v5671 = vunpack.c.l.b16 %v5241
    %v5672 = vunpack.c.h.b16 %v5241
    %v5673 = vunpack.c.l.b16 %v5242
    %v5674 = vunpack.c.h.b16 %v5242
    %v5675 = vunpack.c.l.b16 %v5243
    %v5676 = vunpack.c.h.b16 %v5243
    %v5677 = vunpack.c.l.b16 %v5244
    %v5678 = vunpack.c.h.b16 %v5244
    %v5679 = vunpack.c.l.b16 %v5245
    %v5680 = vunpack.c.h.b16 %v5245
    %v5681 = vunpack.c.l.b16 %v5246
    %v5682 = vunpack.c.h.b16 %v5246
    %v5683 = vunpack.c.l.b16 %v5247
    %v5684 = vunpack.c.h.b16 %v5247
    %v5685 = vunpack.c.l.b16 %v5248
    %v5686 = vunpack.c.h.b16 %v5248
    %v5687 = vunpack.c.l.b16 %v5249
    %v5688 = vunpack.c.h.b16 %v5249
    %v5689 = vunpack.c.l.b16 %v5250
    %v5690 = vunpack.c.h.b16 %v5250
    %v5691 = vunpack.c.l.b16 %v5251
    %v5692 = vunpack.c.h.b16 %v5251
    %v5693 = vunpack.c.l.b16 %v5252
    %v5694 = vunpack.c.h.b16 %v5252
    %v5695 = vunpack.c.l.b16 %v5253
    %v5696 = vunpack.c.h.b16 %v5253
    %v5697 = vunpack.c.l.b16 %v5254
    %v5698 = vunpack.c.h.b16 %v5254
    %v5699 = vunpack.c.l.b16 %v5255
    %v5700 = vunpack.c.h.b16 %v5255
    %v5701 = vunpack.c.l.b16 %v5256
    %v5702 = vunpack.c.h.b16 %v5256
    %v5703 = vunpack.c.l.b16 %v5257
    %v5704 = vunpack.c.h.b16 %v5257
    %v5705 = vunpack.c.l.b16 %v5258
    %v5706 = vunpack.c.h.b16 %v5258
    %v5707 = vunpack.c.l.b16 %v5259
    %v5708 = vunpack.c.h.b16 %v5259
    %v5709 = vunpack.c.l.b16 %v5260
    %v5710 = vunpack.c.h.b16 %v5260
    %v5711 = vunpack.c.l.b16 %v5261
    %v5712 = vunpack.c.h.b16 %v5261
    %v5713 = vunpack.c.l.b16 %v5262
    %v5714 = vunpack.c.h.b16 %v5262
    %v5715 = vunpack.c.l.b16 %v5263
    %v5716 = vunpack.c.h.b16 %v5263
    %v5717 = vunpack.c.l.b16 %v5264
    %v5718 = vunpack.c.h.b16 %v5264
    %v5719 = vunpack.c.l.b16 %v5265
    %v5720 = vunpack.c.h.b16 %v5265
    %v5721 = vunpack.c.l.b16 %v5266
    %v5722 = vunpack.c.h.b16 %v5266
    %v5723 = vunpack.c.l.b16 %v5267
    %v5724 = vunpack.c.h.b16 %v5267
    %v5725 = vunpack.c.l.b16 %v5268
    %v5726 = vunpack.c.h.b16 %v5268
    %v5727 = vunpack.c.l.b16 %v5269
    %v5728 = vunpack.c.h.b16 %v5269
    %v5729 = vunpack.c.l.b16 %v5270
    %v5730 = vunpack.c.h.b16 %v5270
    %v5731 = vunpack.c.l.b16 %v5271
    %v5732 = vunpack.c.h.b16 %v5271
    %v5733 = vunpack.c.l.b16 %v5272
    %v5734 = vunpack.c.h.b16 %v5272
    %v5735 = vunpack.c.l.b16 %v5273
    %v5736 = vunpack.c.h.b16 %v5273
    %v5737 = vunpack.c.l.b16 %v5274
    %v5738 = vunpack.c.h.b16 %v5274
    %v5739 = vunpack.c.l.b16 %v5275
    %v5740 = vunpack.c.h.b16 %v5275
    %v5741 = vunpack.c.l.b16 %v5276
    %v5742 = vunpack.c.h.b16 %v5276
    %v5743 = vunpack.c.l.b16 %v5277
    %v5744 = vunpack.c.h.b16 %v5277
    %v5745 = vunpack.c.l.b16 %v5278
    %v5746 = vunpack.c.h.b16 %v5278
    %v5747 = vunpack.c.l.b16 %v5279
    %v5748 = vunpack.c.h.b16 %v5279
    %v5749 = vunpack.c.l.b16 %v5280
    %v5750 = vunpack.c.h.b16 %v5280
    %v5751 = vunpack.c.l.b16 %v5281
    %v5752 = vunpack.c.h.b16 %v5281
    %v5753 = vunpack.c.l.b16 %v5282
    %v5754 = vunpack.c.h.b16 %v5282
    %v5755 = vunpack.c.l.b16 %v5283
    %v5756 = vunpack.c.h.b16 %v5283
    %v5757 = vunpack.c.l.b16 %v5284
    %v5758 = vunpack.c.h.b16 %v5284
    %v5759 = vunpack.c.l.b16 %v5285
    %v5760 = vunpack.c.h.b16 %v5285
    %v5761 = vunpack.c.l.b16 %v5286
    %v5762 = vunpack.c.h.b16 %v5286
    %v5763 = vunpack.c.l.b16 %v5287
    %v5764 = vunpack.c.h.b16 %v5287
    %v5765 = vunpack.c.l.b16 %v5288
    %v5766 = vunpack.c.h.b16 %v5288
    %v5767 = vunpack.c.l.b16 %v5289
    %v5768 = vunpack.c.h.b16 %v5289
    %v5769 = vunpack.c.l.b16 %v5290
    %v5770 = vunpack.c.h.b16 %v5290
    %v5771 = vunpack.c.l.b16 %v5291
    %v5772 = vunpack.c.h.b16 %v5291
    %v5773 = vunpack.c.l.b16 %v5292
    %v5774 = vunpack.c.h.b16 %v5292
    %v5775 = vunpack.c.l.b16 %v5293
    %v5776 = vunpack.c.h.b16 %v5293
    %v5777 = vunpack.c.l.b16 %v5294
    %v5778 = vunpack.c.h.b16 %v5294
    %v5779 = vunpack.c.l.b16 %v5295
    %v5780 = vunpack.c.h.b16 %v5295
    %v5781 = vunpack.c.l.b16 %v5296
    %v5782 = vunpack.c.h.b16 %v5296
    %v5783 = vunpack.c.l.b16 %v5297
    %v5784 = vunpack.c.h.b16 %v5297
    %v5785 = vunpack.c.l.b16 %v5298
    %v5786 = vunpack.c.h.b16 %v5298
    %v5787 = vunpack.c.l.b16 %v5299
    %v5788 = vunpack.c.h.b16 %v5299
    %v5789 = vunpack.c.l.b16 %v5300
    %v5790 = vunpack.c.h.b16 %v5300
    %v5791 = vunpack.c.l.b16 %v5301
    %v5792 = vunpack.c.h.b16 %v5301
    %v5793 = vunpack.c.l.b16 %v5302
    %v5794 = vunpack.c.h.b16 %v5302
    %v5795 = vunpack.c.l.b16 %v5303
    %v5796 = vunpack.c.h.b16 %v5303
    %v5797 = vunpack.c.l.b16 %v5304
    %v5798 = vunpack.c.h.b16 %v5304
    %v5799 = vunpack.c.l.b16 %v5305
    %v5800 = vunpack.c.h.b16 %v5305
    %v5801 = vunpack.c.l.b16 %v5306
    %v5802 = vunpack.c.h.b16 %v5306
    %v5803 = vunpack.c.l.b16 %v5307
    %v5804 = vunpack.c.h.b16 %v5307
    %v5805 = vunpack.c.l.b16 %v5308
    %v5806 = vunpack.c.h.b16 %v5308
    %v5807 = vunpack.c.l.b16 %v5309
    %v5808 = vunpack.c.h.b16 %v5309
    %v5809 = vunpack.c.l.b16 %v5310
    %v5810 = vunpack.c.h.b16 %v5310
    %v5811 = vunpack.c.l.b16 %v5311
    %v5812 = vunpack.c.h.b16 %v5311
    %v5813 = vunpack.c.l.b16 %v5312
    %v5814 = vunpack.c.h.b16 %v5312
    %v5815 = vunpack.c.l.b16 %v5313
    %v5816 = vunpack.c.h.b16 %v5313
    %v5817 = vunpack.c.l.b16 %v5314
    %v5818 = vunpack.c.h.b16 %v5314
    %v5819 = vunpack.c.l.b16 %v5315
    %v5820 = vunpack.c.h.b16 %v5315
    %v5821 = vunpack.c.l.b16 %v5316
    %v5822 = vunpack.c.h.b16 %v5316
    %v5823 = vunpack.c.l.b16 %v5317
    %v5824 = vunpack.c.h.b16 %v5317
    %v5825 = vunpack.c.l.b16 %v5318
    %v5826 = vunpack.c.h.b16 %v5318
    %v5827 = vunpack.c.l.b16 %v5319
    %v5828 = vunpack.c.h.b16 %v5319
    %v5829 = vunpack.c.l.b16 %v5320
    %v5830 = vunpack.c.h.b16 %v5320
    %v5831 = vunpack.c.l.b16 %v5321
    %v5832 = vunpack.c.h.b16 %v5321
    %v5833 = vunpack.c.l.b16 %v5322
    %v5834 = vunpack.c.h.b16 %v5322
    %v5835 = vunpack.c.l.b16 %v5323
    %v5836 = vunpack.c.h.b16 %v5323
    %v5837 = vunpack.c.l.b16 %v5324
    %v5838 = vunpack.c.h.b16 %v5324
    %v5839 = vunpack.c.l.b16 %v5325
    %v5840 = vunpack.c.h.b16 %v5325
    %v5841 = vunpack.c.l.b16 %v5326
    %v5842 = vunpack.c.h.b16 %v5326
    %v5843 = vunpack.c.l.b16 %v5327
    %v5844 = vunpack.c.h.b16 %v5327
    %v5845 = vunpack.c.l.b16 %v5328
    %v5846 = vunpack.c.h.b16 %v5328
    %v5847 = vunpack.c.l.b16 %v5329
    %v5848 = vunpack.c.h.b16 %v5329
    %v5849 = vunpack.c.l.b16 %v5330
    %v5850 = vunpack.c.h.b16 %v5330
    %v5851 = vunpack.c.l.b16 %v5331
    %v5852 = vunpack.c.h.b16 %v5331
    %v5853 = vunpack.c.l.b16 %v5332
    %v5854 = vunpack.c.h.b16 %v5332
    %v5855 = vunpack.c.l.b16 %v5333
    %v5856 = vunpack.c.h.b16 %v5333
    %v5857 = vunpack.c.l.b16 %v5334
    %v5858 = vunpack.c.h.b16 %v5334
    %v5859 = vunpack.c.l.b16 %v5335
    %v5860 = vunpack.c.h.b16 %v5335
    %v5861 = vunpack.c.l.b16 %v5336
    %v5862 = vunpack.c.h.b16 %v5336
    %v5863 = vunpack.c.l.b16 %v5337
    %v5864 = vunpack.c.h.b16 %v5337
    %v5865 = vunpack.c.l.b16 %v5338
    %v5866 = vunpack.c.h.b16 %v5338
    %v5867 = vunpack.c.l.b16 %v5339
    %v5868 = vunpack.c.h.b16 %v5339
    %v5869 = vunpack.c.l.b16 %v5340
    %v5870 = vunpack.c.h.b16 %v5340
    %v5871 = vunpack.c.l.b16 %v5341
    %v5872 = vunpack.c.h.b16 %v5341
    %v5873 = vunpack.c.l.b16 %v5342
    %v5874 = vunpack.c.h.b16 %v5342
    %v5875 = vunpack.c.l.b16 %v5343
    %v5876 = vunpack.c.h.b16 %v5343
    %v5877 = vunpack.c.l.b16 %v5344
    %v5878 = vunpack.c.h.b16 %v5344
    %v5879 = vunpack.c.l.b16 %v5345
    %v5880 = vunpack.c.h.b16 %v5345
    %v5881 = vunpack.c.l.b16 %v5346
    %v5882 = vunpack.c.h.b16 %v5346
    %v5883 = vunpack.c.l.b16 %v5347
    %v5884 = vunpack.c.h.b16 %v5347
    %v5885 = vunpack.c.l.b16 %v5348
    %v5886 = vunpack.c.h.b16 %v5348
    %v5887 = vunpack.c.l.b16 %v5349
    %v5888 = vunpack.c.h.b16 %v5349
    %v5889 = vunpack.c.l.b16 %v5350
    %v5890 = vunpack.c.h.b16 %v5350
    %v5891 = vunpack.c.l.b16 %v5351
    %v5892 = vunpack.c.h.b16 %v5351
    %v5893 = vunpack.c.l.b16 %v5352
    %v5894 = vunpack.c.h.b16 %v5352
    %v5895 = vunpack.c.l.b16 %v5353
    %v5896 = vunpack.c.h.b16 %v5353
    %v5897 = vunpack.c.l.b16 %v5354
    %v5898 = vunpack.c.h.b16 %v5354
    %v5899 = vunpack.c.l.b16 %v5355
    %v5900 = vunpack.c.h.b16 %v5355
    %v5901 = vunpack.c.l.b16 %v5356
    %v5902 = vunpack.c.h.b16 %v5356
    %v5903 = vunpack.c.l.b16 %v5357
    %v5904 = vunpack.c.h.b16 %v5357
    %v5905 = vunpack.c.l.b16 %v5358
    %v5906 = vunpack.c.h.b16 %v5358
    %v5907 = vunpack.c.l.b16 %v5359
    %v5908 = vunpack.c.h.b16 %v5359
    %v5909 = vunpack.c.l.b16 %v5360
    %v5910 = vunpack.c.h.b16 %v5360
    %v5911 = vunpack.c.l.b16 %v5361
    %v5912 = vunpack.c.h.b16 %v5361
    %v5913 = vunpack.c.l.b16 %v5362
    %v5914 = vunpack.c.h.b16 %v5362
    %v5915 = vunpack.c.l.b16 %v5363
    %v5916 = vunpack.c.h.b16 %v5363
    %v5917 = vunpack.c.l.b16 %v5364
    %v5918 = vunpack.c.h.b16 %v5364
    %v5919 = vunpack.c.l.b16 %v5365
    %v5920 = vunpack.c.h.b16 %v5365
    %v5921 = vunpack.c.l.b16 %v5366
    %v5922 = vunpack.c.h.b16 %v5366
    %v5923 = vunpack.c.l.b16 %v5367
    %v5924 = vunpack.c.h.b16 %v5367
    %v5925 = vunpack.c.l.b16 %v5368
    %v5926 = vunpack.c.h.b16 %v5368
    %v5927 = vunpack.c.l.b16 %v5369
    %v5928 = vunpack.c.h.b16 %v5369
    %v5929 = vunpack.c.l.b16 %v5370
    %v5930 = vunpack.c.h.b16 %v5370
    %v5931 = vunpack.c.l.b16 %v5371
    %v5932 = vunpack.c.h.b16 %v5371
    %v5933 = vunpack.c.l.b16 %v5372
    %v5934 = vunpack.c.h.b16 %v5372
    %v5935 = vunpack.c.l.b16 %v5373
    %v5936 = vunpack.c.h.b16 %v5373
    %v5937 = vunpack.c.l.b16 %v5374
    %v5938 = vunpack.c.h.b16 %v5374
    %v5939 = vunpack.c.l.b16 %v5375
    %v5940 = vunpack.c.h.b16 %v5375
    %v5941 = vunpack.c.l.b16 %v5376
    %v5942 = vunpack.c.h.b16 %v5376
    %v5943 = vunpack.c.l.b16 %v5377
    %v5944 = vunpack.c.h.b16 %v5377
    %v5945 = vunpack.c.l.b16 %v5378
    %v5946 = vunpack.c.h.b16 %v5378
    %v5947 = vunpack.c.l.b16 %v5379
    %v5948 = vunpack.c.h.b16 %v5379
    %v5949 = vunpack.c.l.b16 %v5380
    %v5950 = vunpack.c.h.b16 %v5380
    %v5951 = vunpack.c.l.b16 %v5381
    %v5952 = vunpack.c.h.b16 %v5381
    %v5953 = vpack.c.b16 %v5637, %v5633
    %v5954 = vpack.c.b16 %v5638, %v5634
    %v5955 = vpack.c.b16 %v5639, %v5635
    %v5956 = vpack.c.b16 %v5640, %v5636
    %v5957 = vpack.c.b16 %v5645, %v5641
    %v5958 = vpack.c.b16 %v5646, %v5642
    %v5959 = vpack.c.b16 %v5647, %v5643
    %v5960 = vpack.c.b16 %v5648, %v5644
    %v5961 = vpack.c.b16 %v5653, %v5649
    %v5962 = vpack.c.b16 %v5654, %v5650
    %v5963 = vpack.c.b16 %v5655, %v5651
    %v5964 = vpack.c.b16 %v5656, %v5652
    %v5965 = vpack.c.b16 %v5661, %v5657
    %v5966 = vpack.c.b16 %v5662, %v5658
    %v5967 = vpack.c.b16 %v5663, %v5659
    %v5968 = vpack.c.b16 %v5664, %v5660
    %v5969 = vpack.c.b16 %v5669, %v5665
    %v5970 = vpack.c.b16 %v5670, %v5666
    %v5971 = vpack.c.b16 %v5671, %v5667
    %v5972 = vpack.c.b16 %v5672, %v5668
    %v5973 = vpack.c.b16 %v5677, %v5673
    %v5974 = vpack.c.b16 %v5678, %v5674
    %v5975 = vpack.c.b16 %v5679, %v5675
    %v5976 = vpack.c.b16 %v5680, %v5676
    %v5977 = vpack.c.b16 %v5685, %v5681
    %v5978 = vpack.c.b16 %v5686, %v5682
    %v5979 = vpack.c.b16 %v5687, %v5683
    %v5980 = vpack.c.b16 %v5688, %v5684
    %v5981 = vpack.c.b16 %v5693, %v5689
    %v5982 = vpack.c.b16 %v5694, %v5690
    %v5983 = vpack.c.b16 %v5695, %v5691
    %v5984 = vpack.c.b16 %v5696, %v5692
    %v5985 = vpack.c.b16 %v5701, %v5697
    %v5986 = vpack.c.b16 %v5702, %v5698
    %v5987 = vpack.c.b16 %v5703, %v5699
    %v5988 = vpack.c.b16 %v5704, %v5700
    %v5989 = vpack.c.b16 %v5709, %v5705
    %v5990 = vpack.c.b16 %v5710, %v5706
    %v5991 = vpack.c.b16 %v5711, %v5707
    %v5992 = vpack.c.b16 %v5712, %v5708
    %v5993 = vpack.c.b16 %v5717, %v5713
    %v5994 = vpack.c.b16 %v5718, %v5714
    %v5995 = vpack.c.b16 %v5719, %v5715
    %v5996 = vpack.c.b16 %v5720, %v5716
    %v5997 = vpack.c.b16 %v5725, %v5721
    %v5998 = vpack.c.b16 %v5726, %v5722
    %v5999 = vpack.c.b16 %v5727, %v5723
    %v6000 = vpack.c.b16 %v5728, %v5724
    %v6001 = vpack.c.b16 %v5733, %v5729
    %v6002 = vpack.c.b16 %v5734, %v5730
    %v6003 = vpack.c.b16 %v5735, %v5731
    %v6004 = vpack.c.b16 %v5736, %v5732
    %v6005 = vpack.c.b16 %v5741, %v5737
    %v6006 = vpack.c.b16 %v5742, %v5738
    %v6007 = vpack.c.b16 %v5743, %v5739
    %v6008 = vpack.c.b16 %v5744, %v5740
    %v6009 = vpack.c.b16 %v5749, %v5745
    %v6010 = vpack.c.b16 %v5750, %v5746
    %v6011 = vpack.c.b16 %v5751, %v5747
    %v6012 = vpack.c.b16 %v5752, %v5748
    %v6013 = vpack.c.b16 %v5757, %v5753
    %v6014 = vpack.c.b16 %v5758, %v5754
    %v6015 = vpack.c.b16 %v5759, %v5755
    %v6016 = vpack.c.b16 %v5760, %v5756
    %v6017 = vpack.c.b16 %v5765, %v5761
    %v6018 = vpack.c.b16 %v5766, %v5762
    %v6019 = vpack.c.b16 %v5767, %v5763
    %v6020 = vpack.c.b16 %v5768, %v5764
    %v6021 = vpack.c.b16 %v5773, %v5769
    %v6022 = vpack.c.b16 %v5774, %v5770
    %v6023 = vpack.c.b16 %v5775, %v5771
    %v6024 = vpack.c.b16 %v5776, %v5772
    %v6025 = vpack.c.b16 %v5781, %v5777
    %v6026 = vpack.c.b16 %v5782, %v5778
    %v6027 = vpack.c.b16 %v5783, %v5779
    %v6028 = vpack.c.b16 %v5784, %v5780
    %v6029 = vpack.c.b16 %v5789, %v5785
    %v6030 = vpack.c.b16 %v5790, %v5786
    %v6031 = vpack.c.b16 %v5791, %v5787
    %v6032 = vpack.c.b16 %v5792, %v5788
    %v6033 = vpack.c.b16 %v5797, %v5793
    %v6034 = vpack.c.b16 %v5798, %v5794
    %v6035 = vpack.c.b16 %v5799, %v5795
    %v6036 = vpack.c.b16 %v5800, %v5796
    %v6037 = vpack.c.b16 %v5805, %v5801
    %v6038 = vpack.c.b16 %v5806, %v5802
    %v6039 = vpack.c.b16 %v5807, %v5803
    %v6040 = vpack.c.b16 %v5808, %v5804
    %v6041 = vpack.c.b16 %v5813, %v5809
    %v6042 = vpack.c.b16 %v5814, %v5810
    %v6043 = vpack.c.b16 %v5815, %v5811
    %v6044 = vpack.c.b16 %v5816, %v5812
    %v6045 = vpack.c.b16 %v5821, %v5817
    %v6046 = vpack.c.b16 %v5822, %v5818
    %v6047 = vpack.c.b16 %v5823, %v5819
    %v6048 = vpack.c.b16 %v5824, %v5820
    %v6049 = vpack.c.b16 %v5829, %v5825
    %v6050 = vpack.c.b16 %v5830, %v5826
    %v6051 = vpack.c.b16 %v5831, %v5827
    %v6052 = vpack.c.b16 %v5832, %v5828
    %v6053 = vpack.c.b16 %v5837, %v5833
    %v6054 = vpack.c.b16 %v5838, %v5834
    %v6055 = vpack.c.b16 %v5839, %v5835
    %v6056 = vpack.c.b16 %v5840, %v5836
    %v6057 = vpack.c.b16 %v5845, %v5841
    %v6058 = vpack.c.b16 %v5846, %v5842
    %v6059 = vpack.c.b16 %v5847, %v5843
    %v6060 = vpack.c.b16 %v5848, %v5844
    %v6061 = vpack.c.b16 %v5853, %v5849
    %v6062 = vpack.c.b16 %v5854, %v5850
    %v6063 = vpack.c.b16 %v5855, %v5851
    %v6064 = vpack.c.b16 %v5856, %v5852
    %v6065 = vpack.c.b16 %v5861, %v5857
    %v6066 = vpack.c.b16 %v5862, %v5858
    %v6067 = vpack.c.b16 %v5863, %v5859
    %v6068 = vpack.c.b16 %v5864, %v5860
    %v6069 = vpack.c.b16 %v5869, %v5865
    %v6070 = vpack.c.b16 %v5870, %v5866
    %v6071 = vpack.c.b16 %v5871, %v5867
    %v6072 = vpack.c.b16 %v5872, %v5868
    %v6073 = vpack.c.b16 %v5877, %v5873
    %v6074 = vpack.c.b16 %v5878, %v5874
    %v6075 = vpack.c.b16 %v5879, %v5875
    %v6076 = vpack.c.b16 %v5880, %v5876
    %v6077 = vpack.c.b16 %v5885, %v5881
    %v6078 = vpack.c.b16 %v5886, %v5882
    %v6079 = vpack.c.b16 %v5887, %v5883
    %v6080 = vpack.c.b16 %v5888, %v5884
    %v6081 = vpack.c.b16 %v5893, %v5889
    %v6082 = vpack.c.b16 %v5894, %v5890
    %v6083 = vpack.c.b16 %v5895, %v5891
    %v6084 = vpack.c.b16 %v5896, %v5892
    %v6085 = vpack.c.b16 %v5901, %v5897
    %v6086 = vpack.c.b16 %v5902, %v5898
    %v6087 = vpack.c.b16 %v5903, %v5899
    %v6088 = vpack.c.b16 %v5904, %v5900
    %v6089 = vpack.c.b16 %v5909, %v5905
    %v6090 = vpack.c.b16 %v5910, %v5906
    %v6091 = vpack.c.b16 %v5911, %v5907
    %v6092 = vpack.c.b16 %v5912, %v5908
    %v6093 = vpack.c.b16 %v5917, %v5913
    %v6094 = vpack.c.b16 %v5918, %v5914
    %v6095 = vpack.c.b16 %v5919, %v5915
    %v6096 = vpack.c.b16 %v5920, %v5916
    %v6097 = vpack.c.b16 %v5925, %v5921
    %v6098 = vpack.c.b16 %v5926, %v5922
    %v6099 = vpack.c.b16 %v5927, %v5923
    %v6100 = vpack.c.b16 %v5928, %v5924
    %v6101 = vpack.c.b16 %v5933, %v5929
    %v6102 = vpack.c.b16 %v5934, %v5930
    %v6103 = vpack.c.b16 %v5935, %v5931
    %v6104 = vpack.c.b16 %v5936, %v5932
    %v6105 = vpack.c.b16 %v5941, %v5937
    %v6106 = vpack.c.b16 %v5942, %v5938
    %v6107 = vpack.c.b16 %v5943, %v5939
    %v6108 = vpack.c.b16 %v5944, %v5940
    %v6109 = vpack.c.b16 %v5949, %v5945
    %v6110 = vpack.c.b16 %v5950, %v5946
    %v6111 = vpack.c.b16 %v5951, %v5947
    %v6112 = vpack.c.b16 %v5952, %v5948
    %6273 = vmatprep.subr.bf16.mxu0 %v5954
    %6274 = vmatpush1.bf16.msra.mxu0 %v5953
    %6275 = vmatprep.subr.bf16.mxu0 %v5958
    %6276 = vmatpush1.bf16.msra.mxu0 %v5957
    %6277 = vmatprep.subr.bf16.mxu0 %v5962
    %6278 = vmatpush1.bf16.msra.mxu0 %v5961
    %6279 = vmatprep.subr.bf16.mxu0 %v5966
    %6280 = vmatpush1.bf16.msra.mxu0 %v5965
    %6281 = vmatprep.subr.bf16.mxu0 %v5970
    %6282 = vmatpush1.bf16.msra.mxu0 %v5969
    %6283 = vmatprep.subr.bf16.mxu0 %v5974
    %6284 = vmatpush1.bf16.msra.mxu0 %v5973
    %6285 = vmatprep.subr.bf16.mxu0 %v5978
    %6286 = vmatpush1.bf16.msra.mxu0 %v5977
    %6287 = vmatprep.subr.bf16.mxu0 %v5982
    %6288 = vmatpush1.bf16.msra.mxu0 %v5981
    %6289 = vmatprep.subr.bf16.mxu0 %v5986
    %6290 = vmatpush1.bf16.msra.mxu0 %v5985
    %6291 = vmatprep.subr.bf16.mxu0 %v5990
    %6292 = vmatpush1.bf16.msra.mxu0 %v5989
    %6293 = vmatprep.subr.bf16.mxu0 %v5994
    %6294 = vmatpush1.bf16.msra.mxu0 %v5993
    %6295 = vmatprep.subr.bf16.mxu0 %v5998
    %6296 = vmatpush1.bf16.msra.mxu0 %v5997
    %6297 = vmatprep.subr.bf16.mxu0 %v6002
    %6298 = vmatpush1.bf16.msra.mxu0 %v6001
    %6299 = vmatprep.subr.bf16.mxu0 %v6006
    %6300 = vmatpush1.bf16.msra.mxu0 %v6005
    %6301 = vmatprep.subr.bf16.mxu0 %v6010
    %6302 = vmatpush1.bf16.msra.mxu0 %v6009
    %6303 = vmatprep.subr.bf16.mxu0 %v6014
    %6304 = vmatpush1.bf16.msra.mxu0 %v6013
    %6305 = vmatprep.mubr.bf16.mxu0 %v5443
    %6306 = vmatmul.mubr.bf16.gmra.mrb[0].mxu0 %v5440
    %v6307 = vpop.f32.mrb[0].mxu0
    %v6308 = vadd.f32 0.0, %v6307
    %v6309 = vpop.f32.mrb[0].mxu0
    %v6310 = vadd.f32 0.0, %v6309
    %v6311 = vpop.f32.mrb[0].mxu0
    %v6312 = vadd.f32 0.0, %v6311
    %v6313 = vpop.f32.mrb[0].mxu0
    %v6314 = vadd.f32 0.0, %v6313
    %6315 = vmatprep.mubr.bf16.mxu0 %v5456
    %6316 = vmatmul.mubr.bf16.gmra.mrb[0].mxu0 %v5454
    %v6317 = vpop.f32.mrb[0].mxu0
    %v6318 = vadd.f32 0.0, %v6317
    %v6319 = vpop.f32.mrb[0].mxu0
    %v6320 = vadd.f32 0.0, %v6319
    %v6321 = vpop.f32.mrb[0].mxu0
    %v6322 = vadd.f32 0.0, %v6321
    %v6323 = vpop.f32.mrb[0].mxu0
    %v6324 = vadd.f32 0.0, %v6323
    %6325 = vdwg.mxu0
    %6326 = vmatprep.subr.bf16.mxu0 %v6018
    %6327 = vmatpush1.bf16.msra.mxu0 %v6017
    %6328 = vmatprep.subr.bf16.mxu0 %v6022
    %6329 = vmatpush1.bf16.msra.mxu0 %v6021
    %6330 = vmatprep.subr.bf16.mxu0 %v6026
    %6331 = vmatpush1.bf16.msra.mxu0 %v6025
    %6332 = vmatprep.subr.bf16.mxu0 %v6030
    %6333 = vmatpush1.bf16.msra.mxu0 %v6029
    %6334 = vmatprep.subr.bf16.mxu0 %v6034
    %6335 = vmatpush1.bf16.msra.mxu0 %v6033
    %6336 = vmatprep.subr.bf16.mxu0 %v6038
    %6337 = vmatpush1.bf16.msra.mxu0 %v6037
    %6338 = vmatprep.subr.bf16.mxu0 %v6042
    %6339 = vmatpush1.bf16.msra.mxu0 %v6041
    %6340 = vmatprep.subr.bf16.mxu0 %v6046
    %6341 = vmatpush1.bf16.msra.mxu0 %v6045
    %6342 = vmatprep.subr.bf16.mxu0 %v6050
    %6343 = vmatpush1.bf16.msra.mxu0 %v6049
    %6344 = vmatprep.subr.bf16.mxu0 %v6054
    %6345 = vmatpush1.bf16.msra.mxu0 %v6053
    %6346 = vmatprep.subr.bf16.mxu0 %v6058
    %6347 = vmatpush1.bf16.msra.mxu0 %v6057
    %6348 = vmatprep.subr.bf16.mxu0 %v6062
    %6349 = vmatpush1.bf16.msra.mxu0 %v6061
    %6350 = vmatprep.subr.bf16.mxu0 %v6066
    %6351 = vmatpush1.bf16.msra.mxu0 %v6065
    %6352 = vmatprep.subr.bf16.mxu0 %v6070
    %6353 = vmatpush1.bf16.msra.mxu0 %v6069
    %6354 = vmatprep.subr.bf16.mxu0 %v6074
    %6355 = vmatpush1.bf16.msra.mxu0 %v6073
    %6356 = vmatprep.subr.bf16.mxu0 %v6078
    %6357 = vmatpush1.bf16.msra.mxu0 %v6077
    %6358 = vmatprep.mubr.bf16.mxu0 %v5449
    %6359 = vmatmul.mubr.bf16.gmra.mrb[0].mxu0 %v5446
    %v6360 = vpop.f32.mrb[0].mxu0
    %v6361 = vadd.f32 %v6308, %v6360
    %v6362 = vpop.f32.mrb[0].mxu0
    %v6363 = vadd.f32 %v6310, %v6362
    %v6364 = vpop.f32.mrb[0].mxu0
    %v6365 = vadd.f32 %v6312, %v6364
    %v6366 = vpop.f32.mrb[0].mxu0
    %v6367 = vadd.f32 %v6314, %v6366
    %6368 = vmatprep.mubr.bf16.mxu0 %v5460
    %6369 = vmatmul.mubr.bf16.gmra.mrb[0].mxu0 %v5458
    %v6370 = vpop.f32.mrb[0].mxu0
    %v6371 = vadd.f32 %v6318, %v6370
    %v6372 = vpop.f32.mrb[0].mxu0
    %v6373 = vadd.f32 %v6320, %v6372
    %v6374 = vpop.f32.mrb[0].mxu0
    %v6375 = vadd.f32 %v6322, %v6374
    %v6376 = vpop.f32.mrb[0].mxu0
    %v6377 = vadd.f32 %v6324, %v6376
    %6378 = vdwg.mxu0
    %6379 = vmatprep.subr.bf16.mxu0 %v6082
    %6380 = vmatpush1.bf16.msra.mxu0 %v6081
    %6381 = vmatprep.subr.bf16.mxu0 %v6086
    %6382 = vmatpush1.bf16.msra.mxu0 %v6085
    %6383 = vmatprep.subr.bf16.mxu0 %v6090
    %6384 = vmatpush1.bf16.msra.mxu0 %v6089
    %6385 = vmatprep.subr.bf16.mxu0 %v6094
    %6386 = vmatpush1.bf16.msra.mxu0 %v6093
    %6387 = vmatprep.subr.bf16.mxu0 %v6098
    %6388 = vmatpush1.bf16.msra.mxu0 %v6097
    %6389 = vmatprep.subr.bf16.mxu0 %v6102
    %6390 = vmatpush1.bf16.msra.mxu0 %v6101
    %6391 = vmatprep.subr.bf16.mxu0 %v6106
    %6392 = vmatpush1.bf16.msra.mxu0 %v6105
    %6393 = vmatprep.subr.bf16.mxu0 %v6110
    %6394 = vmatpush1.bf16.msra.mxu0 %v6109
    %6395 = vmatprep.subr.bf16.mxu0 0
    %6396 = vmatpush1.bf16.msra.mxu0 0
    %6397 = vmatprep.subr.bf16.mxu0 0
    %6398 = vmatpush1.bf16.msra.mxu0 0
    %6399 = vmatprep.subr.bf16.mxu0 0
    %6400 = vmatpush1.bf16.msra.mxu0 0
    %6401 = vmatprep.subr.bf16.mxu0 0
    %6402 = vmatpush1.bf16.msra.mxu0 0
    %6403 = vmatprep.subr.bf16.mxu0 0
    %6404 = vmatpush1.bf16.msra.mxu0 0
    %6405 = vmatprep.subr.bf16.mxu0 0
    %6406 = vmatpush1.bf16.msra.mxu0 0
    %6407 = vmatprep.subr.bf16.mxu0 0
    %6408 = vmatpush1.bf16.msra.mxu0 0
    %6409 = vmatprep.subr.bf16.mxu0 0
    %6410 = vmatpush1.bf16.msra.mxu0 0
    %6411 = vmatprep.mubr.bf16.mxu0 0
    %6412 = vmatmul.mubr.bf16.gmra.mrb[0].mxu0 %v5452
    %v6413 = vpop.f32.mrb[0].mxu0
    %v6414 = vadd.f32 %v6361, %v6413
    %v6415 = vpop.f32.mrb[0].mxu0
    %v6416 = vadd.f32 %v6363, %v6415
    %v6417 = vpop.f32.mrb[0].mxu0
    %v6418 = vadd.f32 %v6365, %v6417
    %v6419 = vpop.f32.mrb[0].mxu0
    %v6420 = vadd.f32 %v6367, %v6419
    %6421 = vmatprep.mubr.bf16.mxu0 0
    %6422 = vmatmul.mubr.bf16.gmra.mrb[0].mxu0 %v5462
    %v6423 = vpop.f32.mrb[0].mxu0
    %v6424 = vadd.f32 %v6371, %v6423
    %v6425 = vpop.f32.mrb[0].mxu0
    %v6426 = vadd.f32 %v6373, %v6425
    %v6427 = vpop.f32.mrb[0].mxu0
    %v6428 = vadd.f32 %v6375, %v6427
    %v6429 = vpop.f32.mrb[0].mxu0
    %v6430 = vadd.f32 %v6377, %v6429
    %6431 = vdwg.mxu0
    %6432 = vmatprep.subr.bf16.mxu0 %v5956
    %6433 = vmatpush1.bf16.msra.mxu0 %v5955
    %6434 = vmatprep.subr.bf16.mxu0 %v5960
    %6435 = vmatpush1.bf16.msra.mxu0 %v5959
    %6436 = vmatprep.subr.bf16.mxu0 %v5964
    %6437 = vmatpush1.bf16.msra.mxu0 %v5963
    %6438 = vmatprep.subr.bf16.mxu0 %v5968
    %6439 = vmatpush1.bf16.msra.mxu0 %v5967
    %6440 = vmatprep.subr.bf16.mxu0 %v5972
    %6441 = vmatpush1.bf16.msra.mxu0 %v5971
    %6442 = vmatprep.subr.bf16.mxu0 %v5976
    %6443 = vmatpush1.bf16.msra.mxu0 %v5975
    %6444 = vmatprep.subr.bf16.mxu0 %v5980
    %6445 = vmatpush1.bf16.msra.mxu0 %v5979
    %6446 = vmatprep.subr.bf16.mxu0 %v5984
    %6447 = vmatpush1.bf16.msra.mxu0 %v5983
    %6448 = vmatprep.subr.bf16.mxu0 %v5988
    %6449 = vmatpush1.bf16.msra.mxu0 %v5987
    %6450 = vmatprep.subr.bf16.mxu0 %v5992
    %6451 = vmatpush1.bf16.msra.mxu0 %v5991
    %6452 = vmatprep.subr.bf16.mxu0 %v5996
    %6453 = vmatpush1.bf16.msra.mxu0 %v5995
    %6454 = vmatprep.subr.bf16.mxu0 %v6000
    %6455 = vmatpush1.bf16.msra.mxu0 %v5999
    %6456 = vmatprep.subr.bf16.mxu0 %v6004
    %6457 = vmatpush1.bf16.msra.mxu0 %v6003
    %6458 = vmatprep.subr.bf16.mxu0 %v6008
    %6459 = vmatpush1.bf16.msra.mxu0 %v6007
    %6460 = vmatprep.subr.bf16.mxu0 %v6012
    %6461 = vmatpush1.bf16.msra.mxu0 %v6011
    %6462 = vmatprep.subr.bf16.mxu0 %v6016
    %6463 = vmatpush1.bf16.msra.mxu0 %v6015
    %6464 = vmatprep.mubr.bf16.mxu0 %v5443
    %6465 = vmatmul.mubr.bf16.gmra.mrb[0].mxu0 %v5440
    %v6466 = vpop.f32.mrb[0].mxu0
    %v6467 = vadd.f32 0.0, %v6466
    %v6468 = vpop.f32.mrb[0].mxu0
    %v6469 = vadd.f32 0.0, %v6468
    %v6470 = vpop.f32.mrb[0].mxu0
    %v6471 = vadd.f32 0.0, %v6470
    %v6472 = vpop.f32.mrb[0].mxu0
    %v6473 = vadd.f32 0.0, %v6472
    %6474 = vmatprep.mubr.bf16.mxu0 %v5456
    %6475 = vmatmul.mubr.bf16.gmra.mrb[0].mxu0 %v5454
    %v6476 = vpop.f32.mrb[0].mxu0
    %v6477 = vadd.f32 0.0, %v6476
    %v6478 = vpop.f32.mrb[0].mxu0
    %v6479 = vadd.f32 0.0, %v6478
    %v6480 = vpop.f32.mrb[0].mxu0
    %v6481 = vadd.f32 0.0, %v6480
    %v6482 = vpop.f32.mrb[0].mxu0
    %v6483 = vadd.f32 0.0, %v6482
    %6484 = vdwg.mxu0
    %6485 = vmatprep.subr.bf16.mxu0 %v6020
    %6486 = vmatpush1.bf16.msra.mxu0 %v6019
    %6487 = vmatprep.subr.bf16.mxu0 %v6024
    %6488 = vmatpush1.bf16.msra.mxu0 %v6023
    %6489 = vmatprep.subr.bf16.mxu0 %v6028
    %6490 = vmatpush1.bf16.msra.mxu0 %v6027
    %6491 = vmatprep.subr.bf16.mxu0 %v6032
    %6492 = vmatpush1.bf16.msra.mxu0 %v6031
    %6493 = vmatprep.subr.bf16.mxu0 %v6036
    %6494 = vmatpush1.bf16.msra.mxu0 %v6035
    %6495 = vmatprep.subr.bf16.mxu0 %v6040
    %6496 = vmatpush1.bf16.msra.mxu0 %v6039
    %6497 = vmatprep.subr.bf16.mxu0 %v6044
    %6498 = vmatpush1.bf16.msra.mxu0 %v6043
    %6499 = vmatprep.subr.bf16.mxu0 %v6048
    %6500 = vmatpush1.bf16.msra.mxu0 %v6047
    %6501 = vmatprep.subr.bf16.mxu0 %v6052
    %6502 = vmatpush1.bf16.msra.mxu0 %v6051
    %6503 = vmatprep.subr.bf16.mxu0 %v6056
    %6504 = vmatpush1.bf16.msra.mxu0 %v6055
    %6505 = vmatprep.subr.bf16.mxu0 %v6060
    %6506 = vmatpush1.bf16.msra.mxu0 %v6059
    %6507 = vmatprep.subr.bf16.mxu0 %v6064
    %6508 = vmatpush1.bf16.msra.mxu0 %v6063
    %6509 = vmatprep.subr.bf16.mxu0 %v6068
    %6510 = vmatpush1.bf16.msra.mxu0 %v6067
    %6511 = vmatprep.subr.bf16.mxu0 %v6072
    %6512 = vmatpush1.bf16.msra.mxu0 %v6071
    %6513 = vmatprep.subr.bf16.mxu0 %v6076
    %6514 = vmatpush1.bf16.msra.mxu0 %v6075
    %6515 = vmatprep.subr.bf16.mxu0 %v6080
    %6516 = vmatpush1.bf16.msra.mxu0 %v6079
    %6517 = vmatprep.mubr.bf16.mxu0 %v5449
    %6518 = vmatmul.mubr.bf16.gmra.mrb[0].mxu0 %v5446
    %v6519 = vpop.f32.mrb[0].mxu0
    %v6520 = vadd.f32 %v6467, %v6519
    %v6521 = vpop.f32.mrb[0].mxu0
    %v6522 = vadd.f32 %v6469, %v6521
    %v6523 = vpop.f32.mrb[0].mxu0
    %v6524 = vadd.f32 %v6471, %v6523
    %v6525 = vpop.f32.mrb[0].mxu0
    %v6526 = vadd.f32 %v6473, %v6525
    %6527 = vmatprep.mubr.bf16.mxu0 %v5460
    %6528 = vmatmul.mubr.bf16.gmra.mrb[0].mxu0 %v5458
    %v6529 = vpop.f32.mrb[0].mxu0
    %v6530 = vadd.f32 %v6477, %v6529
    %v6531 = vpop.f32.mrb[0].mxu0
    %v6532 = vadd.f32 %v6479, %v6531
    %v6533 = vpop.f32.mrb[0].mxu0
    %v6534 = vadd.f32 %v6481, %v6533
    %v6535 = vpop.f32.mrb[0].mxu0
    %v6536 = vadd.f32 %v6483, %v6535
    %6537 = vdwg.mxu0
    %6538 = vmatprep.subr.bf16.mxu0 %v6084
    %6539 = vmatpush1.bf16.msra.mxu0 %v6083
    %6540 = vmatprep.subr.bf16.mxu0 %v6088
    %6541 = vmatpush1.bf16.msra.mxu0 %v6087
    %6542 = vmatprep.subr.bf16.mxu0 %v6092
    %6543 = vmatpush1.bf16.msra.mxu0 %v6091
    %6544 = vmatprep.subr.bf16.mxu0 %v6096
    %6545 = vmatpush1.bf16.msra.mxu0 %v6095
    %6546 = vmatprep.subr.bf16.mxu0 %v6100
    %6547 = vmatpush1.bf16.msra.mxu0 %v6099
    %6548 = vmatprep.subr.bf16.mxu0 %v6104
    %6549 = vmatpush1.bf16.msra.mxu0 %v6103
    %6550 = vmatprep.subr.bf16.mxu0 %v6108
    %6551 = vmatpush1.bf16.msra.mxu0 %v6107
    %6552 = vmatprep.subr.bf16.mxu0 %v6112
    %6553 = vmatpush1.bf16.msra.mxu0 %v6111
    %6554 = vmatprep.subr.bf16.mxu0 0
    %6555 = vmatpush1.bf16.msra.mxu0 0
    %6556 = vmatprep.subr.bf16.mxu0 0
    %6557 = vmatpush1.bf16.msra.mxu0 0
    %6558 = vmatprep.subr.bf16.mxu0 0
    %6559 = vmatpush1.bf16.msra.mxu0 0
    %6560 = vmatprep.subr.bf16.mxu0 0
    %6561 = vmatpush1.bf16.msra.mxu0 0
    %6562 = vmatprep.subr.bf16.mxu0 0
    %6563 = vmatpush1.bf16.msra.mxu0 0
    %6564 = vmatprep.subr.bf16.mxu0 0
    %6565 = vmatpush1.bf16.msra.mxu0 0
    %6566 = vmatprep.subr.bf16.mxu0 0
    %6567 = vmatpush1.bf16.msra.mxu0 0
    %6568 = vmatprep.subr.bf16.mxu0 0
    %6569 = vmatpush1.bf16.msra.mxu0 0
    %6570 = vmatprep.mubr.bf16.mxu0 0
    %6571 = vmatmul.mubr.bf16.gmra.mrb[0].mxu0 %v5452
    %v6572 = vpop.f32.mrb[0].mxu0
    %v6573 = vadd.f32 %v6520, %v6572
    %v6574 = vpop.f32.mrb[0].mxu0
    %v6575 = vadd.f32 %v6522, %v6574
    %v6576 = vpop.f32.mrb[0].mxu0
    %v6577 = vadd.f32 %v6524, %v6576
    %v6578 = vpop.f32.mrb[0].mxu0
    %v6579 = vadd.f32 %v6526, %v6578
    %6580 = vmatprep.mubr.bf16.mxu0 0
    %6581 = vmatmul.mubr.bf16.gmra.mrb[0].mxu0 %v5462
    %v6582 = vpop.f32.mrb[0].mxu0
    %v6583 = vadd.f32 %v6530, %v6582
    %v6584 = vpop.f32.mrb[0].mxu0
    %v6585 = vadd.f32 %v6532, %v6584
    %v6586 = vpop.f32.mrb[0].mxu0
    %v6587 = vadd.f32 %v6534, %v6586
    %v6588 = vpop.f32.mrb[0].mxu0
    %v6589 = vadd.f32 %v6536, %v6588
    %6590 = vdwg.mxu0
    %v6591 = vadd.f32 %v5190, %v6414
    %v6592 = vadd.f32 %v5191, %v6416
    %v6593 = vadd.f32 %v5192, %v6573
    %v6594 = vadd.f32 %v5193, %v6575
    %v6595 = vadd.f32 %v5194, %v6418
    %v6596 = vadd.f32 %v5195, %v6420
    %v6597 = vadd.f32 %v5196, %v6577
    %v6598 = vadd.f32 %v5197, %v6579
    %v6599 = vadd.f32 %v5198, %v6424
    %v6600 = vadd.f32 %v5199, %v6426
    %v6601 = vadd.f32 %v5200, %v6583
    %v6602 = vadd.f32 %v5201, %v6585
    %v6603 = vadd.f32 %v5202, %v6428
    %v6604 = vadd.f32 %v5203, %v6430
    %v6605 = vadd.f32 %v5204, %v6587
    %v6606 = vadd.f32 %v5205, %v6589
    %v6607 = vld [vmem:[#allocation2 + $0x50] sm:$0x33]
    %v6608 = vld [vmem:[#allocation2 + $0x58] sm:$0x33]
    %v6609 = vld [vmem:[#allocation2 + $0x60] sm:$0x3]
    %s6610 = scalar_lea.vmem %s3, 5120
    %v6611 = vld [vmem:[%s6610] sm:$0xff]
    %v6612 = vld [vmem:[%s6610 + $0x8] sm:$0xff]
    %v6613 = vld [vmem:[%s6610 + $0x10] sm:$0xff]
    %v6614 = vld [vmem:[%s6610 + $0x18] sm:$0xff]
    %v6615 = vld [vmem:[%s6610 + $0x20] sm:$0xff]
    %v6616 = vld [vmem:[%s6610 + $0x28] sm:$0xff]
    %v6617 = vld [vmem:[%s6610 + $0x30] sm:$0xff]
    %v6618 = vld [vmem:[%s6610 + $0x38] sm:$0xff]
    %v6619 = vld [vmem:[%s6610 + $0x40] sm:$0xff]
    %v6620 = vld [vmem:[%s6610 + $0x48] sm:$0xff]
    %v6621 = vld [vmem:[%s6610 + $0x50] sm:$0xff]
    %v6622 = vld [vmem:[%s6610 + $0x58] sm:$0xff]
    %v6623 = vld [vmem:[%s6610 + $0x60] sm:$0xff]
    %v6624 = vld [vmem:[%s6610 + $0x68] sm:$0xff]
    %v6625 = vld [vmem:[%s6610 + $0x70] sm:$0xff]
    %v6626 = vld [vmem:[%s6610 + $0x78] sm:$0xff]
    %v6627 = vld [vmem:[%s6610 + $0x80] sm:$0xff]
    %v6628 = vld [vmem:[%s6610 + $0x88] sm:$0xff]
    %v6629 = vld [vmem:[%s6610 + $0x90] sm:$0xff]
    %v6630 = vld [vmem:[%s6610 + $0x98] sm:$0xff]
    %v6631 = vld [vmem:[%s6610 + $0xa0] sm:$0xff]
    %v6632 = vld [vmem:[%s6610 + $0xa8] sm:$0xff]
    %v6633 = vld [vmem:[%s6610 + $0xb0] sm:$0xff]
    %v6634 = vld [vmem:[%s6610 + $0xb8] sm:$0xff]
    %v6635 = vld [vmem:[%s6610 + $0xc0] sm:$0xff]
    %v6636 = vld [vmem:[%s6610 + $0xc8] sm:$0xff]
    %v6637 = vld [vmem:[%s6610 + $0xd0] sm:$0xff]
    %v6638 = vld [vmem:[%s6610 + $0xd8] sm:$0xff]
    %v6639 = vld [vmem:[%s6610 + $0xe0] sm:$0xff]
    %v6640 = vld [vmem:[%s6610 + $0xe8] sm:$0xff]
    %v6641 = vld [vmem:[%s6610 + $0xf0] sm:$0xff]
    %v6642 = vld [vmem:[%s6610 + $0xf8] sm:$0xff]
    %v6643 = vld [vmem:[%s6610 + $0x100] sm:$0xff]
    %v6644 = vld [vmem:[%s6610 + $0x108] sm:$0xff]
    %v6645 = vld [vmem:[%s6610 + $0x110] sm:$0xff]
    %v6646 = vld [vmem:[%s6610 + $0x118] sm:$0xff]
    %v6647 = vld [vmem:[%s6610 + $0x120] sm:$0xff]
    %v6648 = vld [vmem:[%s6610 + $0x128] sm:$0xff]
    %v6649 = vld [vmem:[%s6610 + $0x130] sm:$0xff]
    %v6650 = vld [vmem:[%s6610 + $0x138] sm:$0xff]
    %v6651 = vld [vmem:[%s6610 + $0x140] sm:$0xff]
    %v6652 = vld [vmem:[%s6610 + $0x148] sm:$0xff]
    %v6653 = vld [vmem:[%s6610 + $0x150] sm:$0xff]
    %v6654 = vld [vmem:[%s6610 + $0x158] sm:$0xff]
    %v6655 = vld [vmem:[%s6610 + $0x160] sm:$0xff]
    %v6656 = vld [vmem:[%s6610 + $0x168] sm:$0xff]
    %v6657 = vld [vmem:[%s6610 + $0x170] sm:$0xff]
    %v6658 = vld [vmem:[%s6610 + $0x178] sm:$0xff]
    %v6659 = vld [vmem:[%s6610 + $0x180] sm:$0xff]
    %v6660 = vld [vmem:[%s6610 + $0x188] sm:$0xff]
    %v6661 = vld [vmem:[%s6610 + $0x190] sm:$0xff]
    %v6662 = vld [vmem:[%s6610 + $0x198] sm:$0xff]
    %v6663 = vld [vmem:[%s6610 + $0x1a0] sm:$0xff]
    %v6664 = vld [vmem:[%s6610 + $0x1a8] sm:$0xff]
    %v6665 = vld [vmem:[%s6610 + $0x1b0] sm:$0xff]
    %v6666 = vld [vmem:[%s6610 + $0x1b8] sm:$0xff]
    %v6667 = vld [vmem:[%s6610 + $0x1c0] sm:$0xff]
    %v6668 = vld [vmem:[%s6610 + $0x1c8] sm:$0xff]
    %v6669 = vld [vmem:[%s6610 + $0x1d0] sm:$0xff]
    %v6670 = vld [vmem:[%s6610 + $0x1d8] sm:$0xff]
    %v6671 = vld [vmem:[%s6610 + $0x1e0] sm:$0xff]
    %v6672 = vld [vmem:[%s6610 + $0x1e8] sm:$0xff]
    %v6673 = vld [vmem:[%s6610 + $0x1f0] sm:$0xff]
    %v6674 = vld [vmem:[%s6610 + $0x1f8] sm:$0xff]
    %v6675 = vld [vmem:[%s6610 + $0x200] sm:$0xff]
    %v6676 = vld [vmem:[%s6610 + $0x208] sm:$0xff]
    %v6677 = vld [vmem:[%s6610 + $0x210] sm:$0xff]
    %v6678 = vld [vmem:[%s6610 + $0x218] sm:$0xff]
    %v6679 = vld [vmem:[%s6610 + $0x220] sm:$0xff]
    %v6680 = vld [vmem:[%s6610 + $0x228] sm:$0xff]
    %v6681 = vld [vmem:[%s6610 + $0x230] sm:$0xff]
    %v6682 = vld [vmem:[%s6610 + $0x238] sm:$0xff]
    %v6683 = vld [vmem:[%s6610 + $0x240] sm:$0xff]
    %v6684 = vld [vmem:[%s6610 + $0x248] sm:$0xff]
    %v6685 = vld [vmem:[%s6610 + $0x250] sm:$0xff]
    %v6686 = vld [vmem:[%s6610 + $0x258] sm:$0xff]
    %v6687 = vld [vmem:[%s6610 + $0x260] sm:$0xff]
    %v6688 = vld [vmem:[%s6610 + $0x268] sm:$0xff]
    %v6689 = vld [vmem:[%s6610 + $0x270] sm:$0xff]
    %v6690 = vld [vmem:[%s6610 + $0x278] sm:$0xff]
    %v6691 = vld [vmem:[%s6610 + $0x280] sm:$0xff]
    %v6692 = vld [vmem:[%s6610 + $0x288] sm:$0xff]
    %v6693 = vld [vmem:[%s6610 + $0x290] sm:$0xff]
    %v6694 = vld [vmem:[%s6610 + $0x298] sm:$0xff]
    %v6695 = vld [vmem:[%s6610 + $0x2a0] sm:$0xff]
    %v6696 = vld [vmem:[%s6610 + $0x2a8] sm:$0xff]
    %v6697 = vld [vmem:[%s6610 + $0x2b0] sm:$0xff]
    %v6698 = vld [vmem:[%s6610 + $0x2b8] sm:$0xff]
    %v6699 = vld [vmem:[%s6610 + $0x2c0] sm:$0xff]
    %v6700 = vld [vmem:[%s6610 + $0x2c8] sm:$0xff]
    %v6701 = vld [vmem:[%s6610 + $0x2d0] sm:$0xff]
    %v6702 = vld [vmem:[%s6610 + $0x2d8] sm:$0xff]
    %v6703 = vld [vmem:[%s6610 + $0x2e0] sm:$0xff]
    %v6704 = vld [vmem:[%s6610 + $0x2e8] sm:$0xff]
    %v6705 = vld [vmem:[%s6610 + $0x2f0] sm:$0xff]
    %v6706 = vld [vmem:[%s6610 + $0x2f8] sm:$0xff]
    %v6707 = vld [vmem:[%s6610 + $0x300] sm:$0xff]
    %v6708 = vld [vmem:[%s6610 + $0x308] sm:$0xff]
    %v6709 = vld [vmem:[%s6610 + $0x310] sm:$0xff]
    %v6710 = vld [vmem:[%s6610 + $0x318] sm:$0xff]
    %v6711 = vld [vmem:[%s6610 + $0x320] sm:$0xff]
    %v6712 = vld [vmem:[%s6610 + $0x328] sm:$0xff]
    %v6713 = vld [vmem:[%s6610 + $0x330] sm:$0xff]
    %v6714 = vld [vmem:[%s6610 + $0x338] sm:$0xff]
    %v6715 = vld [vmem:[%s6610 + $0x340] sm:$0xff]
    %v6716 = vld [vmem:[%s6610 + $0x348] sm:$0xff]
    %v6717 = vld [vmem:[%s6610 + $0x350] sm:$0xff]
    %v6718 = vld [vmem:[%s6610 + $0x358] sm:$0xff]
    %v6719 = vld [vmem:[%s6610 + $0x360] sm:$0xff]
    %v6720 = vld [vmem:[%s6610 + $0x368] sm:$0xff]
    %v6721 = vld [vmem:[%s6610 + $0x370] sm:$0xff]
    %v6722 = vld [vmem:[%s6610 + $0x378] sm:$0xff]
    %v6723 = vld [vmem:[%s6610 + $0x380] sm:$0xff]
    %v6724 = vld [vmem:[%s6610 + $0x388] sm:$0xff]
    %v6725 = vld [vmem:[%s6610 + $0x390] sm:$0xff]
    %v6726 = vld [vmem:[%s6610 + $0x398] sm:$0xff]
    %v6727 = vld [vmem:[%s6610 + $0x3a0] sm:$0xff]
    %v6728 = vld [vmem:[%s6610 + $0x3a8] sm:$0xff]
    %v6729 = vld [vmem:[%s6610 + $0x3b0] sm:$0xff]
    %v6730 = vld [vmem:[%s6610 + $0x3b8] sm:$0xff]
    %v6731 = vld [vmem:[%s6610 + $0x3c0] sm:$0xff]
    %v6732 = vld [vmem:[%s6610 + $0x3c8] sm:$0xff]
    %v6733 = vld [vmem:[%s6610 + $0x3d0] sm:$0xff]
    %v6734 = vld [vmem:[%s6610 + $0x3d8] sm:$0xff]
    %v6735 = vld [vmem:[%s6610 + $0x3e0] sm:$0xff]
    %v6736 = vld [vmem:[%s6610 + $0x3e8] sm:$0xff]
    %v6737 = vld [vmem:[%s6610 + $0x3f0] sm:$0xff]
    %v6738 = vld [vmem:[%s6610 + $0x3f8] sm:$0xff]
    %v6739 = vld [vmem:[%s6610 + $0x400] sm:$0xff]
    %v6740 = vld [vmem:[%s6610 + $0x408] sm:$0xff]
    %v6741 = vld [vmem:[%s6610 + $0x410] sm:$0xff]
    %v6742 = vld [vmem:[%s6610 + $0x418] sm:$0xff]
    %v6743 = vld [vmem:[%s6610 + $0x420] sm:$0xff]
    %v6744 = vld [vmem:[%s6610 + $0x428] sm:$0xff]
    %v6745 = vld [vmem:[%s6610 + $0x430] sm:$0xff]
    %v6746 = vld [vmem:[%s6610 + $0x438] sm:$0xff]
    %v6747 = vld [vmem:[%s6610 + $0x440] sm:$0xff]
    %v6748 = vld [vmem:[%s6610 + $0x448] sm:$0xff]
    %v6749 = vld [vmem:[%s6610 + $0x450] sm:$0xff]
    %v6750 = vld [vmem:[%s6610 + $0x458] sm:$0xff]
    %v6751 = vld [vmem:[%s6610 + $0x460] sm:$0xff]
    %v6752 = vld [vmem:[%s6610 + $0x468] sm:$0xff]
    %v6753 = vld [vmem:[%s6610 + $0x470] sm:$0xff]
    %v6754 = vld [vmem:[%s6610 + $0x478] sm:$0xff]
    %v6755 = vld [vmem:[%s6610 + $0x480] sm:$0xff]
    %v6756 = vld [vmem:[%s6610 + $0x488] sm:$0xff]
    %v6757 = vld [vmem:[%s6610 + $0x490] sm:$0xff]
    %v6758 = vld [vmem:[%s6610 + $0x498] sm:$0xff]
    %v6759 = vld [vmem:[%s6610 + $0x4a0] sm:$0xff]
    %v6760 = vld [vmem:[%s6610 + $0x4a8] sm:$0xff]
    %v6761 = vld [vmem:[%s6610 + $0x4b0] sm:$0xff]
    %v6762 = vld [vmem:[%s6610 + $0x4b8] sm:$0xff]
    %v6763 = vld [vmem:[%s6610 + $0x4c0] sm:$0xff]
    %v6764 = vld [vmem:[%s6610 + $0x4c8] sm:$0xff]
    %v6765 = vld [vmem:[%s6610 + $0x4d0] sm:$0xff]
    %v6766 = vld [vmem:[%s6610 + $0x4d8] sm:$0xff]
    %v6767 = vld [vmem:[%s6610 + $0x4e0] sm:$0xff]
    %v6768 = vld [vmem:[%s6610 + $0x4e8] sm:$0xff]
    %v6769 = vld [vmem:[%s6610 + $0x4f0] sm:$0xff]
    %v6770 = vld [vmem:[%s6610 + $0x4f8] sm:$0xff]
    %v6774 = vunpack.c.l.b16 %v6607
    %v6775 = vunpack.c.h.b16 %v6607
    %v6776 = vunpack.c.l.b16 %v6608
    %v6777 = vunpack.c.h.b16 %v6608
    %v6778 = vunpack.c.l.b16 %v6609
    %v6779 = vpack.c.b16 %v5407, %v5402
    %v6780 = vpack.c.b16 %v5408, %v5403
    %v6781 = vpack.c.b16 %v5409, %v5404
    %v6782 = vpack.c.b16 %v5410, %v5405
    %v6783 = vpack.c.b16 %v5411, %v5406
    %v6784 = vpack.c.b16 %v6774, %v5412
    %v6785 = vpack.c.b16 %v6775, %v5413
    %v6786 = vpack.c.b16 %v6776, %v5414
    %v6787 = vpack.c.b16 %v6777, %v5415
    %v6788 = vpack.c.b16 %v6778, %v5416
    %v6959 = vunpack.c.l.b16 %v6611
    %v6960 = vunpack.c.h.b16 %v6611
    %v6961 = vunpack.c.l.b16 %v6612
    %v6962 = vunpack.c.h.b16 %v6612
    %v6963 = vunpack.c.l.b16 %v6613
    %v6964 = vunpack.c.h.b16 %v6613
    %v6965 = vunpack.c.l.b16 %v6614
    %v6966 = vunpack.c.h.b16 %v6614
    %v6967 = vunpack.c.l.b16 %v6615
    %v6968 = vunpack.c.h.b16 %v6615
    %v6969 = vunpack.c.l.b16 %v6616
    %v6970 = vunpack.c.h.b16 %v6616
    %v6971 = vunpack.c.l.b16 %v6617
    %v6972 = vunpack.c.h.b16 %v6617
    %v6973 = vunpack.c.l.b16 %v6618
    %v6974 = vunpack.c.h.b16 %v6618
    %v6975 = vunpack.c.l.b16 %v6619
    %v6976 = vunpack.c.h.b16 %v6619
    %v6977 = vunpack.c.l.b16 %v6620
    %v6978 = vunpack.c.h.b16 %v6620
    %v6979 = vunpack.c.l.b16 %v6621
    %v6980 = vunpack.c.h.b16 %v6621
    %v6981 = vunpack.c.l.b16 %v6622
    %v6982 = vunpack.c.h.b16 %v6622
    %v6983 = vunpack.c.l.b16 %v6623
    %v6984 = vunpack.c.h.b16 %v6623
    %v6985 = vunpack.c.l.b16 %v6624
    %v6986 = vunpack.c.h.b16 %v6624
    %v6987 = vunpack.c.l.b16 %v6625
    %v6988 = vunpack.c.h.b16 %v6625
    %v6989 = vunpack.c.l.b16 %v6626
    %v6990 = vunpack.c.h.b16 %v6626
    %v6991 = vunpack.c.l.b16 %v6627
    %v6992 = vunpack.c.h.b16 %v6627
    %v6993 = vunpack.c.l.b16 %v6628
    %v6994 = vunpack.c.h.b16 %v6628
    %v6995 = vunpack.c.l.b16 %v6629
    %v6996 = vunpack.c.h.b16 %v6629
    %v6997 = vunpack.c.l.b16 %v6630
    %v6998 = vunpack.c.h.b16 %v6630
    %v6999 = vunpack.c.l.b16 %v6631
    %v7000 = vunpack.c.h.b16 %v6631
    %v7001 = vunpack.c.l.b16 %v6632
    %v7002 = vunpack.c.h.b16 %v6632
    %v7003 = vunpack.c.l.b16 %v6633
    %v7004 = vunpack.c.h.b16 %v6633
    %v7005 = vunpack.c.l.b16 %v6634
    %v7006 = vunpack.c.h.b16 %v6634
    %v7007 = vunpack.c.l.b16 %v6635
    %v7008 = vunpack.c.h.b16 %v6635
    %v7009 = vunpack.c.l.b16 %v6636
    %v7010 = vunpack.c.h.b16 %v6636
    %v7011 = vunpack.c.l.b16 %v6637
    %v7012 = vunpack.c.h.b16 %v6637
    %v7013 = vunpack.c.l.b16 %v6638
    %v7014 = vunpack.c.h.b16 %v6638
    %v7015 = vunpack.c.l.b16 %v6639
    %v7016 = vunpack.c.h.b16 %v6639
    %v7017 = vunpack.c.l.b16 %v6640
    %v7018 = vunpack.c.h.b16 %v6640
    %v7019 = vunpack.c.l.b16 %v6641
    %v7020 = vunpack.c.h.b16 %v6641
    %v7021 = vunpack.c.l.b16 %v6642
    %v7022 = vunpack.c.h.b16 %v6642
    %v7023 = vunpack.c.l.b16 %v6643
    %v7024 = vunpack.c.h.b16 %v6643
    %v7025 = vunpack.c.l.b16 %v6644
    %v7026 = vunpack.c.h.b16 %v6644
    %v7027 = vunpack.c.l.b16 %v6645
    %v7028 = vunpack.c.h.b16 %v6645
    %v7029 = vunpack.c.l.b16 %v6646
    %v7030 = vunpack.c.h.b16 %v6646
    %v7031 = vunpack.c.l.b16 %v6647
    %v7032 = vunpack.c.h.b16 %v6647
    %v7033 = vunpack.c.l.b16 %v6648
    %v7034 = vunpack.c.h.b16 %v6648
    %v7035 = vunpack.c.l.b16 %v6649
    %v7036 = vunpack.c.h.b16 %v6649
    %v7037 = vunpack.c.l.b16 %v6650
    %v7038 = vunpack.c.h.b16 %v6650
    %v7039 = vunpack.c.l.b16 %v6651
    %v7040 = vunpack.c.h.b16 %v6651
    %v7041 = vunpack.c.l.b16 %v6652
    %v7042 = vunpack.c.h.b16 %v6652
    %v7043 = vunpack.c.l.b16 %v6653
    %v7044 = vunpack.c.h.b16 %v6653
    %v7045 = vunpack.c.l.b16 %v6654
    %v7046 = vunpack.c.h.b16 %v6654
    %v7047 = vunpack.c.l.b16 %v6655
    %v7048 = vunpack.c.h.b16 %v6655
    %v7049 = vunpack.c.l.b16 %v6656
    %v7050 = vunpack.c.h.b16 %v6656
    %v7051 = vunpack.c.l.b16 %v6657
    %v7052 = vunpack.c.h.b16 %v6657
    %v7053 = vunpack.c.l.b16 %v6658
    %v7054 = vunpack.c.h.b16 %v6658
    %v7055 = vunpack.c.l.b16 %v6659
    %v7056 = vunpack.c.h.b16 %v6659
    %v7057 = vunpack.c.l.b16 %v6660
    %v7058 = vunpack.c.h.b16 %v6660
    %v7059 = vunpack.c.l.b16 %v6661
    %v7060 = vunpack.c.h.b16 %v6661
    %v7061 = vunpack.c.l.b16 %v6662
    %v7062 = vunpack.c.h.b16 %v6662
    %v7063 = vunpack.c.l.b16 %v6663
    %v7064 = vunpack.c.h.b16 %v6663
    %v7065 = vunpack.c.l.b16 %v6664
    %v7066 = vunpack.c.h.b16 %v6664
    %v7067 = vunpack.c.l.b16 %v6665
    %v7068 = vunpack.c.h.b16 %v6665
    %v7069 = vunpack.c.l.b16 %v6666
    %v7070 = vunpack.c.h.b16 %v6666
    %v7071 = vunpack.c.l.b16 %v6667
    %v7072 = vunpack.c.h.b16 %v6667
    %v7073 = vunpack.c.l.b16 %v6668
    %v7074 = vunpack.c.h.b16 %v6668
    %v7075 = vunpack.c.l.b16 %v6669
    %v7076 = vunpack.c.h.b16 %v6669
    %v7077 = vunpack.c.l.b16 %v6670
    %v7078 = vunpack.c.h.b16 %v6670
    %v7079 = vunpack.c.l.b16 %v6671
    %v7080 = vunpack.c.h.b16 %v6671
    %v7081 = vunpack.c.l.b16 %v6672
    %v7082 = vunpack.c.h.b16 %v6672
    %v7083 = vunpack.c.l.b16 %v6673
    %v7084 = vunpack.c.h.b16 %v6673
    %v7085 = vunpack.c.l.b16 %v6674
    %v7086 = vunpack.c.h.b16 %v6674
    %v7087 = vunpack.c.l.b16 %v6675
    %v7088 = vunpack.c.h.b16 %v6675
    %v7089 = vunpack.c.l.b16 %v6676
    %v7090 = vunpack.c.h.b16 %v6676
    %v7091 = vunpack.c.l.b16 %v6677
    %v7092 = vunpack.c.h.b16 %v6677
    %v7093 = vunpack.c.l.b16 %v6678
    %v7094 = vunpack.c.h.b16 %v6678
    %v7095 = vunpack.c.l.b16 %v6679
    %v7096 = vunpack.c.h.b16 %v6679
    %v7097 = vunpack.c.l.b16 %v6680
    %v7098 = vunpack.c.h.b16 %v6680
    %v7099 = vunpack.c.l.b16 %v6681
    %v7100 = vunpack.c.h.b16 %v6681
    %v7101 = vunpack.c.l.b16 %v6682
    %v7102 = vunpack.c.h.b16 %v6682
    %v7103 = vunpack.c.l.b16 %v6683
    %v7104 = vunpack.c.h.b16 %v6683
    %v7105 = vunpack.c.l.b16 %v6684
    %v7106 = vunpack.c.h.b16 %v6684
    %v7107 = vunpack.c.l.b16 %v6685
    %v7108 = vunpack.c.h.b16 %v6685
    %v7109 = vunpack.c.l.b16 %v6686
    %v7110 = vunpack.c.h.b16 %v6686
    %v7111 = vunpack.c.l.b16 %v6687
    %v7112 = vunpack.c.h.b16 %v6687
    %v7113 = vunpack.c.l.b16 %v6688
    %v7114 = vunpack.c.h.b16 %v6688
    %v7115 = vunpack.c.l.b16 %v6689
    %v7116 = vunpack.c.h.b16 %v6689
    %v7117 = vunpack.c.l.b16 %v6690
    %v7118 = vunpack.c.h.b16 %v6690
    %v7119 = vunpack.c.l.b16 %v6691
    %v7120 = vunpack.c.h.b16 %v6691
    %v7121 = vunpack.c.l.b16 %v6692
    %v7122 = vunpack.c.h.b16 %v6692
    %v7123 = vunpack.c.l.b16 %v6693
    %v7124 = vunpack.c.h.b16 %v6693
    %v7125 = vunpack.c.l.b16 %v6694
    %v7126 = vunpack.c.h.b16 %v6694
    %v7127 = vunpack.c.l.b16 %v6695
    %v7128 = vunpack.c.h.b16 %v6695
    %v7129 = vunpack.c.l.b16 %v6696
    %v7130 = vunpack.c.h.b16 %v6696
    %v7131 = vunpack.c.l.b16 %v6697
    %v7132 = vunpack.c.h.b16 %v6697
    %v7133 = vunpack.c.l.b16 %v6698
    %v7134 = vunpack.c.h.b16 %v6698
    %v7135 = vunpack.c.l.b16 %v6699
    %v7136 = vunpack.c.h.b16 %v6699
    %v7137 = vunpack.c.l.b16 %v6700
    %v7138 = vunpack.c.h.b16 %v6700
    %v7139 = vunpack.c.l.b16 %v6701
    %v7140 = vunpack.c.h.b16 %v6701
    %v7141 = vunpack.c.l.b16 %v6702
    %v7142 = vunpack.c.h.b16 %v6702
    %v7143 = vunpack.c.l.b16 %v6703
    %v7144 = vunpack.c.h.b16 %v6703
    %v7145 = vunpack.c.l.b16 %v6704
    %v7146 = vunpack.c.h.b16 %v6704
    %v7147 = vunpack.c.l.b16 %v6705
    %v7148 = vunpack.c.h.b16 %v6705
    %v7149 = vunpack.c.l.b16 %v6706
    %v7150 = vunpack.c.h.b16 %v6706
    %v7151 = vunpack.c.l.b16 %v6707
    %v7152 = vunpack.c.h.b16 %v6707
    %v7153 = vunpack.c.l.b16 %v6708
    %v7154 = vunpack.c.h.b16 %v6708
    %v7155 = vunpack.c.l.b16 %v6709
    %v7156 = vunpack.c.h.b16 %v6709
    %v7157 = vunpack.c.l.b16 %v6710
    %v7158 = vunpack.c.h.b16 %v6710
    %v7159 = vunpack.c.l.b16 %v6711
    %v7160 = vunpack.c.h.b16 %v6711
    %v7161 = vunpack.c.l.b16 %v6712
    %v7162 = vunpack.c.h.b16 %v6712
    %v7163 = vunpack.c.l.b16 %v6713
    %v7164 = vunpack.c.h.b16 %v6713
    %v7165 = vunpack.c.l.b16 %v6714
    %v7166 = vunpack.c.h.b16 %v6714
    %v7167 = vunpack.c.l.b16 %v6715
    %v7168 = vunpack.c.h.b16 %v6715
    %v7169 = vunpack.c.l.b16 %v6716
    %v7170 = vunpack.c.h.b16 %v6716
    %v7171 = vunpack.c.l.b16 %v6717
    %v7172 = vunpack.c.h.b16 %v6717
    %v7173 = vunpack.c.l.b16 %v6718
    %v7174 = vunpack.c.h.b16 %v6718
    %v7175 = vunpack.c.l.b16 %v6719
    %v7176 = vunpack.c.h.b16 %v6719
    %v7177 = vunpack.c.l.b16 %v6720
    %v7178 = vunpack.c.h.b16 %v6720
    %v7179 = vunpack.c.l.b16 %v6721
    %v7180 = vunpack.c.h.b16 %v6721
    %v7181 = vunpack.c.l.b16 %v6722
    %v7182 = vunpack.c.h.b16 %v6722
    %v7183 = vunpack.c.l.b16 %v6723
    %v7184 = vunpack.c.h.b16 %v6723
    %v7185 = vunpack.c.l.b16 %v6724
    %v7186 = vunpack.c.h.b16 %v6724
    %v7187 = vunpack.c.l.b16 %v6725
    %v7188 = vunpack.c.h.b16 %v6725
    %v7189 = vunpack.c.l.b16 %v6726
    %v7190 = vunpack.c.h.b16 %v6726
    %v7191 = vunpack.c.l.b16 %v6727
    %v7192 = vunpack.c.h.b16 %v6727
    %v7193 = vunpack.c.l.b16 %v6728
    %v7194 = vunpack.c.h.b16 %v6728
    %v7195 = vunpack.c.l.b16 %v6729
    %v7196 = vunpack.c.h.b16 %v6729
    %v7197 = vunpack.c.l.b16 %v6730
    %v7198 = vunpack.c.h.b16 %v6730
    %v7199 = vunpack.c.l.b16 %v6731
    %v7200 = vunpack.c.h.b16 %v6731
    %v7201 = vunpack.c.l.b16 %v6732
    %v7202 = vunpack.c.h.b16 %v6732
    %v7203 = vunpack.c.l.b16 %v6733
    %v7204 = vunpack.c.h.b16 %v6733
    %v7205 = vunpack.c.l.b16 %v6734
    %v7206 = vunpack.c.h.b16 %v6734
    %v7207 = vunpack.c.l.b16 %v6735
    %v7208 = vunpack.c.h.b16 %v6735
    %v7209 = vunpack.c.l.b16 %v6736
    %v7210 = vunpack.c.h.b16 %v6736
    %v7211 = vunpack.c.l.b16 %v6737
    %v7212 = vunpack.c.h.b16 %v6737
    %v7213 = vunpack.c.l.b16 %v6738
    %v7214 = vunpack.c.h.b16 %v6738
    %v7215 = vunpack.c.l.b16 %v6739
    %v7216 = vunpack.c.h.b16 %v6739
    %v7217 = vunpack.c.l.b16 %v6740
    %v7218 = vunpack.c.h.b16 %v6740
    %v7219 = vunpack.c.l.b16 %v6741
    %v7220 = vunpack.c.h.b16 %v6741
    %v7221 = vunpack.c.l.b16 %v6742
    %v7222 = vunpack.c.h.b16 %v6742
    %v7223 = vunpack.c.l.b16 %v6743
    %v7224 = vunpack.c.h.b16 %v6743
    %v7225 = vunpack.c.l.b16 %v6744
    %v7226 = vunpack.c.h.b16 %v6744
    %v7227 = vunpack.c.l.b16 %v6745
    %v7228 = vunpack.c.h.b16 %v6745
    %v7229 = vunpack.c.l.b16 %v6746
    %v7230 = vunpack.c.h.b16 %v6746
    %v7231 = vunpack.c.l.b16 %v6747
    %v7232 = vunpack.c.h.b16 %v6747
    %v7233 = vunpack.c.l.b16 %v6748
    %v7234 = vunpack.c.h.b16 %v6748
    %v7235 = vunpack.c.l.b16 %v6749
    %v7236 = vunpack.c.h.b16 %v6749
    %v7237 = vunpack.c.l.b16 %v6750
    %v7238 = vunpack.c.h.b16 %v6750
    %v7239 = vunpack.c.l.b16 %v6751
    %v7240 = vunpack.c.h.b16 %v6751
    %v7241 = vunpack.c.l.b16 %v6752
    %v7242 = vunpack.c.h.b16 %v6752
    %v7243 = vunpack.c.l.b16 %v6753
    %v7244 = vunpack.c.h.b16 %v6753
    %v7245 = vunpack.c.l.b16 %v6754
    %v7246 = vunpack.c.h.b16 %v6754
    %v7247 = vunpack.c.l.b16 %v6755
    %v7248 = vunpack.c.h.b16 %v6755
    %v7249 = vunpack.c.l.b16 %v6756
    %v7250 = vunpack.c.h.b16 %v6756
    %v7251 = vunpack.c.l.b16 %v6757
    %v7252 = vunpack.c.h.b16 %v6757
    %v7253 = vunpack.c.l.b16 %v6758
    %v7254 = vunpack.c.h.b16 %v6758
    %v7255 = vunpack.c.l.b16 %v6759
    %v7256 = vunpack.c.h.b16 %v6759
    %v7257 = vunpack.c.l.b16 %v6760
    %v7258 = vunpack.c.h.b16 %v6760
    %v7259 = vunpack.c.l.b16 %v6761
    %v7260 = vunpack.c.h.b16 %v6761
    %v7261 = vunpack.c.l.b16 %v6762
    %v7262 = vunpack.c.h.b16 %v6762
    %v7263 = vunpack.c.l.b16 %v6763
    %v7264 = vunpack.c.h.b16 %v6763
    %v7265 = vunpack.c.l.b16 %v6764
    %v7266 = vunpack.c.h.b16 %v6764
    %v7267 = vunpack.c.l.b16 %v6765
    %v7268 = vunpack.c.h.b16 %v6765
    %v7269 = vunpack.c.l.b16 %v6766
    %v7270 = vunpack.c.h.b16 %v6766
    %v7271 = vunpack.c.l.b16 %v6767
    %v7272 = vunpack.c.h.b16 %v6767
    %v7273 = vunpack.c.l.b16 %v6768
    %v7274 = vunpack.c.h.b16 %v6768
    %v7275 = vunpack.c.l.b16 %v6769
    %v7276 = vunpack.c.h.b16 %v6769
    %v7277 = vunpack.c.l.b16 %v6770
    %v7278 = vunpack.c.h.b16 %v6770
    %v7279 = vpack.c.b16 %v6963, %v6959
    %v7280 = vpack.c.b16 %v6964, %v6960
    %v7281 = vpack.c.b16 %v6965, %v6961
    %v7282 = vpack.c.b16 %v6966, %v6962
    %v7283 = vpack.c.b16 %v6971, %v6967
    %v7284 = vpack.c.b16 %v6972, %v6968
    %v7285 = vpack.c.b16 %v6973, %v6969
    %v7286 = vpack.c.b16 %v6974, %v6970
    %v7287 = vpack.c.b16 %v6979, %v6975
    %v7288 = vpack.c.b16 %v6980, %v6976
    %v7289 = vpack.c.b16 %v6981, %v6977
    %v7290 = vpack.c.b16 %v6982, %v6978
    %v7291 = vpack.c.b16 %v6987, %v6983
    %v7292 = vpack.c.b16 %v6988, %v6984
    %v7293 = vpack.c.b16 %v6989, %v6985
    %v7294 = vpack.c.b16 %v6990, %v6986
    %v7295 = vpack.c.b16 %v6995, %v6991
    %v7296 = vpack.c.b16 %v6996, %v6992
    %v7297 = vpack.c.b16 %v6997, %v6993
    %v7298 = vpack.c.b16 %v6998, %v6994
    %v7299 = vpack.c.b16 %v7003, %v6999
    %v7300 = vpack.c.b16 %v7004, %v7000
    %v7301 = vpack.c.b16 %v7005, %v7001
    %v7302 = vpack.c.b16 %v7006, %v7002
    %v7303 = vpack.c.b16 %v7011, %v7007
    %v7304 = vpack.c.b16 %v7012, %v7008
    %v7305 = vpack.c.b16 %v7013, %v7009
    %v7306 = vpack.c.b16 %v7014, %v7010
    %v7307 = vpack.c.b16 %v7019, %v7015
    %v7308 = vpack.c.b16 %v7020, %v7016
    %v7309 = vpack.c.b16 %v7021, %v7017
    %v7310 = vpack.c.b16 %v7022, %v7018
    %v7311 = vpack.c.b16 %v7027, %v7023
    %v7312 = vpack.c.b16 %v7028, %v7024
    %v7313 = vpack.c.b16 %v7029, %v7025
    %v7314 = vpack.c.b16 %v7030, %v7026
    %v7315 = vpack.c.b16 %v7035, %v7031
    %v7316 = vpack.c.b16 %v7036, %v7032
    %v7317 = vpack.c.b16 %v7037, %v7033
    %v7318 = vpack.c.b16 %v7038, %v7034
    %v7319 = vpack.c.b16 %v7043, %v7039
    %v7320 = vpack.c.b16 %v7044, %v7040
    %v7321 = vpack.c.b16 %v7045, %v7041
    %v7322 = vpack.c.b16 %v7046, %v7042
    %v7323 = vpack.c.b16 %v7051, %v7047
    %v7324 = vpack.c.b16 %v7052, %v7048
    %v7325 = vpack.c.b16 %v7053, %v7049
    %v7326 = vpack.c.b16 %v7054, %v7050
    %v7327 = vpack.c.b16 %v7059, %v7055
    %v7328 = vpack.c.b16 %v7060, %v7056
    %v7329 = vpack.c.b16 %v7061, %v7057
    %v7330 = vpack.c.b16 %v7062, %v7058
    %v7331 = vpack.c.b16 %v7067, %v7063
    %v7332 = vpack.c.b16 %v7068, %v7064
    %v7333 = vpack.c.b16 %v7069, %v7065
    %v7334 = vpack.c.b16 %v7070, %v7066
    %v7335 = vpack.c.b16 %v7075, %v7071
    %v7336 = vpack.c.b16 %v7076, %v7072
    %v7337 = vpack.c.b16 %v7077, %v7073
    %v7338 = vpack.c.b16 %v7078, %v7074
    %v7339 = vpack.c.b16 %v7083, %v7079
    %v7340 = vpack.c.b16 %v7084, %v7080
    %v7341 = vpack.c.b16 %v7085, %v7081
    %v7342 = vpack.c.b16 %v7086, %v7082
    %v7343 = vpack.c.b16 %v7091, %v7087
    %v7344 = vpack.c.b16 %v7092, %v7088
    %v7345 = vpack.c.b16 %v7093, %v7089
    %v7346 = vpack.c.b16 %v7094, %v7090
    %v7347 = vpack.c.b16 %v7099, %v7095
    %v7348 = vpack.c.b16 %v7100, %v7096
    %v7349 = vpack.c.b16 %v7101, %v7097
    %v7350 = vpack.c.b16 %v7102, %v7098
    %v7351 = vpack.c.b16 %v7107, %v7103
    %v7352 = vpack.c.b16 %v7108, %v7104
    %v7353 = vpack.c.b16 %v7109, %v7105
    %v7354 = vpack.c.b16 %v7110, %v7106
    %v7355 = vpack.c.b16 %v7115, %v7111
    %v7356 = vpack.c.b16 %v7116, %v7112
    %v7357 = vpack.c.b16 %v7117, %v7113
    %v7358 = vpack.c.b16 %v7118, %v7114
    %v7359 = vpack.c.b16 %v7123, %v7119
    %v7360 = vpack.c.b16 %v7124, %v7120
    %v7361 = vpack.c.b16 %v7125, %v7121
    %v7362 = vpack.c.b16 %v7126, %v7122
    %v7363 = vpack.c.b16 %v7131, %v7127
    %v7364 = vpack.c.b16 %v7132, %v7128
    %v7365 = vpack.c.b16 %v7133, %v7129
    %v7366 = vpack.c.b16 %v7134, %v7130
    %v7367 = vpack.c.b16 %v7139, %v7135
    %v7368 = vpack.c.b16 %v7140, %v7136
    %v7369 = vpack.c.b16 %v7141, %v7137
    %v7370 = vpack.c.b16 %v7142, %v7138
    %v7371 = vpack.c.b16 %v7147, %v7143
    %v7372 = vpack.c.b16 %v7148, %v7144
    %v7373 = vpack.c.b16 %v7149, %v7145
    %v7374 = vpack.c.b16 %v7150, %v7146
    %v7375 = vpack.c.b16 %v7155, %v7151
    %v7376 = vpack.c.b16 %v7156, %v7152
    %v7377 = vpack.c.b16 %v7157, %v7153
    %v7378 = vpack.c.b16 %v7158, %v7154
    %v7379 = vpack.c.b16 %v7163, %v7159
    %v7380 = vpack.c.b16 %v7164, %v7160
    %v7381 = vpack.c.b16 %v7165, %v7161
    %v7382 = vpack.c.b16 %v7166, %v7162
    %v7383 = vpack.c.b16 %v7171, %v7167
    %v7384 = vpack.c.b16 %v7172, %v7168
    %v7385 = vpack.c.b16 %v7173, %v7169
    %v7386 = vpack.c.b16 %v7174, %v7170
    %v7387 = vpack.c.b16 %v7179, %v7175
    %v7388 = vpack.c.b16 %v7180, %v7176
    %v7389 = vpack.c.b16 %v7181, %v7177
    %v7390 = vpack.c.b16 %v7182, %v7178
    %v7391 = vpack.c.b16 %v7187, %v7183
    %v7392 = vpack.c.b16 %v7188, %v7184
    %v7393 = vpack.c.b16 %v7189, %v7185
    %v7394 = vpack.c.b16 %v7190, %v7186
    %v7395 = vpack.c.b16 %v7195, %v7191
    %v7396 = vpack.c.b16 %v7196, %v7192
    %v7397 = vpack.c.b16 %v7197, %v7193
    %v7398 = vpack.c.b16 %v7198, %v7194
    %v7399 = vpack.c.b16 %v7203, %v7199
    %v7400 = vpack.c.b16 %v7204, %v7200
    %v7401 = vpack.c.b16 %v7205, %v7201
    %v7402 = vpack.c.b16 %v7206, %v7202
    %v7403 = vpack.c.b16 %v7211, %v7207
    %v7404 = vpack.c.b16 %v7212, %v7208
    %v7405 = vpack.c.b16 %v7213, %v7209
    %v7406 = vpack.c.b16 %v7214, %v7210
    %v7407 = vpack.c.b16 %v7219, %v7215
    %v7408 = vpack.c.b16 %v7220, %v7216
    %v7409 = vpack.c.b16 %v7221, %v7217
    %v7410 = vpack.c.b16 %v7222, %v7218
    %v7411 = vpack.c.b16 %v7227, %v7223
    %v7412 = vpack.c.b16 %v7228, %v7224
    %v7413 = vpack.c.b16 %v7229, %v7225
    %v7414 = vpack.c.b16 %v7230, %v7226
    %v7415 = vpack.c.b16 %v7235, %v7231
    %v7416 = vpack.c.b16 %v7236, %v7232
    %v7417 = vpack.c.b16 %v7237, %v7233
    %v7418 = vpack.c.b16 %v7238, %v7234
    %v7419 = vpack.c.b16 %v7243, %v7239
    %v7420 = vpack.c.b16 %v7244, %v7240
    %v7421 = vpack.c.b16 %v7245, %v7241
    %v7422 = vpack.c.b16 %v7246, %v7242
    %v7423 = vpack.c.b16 %v7251, %v7247
    %v7424 = vpack.c.b16 %v7252, %v7248
    %v7425 = vpack.c.b16 %v7253, %v7249
    %v7426 = vpack.c.b16 %v7254, %v7250
    %v7427 = vpack.c.b16 %v7259, %v7255
    %v7428 = vpack.c.b16 %v7260, %v7256
    %v7429 = vpack.c.b16 %v7261, %v7257
    %v7430 = vpack.c.b16 %v7262, %v7258
    %v7431 = vpack.c.b16 %v7267, %v7263
    %v7432 = vpack.c.b16 %v7268, %v7264
    %v7433 = vpack.c.b16 %v7269, %v7265
    %v7434 = vpack.c.b16 %v7270, %v7266
    %v7435 = vpack.c.b16 %v7275, %v7271
    %v7436 = vpack.c.b16 %v7276, %v7272
    %v7437 = vpack.c.b16 %v7277, %v7273
    %v7438 = vpack.c.b16 %v7278, %v7274
    %7599 = vmatprep.subr.bf16.mxu0 %v7280
    %7600 = vmatpush1.bf16.msra.mxu0 %v7279
    %7601 = vmatprep.subr.bf16.mxu0 %v7284
    %7602 = vmatpush1.bf16.msra.mxu0 %v7283
    %7603 = vmatprep.subr.bf16.mxu0 %v7288
    %7604 = vmatpush1.bf16.msra.mxu0 %v7287
    %7605 = vmatprep.subr.bf16.mxu0 %v7292
    %7606 = vmatpush1.bf16.msra.mxu0 %v7291
    %7607 = vmatprep.subr.bf16.mxu0 %v7296
    %7608 = vmatpush1.bf16.msra.mxu0 %v7295
    %7609 = vmatprep.subr.bf16.mxu0 %v7300
    %7610 = vmatpush1.bf16.msra.mxu0 %v7299
    %7611 = vmatprep.subr.bf16.mxu0 %v7304
    %7612 = vmatpush1.bf16.msra.mxu0 %v7303
    %7613 = vmatprep.subr.bf16.mxu0 %v7308
    %7614 = vmatpush1.bf16.msra.mxu0 %v7307
    %7615 = vmatprep.subr.bf16.mxu0 %v7312
    %7616 = vmatpush1.bf16.msra.mxu0 %v7311
    %7617 = vmatprep.subr.bf16.mxu0 %v7316
    %7618 = vmatpush1.bf16.msra.mxu0 %v7315
    %7619 = vmatprep.subr.bf16.mxu0 %v7320
    %7620 = vmatpush1.bf16.msra.mxu0 %v7319
    %7621 = vmatprep.subr.bf16.mxu0 %v7324
    %7622 = vmatpush1.bf16.msra.mxu0 %v7323
    %7623 = vmatprep.subr.bf16.mxu0 %v7328
    %7624 = vmatpush1.bf16.msra.mxu0 %v7327
    %7625 = vmatprep.subr.bf16.mxu0 %v7332
    %7626 = vmatpush1.bf16.msra.mxu0 %v7331
    %7627 = vmatprep.subr.bf16.mxu0 %v7336
    %7628 = vmatpush1.bf16.msra.mxu0 %v7335
    %7629 = vmatprep.subr.bf16.mxu0 %v7340
    %7630 = vmatpush1.bf16.msra.mxu0 %v7339
    %7631 = vmatprep.mubr.bf16.mxu0 %v6780
    %7632 = vmatmul.mubr.bf16.gmra.mrb[0].mxu0 %v6779
    %v7633 = vpop.f32.mrb[0].mxu0
    %v7634 = vadd.f32 0.0, %v7633
    %v7635 = vpop.f32.mrb[0].mxu0
    %v7636 = vadd.f32 0.0, %v7635
    %v7637 = vpop.f32.mrb[0].mxu0
    %v7638 = vadd.f32 0.0, %v7637
    %v7639 = vpop.f32.mrb[0].mxu0
    %v7640 = vadd.f32 0.0, %v7639
    %7641 = vmatprep.mubr.bf16.mxu0 %v6785
    %7642 = vmatmul.mubr.bf16.gmra.mrb[0].mxu0 %v6784
    %v7643 = vpop.f32.mrb[0].mxu0
    %v7644 = vadd.f32 0.0, %v7643
    %v7645 = vpop.f32.mrb[0].mxu0
    %v7646 = vadd.f32 0.0, %v7645
    %v7647 = vpop.f32.mrb[0].mxu0
    %v7648 = vadd.f32 0.0, %v7647
    %v7649 = vpop.f32.mrb[0].mxu0
    %v7650 = vadd.f32 0.0, %v7649
    %7651 = vdwg.mxu0
    %7652 = vmatprep.subr.bf16.mxu0 %v7344
    %7653 = vmatpush1.bf16.msra.mxu0 %v7343
    %7654 = vmatprep.subr.bf16.mxu0 %v7348
    %7655 = vmatpush1.bf16.msra.mxu0 %v7347
    %7656 = vmatprep.subr.bf16.mxu0 %v7352
    %7657 = vmatpush1.bf16.msra.mxu0 %v7351
    %7658 = vmatprep.subr.bf16.mxu0 %v7356
    %7659 = vmatpush1.bf16.msra.mxu0 %v7355
    %7660 = vmatprep.subr.bf16.mxu0 %v7360
    %7661 = vmatpush1.bf16.msra.mxu0 %v7359
    %7662 = vmatprep.subr.bf16.mxu0 %v7364
    %7663 = vmatpush1.bf16.msra.mxu0 %v7363
    %7664 = vmatprep.subr.bf16.mxu0 %v7368
    %7665 = vmatpush1.bf16.msra.mxu0 %v7367
    %7666 = vmatprep.subr.bf16.mxu0 %v7372
    %7667 = vmatpush1.bf16.msra.mxu0 %v7371
    %7668 = vmatprep.subr.bf16.mxu0 %v7376
    %7669 = vmatpush1.bf16.msra.mxu0 %v7375
    %7670 = vmatprep.subr.bf16.mxu0 %v7380
    %7671 = vmatpush1.bf16.msra.mxu0 %v7379
    %7672 = vmatprep.subr.bf16.mxu0 %v7384
    %7673 = vmatpush1.bf16.msra.mxu0 %v7383
    %7674 = vmatprep.subr.bf16.mxu0 %v7388
    %7675 = vmatpush1.bf16.msra.mxu0 %v7387
    %7676 = vmatprep.subr.bf16.mxu0 %v7392
    %7677 = vmatpush1.bf16.msra.mxu0 %v7391
    %7678 = vmatprep.subr.bf16.mxu0 %v7396
    %7679 = vmatpush1.bf16.msra.mxu0 %v7395
    %7680 = vmatprep.subr.bf16.mxu0 %v7400
    %7681 = vmatpush1.bf16.msra.mxu0 %v7399
    %7682 = vmatprep.subr.bf16.mxu0 %v7404
    %7683 = vmatpush1.bf16.msra.mxu0 %v7403
    %7684 = vmatprep.mubr.bf16.mxu0 %v6782
    %7685 = vmatmul.mubr.bf16.gmra.mrb[0].mxu0 %v6781
    %v7686 = vpop.f32.mrb[0].mxu0
    %v7687 = vadd.f32 %v7634, %v7686
    %v7688 = vpop.f32.mrb[0].mxu0
    %v7689 = vadd.f32 %v7636, %v7688
    %v7690 = vpop.f32.mrb[0].mxu0
    %v7691 = vadd.f32 %v7638, %v7690
    %v7692 = vpop.f32.mrb[0].mxu0
    %v7693 = vadd.f32 %v7640, %v7692
    %7694 = vmatprep.mubr.bf16.mxu0 %v6787
    %7695 = vmatmul.mubr.bf16.gmra.mrb[0].mxu0 %v6786
    %v7696 = vpop.f32.mrb[0].mxu0
    %v7697 = vadd.f32 %v7644, %v7696
    %v7698 = vpop.f32.mrb[0].mxu0
    %v7699 = vadd.f32 %v7646, %v7698
    %v7700 = vpop.f32.mrb[0].mxu0
    %v7701 = vadd.f32 %v7648, %v7700
    %v7702 = vpop.f32.mrb[0].mxu0
    %v7703 = vadd.f32 %v7650, %v7702
    %7704 = vdwg.mxu0
    %7705 = vmatprep.subr.bf16.mxu0 %v7408
    %7706 = vmatpush1.bf16.msra.mxu0 %v7407
    %7707 = vmatprep.subr.bf16.mxu0 %v7412
    %7708 = vmatpush1.bf16.msra.mxu0 %v7411
    %7709 = vmatprep.subr.bf16.mxu0 %v7416
    %7710 = vmatpush1.bf16.msra.mxu0 %v7415
    %7711 = vmatprep.subr.bf16.mxu0 %v7420
    %7712 = vmatpush1.bf16.msra.mxu0 %v7419
    %7713 = vmatprep.subr.bf16.mxu0 %v7424
    %7714 = vmatpush1.bf16.msra.mxu0 %v7423
    %7715 = vmatprep.subr.bf16.mxu0 %v7428
    %7716 = vmatpush1.bf16.msra.mxu0 %v7427
    %7717 = vmatprep.subr.bf16.mxu0 %v7432
    %7718 = vmatpush1.bf16.msra.mxu0 %v7431
    %7719 = vmatprep.subr.bf16.mxu0 %v7436
    %7720 = vmatpush1.bf16.msra.mxu0 %v7435
    %7721 = vmatprep.subr.bf16.mxu0 0
    %7722 = vmatpush1.bf16.msra.mxu0 0
    %7723 = vmatprep.subr.bf16.mxu0 0
    %7724 = vmatpush1.bf16.msra.mxu0 0
    %7725 = vmatprep.subr.bf16.mxu0 0
    %7726 = vmatpush1.bf16.msra.mxu0 0
    %7727 = vmatprep.subr.bf16.mxu0 0
    %7728 = vmatpush1.bf16.msra.mxu0 0
    %7729 = vmatprep.subr.bf16.mxu0 0
    %7730 = vmatpush1.bf16.msra.mxu0 0
    %7731 = vmatprep.subr.bf16.mxu0 0
    %7732 = vmatpush1.bf16.msra.mxu0 0
    %7733 = vmatprep.subr.bf16.mxu0 0
    %7734 = vmatpush1.bf16.msra.mxu0 0
    %7735 = vmatprep.subr.bf16.mxu0 0
    %7736 = vmatpush1.bf16.msra.mxu0 0
    %7737 = vmatprep.mubr.bf16.mxu0 0
    %7738 = vmatmul.mubr.bf16.gmra.mrb[0].mxu0 %v6783
    %v7739 = vpop.f32.mrb[0].mxu0
    %v7740 = vadd.f32 %v7687, %v7739
    %v7741 = vpop.f32.mrb[0].mxu0
    %v7742 = vadd.f32 %v7689, %v7741
    %v7743 = vpop.f32.mrb[0].mxu0
    %v7744 = vadd.f32 %v7691, %v7743
    %v7745 = vpop.f32.mrb[0].mxu0
    %v7746 = vadd.f32 %v7693, %v7745
    %7747 = vmatprep.mubr.bf16.mxu0 0
    %7748 = vmatmul.mubr.bf16.gmra.mrb[0].mxu0 %v6788
    %v7749 = vpop.f32.mrb[0].mxu0
    %v7750 = vadd.f32 %v7697, %v7749
    %v7751 = vpop.f32.mrb[0].mxu0
    %v7752 = vadd.f32 %v7699, %v7751
    %v7753 = vpop.f32.mrb[0].mxu0
    %v7754 = vadd.f32 %v7701, %v7753
    %v7755 = vpop.f32.mrb[0].mxu0
    %v7756 = vadd.f32 %v7703, %v7755
    %7757 = vdwg.mxu0
    %7758 = vmatprep.subr.bf16.mxu0 %v7282
    %7759 = vmatpush1.bf16.msra.mxu0 %v7281
    %7760 = vmatprep.subr.bf16.mxu0 %v7286
    %7761 = vmatpush1.bf16.msra.mxu0 %v7285
    %7762 = vmatprep.subr.bf16.mxu0 %v7290
    %7763 = vmatpush1.bf16.msra.mxu0 %v7289
    %7764 = vmatprep.subr.bf16.mxu0 %v7294
    %7765 = vmatpush1.bf16.msra.mxu0 %v7293
    %7766 = vmatprep.subr.bf16.mxu0 %v7298
    %7767 = vmatpush1.bf16.msra.mxu0 %v7297
    %7768 = vmatprep.subr.bf16.mxu0 %v7302
    %7769 = vmatpush1.bf16.msra.mxu0 %v7301
    %7770 = vmatprep.subr.bf16.mxu0 %v7306
    %7771 = vmatpush1.bf16.msra.mxu0 %v7305
    %7772 = vmatprep.subr.bf16.mxu0 %v7310
    %7773 = vmatpush1.bf16.msra.mxu0 %v7309
    %7774 = vmatprep.subr.bf16.mxu0 %v7314
    %7775 = vmatpush1.bf16.msra.mxu0 %v7313
    %7776 = vmatprep.subr.bf16.mxu0 %v7318
    %7777 = vmatpush1.bf16.msra.mxu0 %v7317
    %7778 = vmatprep.subr.bf16.mxu0 %v7322
    %7779 = vmatpush1.bf16.msra.mxu0 %v7321
    %7780 = vmatprep.subr.bf16.mxu0 %v7326
    %7781 = vmatpush1.bf16.msra.mxu0 %v7325
    %7782 = vmatprep.subr.bf16.mxu0 %v7330
    %7783 = vmatpush1.bf16.msra.mxu0 %v7329
    %7784 = vmatprep.subr.bf16.mxu0 %v7334
    %7785 = vmatpush1.bf16.msra.mxu0 %v7333
    %7786 = vmatprep.subr.bf16.mxu0 %v7338
    %7787 = vmatpush1.bf16.msra.mxu0 %v7337
    %7788 = vmatprep.subr.bf16.mxu0 %v7342
    %7789 = vmatpush1.bf16.msra.mxu0 %v7341
    %7790 = vmatprep.mubr.bf16.mxu0 %v6780
    %7791 = vmatmul.mubr.bf16.gmra.mrb[0].mxu0 %v6779
    %v7792 = vpop.f32.mrb[0].mxu0
    %v7793 = vadd.f32 0.0, %v7792
    %v7794 = vpop.f32.mrb[0].mxu0
    %v7795 = vadd.f32 0.0, %v7794
    %v7796 = vpop.f32.mrb[0].mxu0
    %v7797 = vadd.f32 0.0, %v7796
    %v7798 = vpop.f32.mrb[0].mxu0
    %v7799 = vadd.f32 0.0, %v7798
    %7800 = vmatprep.mubr.bf16.mxu0 %v6785
    %7801 = vmatmul.mubr.bf16.gmra.mrb[0].mxu0 %v6784
    %v7802 = vpop.f32.mrb[0].mxu0
    %v7803 = vadd.f32 0.0, %v7802
    %v7804 = vpop.f32.mrb[0].mxu0
    %v7805 = vadd.f32 0.0, %v7804
    %v7806 = vpop.f32.mrb[0].mxu0
    %v7807 = vadd.f32 0.0, %v7806
    %v7808 = vpop.f32.mrb[0].mxu0
    %v7809 = vadd.f32 0.0, %v7808
    %7810 = vdwg.mxu0
    %7811 = vmatprep.subr.bf16.mxu0 %v7346
    %7812 = vmatpush1.bf16.msra.mxu0 %v7345
    %7813 = vmatprep.subr.bf16.mxu0 %v7350
    %7814 = vmatpush1.bf16.msra.mxu0 %v7349
    %7815 = vmatprep.subr.bf16.mxu0 %v7354
    %7816 = vmatpush1.bf16.msra.mxu0 %v7353
    %7817 = vmatprep.subr.bf16.mxu0 %v7358
    %7818 = vmatpush1.bf16.msra.mxu0 %v7357
    %7819 = vmatprep.subr.bf16.mxu0 %v7362
    %7820 = vmatpush1.bf16.msra.mxu0 %v7361
    %7821 = vmatprep.subr.bf16.mxu0 %v7366
    %7822 = vmatpush1.bf16.msra.mxu0 %v7365
    %7823 = vmatprep.subr.bf16.mxu0 %v7370
    %7824 = vmatpush1.bf16.msra.mxu0 %v7369
    %7825 = vmatprep.subr.bf16.mxu0 %v7374
    %7826 = vmatpush1.bf16.msra.mxu0 %v7373
    %7827 = vmatprep.subr.bf16.mxu0 %v7378
    %7828 = vmatpush1.bf16.msra.mxu0 %v7377
    %7829 = vmatprep.subr.bf16.mxu0 %v7382
    %7830 = vmatpush1.bf16.msra.mxu0 %v7381
    %7831 = vmatprep.subr.bf16.mxu0 %v7386
    %7832 = vmatpush1.bf16.msra.mxu0 %v7385
    %7833 = vmatprep.subr.bf16.mxu0 %v7390
    %7834 = vmatpush1.bf16.msra.mxu0 %v7389
    %7835 = vmatprep.subr.bf16.mxu0 %v7394
    %7836 = vmatpush1.bf16.msra.mxu0 %v7393
    %7837 = vmatprep.subr.bf16.mxu0 %v7398
    %7838 = vmatpush1.bf16.msra.mxu0 %v7397
    %7839 = vmatprep.subr.bf16.mxu0 %v7402
    %7840 = vmatpush1.bf16.msra.mxu0 %v7401
    %7841 = vmatprep.subr.bf16.mxu0 %v7406
    %7842 = vmatpush1.bf16.msra.mxu0 %v7405
    %7843 = vmatprep.mubr.bf16.mxu0 %v6782
    %7844 = vmatmul.mubr.bf16.gmra.mrb[0].mxu0 %v6781
    %v7845 = vpop.f32.mrb[0].mxu0
    %v7846 = vadd.f32 %v7793, %v7845
    %v7847 = vpop.f32.mrb[0].mxu0
    %v7848 = vadd.f32 %v7795, %v7847
    %v7849 = vpop.f32.mrb[0].mxu0
    %v7850 = vadd.f32 %v7797, %v7849
    %v7851 = vpop.f32.mrb[0].mxu0
    %v7852 = vadd.f32 %v7799, %v7851
    %7853 = vmatprep.mubr.bf16.mxu0 %v6787
    %7854 = vmatmul.mubr.bf16.gmra.mrb[0].mxu0 %v6786
    %v7855 = vpop.f32.mrb[0].mxu0
    %v7856 = vadd.f32 %v7803, %v7855
    %v7857 = vpop.f32.mrb[0].mxu0
    %v7858 = vadd.f32 %v7805, %v7857
    %v7859 = vpop.f32.mrb[0].mxu0
    %v7860 = vadd.f32 %v7807, %v7859
    %v7861 = vpop.f32.mrb[0].mxu0
    %v7862 = vadd.f32 %v7809, %v7861
    %7863 = vdwg.mxu0
    %7864 = vmatprep.subr.bf16.mxu0 %v7410
    %7865 = vmatpush1.bf16.msra.mxu0 %v7409
    %7866 = vmatprep.subr.bf16.mxu0 %v7414
    %7867 = vmatpush1.bf16.msra.mxu0 %v7413
    %7868 = vmatprep.subr.bf16.mxu0 %v7418
    %7869 = vmatpush1.bf16.msra.mxu0 %v7417
    %7870 = vmatprep.subr.bf16.mxu0 %v7422
    %7871 = vmatpush1.bf16.msra.mxu0 %v7421
    %7872 = vmatprep.subr.bf16.mxu0 %v7426
    %7873 = vmatpush1.bf16.msra.mxu0 %v7425
    %7874 = vmatprep.subr.bf16.mxu0 %v7430
    %7875 = vmatpush1.bf16.msra.mxu0 %v7429
    %7876 = vmatprep.subr.bf16.mxu0 %v7434
    %7877 = vmatpush1.bf16.msra.mxu0 %v7433
    %7878 = vmatprep.subr.bf16.mxu0 %v7438
    %7879 = vmatpush1.bf16.msra.mxu0 %v7437
    %7880 = vmatprep.subr.bf16.mxu0 0
    %7881 = vmatpush1.bf16.msra.mxu0 0
    %7882 = vmatprep.subr.bf16.mxu0 0
    %7883 = vmatpush1.bf16.msra.mxu0 0
    %7884 = vmatprep.subr.bf16.mxu0 0
    %7885 = vmatpush1.bf16.msra.mxu0 0
    %7886 = vmatprep.subr.bf16.mxu0 0
    %7887 = vmatpush1.bf16.msra.mxu0 0
    %7888 = vmatprep.subr.bf16.mxu0 0
    %7889 = vmatpush1.bf16.msra.mxu0 0
    %7890 = vmatprep.subr.bf16.mxu0 0
    %7891 = vmatpush1.bf16.msra.mxu0 0
    %7892 = vmatprep.subr.bf16.mxu0 0
    %7893 = vmatpush1.bf16.msra.mxu0 0
    %7894 = vmatprep.subr.bf16.mxu0 0
    %7895 = vmatpush1.bf16.msra.mxu0 0
    %7896 = vmatprep.mubr.bf16.mxu0 0
    %7897 = vmatmul.mubr.bf16.gmra.mrb[0].mxu0 %v6783
    %v7898 = vpop.f32.mrb[0].mxu0
    %v7899 = vadd.f32 %v7846, %v7898
    %v7900 = vpop.f32.mrb[0].mxu0
    %v7901 = vadd.f32 %v7848, %v7900
    %v7902 = vpop.f32.mrb[0].mxu0
    %v7903 = vadd.f32 %v7850, %v7902
    %v7904 = vpop.f32.mrb[0].mxu0
    %v7905 = vadd.f32 %v7852, %v7904
    %7906 = vmatprep.mubr.bf16.mxu0 0
    %7907 = vmatmul.mubr.bf16.gmra.mrb[0].mxu0 %v6788
    %v7908 = vpop.f32.mrb[0].mxu0
    %v7909 = vadd.f32 %v7856, %v7908
    %v7910 = vpop.f32.mrb[0].mxu0
    %v7911 = vadd.f32 %v7858, %v7910
    %v7912 = vpop.f32.mrb[0].mxu0
    %v7913 = vadd.f32 %v7860, %v7912
    %v7914 = vpop.f32.mrb[0].mxu0
    %v7915 = vadd.f32 %v7862, %v7914
    %7916 = vdwg.mxu0
    %v7917 = vadd.f32 %v6591, %v7740
    %v7918 = vadd.f32 %v6592, %v7742
    %v7919 = vadd.f32 %v6593, %v7899
    %v7920 = vadd.f32 %v6594, %v7901
    %v7921 = vadd.f32 %v6595, %v7744
    %v7922 = vadd.f32 %v6596, %v7746
    %v7923 = vadd.f32 %v6597, %v7903
    %v7924 = vadd.f32 %v6598, %v7905
    %v7925 = vadd.f32 %v6599, %v7750
    %v7926 = vadd.f32 %v6600, %v7752
    %v7927 = vadd.f32 %v6601, %v7909
    %v7928 = vadd.f32 %v6602, %v7911
    %v7929 = vadd.f32 %v6603, %v7754
    %v7930 = vadd.f32 %v6604, %v7756
    %v7931 = vadd.f32 %v6605, %v7913
    %v7932 = vadd.f32 %v6606, %v7915
    %v7933 = vmax.f32 %v7917, 0.0
    %v7934 = vmax.f32 %v7918, 0.0
    %v7935 = vmax.f32 %v7919, 0.0
    %v7936 = vmax.f32 %v7920, 0.0
    %v7937 = vmax.f32 %v7921, 0.0
    %v7938 = vmax.f32 %v7922, 0.0
    %v7939 = vmax.f32 %v7923, 0.0
    %v7940 = vmax.f32 %v7924, 0.0
    %v7941 = vmax.f32 %v7925, 0.0
    %v7942 = vmax.f32 %v7926, 0.0
    %v7943 = vmax.f32 %v7927, 0.0
    %v7944 = vmax.f32 %v7928, 0.0
    %v7945 = vmax.f32 %v7929, 0.0
    %v7946 = vmax.f32 %v7930, 0.0
    %v7947 = vmax.f32 %v7931, 0.0
    %v7948 = vmax.f32 %v7932, 0.0
    %7949 = vst [vmem:[#allocation3] sm:$0x11] 0
    %7950 = vst [vmem:[#allocation3 + $0x8] sm:$0x11] 0
    %7951 = vst [vmem:[#allocation3 + $0x10] sm:$0x1] 0
    %7952 = vst [vmem:[#allocation3 + $0x3c] sm:$0x11] 0
    %7953 = vst [vmem:[#allocation3 + $0x44] sm:$0x11] 0
    %7954 = vst [vmem:[#allocation3 + $0x4c] sm:$0x1] 0
    %7955 = vst [vmem:[#allocation3 + $0x28] sm:$0x11] 0
    %7956 = vst [vmem:[#allocation3 + $0x30] sm:$0x11] 0
    %7957 = vst [vmem:[#allocation3 + $0x38] sm:$0x1] 0
    %7958 = vst [vmem:[#allocation3 + $0x64] sm:$0x11] 0
    %7959 = vst [vmem:[#allocation3 + $0x6c] sm:$0x11] 0
    %7960 = vst [vmem:[#allocation3 + $0x74] sm:$0x1] 0
    %7961 = vst [vmem:[#allocation3] sm:$0xe] 0
    %7962 = vst [vmem:[#allocation3 + $0x14] sm:$0xf] 0
    %7963 = vst [vmem:[#allocation3 + $0x3c] sm:$0xe] 0
    %7964 = vst [vmem:[#allocation3 + $0x50] sm:$0xf] 0
    %vm7965 = vcmask 1043969
    %7966 = vst.msk [vmem:[#allocation3 + $0x10] sm:$0xe] %vm7965, 0
    %7967 = vst.msk [vmem:[#allocation3 + $0x24] sm:$0xf] %vm1033, 0
    %7968 = vst.msk [vmem:[#allocation3 + $0x4c] sm:$0xe] %vm7965, 0
    %7969 = vst.msk [vmem:[#allocation3 + $0x60] sm:$0xf] %vm1033, 0
    %v7986 = vcombine.low %v7933, %v7934
    %v7987 = vcombine.high %v7933, %v7934
    %v7988 = vcombine.low %v7935, %v7936
    %v7989 = vcombine.high %v7935, %v7936
    %v7991 = vunpack.c.l.s4 1983009808
    %v7992 = vunpack.c.0.s8 %v7991
    %v7993 = vlaneseq
    %v7994 = vshrl.u32 %v7993, 7
    %v7995 = vsub.s32 %v7992, %v7994
    %v7996 = vrot.slane %v7986, %v7995
    %v7998 = vunpack.c.l.s4 1983009808
    %v7999 = vunpack.c.0.s8 %v7998
    %v8000 = vlaneseq
    %v8001 = vshrl.u32 %v8000, 7
    %v8002 = vsub.s32 %v7999, %v8001
    %v8003 = vrot.slane %v7987, %v8002
    %v8005 = vunpack.c.l.s4 1983009808
    %v8006 = vunpack.c.0.s8 %v8005
    %v8007 = vlaneseq
    %v8008 = vshrl.u32 %v8007, 7
    %v8009 = vsub.s32 %v8006, %v8008
    %v8010 = vrot.slane %v7988, %v8009
    %v8012 = vunpack.c.l.s4 1983009808
    %v8013 = vunpack.c.0.s8 %v8012
    %v8014 = vlaneseq
    %v8015 = vshrl.u32 %v8014, 7
    %v8016 = vsub.s32 %v8013, %v8015
    %v8017 = vrot.slane %v7989, %v8016
    %v8018 = vcombine.low %v7996, %v8010
    %v8019 = vcombine.high %v7996, %v8010
    %v8020 = vcombine.low %v8003, %v8017
    %v8021 = vcombine.high %v8003, %v8017
    %v8022 = vcombine.low %v7937, %v7938
    %v8023 = vcombine.high %v7937, %v7938
    %v8024 = vcombine.low %v7939, %v7940
    %v8025 = vcombine.high %v7939, %v7940
    %v8027 = vunpack.c.l.s4 1983009808
    %v8028 = vunpack.c.0.s8 %v8027
    %v8029 = vlaneseq
    %v8030 = vshrl.u32 %v8029, 7
    %v8031 = vsub.s32 %v8028, %v8030
    %v8032 = vrot.slane %v8022, %v8031
    %v8034 = vunpack.c.l.s4 1983009808
    %v8035 = vunpack.c.0.s8 %v8034
    %v8036 = vlaneseq
    %v8037 = vshrl.u32 %v8036, 7
    %v8038 = vsub.s32 %v8035, %v8037
    %v8039 = vrot.slane %v8023, %v8038
    %v8041 = vunpack.c.l.s4 1983009808
    %v8042 = vunpack.c.0.s8 %v8041
    %v8043 = vlaneseq
    %v8044 = vshrl.u32 %v8043, 7
    %v8045 = vsub.s32 %v8042, %v8044
    %v8046 = vrot.slane %v8024, %v8045
    %v8048 = vunpack.c.l.s4 1983009808
    %v8049 = vunpack.c.0.s8 %v8048
    %v8050 = vlaneseq
    %v8051 = vshrl.u32 %v8050, 7
    %v8052 = vsub.s32 %v8049, %v8051
    %v8053 = vrot.slane %v8025, %v8052
    %v8054 = vcombine.low %v8032, %v8046
    %v8055 = vcombine.high %v8032, %v8046
    %v8056 = vcombine.low %v8039, %v8053
    %v8057 = vcombine.high %v8039, %v8053
    %v8058 = vcombine.low %v7941, %v7942
    %v8059 = vcombine.high %v7941, %v7942
    %v8060 = vcombine.low %v7943, %v7944
    %v8061 = vcombine.high %v7943, %v7944
    %v8063 = vunpack.c.l.s4 1983009808
    %v8064 = vunpack.c.0.s8 %v8063
    %v8065 = vlaneseq
    %v8066 = vshrl.u32 %v8065, 7
    %v8067 = vsub.s32 %v8064, %v8066
    %v8068 = vrot.slane %v8058, %v8067
    %v8070 = vunpack.c.l.s4 1983009808
    %v8071 = vunpack.c.0.s8 %v8070
    %v8072 = vlaneseq
    %v8073 = vshrl.u32 %v8072, 7
    %v8074 = vsub.s32 %v8071, %v8073
    %v8075 = vrot.slane %v8059, %v8074
    %v8077 = vunpack.c.l.s4 1983009808
    %v8078 = vunpack.c.0.s8 %v8077
    %v8079 = vlaneseq
    %v8080 = vshrl.u32 %v8079, 7
    %v8081 = vsub.s32 %v8078, %v8080
    %v8082 = vrot.slane %v8060, %v8081
    %v8084 = vunpack.c.l.s4 1983009808
    %v8085 = vunpack.c.0.s8 %v8084
    %v8086 = vlaneseq
    %v8087 = vshrl.u32 %v8086, 7
    %v8088 = vsub.s32 %v8085, %v8087
    %v8089 = vrot.slane %v8061, %v8088
    %v8090 = vcombine.low %v8068, %v8082
    %v8091 = vcombine.high %v8068, %v8082
    %v8092 = vcombine.low %v8075, %v8089
    %v8093 = vcombine.high %v8075, %v8089
    %v8094 = vcombine.low %v7945, %v7946
    %v8095 = vcombine.low %v7947, %v7948
    %v8097 = vunpack.c.l.s4 1983009808
    %v8098 = vunpack.c.0.s8 %v8097
    %v8099 = vlaneseq
    %v8100 = vshrl.u32 %v8099, 7
    %v8101 = vsub.s32 %v8098, %v8100
    %v8102 = vrot.slane %v8094, %v8101
    %v8104 = vunpack.c.l.s4 1983009808
    %v8105 = vunpack.c.0.s8 %v8104
    %v8106 = vlaneseq
    %v8107 = vshrl.u32 %v8106, 7
    %v8108 = vsub.s32 %v8105, %v8107
    %v8109 = vrot.slane %v8095, %v8108
    %v8110 = vcombine.low %v8102, %v8109
    %v8111 = vcombine.high %v8102, %v8109
    %v8112 = vcombine.low %v8018, %v8020
    %v8113 = vcombine.high %v8018, %v8020
    %v8114 = vcombine.low %v8054, %v8056
    %v8115 = vcombine.high %v8054, %v8056
    %v8117 = vunpack.c.l.s4 1983009808
    %v8118 = vunpack.c.0.s8 %v8117
    %v8119 = vlaneseq
    %v8120 = vshrl.u32 %v8119, 7
    %v8121 = vsub.s32 %v8118, %v8120
    %v8122 = vrot.slane %v8112, %v8121
    %v8124 = vunpack.c.l.s4 1983009808
    %v8125 = vunpack.c.0.s8 %v8124
    %v8126 = vlaneseq
    %v8127 = vshrl.u32 %v8126, 7
    %v8128 = vsub.s32 %v8125, %v8127
    %v8129 = vrot.slane %v8113, %v8128
    %v8131 = vunpack.c.l.s4 1983009808
    %v8132 = vunpack.c.0.s8 %v8131
    %v8133 = vlaneseq
    %v8134 = vshrl.u32 %v8133, 7
    %v8135 = vsub.s32 %v8132, %v8134
    %v8136 = vrot.slane %v8114, %v8135
    %v8138 = vunpack.c.l.s4 1983009808
    %v8139 = vunpack.c.0.s8 %v8138
    %v8140 = vlaneseq
    %v8141 = vshrl.u32 %v8140, 7
    %v8142 = vsub.s32 %v8139, %v8141
    %v8143 = vrot.slane %v8115, %v8142
    %v8144 = vcombine.low %v8122, %v8136
    %v8145 = vcombine.high %v8122, %v8136
    %v8146 = vcombine.low %v8129, %v8143
    %v8147 = vcombine.high %v8129, %v8143
    %v8148 = vcombine.low %v8090, %v8092
    %v8149 = vcombine.high %v8090, %v8092
    %v8150 = vcombine.high %v8110, %v8110
    %v8152 = vunpack.c.l.s4 1983009808
    %v8153 = vunpack.c.0.s8 %v8152
    %v8154 = vlaneseq
    %v8155 = vshrl.u32 %v8154, 7
    %v8156 = vsub.s32 %v8153, %v8155
    %v8157 = vrot.slane %v8148, %v8156
    %v8159 = vunpack.c.l.s4 1983009808
    %v8160 = vunpack.c.0.s8 %v8159
    %v8161 = vlaneseq
    %v8162 = vshrl.u32 %v8161, 7
    %v8163 = vsub.s32 %v8160, %v8162
    %v8164 = vrot.slane %v8149, %v8163
    %v8166 = vunpack.c.l.s4 1983009808
    %v8167 = vunpack.c.0.s8 %v8166
    %v8168 = vlaneseq
    %v8169 = vshrl.u32 %v8168, 7
    %v8170 = vsub.s32 %v8167, %v8169
    %v8171 = vrot.slane %v8110, %v8170
    %v8173 = vunpack.c.l.s4 1983009808
    %v8174 = vunpack.c.0.s8 %v8173
    %v8175 = vlaneseq
    %v8176 = vshrl.u32 %v8175, 7
    %v8177 = vsub.s32 %v8174, %v8176
    %v8178 = vrot.slane %v8150, %v8177
    %v8179 = vcombine.low %v8157, %v8171
    %v8180 = vcombine.high %v8157, %v8171
    %v8181 = vcombine.low %v8164, %v8178
    %v8182 = vcombine.high %v8164, %v8178
    %v8191 = vpack.c.bf16 %v8179, %v8144
    %v8192 = vpack.c.bf16 %v8180, %v8145
    %v8193 = vpack.c.bf16 %v8181, %v8146
    %v8194 = vpack.c.bf16 %v8182, %v8147
    %v8199 = vunpack.c.l.b16 %v8191
    %v8200 = vunpack.c.l.b16 %v8192
    %v8201 = vunpack.c.l.b16 %v8193
    %v8202 = vunpack.c.l.b16 %v8194
    %v8203 = vunpack.c.h.b16 %v8191
    %v8204 = vunpack.c.h.b16 %v8192
    %v8205 = vunpack.c.h.b16 %v8193
    %v8206 = vunpack.c.h.b16 %v8194
    %v8207 = vpack.c.b16 %v8200, %v8199
    %v8208 = vpack.c.b16 %v8202, %v8201
    %v8209 = vpack.c.b16 %v8204, %v8203
    %v8210 = vpack.c.b16 %v8206, %v8205
    %vm8211 = vcmask 1040384
    %vm8212 = vcmask 1044484
    %vm8213 = vmor %vm8211, %vm8212
    %v8214 = vrot.slane %v8207, 7
    %v8215 = vrot.slane %v8208, 7
    %v8216 = vrot.slane %v8214, 4
    %v8217 = vrot.slane %v8209, 7
    %v8218 = vsel %vm8213, %v8216, %v8217
    %v8219 = vrot.slane %v8215, 4
    %v8220 = vrot.slane %v8210, 7
    %v8221 = vsel %vm8213, %v8219, %v8220
    %8226 = vst [vmem:[#allocation3 + $0x4] sm:$0xee] %v8214
    %vm8227 = vcmask 1043457
    %vm8228 = vcmask 523269
    %vm8229 = vmor %vm8228, %vm8227
    %8230 = vst.msk [vmem:[#allocation3 + $0xc] sm:$0xee] %vm8229, %v8215
    %8231 = vst [vmem:[#allocation3 + $0x18] sm:$0xff] %v8218
    %8232 = vst.msk [vmem:[#allocation3 + $0x20] sm:$0xff] %vm1116, %v8221
    %v8233 = vcombine.low %v8019, %v8021
    %v8234 = vcombine.high %v8019, %v8021
    %v8235 = vcombine.low %v8055, %v8057
    %v8236 = vcombine.high %v8055, %v8057
    %v8238 = vunpack.c.l.s4 1983009808
    %v8239 = vunpack.c.0.s8 %v8238
    %v8240 = vlaneseq
    %v8241 = vshrl.u32 %v8240, 7
    %v8242 = vsub.s32 %v8239, %v8241
    %v8243 = vrot.slane %v8233, %v8242
    %v8245 = vunpack.c.l.s4 1983009808
    %v8246 = vunpack.c.0.s8 %v8245
    %v8247 = vlaneseq
    %v8248 = vshrl.u32 %v8247, 7
    %v8249 = vsub.s32 %v8246, %v8248
    %v8250 = vrot.slane %v8234, %v8249
    %v8252 = vunpack.c.l.s4 1983009808
    %v8253 = vunpack.c.0.s8 %v8252
    %v8254 = vlaneseq
    %v8255 = vshrl.u32 %v8254, 7
    %v8256 = vsub.s32 %v8253, %v8255
    %v8257 = vrot.slane %v8235, %v8256
    %v8259 = vunpack.c.l.s4 1983009808
    %v8260 = vunpack.c.0.s8 %v8259
    %v8261 = vlaneseq
    %v8262 = vshrl.u32 %v8261, 7
    %v8263 = vsub.s32 %v8260, %v8262
    %v8264 = vrot.slane %v8236, %v8263
    %v8265 = vcombine.low %v8243, %v8257
    %v8266 = vcombine.high %v8243, %v8257
    %v8267 = vcombine.low %v8250, %v8264
    %v8268 = vcombine.high %v8250, %v8264
    %v8269 = vcombine.low %v8091, %v8093
    %v8270 = vcombine.high %v8091, %v8093
    %v8271 = vcombine.high %v8111, %v8111
    %v8273 = vunpack.c.l.s4 1983009808
    %v8274 = vunpack.c.0.s8 %v8273
    %v8275 = vlaneseq
    %v8276 = vshrl.u32 %v8275, 7
    %v8277 = vsub.s32 %v8274, %v8276
    %v8278 = vrot.slane %v8269, %v8277
    %v8280 = vunpack.c.l.s4 1983009808
    %v8281 = vunpack.c.0.s8 %v8280
    %v8282 = vlaneseq
    %v8283 = vshrl.u32 %v8282, 7
    %v8284 = vsub.s32 %v8281, %v8283
    %v8285 = vrot.slane %v8270, %v8284
    %v8287 = vunpack.c.l.s4 1983009808
    %v8288 = vunpack.c.0.s8 %v8287
    %v8289 = vlaneseq
    %v8290 = vshrl.u32 %v8289, 7
    %v8291 = vsub.s32 %v8288, %v8290
    %v8292 = vrot.slane %v8111, %v8291
    %v8294 = vunpack.c.l.s4 1983009808
    %v8295 = vunpack.c.0.s8 %v8294
    %v8296 = vlaneseq
    %v8297 = vshrl.u32 %v8296, 7
    %v8298 = vsub.s32 %v8295, %v8297
    %v8299 = vrot.slane %v8271, %v8298
    %v8300 = vcombine.low %v8278, %v8292
    %v8301 = vcombine.high %v8278, %v8292
    %v8302 = vcombine.low %v8285, %v8299
    %v8303 = vcombine.high %v8285, %v8299
    %v8312 = vpack.c.bf16 %v8300, %v8265
    %v8313 = vpack.c.bf16 %v8301, %v8266
    %v8314 = vpack.c.bf16 %v8302, %v8267
    %v8315 = vpack.c.bf16 %v8303, %v8268
    %v8320 = vunpack.c.l.b16 %v8312
    %v8321 = vunpack.c.l.b16 %v8313
    %v8322 = vunpack.c.l.b16 %v8314
    %v8323 = vunpack.c.l.b16 %v8315
    %v8324 = vunpack.c.h.b16 %v8312
    %v8325 = vunpack.c.h.b16 %v8313
    %v8326 = vunpack.c.h.b16 %v8314
    %v8327 = vunpack.c.h.b16 %v8315
    %v8328 = vpack.c.b16 %v8321, %v8320
    %v8329 = vpack.c.b16 %v8323, %v8322
    %v8330 = vpack.c.b16 %v8325, %v8324
    %v8331 = vpack.c.b16 %v8327, %v8326
    %v8332 = vrot.slane %v8328, 7
    %v8333 = vrot.slane %v8329, 7
    %v8334 = vrot.slane %v8332, 4
    %v8335 = vrot.slane %v8330, 7
    %v8336 = vsel %vm8213, %v8334, %v8335
    %v8337 = vrot.slane %v8333, 4
    %v8338 = vrot.slane %v8331, 7
    %v8339 = vsel %vm8213, %v8337, %v8338
    %s8344 = scalar_lea.vmem [#allocation3], 60
    %8345 = vst [vmem:[%s8344 + $0x4] sm:$0xee] %v8332
    %8346 = vst.msk [vmem:[%s8344 + $0xc] sm:$0xee] %vm8229, %v8333
    %8347 = vst [vmem:[%s8344 + $0x18] sm:$0xff] %v8336
    %8348 = vst.msk [vmem:[%s8344 + $0x20] sm:$0xff] %vm1116, %v8339
    %v8349 = vld [vmem:[%s6] sm:$0x3]
    %v8351 = vlaneseq
    %v8352 = vshrl.u32 %v8351, 7
    %v8353 = vsub.s32 0, %v8352
    %v8354 = vrot.slane %v8349, %v8353
    %v8355 = vlaneseq
    %v8356 = vshrl.u32 %v8355, 7
    %v8357 = vsub.s32 1, %v8356
    %v8358 = vrot.slane %v8349, %v8357
    %v8361 = vld [vmem:[#allocation3] sm:$0xff]
    %v8362 = vld [vmem:[#allocation3 + $0x8] sm:$0xff]
    %v8363 = vld [vmem:[#allocation3 + $0x10] sm:$0xf]
    %v8364 = vld [vmem:[#allocation3 + $0x14] sm:$0x77]
    %v8365 = vld [vmem:[#allocation3 + $0x1c] sm:$0x77]
    %v8366 = vld [vmem:[#allocation3 + $0x24] sm:$0x7]
    %v8367 = vld [vmem:[%s5] sm:$0xff]
    %v8368 = vld [vmem:[%s5 + $0x8] sm:$0xff]
    %v8369 = vld [vmem:[%s5 + $0x10] sm:$0xff]
    %v8370 = vld [vmem:[%s5 + $0x18] sm:$0xff]
    %v8371 = vld [vmem:[%s5 + $0x20] sm:$0xff]
    %v8372 = vld [vmem:[%s5 + $0x28] sm:$0xff]
    %v8373 = vld [vmem:[%s5 + $0x30] sm:$0xff]
    %v8374 = vld [vmem:[%s5 + $0x38] sm:$0xff]
    %v8375 = vld [vmem:[%s5 + $0x40] sm:$0xff]
    %v8376 = vld [vmem:[%s5 + $0x48] sm:$0xff]
    %v8377 = vld [vmem:[%s5 + $0x50] sm:$0xff]
    %v8378 = vld [vmem:[%s5 + $0x58] sm:$0xff]
    %v8379 = vld [vmem:[%s5 + $0x60] sm:$0xff]
    %v8380 = vld [vmem:[%s5 + $0x68] sm:$0xff]
    %v8381 = vld [vmem:[%s5 + $0x70] sm:$0xff]
    %v8382 = vld [vmem:[%s5 + $0x78] sm:$0xff]
    %v8383 = vld [vmem:[%s5 + $0x80] sm:$0xff]
    %v8384 = vld [vmem:[%s5 + $0x88] sm:$0xff]
    %v8385 = vld [vmem:[%s5 + $0x90] sm:$0xff]
    %v8386 = vld [vmem:[%s5 + $0x98] sm:$0xff]
    %v8387 = vld [vmem:[%s5 + $0xa0] sm:$0xff]
    %v8388 = vld [vmem:[%s5 + $0xa8] sm:$0xff]
    %v8389 = vld [vmem:[%s5 + $0xb0] sm:$0xff]
    %v8390 = vld [vmem:[%s5 + $0xb8] sm:$0xff]
    %v8391 = vld [vmem:[%s5 + $0xc0] sm:$0xff]
    %v8392 = vld [vmem:[%s5 + $0xc8] sm:$0xff]
    %v8393 = vld [vmem:[%s5 + $0xd0] sm:$0xff]
    %v8394 = vld [vmem:[%s5 + $0xd8] sm:$0xff]
    %v8395 = vld [vmem:[%s5 + $0xe0] sm:$0xff]
    %v8396 = vld [vmem:[%s5 + $0xe8] sm:$0xff]
    %v8397 = vld [vmem:[%s5 + $0xf0] sm:$0xff]
    %v8398 = vld [vmem:[%s5 + $0xf8] sm:$0xff]
    %v8399 = vld [vmem:[%s5 + $0x100] sm:$0xff]
    %v8400 = vld [vmem:[%s5 + $0x108] sm:$0xff]
    %v8401 = vld [vmem:[%s5 + $0x110] sm:$0xff]
    %v8402 = vld [vmem:[%s5 + $0x118] sm:$0xff]
    %v8403 = vld [vmem:[%s5 + $0x120] sm:$0xff]
    %v8404 = vld [vmem:[%s5 + $0x128] sm:$0xff]
    %v8405 = vld [vmem:[%s5 + $0x130] sm:$0xff]
    %v8406 = vld [vmem:[%s5 + $0x138] sm:$0xff]
    %v8407 = vld [vmem:[%s5 + $0x140] sm:$0xff]
    %v8408 = vld [vmem:[%s5 + $0x148] sm:$0xff]
    %v8409 = vld [vmem:[%s5 + $0x150] sm:$0xff]
    %v8410 = vld [vmem:[%s5 + $0x158] sm:$0xff]
    %v8411 = vld [vmem:[%s5 + $0x160] sm:$0xff]
    %v8412 = vld [vmem:[%s5 + $0x168] sm:$0xff]
    %v8413 = vld [vmem:[%s5 + $0x170] sm:$0xff]
    %v8414 = vld [vmem:[%s5 + $0x178] sm:$0xff]
    %v8415 = vld [vmem:[%s5 + $0x180] sm:$0xff]
    %v8416 = vld [vmem:[%s5 + $0x188] sm:$0xff]
    %v8417 = vld [vmem:[%s5 + $0x190] sm:$0xff]
    %v8418 = vld [vmem:[%s5 + $0x198] sm:$0xff]
    %v8419 = vld [vmem:[%s5 + $0x1a0] sm:$0xff]
    %v8420 = vld [vmem:[%s5 + $0x1a8] sm:$0xff]
    %v8421 = vld [vmem:[%s5 + $0x1b0] sm:$0xff]
    %v8422 = vld [vmem:[%s5 + $0x1b8] sm:$0xff]
    %v8423 = vld [vmem:[%s5 + $0x1c0] sm:$0xff]
    %v8424 = vld [vmem:[%s5 + $0x1c8] sm:$0xff]
    %v8425 = vld [vmem:[%s5 + $0x1d0] sm:$0xff]
    %v8426 = vld [vmem:[%s5 + $0x1d8] sm:$0xff]
    %v8427 = vld [vmem:[%s5 + $0x1e0] sm:$0xff]
    %v8428 = vld [vmem:[%s5 + $0x1e8] sm:$0xff]
    %v8429 = vld [vmem:[%s5 + $0x1f0] sm:$0xff]
    %v8430 = vld [vmem:[%s5 + $0x1f8] sm:$0xff]
    %v8431 = vld [vmem:[%s5 + $0x200] sm:$0xff]
    %v8432 = vld [vmem:[%s5 + $0x208] sm:$0xff]
    %v8433 = vld [vmem:[%s5 + $0x210] sm:$0xff]
    %v8434 = vld [vmem:[%s5 + $0x218] sm:$0xff]
    %v8435 = vld [vmem:[%s5 + $0x220] sm:$0xff]
    %v8436 = vld [vmem:[%s5 + $0x228] sm:$0xff]
    %v8437 = vld [vmem:[%s5 + $0x230] sm:$0xff]
    %v8438 = vld [vmem:[%s5 + $0x238] sm:$0xff]
    %v8439 = vld [vmem:[%s5 + $0x240] sm:$0xff]
    %v8440 = vld [vmem:[%s5 + $0x248] sm:$0xff]
    %v8441 = vld [vmem:[%s5 + $0x250] sm:$0xff]
    %v8442 = vld [vmem:[%s5 + $0x258] sm:$0xff]
    %v8443 = vld [vmem:[%s5 + $0x260] sm:$0xff]
    %v8444 = vld [vmem:[%s5 + $0x268] sm:$0xff]
    %v8445 = vld [vmem:[%s5 + $0x270] sm:$0xff]
    %v8446 = vld [vmem:[%s5 + $0x278] sm:$0xff]
    %v8453 = vunpack.c.l.b16 %v8361
    %v8454 = vunpack.c.h.b16 %v8361
    %v8455 = vunpack.c.l.b16 %v8362
    %v8456 = vunpack.c.h.b16 %v8362
    %v8457 = vunpack.c.l.b16 %v8363
    %v8458 = vunpack.c.l.b16 %v8364
    %v8459 = vunpack.c.h.b16 %v8364
    %v8460 = vunpack.c.l.b16 %v8365
    %v8461 = vunpack.c.h.b16 %v8365
    %v8462 = vunpack.c.l.b16 %v8366
    %v8463 = vpack.c.b16 %v8458, %v8453
    %v8464 = vpack.c.b16 %v8459, %v8454
    %v8465 = vpack.c.b16 %v8460, %v8455
    %v8466 = vpack.c.b16 %v8461, %v8456
    %v8467 = vpack.c.b16 %v8462, %v8457
    %v8553 = vunpack.c.l.b16 %v8367
    %v8554 = vunpack.c.h.b16 %v8367
    %v8555 = vunpack.c.l.b16 %v8368
    %v8556 = vunpack.c.h.b16 %v8368
    %v8557 = vunpack.c.l.b16 %v8369
    %v8558 = vunpack.c.h.b16 %v8369
    %v8559 = vunpack.c.l.b16 %v8370
    %v8560 = vunpack.c.h.b16 %v8370
    %v8561 = vunpack.c.l.b16 %v8371
    %v8562 = vunpack.c.h.b16 %v8371
    %v8563 = vunpack.c.l.b16 %v8372
    %v8564 = vunpack.c.h.b16 %v8372
    %v8565 = vunpack.c.l.b16 %v8373
    %v8566 = vunpack.c.h.b16 %v8373
    %v8567 = vunpack.c.l.b16 %v8374
    %v8568 = vunpack.c.h.b16 %v8374
    %v8569 = vunpack.c.l.b16 %v8375
    %v8570 = vunpack.c.h.b16 %v8375
    %v8571 = vunpack.c.l.b16 %v8376
    %v8572 = vunpack.c.h.b16 %v8376
    %v8573 = vunpack.c.l.b16 %v8377
    %v8574 = vunpack.c.h.b16 %v8377
    %v8575 = vunpack.c.l.b16 %v8378
    %v8576 = vunpack.c.h.b16 %v8378
    %v8577 = vunpack.c.l.b16 %v8379
    %v8578 = vunpack.c.h.b16 %v8379
    %v8579 = vunpack.c.l.b16 %v8380
    %v8580 = vunpack.c.h.b16 %v8380
    %v8581 = vunpack.c.l.b16 %v8381
    %v8582 = vunpack.c.h.b16 %v8381
    %v8583 = vunpack.c.l.b16 %v8382
    %v8584 = vunpack.c.h.b16 %v8382
    %v8585 = vunpack.c.l.b16 %v8383
    %v8586 = vunpack.c.h.b16 %v8383
    %v8587 = vunpack.c.l.b16 %v8384
    %v8588 = vunpack.c.h.b16 %v8384
    %v8589 = vunpack.c.l.b16 %v8385
    %v8590 = vunpack.c.h.b16 %v8385
    %v8591 = vunpack.c.l.b16 %v8386
    %v8592 = vunpack.c.h.b16 %v8386
    %v8593 = vunpack.c.l.b16 %v8387
    %v8594 = vunpack.c.h.b16 %v8387
    %v8595 = vunpack.c.l.b16 %v8388
    %v8596 = vunpack.c.h.b16 %v8388
    %v8597 = vunpack.c.l.b16 %v8389
    %v8598 = vunpack.c.h.b16 %v8389
    %v8599 = vunpack.c.l.b16 %v8390
    %v8600 = vunpack.c.h.b16 %v8390
    %v8601 = vunpack.c.l.b16 %v8391
    %v8602 = vunpack.c.h.b16 %v8391
    %v8603 = vunpack.c.l.b16 %v8392
    %v8604 = vunpack.c.h.b16 %v8392
    %v8605 = vunpack.c.l.b16 %v8393
    %v8606 = vunpack.c.h.b16 %v8393
    %v8607 = vunpack.c.l.b16 %v8394
    %v8608 = vunpack.c.h.b16 %v8394
    %v8609 = vunpack.c.l.b16 %v8395
    %v8610 = vunpack.c.h.b16 %v8395
    %v8611 = vunpack.c.l.b16 %v8396
    %v8612 = vunpack.c.h.b16 %v8396
    %v8613 = vunpack.c.l.b16 %v8397
    %v8614 = vunpack.c.h.b16 %v8397
    %v8615 = vunpack.c.l.b16 %v8398
    %v8616 = vunpack.c.h.b16 %v8398
    %v8617 = vunpack.c.l.b16 %v8399
    %v8618 = vunpack.c.h.b16 %v8399
    %v8619 = vunpack.c.l.b16 %v8400
    %v8620 = vunpack.c.h.b16 %v8400
    %v8621 = vunpack.c.l.b16 %v8401
    %v8622 = vunpack.c.h.b16 %v8401
    %v8623 = vunpack.c.l.b16 %v8402
    %v8624 = vunpack.c.h.b16 %v8402
    %v8625 = vunpack.c.l.b16 %v8403
    %v8626 = vunpack.c.h.b16 %v8403
    %v8627 = vunpack.c.l.b16 %v8404
    %v8628 = vunpack.c.h.b16 %v8404
    %v8629 = vunpack.c.l.b16 %v8405
    %v8630 = vunpack.c.h.b16 %v8405
    %v8631 = vunpack.c.l.b16 %v8406
    %v8632 = vunpack.c.h.b16 %v8406
    %v8633 = vunpack.c.l.b16 %v8407
    %v8634 = vunpack.c.h.b16 %v8407
    %v8635 = vunpack.c.l.b16 %v8408
    %v8636 = vunpack.c.h.b16 %v8408
    %v8637 = vunpack.c.l.b16 %v8409
    %v8638 = vunpack.c.h.b16 %v8409
    %v8639 = vunpack.c.l.b16 %v8410
    %v8640 = vunpack.c.h.b16 %v8410
    %v8641 = vunpack.c.l.b16 %v8411
    %v8642 = vunpack.c.h.b16 %v8411
    %v8643 = vunpack.c.l.b16 %v8412
    %v8644 = vunpack.c.h.b16 %v8412
    %v8645 = vunpack.c.l.b16 %v8413
    %v8646 = vunpack.c.h.b16 %v8413
    %v8647 = vunpack.c.l.b16 %v8414
    %v8648 = vunpack.c.h.b16 %v8414
    %v8649 = vunpack.c.l.b16 %v8415
    %v8650 = vunpack.c.h.b16 %v8415
    %v8651 = vunpack.c.l.b16 %v8416
    %v8652 = vunpack.c.h.b16 %v8416
    %v8653 = vunpack.c.l.b16 %v8417
    %v8654 = vunpack.c.h.b16 %v8417
    %v8655 = vunpack.c.l.b16 %v8418
    %v8656 = vunpack.c.h.b16 %v8418
    %v8657 = vunpack.c.l.b16 %v8419
    %v8658 = vunpack.c.h.b16 %v8419
    %v8659 = vunpack.c.l.b16 %v8420
    %v8660 = vunpack.c.h.b16 %v8420
    %v8661 = vunpack.c.l.b16 %v8421
    %v8662 = vunpack.c.h.b16 %v8421
    %v8663 = vunpack.c.l.b16 %v8422
    %v8664 = vunpack.c.h.b16 %v8422
    %v8665 = vunpack.c.l.b16 %v8423
    %v8666 = vunpack.c.h.b16 %v8423
    %v8667 = vunpack.c.l.b16 %v8424
    %v8668 = vunpack.c.h.b16 %v8424
    %v8669 = vunpack.c.l.b16 %v8425
    %v8670 = vunpack.c.h.b16 %v8425
    %v8671 = vunpack.c.l.b16 %v8426
    %v8672 = vunpack.c.h.b16 %v8426
    %v8673 = vunpack.c.l.b16 %v8427
    %v8674 = vunpack.c.h.b16 %v8427
    %v8675 = vunpack.c.l.b16 %v8428
    %v8676 = vunpack.c.h.b16 %v8428
    %v8677 = vunpack.c.l.b16 %v8429
    %v8678 = vunpack.c.h.b16 %v8429
    %v8679 = vunpack.c.l.b16 %v8430
    %v8680 = vunpack.c.h.b16 %v8430
    %v8681 = vunpack.c.l.b16 %v8431
    %v8682 = vunpack.c.h.b16 %v8431
    %v8683 = vunpack.c.l.b16 %v8432
    %v8684 = vunpack.c.h.b16 %v8432
    %v8685 = vunpack.c.l.b16 %v8433
    %v8686 = vunpack.c.h.b16 %v8433
    %v8687 = vunpack.c.l.b16 %v8434
    %v8688 = vunpack.c.h.b16 %v8434
    %v8689 = vunpack.c.l.b16 %v8435
    %v8690 = vunpack.c.h.b16 %v8435
    %v8691 = vunpack.c.l.b16 %v8436
    %v8692 = vunpack.c.h.b16 %v8436
    %v8693 = vunpack.c.l.b16 %v8437
    %v8694 = vunpack.c.h.b16 %v8437
    %v8695 = vunpack.c.l.b16 %v8438
    %v8696 = vunpack.c.h.b16 %v8438
    %v8697 = vunpack.c.l.b16 %v8439
    %v8698 = vunpack.c.h.b16 %v8439
    %v8699 = vunpack.c.l.b16 %v8440
    %v8700 = vunpack.c.h.b16 %v8440
    %v8701 = vunpack.c.l.b16 %v8441
    %v8702 = vunpack.c.h.b16 %v8441
    %v8703 = vunpack.c.l.b16 %v8442
    %v8704 = vunpack.c.h.b16 %v8442
    %v8705 = vunpack.c.l.b16 %v8443
    %v8706 = vunpack.c.h.b16 %v8443
    %v8707 = vunpack.c.l.b16 %v8444
    %v8708 = vunpack.c.h.b16 %v8444
    %v8709 = vunpack.c.l.b16 %v8445
    %v8710 = vunpack.c.h.b16 %v8445
    %v8711 = vunpack.c.l.b16 %v8446
    %v8712 = vunpack.c.h.b16 %v8446
    %v8713 = vpack.c.b16 %v8555, %v8553
    %v8714 = vpack.c.b16 %v8556, %v8554
    %v8715 = vpack.c.b16 %v8559, %v8557
    %v8716 = vpack.c.b16 %v8560, %v8558
    %v8717 = vpack.c.b16 %v8563, %v8561
    %v8718 = vpack.c.b16 %v8564, %v8562
    %v8719 = vpack.c.b16 %v8567, %v8565
    %v8720 = vpack.c.b16 %v8568, %v8566
    %v8721 = vpack.c.b16 %v8571, %v8569
    %v8722 = vpack.c.b16 %v8572, %v8570
    %v8723 = vpack.c.b16 %v8575, %v8573
    %v8724 = vpack.c.b16 %v8576, %v8574
    %v8725 = vpack.c.b16 %v8579, %v8577
    %v8726 = vpack.c.b16 %v8580, %v8578
    %v8727 = vpack.c.b16 %v8583, %v8581
    %v8728 = vpack.c.b16 %v8584, %v8582
    %v8729 = vpack.c.b16 %v8587, %v8585
    %v8730 = vpack.c.b16 %v8588, %v8586
    %v8731 = vpack.c.b16 %v8591, %v8589
    %v8732 = vpack.c.b16 %v8592, %v8590
    %v8733 = vpack.c.b16 %v8595, %v8593
    %v8734 = vpack.c.b16 %v8596, %v8594
    %v8735 = vpack.c.b16 %v8599, %v8597
    %v8736 = vpack.c.b16 %v8600, %v8598
    %v8737 = vpack.c.b16 %v8603, %v8601
    %v8738 = vpack.c.b16 %v8604, %v8602
    %v8739 = vpack.c.b16 %v8607, %v8605
    %v8740 = vpack.c.b16 %v8608, %v8606
    %v8741 = vpack.c.b16 %v8611, %v8609
    %v8742 = vpack.c.b16 %v8612, %v8610
    %v8743 = vpack.c.b16 %v8615, %v8613
    %v8744 = vpack.c.b16 %v8616, %v8614
    %v8745 = vpack.c.b16 %v8619, %v8617
    %v8746 = vpack.c.b16 %v8620, %v8618
    %v8747 = vpack.c.b16 %v8623, %v8621
    %v8748 = vpack.c.b16 %v8624, %v8622
    %v8749 = vpack.c.b16 %v8627, %v8625
    %v8750 = vpack.c.b16 %v8628, %v8626
    %v8751 = vpack.c.b16 %v8631, %v8629
    %v8752 = vpack.c.b16 %v8632, %v8630
    %v8753 = vpack.c.b16 %v8635, %v8633
    %v8754 = vpack.c.b16 %v8636, %v8634
    %v8755 = vpack.c.b16 %v8639, %v8637
    %v8756 = vpack.c.b16 %v8640, %v8638
    %v8757 = vpack.c.b16 %v8643, %v8641
    %v8758 = vpack.c.b16 %v8644, %v8642
    %v8759 = vpack.c.b16 %v8647, %v8645
    %v8760 = vpack.c.b16 %v8648, %v8646
    %v8761 = vpack.c.b16 %v8651, %v8649
    %v8762 = vpack.c.b16 %v8652, %v8650
    %v8763 = vpack.c.b16 %v8655, %v8653
    %v8764 = vpack.c.b16 %v8656, %v8654
    %v8765 = vpack.c.b16 %v8659, %v8657
    %v8766 = vpack.c.b16 %v8660, %v8658
    %v8767 = vpack.c.b16 %v8663, %v8661
    %v8768 = vpack.c.b16 %v8664, %v8662
    %v8769 = vpack.c.b16 %v8667, %v8665
    %v8770 = vpack.c.b16 %v8668, %v8666
    %v8771 = vpack.c.b16 %v8671, %v8669
    %v8772 = vpack.c.b16 %v8672, %v8670
    %v8773 = vpack.c.b16 %v8675, %v8673
    %v8774 = vpack.c.b16 %v8676, %v8674
    %v8775 = vpack.c.b16 %v8679, %v8677
    %v8776 = vpack.c.b16 %v8680, %v8678
    %v8777 = vpack.c.b16 %v8683, %v8681
    %v8778 = vpack.c.b16 %v8684, %v8682
    %v8779 = vpack.c.b16 %v8687, %v8685
    %v8780 = vpack.c.b16 %v8688, %v8686
    %v8781 = vpack.c.b16 %v8691, %v8689
    %v8782 = vpack.c.b16 %v8692, %v8690
    %v8783 = vpack.c.b16 %v8695, %v8693
    %v8784 = vpack.c.b16 %v8696, %v8694
    %v8785 = vpack.c.b16 %v8699, %v8697
    %v8786 = vpack.c.b16 %v8700, %v8698
    %v8787 = vpack.c.b16 %v8703, %v8701
    %v8788 = vpack.c.b16 %v8704, %v8702
    %v8789 = vpack.c.b16 %v8707, %v8705
    %v8790 = vpack.c.b16 %v8708, %v8706
    %v8791 = vpack.c.b16 %v8711, %v8709
    %v8792 = vpack.c.b16 %v8712, %v8710
    %8873 = vmatprep.subr.bf16.mxu0 %v8714
    %8874 = vmatpush1.bf16.msra.mxu0 %v8713
    %8875 = vmatprep.subr.bf16.mxu0 %v8716
    %8876 = vmatpush1.bf16.msra.mxu0 %v8715
    %8877 = vmatprep.subr.bf16.mxu0 %v8718
    %8878 = vmatpush1.bf16.msra.mxu0 %v8717
    %8879 = vmatprep.subr.bf16.mxu0 %v8720
    %8880 = vmatpush1.bf16.msra.mxu0 %v8719
    %8881 = vmatprep.subr.bf16.mxu0 %v8722
    %8882 = vmatpush1.bf16.msra.mxu0 %v8721
    %8883 = vmatprep.subr.bf16.mxu0 %v8724
    %8884 = vmatpush1.bf16.msra.mxu0 %v8723
    %8885 = vmatprep.subr.bf16.mxu0 %v8726
    %8886 = vmatpush1.bf16.msra.mxu0 %v8725
    %8887 = vmatprep.subr.bf16.mxu0 %v8728
    %8888 = vmatpush1.bf16.msra.mxu0 %v8727
    %8889 = vmatprep.subr.bf16.mxu0 %v8730
    %8890 = vmatpush1.bf16.msra.mxu0 %v8729
    %8891 = vmatprep.subr.bf16.mxu0 %v8732
    %8892 = vmatpush1.bf16.msra.mxu0 %v8731
    %8893 = vmatprep.subr.bf16.mxu0 %v8734
    %8894 = vmatpush1.bf16.msra.mxu0 %v8733
    %8895 = vmatprep.subr.bf16.mxu0 %v8736
    %8896 = vmatpush1.bf16.msra.mxu0 %v8735
    %8897 = vmatprep.subr.bf16.mxu0 %v8738
    %8898 = vmatpush1.bf16.msra.mxu0 %v8737
    %8899 = vmatprep.subr.bf16.mxu0 %v8740
    %8900 = vmatpush1.bf16.msra.mxu0 %v8739
    %8901 = vmatprep.subr.bf16.mxu0 %v8742
    %8902 = vmatpush1.bf16.msra.mxu0 %v8741
    %8903 = vmatprep.subr.bf16.mxu0 %v8744
    %8904 = vmatpush1.bf16.msra.mxu0 %v8743
    %8905 = vmatprep.mubr.bf16.mxu0 %v8464
    %8906 = vmatmul.mubr.bf16.gmra.mrb[0].mxu0 %v8463
    %v8907 = vpop.f32.mrb[0].mxu0
    %v8908 = vadd.f32 0.0, %v8907
    %v8909 = vpop.f32.mrb[0].mxu0
    %v8910 = vadd.f32 0.0, %v8909
    %v8911 = vpop.f32.mrb[0].mxu0
    %v8912 = vadd.f32 0.0, %v8911
    %v8913 = vpop.f32.mrb[0].mxu0
    %v8914 = vadd.f32 0.0, %v8913
    %8915 = vdwg.mxu0
    %8916 = vmatprep.subr.bf16.mxu0 %v8746
    %8917 = vmatpush1.bf16.msra.mxu0 %v8745
    %8918 = vmatprep.subr.bf16.mxu0 %v8748
    %8919 = vmatpush1.bf16.msra.mxu0 %v8747
    %8920 = vmatprep.subr.bf16.mxu0 %v8750
    %8921 = vmatpush1.bf16.msra.mxu0 %v8749
    %8922 = vmatprep.subr.bf16.mxu0 %v8752
    %8923 = vmatpush1.bf16.msra.mxu0 %v8751
    %8924 = vmatprep.subr.bf16.mxu0 %v8754
    %8925 = vmatpush1.bf16.msra.mxu0 %v8753
    %8926 = vmatprep.subr.bf16.mxu0 %v8756
    %8927 = vmatpush1.bf16.msra.mxu0 %v8755
    %8928 = vmatprep.subr.bf16.mxu0 %v8758
    %8929 = vmatpush1.bf16.msra.mxu0 %v8757
    %8930 = vmatprep.subr.bf16.mxu0 %v8760
    %8931 = vmatpush1.bf16.msra.mxu0 %v8759
    %8932 = vmatprep.subr.bf16.mxu0 %v8762
    %8933 = vmatpush1.bf16.msra.mxu0 %v8761
    %8934 = vmatprep.subr.bf16.mxu0 %v8764
    %8935 = vmatpush1.bf16.msra.mxu0 %v8763
    %8936 = vmatprep.subr.bf16.mxu0 %v8766
    %8937 = vmatpush1.bf16.msra.mxu0 %v8765
    %8938 = vmatprep.subr.bf16.mxu0 %v8768
    %8939 = vmatpush1.bf16.msra.mxu0 %v8767
    %8940 = vmatprep.subr.bf16.mxu0 %v8770
    %8941 = vmatpush1.bf16.msra.mxu0 %v8769
    %8942 = vmatprep.subr.bf16.mxu0 %v8772
    %8943 = vmatpush1.bf16.msra.mxu0 %v8771
    %8944 = vmatprep.subr.bf16.mxu0 %v8774
    %8945 = vmatpush1.bf16.msra.mxu0 %v8773
    %8946 = vmatprep.subr.bf16.mxu0 %v8776
    %8947 = vmatpush1.bf16.msra.mxu0 %v8775
    %8948 = vmatprep.mubr.bf16.mxu0 %v8466
    %8949 = vmatmul.mubr.bf16.gmra.mrb[0].mxu0 %v8465
    %v8950 = vpop.f32.mrb[0].mxu0
    %v8951 = vadd.f32 %v8908, %v8950
    %v8952 = vpop.f32.mrb[0].mxu0
    %v8953 = vadd.f32 %v8910, %v8952
    %v8954 = vpop.f32.mrb[0].mxu0
    %v8955 = vadd.f32 %v8912, %v8954
    %v8956 = vpop.f32.mrb[0].mxu0
    %v8957 = vadd.f32 %v8914, %v8956
    %8958 = vdwg.mxu0
    %8959 = vmatprep.subr.bf16.mxu0 %v8778
    %8960 = vmatpush1.bf16.msra.mxu0 %v8777
    %8961 = vmatprep.subr.bf16.mxu0 %v8780
    %8962 = vmatpush1.bf16.msra.mxu0 %v8779
    %8963 = vmatprep.subr.bf16.mxu0 %v8782
    %8964 = vmatpush1.bf16.msra.mxu0 %v8781
    %8965 = vmatprep.subr.bf16.mxu0 %v8784
    %8966 = vmatpush1.bf16.msra.mxu0 %v8783
    %8967 = vmatprep.subr.bf16.mxu0 %v8786
    %8968 = vmatpush1.bf16.msra.mxu0 %v8785
    %8969 = vmatprep.subr.bf16.mxu0 %v8788
    %8970 = vmatpush1.bf16.msra.mxu0 %v8787
    %8971 = vmatprep.subr.bf16.mxu0 %v8790
    %8972 = vmatpush1.bf16.msra.mxu0 %v8789
    %8973 = vmatprep.subr.bf16.mxu0 %v8792
    %8974 = vmatpush1.bf16.msra.mxu0 %v8791
    %8975 = vmatprep.subr.bf16.mxu0 0
    %8976 = vmatpush1.bf16.msra.mxu0 0
    %8977 = vmatprep.subr.bf16.mxu0 0
    %8978 = vmatpush1.bf16.msra.mxu0 0
    %8979 = vmatprep.subr.bf16.mxu0 0
    %8980 = vmatpush1.bf16.msra.mxu0 0
    %8981 = vmatprep.subr.bf16.mxu0 0
    %8982 = vmatpush1.bf16.msra.mxu0 0
    %8983 = vmatprep.subr.bf16.mxu0 0
    %8984 = vmatpush1.bf16.msra.mxu0 0
    %8985 = vmatprep.subr.bf16.mxu0 0
    %8986 = vmatpush1.bf16.msra.mxu0 0
    %8987 = vmatprep.subr.bf16.mxu0 0
    %8988 = vmatpush1.bf16.msra.mxu0 0
    %8989 = vmatprep.subr.bf16.mxu0 0
    %8990 = vmatpush1.bf16.msra.mxu0 0
    %8991 = vmatprep.mubr.bf16.mxu0 0
    %8992 = vmatmul.mubr.bf16.gmra.mrb[0].mxu0 %v8467
    %v8993 = vpop.f32.mrb[0].mxu0
    %v8994 = vadd.f32 %v8951, %v8993
    %v8995 = vpop.f32.mrb[0].mxu0
    %v8996 = vadd.f32 %v8953, %v8995
    %v8997 = vpop.f32.mrb[0].mxu0
    %v8998 = vadd.f32 %v8955, %v8997
    %v8999 = vpop.f32.mrb[0].mxu0
    %v9000 = vadd.f32 %v8957, %v8999
    %9001 = vdwg.mxu0
    %v9002 = vadd.f32 %v8354, %v8994
    %v9003 = vadd.f32 %v8358, %v8996
    %v9004 = vadd.f32 %v8354, %v8998
    %v9005 = vadd.f32 %v8358, %v9000
    %v9006 = vld [vmem:[%s8344] sm:$0xff]
    %v9007 = vld [vmem:[%s8344 + $0x8] sm:$0xff]
    %v9008 = vld [vmem:[%s8344 + $0x10] sm:$0xf]
    %v9009 = vld [vmem:[%s8344 + $0x14] sm:$0x77]
    %v9010 = vld [vmem:[%s8344 + $0x1c] sm:$0x77]
    %v9011 = vld [vmem:[%s8344 + $0x24] sm:$0x7]
    %s9012 = scalar_lea.vmem %s5, 640
    %v9013 = vld [vmem:[%s9012] sm:$0xff]
    %v9014 = vld [vmem:[%s9012 + $0x8] sm:$0xff]
    %v9015 = vld [vmem:[%s9012 + $0x10] sm:$0xff]
    %v9016 = vld [vmem:[%s9012 + $0x18] sm:$0xff]
    %v9017 = vld [vmem:[%s9012 + $0x20] sm:$0xff]
    %v9018 = vld [vmem:[%s9012 + $0x28] sm:$0xff]
    %v9019 = vld [vmem:[%s9012 + $0x30] sm:$0xff]
    %v9020 = vld [vmem:[%s9012 + $0x38] sm:$0xff]
    %v9021 = vld [vmem:[%s9012 + $0x40] sm:$0xff]
    %v9022 = vld [vmem:[%s9012 + $0x48] sm:$0xff]
    %v9023 = vld [vmem:[%s9012 + $0x50] sm:$0xff]
    %v9024 = vld [vmem:[%s9012 + $0x58] sm:$0xff]
    %v9025 = vld [vmem:[%s9012 + $0x60] sm:$0xff]
    %v9026 = vld [vmem:[%s9012 + $0x68] sm:$0xff]
    %v9027 = vld [vmem:[%s9012 + $0x70] sm:$0xff]
    %v9028 = vld [vmem:[%s9012 + $0x78] sm:$0xff]
    %v9029 = vld [vmem:[%s9012 + $0x80] sm:$0xff]
    %v9030 = vld [vmem:[%s9012 + $0x88] sm:$0xff]
    %v9031 = vld [vmem:[%s9012 + $0x90] sm:$0xff]
    %v9032 = vld [vmem:[%s9012 + $0x98] sm:$0xff]
    %v9033 = vld [vmem:[%s9012 + $0xa0] sm:$0xff]
    %v9034 = vld [vmem:[%s9012 + $0xa8] sm:$0xff]
    %v9035 = vld [vmem:[%s9012 + $0xb0] sm:$0xff]
    %v9036 = vld [vmem:[%s9012 + $0xb8] sm:$0xff]
    %v9037 = vld [vmem:[%s9012 + $0xc0] sm:$0xff]
    %v9038 = vld [vmem:[%s9012 + $0xc8] sm:$0xff]
    %v9039 = vld [vmem:[%s9012 + $0xd0] sm:$0xff]
    %v9040 = vld [vmem:[%s9012 + $0xd8] sm:$0xff]
    %v9041 = vld [vmem:[%s9012 + $0xe0] sm:$0xff]
    %v9042 = vld [vmem:[%s9012 + $0xe8] sm:$0xff]
    %v9043 = vld [vmem:[%s9012 + $0xf0] sm:$0xff]
    %v9044 = vld [vmem:[%s9012 + $0xf8] sm:$0xff]
    %v9045 = vld [vmem:[%s9012 + $0x100] sm:$0xff]
    %v9046 = vld [vmem:[%s9012 + $0x108] sm:$0xff]
    %v9047 = vld [vmem:[%s9012 + $0x110] sm:$0xff]
    %v9048 = vld [vmem:[%s9012 + $0x118] sm:$0xff]
    %v9049 = vld [vmem:[%s9012 + $0x120] sm:$0xff]
    %v9050 = vld [vmem:[%s9012 + $0x128] sm:$0xff]
    %v9051 = vld [vmem:[%s9012 + $0x130] sm:$0xff]
    %v9052 = vld [vmem:[%s9012 + $0x138] sm:$0xff]
    %v9053 = vld [vmem:[%s9012 + $0x140] sm:$0xff]
    %v9054 = vld [vmem:[%s9012 + $0x148] sm:$0xff]
    %v9055 = vld [vmem:[%s9012 + $0x150] sm:$0xff]
    %v9056 = vld [vmem:[%s9012 + $0x158] sm:$0xff]
    %v9057 = vld [vmem:[%s9012 + $0x160] sm:$0xff]
    %v9058 = vld [vmem:[%s9012 + $0x168] sm:$0xff]
    %v9059 = vld [vmem:[%s9012 + $0x170] sm:$0xff]
    %v9060 = vld [vmem:[%s9012 + $0x178] sm:$0xff]
    %v9061 = vld [vmem:[%s9012 + $0x180] sm:$0xff]
    %v9062 = vld [vmem:[%s9012 + $0x188] sm:$0xff]
    %v9063 = vld [vmem:[%s9012 + $0x190] sm:$0xff]
    %v9064 = vld [vmem:[%s9012 + $0x198] sm:$0xff]
    %v9065 = vld [vmem:[%s9012 + $0x1a0] sm:$0xff]
    %v9066 = vld [vmem:[%s9012 + $0x1a8] sm:$0xff]
    %v9067 = vld [vmem:[%s9012 + $0x1b0] sm:$0xff]
    %v9068 = vld [vmem:[%s9012 + $0x1b8] sm:$0xff]
    %v9069 = vld [vmem:[%s9012 + $0x1c0] sm:$0xff]
    %v9070 = vld [vmem:[%s9012 + $0x1c8] sm:$0xff]
    %v9071 = vld [vmem:[%s9012 + $0x1d0] sm:$0xff]
    %v9072 = vld [vmem:[%s9012 + $0x1d8] sm:$0xff]
    %v9073 = vld [vmem:[%s9012 + $0x1e0] sm:$0xff]
    %v9074 = vld [vmem:[%s9012 + $0x1e8] sm:$0xff]
    %v9075 = vld [vmem:[%s9012 + $0x1f0] sm:$0xff]
    %v9076 = vld [vmem:[%s9012 + $0x1f8] sm:$0xff]
    %v9077 = vld [vmem:[%s9012 + $0x200] sm:$0xff]
    %v9078 = vld [vmem:[%s9012 + $0x208] sm:$0xff]
    %v9079 = vld [vmem:[%s9012 + $0x210] sm:$0xff]
    %v9080 = vld [vmem:[%s9012 + $0x218] sm:$0xff]
    %v9081 = vld [vmem:[%s9012 + $0x220] sm:$0xff]
    %v9082 = vld [vmem:[%s9012 + $0x228] sm:$0xff]
    %v9083 = vld [vmem:[%s9012 + $0x230] sm:$0xff]
    %v9084 = vld [vmem:[%s9012 + $0x238] sm:$0xff]
    %v9085 = vld [vmem:[%s9012 + $0x240] sm:$0xff]
    %v9086 = vld [vmem:[%s9012 + $0x248] sm:$0xff]
    %v9087 = vld [vmem:[%s9012 + $0x250] sm:$0xff]
    %v9088 = vld [vmem:[%s9012 + $0x258] sm:$0xff]
    %v9089 = vld [vmem:[%s9012 + $0x260] sm:$0xff]
    %v9090 = vld [vmem:[%s9012 + $0x268] sm:$0xff]
    %v9091 = vld [vmem:[%s9012 + $0x270] sm:$0xff]
    %v9092 = vld [vmem:[%s9012 + $0x278] sm:$0xff]
    %v9099 = vunpack.c.l.b16 %v9006
    %v9100 = vunpack.c.h.b16 %v9006
    %v9101 = vunpack.c.l.b16 %v9007
    %v9102 = vunpack.c.h.b16 %v9007
    %v9103 = vunpack.c.l.b16 %v9008
    %v9104 = vunpack.c.l.b16 %v9009
    %v9105 = vunpack.c.h.b16 %v9009
    %v9106 = vunpack.c.l.b16 %v9010
    %v9107 = vunpack.c.h.b16 %v9010
    %v9108 = vunpack.c.l.b16 %v9011
    %v9109 = vpack.c.b16 %v9104, %v9099
    %v9110 = vpack.c.b16 %v9105, %v9100
    %v9111 = vpack.c.b16 %v9106, %v9101
    %v9112 = vpack.c.b16 %v9107, %v9102
    %v9113 = vpack.c.b16 %v9108, %v9103
    %v9199 = vunpack.c.l.b16 %v9013
    %v9200 = vunpack.c.h.b16 %v9013
    %v9201 = vunpack.c.l.b16 %v9014
    %v9202 = vunpack.c.h.b16 %v9014
    %v9203 = vunpack.c.l.b16 %v9015
    %v9204 = vunpack.c.h.b16 %v9015
    %v9205 = vunpack.c.l.b16 %v9016
    %v9206 = vunpack.c.h.b16 %v9016
    %v9207 = vunpack.c.l.b16 %v9017
    %v9208 = vunpack.c.h.b16 %v9017
    %v9209 = vunpack.c.l.b16 %v9018
    %v9210 = vunpack.c.h.b16 %v9018
    %v9211 = vunpack.c.l.b16 %v9019
    %v9212 = vunpack.c.h.b16 %v9019
    %v9213 = vunpack.c.l.b16 %v9020
    %v9214 = vunpack.c.h.b16 %v9020
    %v9215 = vunpack.c.l.b16 %v9021
    %v9216 = vunpack.c.h.b16 %v9021
    %v9217 = vunpack.c.l.b16 %v9022
    %v9218 = vunpack.c.h.b16 %v9022
    %v9219 = vunpack.c.l.b16 %v9023
    %v9220 = vunpack.c.h.b16 %v9023
    %v9221 = vunpack.c.l.b16 %v9024
    %v9222 = vunpack.c.h.b16 %v9024
    %v9223 = vunpack.c.l.b16 %v9025
    %v9224 = vunpack.c.h.b16 %v9025
    %v9225 = vunpack.c.l.b16 %v9026
    %v9226 = vunpack.c.h.b16 %v9026
    %v9227 = vunpack.c.l.b16 %v9027
    %v9228 = vunpack.c.h.b16 %v9027
    %v9229 = vunpack.c.l.b16 %v9028
    %v9230 = vunpack.c.h.b16 %v9028
    %v9231 = vunpack.c.l.b16 %v9029
    %v9232 = vunpack.c.h.b16 %v9029
    %v9233 = vunpack.c.l.b16 %v9030
    %v9234 = vunpack.c.h.b16 %v9030
    %v9235 = vunpack.c.l.b16 %v9031
    %v9236 = vunpack.c.h.b16 %v9031
    %v9237 = vunpack.c.l.b16 %v9032
    %v9238 = vunpack.c.h.b16 %v9032
    %v9239 = vunpack.c.l.b16 %v9033
    %v9240 = vunpack.c.h.b16 %v9033
    %v9241 = vunpack.c.l.b16 %v9034
    %v9242 = vunpack.c.h.b16 %v9034
    %v9243 = vunpack.c.l.b16 %v9035
    %v9244 = vunpack.c.h.b16 %v9035
    %v9245 = vunpack.c.l.b16 %v9036
    %v9246 = vunpack.c.h.b16 %v9036
    %v9247 = vunpack.c.l.b16 %v9037
    %v9248 = vunpack.c.h.b16 %v9037
    %v9249 = vunpack.c.l.b16 %v9038
    %v9250 = vunpack.c.h.b16 %v9038
    %v9251 = vunpack.c.l.b16 %v9039
    %v9252 = vunpack.c.h.b16 %v9039
    %v9253 = vunpack.c.l.b16 %v9040
    %v9254 = vunpack.c.h.b16 %v9040
    %v9255 = vunpack.c.l.b16 %v9041
    %v9256 = vunpack.c.h.b16 %v9041
    %v9257 = vunpack.c.l.b16 %v9042
    %v9258 = vunpack.c.h.b16 %v9042
    %v9259 = vunpack.c.l.b16 %v9043
    %v9260 = vunpack.c.h.b16 %v9043
    %v9261 = vunpack.c.l.b16 %v9044
    %v9262 = vunpack.c.h.b16 %v9044
    %v9263 = vunpack.c.l.b16 %v9045
    %v9264 = vunpack.c.h.b16 %v9045
    %v9265 = vunpack.c.l.b16 %v9046
    %v9266 = vunpack.c.h.b16 %v9046
    %v9267 = vunpack.c.l.b16 %v9047
    %v9268 = vunpack.c.h.b16 %v9047
    %v9269 = vunpack.c.l.b16 %v9048
    %v9270 = vunpack.c.h.b16 %v9048
    %v9271 = vunpack.c.l.b16 %v9049
    %v9272 = vunpack.c.h.b16 %v9049
    %v9273 = vunpack.c.l.b16 %v9050
    %v9274 = vunpack.c.h.b16 %v9050
    %v9275 = vunpack.c.l.b16 %v9051
    %v9276 = vunpack.c.h.b16 %v9051
    %v9277 = vunpack.c.l.b16 %v9052
    %v9278 = vunpack.c.h.b16 %v9052
    %v9279 = vunpack.c.l.b16 %v9053
    %v9280 = vunpack.c.h.b16 %v9053
    %v9281 = vunpack.c.l.b16 %v9054
    %v9282 = vunpack.c.h.b16 %v9054
    %v9283 = vunpack.c.l.b16 %v9055
    %v9284 = vunpack.c.h.b16 %v9055
    %v9285 = vunpack.c.l.b16 %v9056
    %v9286 = vunpack.c.h.b16 %v9056
    %v9287 = vunpack.c.l.b16 %v9057
    %v9288 = vunpack.c.h.b16 %v9057
    %v9289 = vunpack.c.l.b16 %v9058
    %v9290 = vunpack.c.h.b16 %v9058
    %v9291 = vunpack.c.l.b16 %v9059
    %v9292 = vunpack.c.h.b16 %v9059
    %v9293 = vunpack.c.l.b16 %v9060
    %v9294 = vunpack.c.h.b16 %v9060
    %v9295 = vunpack.c.l.b16 %v9061
    %v9296 = vunpack.c.h.b16 %v9061
    %v9297 = vunpack.c.l.b16 %v9062
    %v9298 = vunpack.c.h.b16 %v9062
    %v9299 = vunpack.c.l.b16 %v9063
    %v9300 = vunpack.c.h.b16 %v9063
    %v9301 = vunpack.c.l.b16 %v9064
    %v9302 = vunpack.c.h.b16 %v9064
    %v9303 = vunpack.c.l.b16 %v9065
    %v9304 = vunpack.c.h.b16 %v9065
    %v9305 = vunpack.c.l.b16 %v9066
    %v9306 = vunpack.c.h.b16 %v9066
    %v9307 = vunpack.c.l.b16 %v9067
    %v9308 = vunpack.c.h.b16 %v9067
    %v9309 = vunpack.c.l.b16 %v9068
    %v9310 = vunpack.c.h.b16 %v9068
    %v9311 = vunpack.c.l.b16 %v9069
    %v9312 = vunpack.c.h.b16 %v9069
    %v9313 = vunpack.c.l.b16 %v9070
    %v9314 = vunpack.c.h.b16 %v9070
    %v9315 = vunpack.c.l.b16 %v9071
    %v9316 = vunpack.c.h.b16 %v9071
    %v9317 = vunpack.c.l.b16 %v9072
    %v9318 = vunpack.c.h.b16 %v9072
    %v9319 = vunpack.c.l.b16 %v9073
    %v9320 = vunpack.c.h.b16 %v9073
    %v9321 = vunpack.c.l.b16 %v9074
    %v9322 = vunpack.c.h.b16 %v9074
    %v9323 = vunpack.c.l.b16 %v9075
    %v9324 = vunpack.c.h.b16 %v9075
    %v9325 = vunpack.c.l.b16 %v9076
    %v9326 = vunpack.c.h.b16 %v9076
    %v9327 = vunpack.c.l.b16 %v9077
    %v9328 = vunpack.c.h.b16 %v9077
    %v9329 = vunpack.c.l.b16 %v9078
    %v9330 = vunpack.c.h.b16 %v9078
    %v9331 = vunpack.c.l.b16 %v9079
    %v9332 = vunpack.c.h.b16 %v9079
    %v9333 = vunpack.c.l.b16 %v9080
    %v9334 = vunpack.c.h.b16 %v9080
    %v9335 = vunpack.c.l.b16 %v9081
    %v9336 = vunpack.c.h.b16 %v9081
    %v9337 = vunpack.c.l.b16 %v9082
    %v9338 = vunpack.c.h.b16 %v9082
    %v9339 = vunpack.c.l.b16 %v9083
    %v9340 = vunpack.c.h.b16 %v9083
    %v9341 = vunpack.c.l.b16 %v9084
    %v9342 = vunpack.c.h.b16 %v9084
    %v9343 = vunpack.c.l.b16 %v9085
    %v9344 = vunpack.c.h.b16 %v9085
    %v9345 = vunpack.c.l.b16 %v9086
    %v9346 = vunpack.c.h.b16 %v9086
    %v9347 = vunpack.c.l.b16 %v9087
    %v9348 = vunpack.c.h.b16 %v9087
    %v9349 = vunpack.c.l.b16 %v9088
    %v9350 = vunpack.c.h.b16 %v9088
    %v9351 = vunpack.c.l.b16 %v9089
    %v9352 = vunpack.c.h.b16 %v9089
    %v9353 = vunpack.c.l.b16 %v9090
    %v9354 = vunpack.c.h.b16 %v9090
    %v9355 = vunpack.c.l.b16 %v9091
    %v9356 = vunpack.c.h.b16 %v9091
    %v9357 = vunpack.c.l.b16 %v9092
    %v9358 = vunpack.c.h.b16 %v9092
    %v9359 = vpack.c.b16 %v9201, %v9199
    %v9360 = vpack.c.b16 %v9202, %v9200
    %v9361 = vpack.c.b16 %v9205, %v9203
    %v9362 = vpack.c.b16 %v9206, %v9204
    %v9363 = vpack.c.b16 %v9209, %v9207
    %v9364 = vpack.c.b16 %v9210, %v9208
    %v9365 = vpack.c.b16 %v9213, %v9211
    %v9366 = vpack.c.b16 %v9214, %v9212
    %v9367 = vpack.c.b16 %v9217, %v9215
    %v9368 = vpack.c.b16 %v9218, %v9216
    %v9369 = vpack.c.b16 %v9221, %v9219
    %v9370 = vpack.c.b16 %v9222, %v9220
    %v9371 = vpack.c.b16 %v9225, %v9223
    %v9372 = vpack.c.b16 %v9226, %v9224
    %v9373 = vpack.c.b16 %v9229, %v9227
    %v9374 = vpack.c.b16 %v9230, %v9228
    %v9375 = vpack.c.b16 %v9233, %v9231
    %v9376 = vpack.c.b16 %v9234, %v9232
    %v9377 = vpack.c.b16 %v9237, %v9235
    %v9378 = vpack.c.b16 %v9238, %v9236
    %v9379 = vpack.c.b16 %v9241, %v9239
    %v9380 = vpack.c.b16 %v9242, %v9240
    %v9381 = vpack.c.b16 %v9245, %v9243
    %v9382 = vpack.c.b16 %v9246, %v9244
    %v9383 = vpack.c.b16 %v9249, %v9247
    %v9384 = vpack.c.b16 %v9250, %v9248
    %v9385 = vpack.c.b16 %v9253, %v9251
    %v9386 = vpack.c.b16 %v9254, %v9252
    %v9387 = vpack.c.b16 %v9257, %v9255
    %v9388 = vpack.c.b16 %v9258, %v9256
    %v9389 = vpack.c.b16 %v9261, %v9259
    %v9390 = vpack.c.b16 %v9262, %v9260
    %v9391 = vpack.c.b16 %v9265, %v9263
    %v9392 = vpack.c.b16 %v9266, %v9264
    %v9393 = vpack.c.b16 %v9269, %v9267
    %v9394 = vpack.c.b16 %v9270, %v9268
    %v9395 = vpack.c.b16 %v9273, %v9271
    %v9396 = vpack.c.b16 %v9274, %v9272
    %v9397 = vpack.c.b16 %v9277, %v9275
    %v9398 = vpack.c.b16 %v9278, %v9276
    %v9399 = vpack.c.b16 %v9281, %v9279
    %v9400 = vpack.c.b16 %v9282, %v9280
    %v9401 = vpack.c.b16 %v9285, %v9283
    %v9402 = vpack.c.b16 %v9286, %v9284
    %v9403 = vpack.c.b16 %v9289, %v9287
    %v9404 = vpack.c.b16 %v9290, %v9288
    %v9405 = vpack.c.b16 %v9293, %v9291
    %v9406 = vpack.c.b16 %v9294, %v9292
    %v9407 = vpack.c.b16 %v9297, %v9295
    %v9408 = vpack.c.b16 %v9298, %v9296
    %v9409 = vpack.c.b16 %v9301, %v9299
    %v9410 = vpack.c.b16 %v9302, %v9300
    %v9411 = vpack.c.b16 %v9305, %v9303
    %v9412 = vpack.c.b16 %v9306, %v9304
    %v9413 = vpack.c.b16 %v9309, %v9307
    %v9414 = vpack.c.b16 %v9310, %v9308
    %v9415 = vpack.c.b16 %v9313, %v9311
    %v9416 = vpack.c.b16 %v9314, %v9312
    %v9417 = vpack.c.b16 %v9317, %v9315
    %v9418 = vpack.c.b16 %v9318, %v9316
    %v9419 = vpack.c.b16 %v9321, %v9319
    %v9420 = vpack.c.b16 %v9322, %v9320
    %v9421 = vpack.c.b16 %v9325, %v9323
    %v9422 = vpack.c.b16 %v9326, %v9324
    %v9423 = vpack.c.b16 %v9329, %v9327
    %v9424 = vpack.c.b16 %v9330, %v9328
    %v9425 = vpack.c.b16 %v9333, %v9331
    %v9426 = vpack.c.b16 %v9334, %v9332
    %v9427 = vpack.c.b16 %v9337, %v9335
    %v9428 = vpack.c.b16 %v9338, %v9336
    %v9429 = vpack.c.b16 %v9341, %v9339
    %v9430 = vpack.c.b16 %v9342, %v9340
    %v9431 = vpack.c.b16 %v9345, %v9343
    %v9432 = vpack.c.b16 %v9346, %v9344
    %v9433 = vpack.c.b16 %v9349, %v9347
    %v9434 = vpack.c.b16 %v9350, %v9348
    %v9435 = vpack.c.b16 %v9353, %v9351
    %v9436 = vpack.c.b16 %v9354, %v9352
    %v9437 = vpack.c.b16 %v9357, %v9355
    %v9438 = vpack.c.b16 %v9358, %v9356
    %9519 = vmatprep.subr.bf16.mxu0 %v9360
    %9520 = vmatpush1.bf16.msra.mxu0 %v9359
    %9521 = vmatprep.subr.bf16.mxu0 %v9362
    %9522 = vmatpush1.bf16.msra.mxu0 %v9361
    %9523 = vmatprep.subr.bf16.mxu0 %v9364
    %9524 = vmatpush1.bf16.msra.mxu0 %v9363
    %9525 = vmatprep.subr.bf16.mxu0 %v9366
    %9526 = vmatpush1.bf16.msra.mxu0 %v9365
    %9527 = vmatprep.subr.bf16.mxu0 %v9368
    %9528 = vmatpush1.bf16.msra.mxu0 %v9367
    %9529 = vmatprep.subr.bf16.mxu0 %v9370
    %9530 = vmatpush1.bf16.msra.mxu0 %v9369
    %9531 = vmatprep.subr.bf16.mxu0 %v9372
    %9532 = vmatpush1.bf16.msra.mxu0 %v9371
    %9533 = vmatprep.subr.bf16.mxu0 %v9374
    %9534 = vmatpush1.bf16.msra.mxu0 %v9373
    %9535 = vmatprep.subr.bf16.mxu0 %v9376
    %9536 = vmatpush1.bf16.msra.mxu0 %v9375
    %9537 = vmatprep.subr.bf16.mxu0 %v9378
    %9538 = vmatpush1.bf16.msra.mxu0 %v9377
    %9539 = vmatprep.subr.bf16.mxu0 %v9380
    %9540 = vmatpush1.bf16.msra.mxu0 %v9379
    %9541 = vmatprep.subr.bf16.mxu0 %v9382
    %9542 = vmatpush1.bf16.msra.mxu0 %v9381
    %9543 = vmatprep.subr.bf16.mxu0 %v9384
    %9544 = vmatpush1.bf16.msra.mxu0 %v9383
    %9545 = vmatprep.subr.bf16.mxu0 %v9386
    %9546 = vmatpush1.bf16.msra.mxu0 %v9385
    %9547 = vmatprep.subr.bf16.mxu0 %v9388
    %9548 = vmatpush1.bf16.msra.mxu0 %v9387
    %9549 = vmatprep.subr.bf16.mxu0 %v9390
    %9550 = vmatpush1.bf16.msra.mxu0 %v9389
    %9551 = vmatprep.mubr.bf16.mxu0 %v9110
    %9552 = vmatmul.mubr.bf16.gmra.mrb[0].mxu0 %v9109
    %v9553 = vpop.f32.mrb[0].mxu0
    %v9554 = vadd.f32 0.0, %v9553
    %v9555 = vpop.f32.mrb[0].mxu0
    %v9556 = vadd.f32 0.0, %v9555
    %v9557 = vpop.f32.mrb[0].mxu0
    %v9558 = vadd.f32 0.0, %v9557
    %v9559 = vpop.f32.mrb[0].mxu0
    %v9560 = vadd.f32 0.0, %v9559
    %9561 = vdwg.mxu0
    %9562 = vmatprep.subr.bf16.mxu0 %v9392
    %9563 = vmatpush1.bf16.msra.mxu0 %v9391
    %9564 = vmatprep.subr.bf16.mxu0 %v9394
    %9565 = vmatpush1.bf16.msra.mxu0 %v9393
    %9566 = vmatprep.subr.bf16.mxu0 %v9396
    %9567 = vmatpush1.bf16.msra.mxu0 %v9395
    %9568 = vmatprep.subr.bf16.mxu0 %v9398
    %9569 = vmatpush1.bf16.msra.mxu0 %v9397
    %9570 = vmatprep.subr.bf16.mxu0 %v9400
    %9571 = vmatpush1.bf16.msra.mxu0 %v9399
    %9572 = vmatprep.subr.bf16.mxu0 %v9402
    %9573 = vmatpush1.bf16.msra.mxu0 %v9401
    %9574 = vmatprep.subr.bf16.mxu0 %v9404
    %9575 = vmatpush1.bf16.msra.mxu0 %v9403
    %9576 = vmatprep.subr.bf16.mxu0 %v9406
    %9577 = vmatpush1.bf16.msra.mxu0 %v9405
    %9578 = vmatprep.subr.bf16.mxu0 %v9408
    %9579 = vmatpush1.bf16.msra.mxu0 %v9407
    %9580 = vmatprep.subr.bf16.mxu0 %v9410
    %9581 = vmatpush1.bf16.msra.mxu0 %v9409
    %9582 = vmatprep.subr.bf16.mxu0 %v9412
    %9583 = vmatpush1.bf16.msra.mxu0 %v9411
    %9584 = vmatprep.subr.bf16.mxu0 %v9414
    %9585 = vmatpush1.bf16.msra.mxu0 %v9413
    %9586 = vmatprep.subr.bf16.mxu0 %v9416
    %9587 = vmatpush1.bf16.msra.mxu0 %v9415
    %9588 = vmatprep.subr.bf16.mxu0 %v9418
    %9589 = vmatpush1.bf16.msra.mxu0 %v9417
    %9590 = vmatprep.subr.bf16.mxu0 %v9420
    %9591 = vmatpush1.bf16.msra.mxu0 %v9419
    %9592 = vmatprep.subr.bf16.mxu0 %v9422
    %9593 = vmatpush1.bf16.msra.mxu0 %v9421
    %9594 = vmatprep.mubr.bf16.mxu0 %v9112
    %9595 = vmatmul.mubr.bf16.gmra.mrb[0].mxu0 %v9111
    %v9596 = vpop.f32.mrb[0].mxu0
    %v9597 = vadd.f32 %v9554, %v9596
    %v9598 = vpop.f32.mrb[0].mxu0
    %v9599 = vadd.f32 %v9556, %v9598
    %v9600 = vpop.f32.mrb[0].mxu0
    %v9601 = vadd.f32 %v9558, %v9600
    %v9602 = vpop.f32.mrb[0].mxu0
    %v9603 = vadd.f32 %v9560, %v9602
    %9604 = vdwg.mxu0
    %9605 = vmatprep.subr.bf16.mxu0 %v9424
    %9606 = vmatpush1.bf16.msra.mxu0 %v9423
    %9607 = vmatprep.subr.bf16.mxu0 %v9426
    %9608 = vmatpush1.bf16.msra.mxu0 %v9425
    %9609 = vmatprep.subr.bf16.mxu0 %v9428
    %9610 = vmatpush1.bf16.msra.mxu0 %v9427
    %9611 = vmatprep.subr.bf16.mxu0 %v9430
    %9612 = vmatpush1.bf16.msra.mxu0 %v9429
    %9613 = vmatprep.subr.bf16.mxu0 %v9432
    %9614 = vmatpush1.bf16.msra.mxu0 %v9431
    %9615 = vmatprep.subr.bf16.mxu0 %v9434
    %9616 = vmatpush1.bf16.msra.mxu0 %v9433
    %9617 = vmatprep.subr.bf16.mxu0 %v9436
    %9618 = vmatpush1.bf16.msra.mxu0 %v9435
    %9619 = vmatprep.subr.bf16.mxu0 %v9438
    %9620 = vmatpush1.bf16.msra.mxu0 %v9437
    %9621 = vmatprep.subr.bf16.mxu0 0
    %9622 = vmatpush1.bf16.msra.mxu0 0
    %9623 = vmatprep.subr.bf16.mxu0 0
    %9624 = vmatpush1.bf16.msra.mxu0 0
    %9625 = vmatprep.subr.bf16.mxu0 0
    %9626 = vmatpush1.bf16.msra.mxu0 0
    %9627 = vmatprep.subr.bf16.mxu0 0
    %9628 = vmatpush1.bf16.msra.mxu0 0
    %9629 = vmatprep.subr.bf16.mxu0 0
    %9630 = vmatpush1.bf16.msra.mxu0 0
    %9631 = vmatprep.subr.bf16.mxu0 0
    %9632 = vmatpush1.bf16.msra.mxu0 0
    %9633 = vmatprep.subr.bf16.mxu0 0
    %9634 = vmatpush1.bf16.msra.mxu0 0
    %9635 = vmatprep.subr.bf16.mxu0 0
    %9636 = vmatpush1.bf16.msra.mxu0 0
    %9637 = vmatprep.mubr.bf16.mxu0 0
    %9638 = vmatmul.mubr.bf16.gmra.mrb[0].mxu0 %v9113
    %v9639 = vpop.f32.mrb[0].mxu0
    %v9640 = vadd.f32 %v9597, %v9639
    %v9641 = vpop.f32.mrb[0].mxu0
    %v9642 = vadd.f32 %v9599, %v9641
    %v9643 = vpop.f32.mrb[0].mxu0
    %v9644 = vadd.f32 %v9601, %v9643
    %v9645 = vpop.f32.mrb[0].mxu0
    %v9646 = vadd.f32 %v9603, %v9645
    %9647 = vdwg.mxu0
    %v9648 = vadd.f32 %v9002, %v9640
    %v9649 = vadd.f32 %v9003, %v9642
    %v9650 = vadd.f32 %v9004, %v9644
    %v9651 = vadd.f32 %v9005, %v9646
    %v9652 = vld [vmem:[#allocation3] sm:$0xee]
    %v9653 = vld [vmem:[#allocation3 + $0x8] sm:$0xee]
    %v9654 = vld [vmem:[#allocation3 + $0x10] sm:$0xe]
    %v9655 = vld [vmem:[#allocation3 + $0x14] sm:$0xff]
    %v9656 = vld [vmem:[#allocation3 + $0x1c] sm:$0xff]
    %v9657 = vld [vmem:[#allocation3 + $0x24] sm:$0xf]
    %s9658 = scalar_lea.vmem %s5, 1280
    %v9659 = vld [vmem:[%s9658] sm:$0xff]
    %v9660 = vld [vmem:[%s9658 + $0x8] sm:$0xff]
    %v9661 = vld [vmem:[%s9658 + $0x10] sm:$0xff]
    %v9662 = vld [vmem:[%s9658 + $0x18] sm:$0xff]
    %v9663 = vld [vmem:[%s9658 + $0x20] sm:$0xff]
    %v9664 = vld [vmem:[%s9658 + $0x28] sm:$0xff]
    %v9665 = vld [vmem:[%s9658 + $0x30] sm:$0xff]
    %v9666 = vld [vmem:[%s9658 + $0x38] sm:$0xff]
    %v9667 = vld [vmem:[%s9658 + $0x40] sm:$0xff]
    %v9668 = vld [vmem:[%s9658 + $0x48] sm:$0xff]
    %v9669 = vld [vmem:[%s9658 + $0x50] sm:$0xff]
    %v9670 = vld [vmem:[%s9658 + $0x58] sm:$0xff]
    %v9671 = vld [vmem:[%s9658 + $0x60] sm:$0xff]
    %v9672 = vld [vmem:[%s9658 + $0x68] sm:$0xff]
    %v9673 = vld [vmem:[%s9658 + $0x70] sm:$0xff]
    %v9674 = vld [vmem:[%s9658 + $0x78] sm:$0xff]
    %v9675 = vld [vmem:[%s9658 + $0x80] sm:$0xff]
    %v9676 = vld [vmem:[%s9658 + $0x88] sm:$0xff]
    %v9677 = vld [vmem:[%s9658 + $0x90] sm:$0xff]
    %v9678 = vld [vmem:[%s9658 + $0x98] sm:$0xff]
    %v9679 = vld [vmem:[%s9658 + $0xa0] sm:$0xff]
    %v9680 = vld [vmem:[%s9658 + $0xa8] sm:$0xff]
    %v9681 = vld [vmem:[%s9658 + $0xb0] sm:$0xff]
    %v9682 = vld [vmem:[%s9658 + $0xb8] sm:$0xff]
    %v9683 = vld [vmem:[%s9658 + $0xc0] sm:$0xff]
    %v9684 = vld [vmem:[%s9658 + $0xc8] sm:$0xff]
    %v9685 = vld [vmem:[%s9658 + $0xd0] sm:$0xff]
    %v9686 = vld [vmem:[%s9658 + $0xd8] sm:$0xff]
    %v9687 = vld [vmem:[%s9658 + $0xe0] sm:$0xff]
    %v9688 = vld [vmem:[%s9658 + $0xe8] sm:$0xff]
    %v9689 = vld [vmem:[%s9658 + $0xf0] sm:$0xff]
    %v9690 = vld [vmem:[%s9658 + $0xf8] sm:$0xff]
    %v9691 = vld [vmem:[%s9658 + $0x100] sm:$0xff]
    %v9692 = vld [vmem:[%s9658 + $0x108] sm:$0xff]
    %v9693 = vld [vmem:[%s9658 + $0x110] sm:$0xff]
    %v9694 = vld [vmem:[%s9658 + $0x118] sm:$0xff]
    %v9695 = vld [vmem:[%s9658 + $0x120] sm:$0xff]
    %v9696 = vld [vmem:[%s9658 + $0x128] sm:$0xff]
    %v9697 = vld [vmem:[%s9658 + $0x130] sm:$0xff]
    %v9698 = vld [vmem:[%s9658 + $0x138] sm:$0xff]
    %v9699 = vld [vmem:[%s9658 + $0x140] sm:$0xff]
    %v9700 = vld [vmem:[%s9658 + $0x148] sm:$0xff]
    %v9701 = vld [vmem:[%s9658 + $0x150] sm:$0xff]
    %v9702 = vld [vmem:[%s9658 + $0x158] sm:$0xff]
    %v9703 = vld [vmem:[%s9658 + $0x160] sm:$0xff]
    %v9704 = vld [vmem:[%s9658 + $0x168] sm:$0xff]
    %v9705 = vld [vmem:[%s9658 + $0x170] sm:$0xff]
    %v9706 = vld [vmem:[%s9658 + $0x178] sm:$0xff]
    %v9707 = vld [vmem:[%s9658 + $0x180] sm:$0xff]
    %v9708 = vld [vmem:[%s9658 + $0x188] sm:$0xff]
    %v9709 = vld [vmem:[%s9658 + $0x190] sm:$0xff]
    %v9710 = vld [vmem:[%s9658 + $0x198] sm:$0xff]
    %v9711 = vld [vmem:[%s9658 + $0x1a0] sm:$0xff]
    %v9712 = vld [vmem:[%s9658 + $0x1a8] sm:$0xff]
    %v9713 = vld [vmem:[%s9658 + $0x1b0] sm:$0xff]
    %v9714 = vld [vmem:[%s9658 + $0x1b8] sm:$0xff]
    %v9715 = vld [vmem:[%s9658 + $0x1c0] sm:$0xff]
    %v9716 = vld [vmem:[%s9658 + $0x1c8] sm:$0xff]
    %v9717 = vld [vmem:[%s9658 + $0x1d0] sm:$0xff]
    %v9718 = vld [vmem:[%s9658 + $0x1d8] sm:$0xff]
    %v9719 = vld [vmem:[%s9658 + $0x1e0] sm:$0xff]
    %v9720 = vld [vmem:[%s9658 + $0x1e8] sm:$0xff]
    %v9721 = vld [vmem:[%s9658 + $0x1f0] sm:$0xff]
    %v9722 = vld [vmem:[%s9658 + $0x1f8] sm:$0xff]
    %v9723 = vld [vmem:[%s9658 + $0x200] sm:$0xff]
    %v9724 = vld [vmem:[%s9658 + $0x208] sm:$0xff]
    %v9725 = vld [vmem:[%s9658 + $0x210] sm:$0xff]
    %v9726 = vld [vmem:[%s9658 + $0x218] sm:$0xff]
    %v9727 = vld [vmem:[%s9658 + $0x220] sm:$0xff]
    %v9728 = vld [vmem:[%s9658 + $0x228] sm:$0xff]
    %v9729 = vld [vmem:[%s9658 + $0x230] sm:$0xff]
    %v9730 = vld [vmem:[%s9658 + $0x238] sm:$0xff]
    %v9731 = vld [vmem:[%s9658 + $0x240] sm:$0xff]
    %v9732 = vld [vmem:[%s9658 + $0x248] sm:$0xff]
    %v9733 = vld [vmem:[%s9658 + $0x250] sm:$0xff]
    %v9734 = vld [vmem:[%s9658 + $0x258] sm:$0xff]
    %v9735 = vld [vmem:[%s9658 + $0x260] sm:$0xff]
    %v9736 = vld [vmem:[%s9658 + $0x268] sm:$0xff]
    %v9737 = vld [vmem:[%s9658 + $0x270] sm:$0xff]
    %v9738 = vld [vmem:[%s9658 + $0x278] sm:$0xff]
    %v9745 = vunpack.c.l.b16 %v9652
    %v9746 = vunpack.c.h.b16 %v9652
    %v9747 = vunpack.c.l.b16 %v9653
    %v9748 = vunpack.c.h.b16 %v9653
    %v9749 = vunpack.c.l.b16 %v9654
    %v9750 = vunpack.c.l.b16 %v9655
    %v9751 = vunpack.c.h.b16 %v9655
    %v9752 = vunpack.c.l.b16 %v9656
    %v9753 = vunpack.c.h.b16 %v9656
    %v9754 = vunpack.c.l.b16 %v9657
    %v9755 = vpack.c.b16 %v9750, %v9745
    %v9756 = vpack.c.b16 %v9751, %v9746
    %v9757 = vpack.c.b16 %v9752, %v9747
    %v9758 = vpack.c.b16 %v9753, %v9748
    %v9759 = vpack.c.b16 %v9754, %v9749
    %v9760 = vrot.slane %v9755, 1
    %v9761 = vrot.slane %v9756, 1
    %v9762 = vrot.slane %v9757, 1
    %v9763 = vrot.slane %v9758, 1
    %v9764 = vrot.slane %v9759, 1
    %v9850 = vunpack.c.l.b16 %v9659
    %v9851 = vunpack.c.h.b16 %v9659
    %v9852 = vunpack.c.l.b16 %v9660
    %v9853 = vunpack.c.h.b16 %v9660
    %v9854 = vunpack.c.l.b16 %v9661
    %v9855 = vunpack.c.h.b16 %v9661
    %v9856 = vunpack.c.l.b16 %v9662
    %v9857 = vunpack.c.h.b16 %v9662
    %v9858 = vunpack.c.l.b16 %v9663
    %v9859 = vunpack.c.h.b16 %v9663
    %v9860 = vunpack.c.l.b16 %v9664
    %v9861 = vunpack.c.h.b16 %v9664
    %v9862 = vunpack.c.l.b16 %v9665
    %v9863 = vunpack.c.h.b16 %v9665
    %v9864 = vunpack.c.l.b16 %v9666
    %v9865 = vunpack.c.h.b16 %v9666
    %v9866 = vunpack.c.l.b16 %v9667
    %v9867 = vunpack.c.h.b16 %v9667
    %v9868 = vunpack.c.l.b16 %v9668
    %v9869 = vunpack.c.h.b16 %v9668
    %v9870 = vunpack.c.l.b16 %v9669
    %v9871 = vunpack.c.h.b16 %v9669
    %v9872 = vunpack.c.l.b16 %v9670
    %v9873 = vunpack.c.h.b16 %v9670
    %v9874 = vunpack.c.l.b16 %v9671
    %v9875 = vunpack.c.h.b16 %v9671
    %v9876 = vunpack.c.l.b16 %v9672
    %v9877 = vunpack.c.h.b16 %v9672
    %v9878 = vunpack.c.l.b16 %v9673
    %v9879 = vunpack.c.h.b16 %v9673
    %v9880 = vunpack.c.l.b16 %v9674
    %v9881 = vunpack.c.h.b16 %v9674
    %v9882 = vunpack.c.l.b16 %v9675
    %v9883 = vunpack.c.h.b16 %v9675
    %v9884 = vunpack.c.l.b16 %v9676
    %v9885 = vunpack.c.h.b16 %v9676
    %v9886 = vunpack.c.l.b16 %v9677
    %v9887 = vunpack.c.h.b16 %v9677
    %v9888 = vunpack.c.l.b16 %v9678
    %v9889 = vunpack.c.h.b16 %v9678
    %v9890 = vunpack.c.l.b16 %v9679
    %v9891 = vunpack.c.h.b16 %v9679
    %v9892 = vunpack.c.l.b16 %v9680
    %v9893 = vunpack.c.h.b16 %v9680
    %v9894 = vunpack.c.l.b16 %v9681
    %v9895 = vunpack.c.h.b16 %v9681
    %v9896 = vunpack.c.l.b16 %v9682
    %v9897 = vunpack.c.h.b16 %v9682
    %v9898 = vunpack.c.l.b16 %v9683
    %v9899 = vunpack.c.h.b16 %v9683
    %v9900 = vunpack.c.l.b16 %v9684
    %v9901 = vunpack.c.h.b16 %v9684
    %v9902 = vunpack.c.l.b16 %v9685
    %v9903 = vunpack.c.h.b16 %v9685
    %v9904 = vunpack.c.l.b16 %v9686
    %v9905 = vunpack.c.h.b16 %v9686
    %v9906 = vunpack.c.l.b16 %v9687
    %v9907 = vunpack.c.h.b16 %v9687
    %v9908 = vunpack.c.l.b16 %v9688
    %v9909 = vunpack.c.h.b16 %v9688
    %v9910 = vunpack.c.l.b16 %v9689
    %v9911 = vunpack.c.h.b16 %v9689
    %v9912 = vunpack.c.l.b16 %v9690
    %v9913 = vunpack.c.h.b16 %v9690
    %v9914 = vunpack.c.l.b16 %v9691
    %v9915 = vunpack.c.h.b16 %v9691
    %v9916 = vunpack.c.l.b16 %v9692
    %v9917 = vunpack.c.h.b16 %v9692
    %v9918 = vunpack.c.l.b16 %v9693
    %v9919 = vunpack.c.h.b16 %v9693
    %v9920 = vunpack.c.l.b16 %v9694
    %v9921 = vunpack.c.h.b16 %v9694
    %v9922 = vunpack.c.l.b16 %v9695
    %v9923 = vunpack.c.h.b16 %v9695
    %v9924 = vunpack.c.l.b16 %v9696
    %v9925 = vunpack.c.h.b16 %v9696
    %v9926 = vunpack.c.l.b16 %v9697
    %v9927 = vunpack.c.h.b16 %v9697
    %v9928 = vunpack.c.l.b16 %v9698
    %v9929 = vunpack.c.h.b16 %v9698
    %v9930 = vunpack.c.l.b16 %v9699
    %v9931 = vunpack.c.h.b16 %v9699
    %v9932 = vunpack.c.l.b16 %v9700
    %v9933 = vunpack.c.h.b16 %v9700
    %v9934 = vunpack.c.l.b16 %v9701
    %v9935 = vunpack.c.h.b16 %v9701
    %v9936 = vunpack.c.l.b16 %v9702
    %v9937 = vunpack.c.h.b16 %v9702
    %v9938 = vunpack.c.l.b16 %v9703
    %v9939 = vunpack.c.h.b16 %v9703
    %v9940 = vunpack.c.l.b16 %v9704
    %v9941 = vunpack.c.h.b16 %v9704
    %v9942 = vunpack.c.l.b16 %v9705
    %v9943 = vunpack.c.h.b16 %v9705
    %v9944 = vunpack.c.l.b16 %v9706
    %v9945 = vunpack.c.h.b16 %v9706
    %v9946 = vunpack.c.l.b16 %v9707
    %v9947 = vunpack.c.h.b16 %v9707
    %v9948 = vunpack.c.l.b16 %v9708
    %v9949 = vunpack.c.h.b16 %v9708
    %v9950 = vunpack.c.l.b16 %v9709
    %v9951 = vunpack.c.h.b16 %v9709
    %v9952 = vunpack.c.l.b16 %v9710
    %v9953 = vunpack.c.h.b16 %v9710
    %v9954 = vunpack.c.l.b16 %v9711
    %v9955 = vunpack.c.h.b16 %v9711
    %v9956 = vunpack.c.l.b16 %v9712
    %v9957 = vunpack.c.h.b16 %v9712
    %v9958 = vunpack.c.l.b16 %v9713
    %v9959 = vunpack.c.h.b16 %v9713
    %v9960 = vunpack.c.l.b16 %v9714
    %v9961 = vunpack.c.h.b16 %v9714
    %v9962 = vunpack.c.l.b16 %v9715
    %v9963 = vunpack.c.h.b16 %v9715
    %v9964 = vunpack.c.l.b16 %v9716
    %v9965 = vunpack.c.h.b16 %v9716
    %v9966 = vunpack.c.l.b16 %v9717
    %v9967 = vunpack.c.h.b16 %v9717
    %v9968 = vunpack.c.l.b16 %v9718
    %v9969 = vunpack.c.h.b16 %v9718
    %v9970 = vunpack.c.l.b16 %v9719
    %v9971 = vunpack.c.h.b16 %v9719
    %v9972 = vunpack.c.l.b16 %v9720
    %v9973 = vunpack.c.h.b16 %v9720
    %v9974 = vunpack.c.l.b16 %v9721
    %v9975 = vunpack.c.h.b16 %v9721
    %v9976 = vunpack.c.l.b16 %v9722
    %v9977 = vunpack.c.h.b16 %v9722
    %v9978 = vunpack.c.l.b16 %v9723
    %v9979 = vunpack.c.h.b16 %v9723
    %v9980 = vunpack.c.l.b16 %v9724
    %v9981 = vunpack.c.h.b16 %v9724
    %v9982 = vunpack.c.l.b16 %v9725
    %v9983 = vunpack.c.h.b16 %v9725
    %v9984 = vunpack.c.l.b16 %v9726
    %v9985 = vunpack.c.h.b16 %v9726
    %v9986 = vunpack.c.l.b16 %v9727
    %v9987 = vunpack.c.h.b16 %v9727
    %v9988 = vunpack.c.l.b16 %v9728
    %v9989 = vunpack.c.h.b16 %v9728
    %v9990 = vunpack.c.l.b16 %v9729
    %v9991 = vunpack.c.h.b16 %v9729
    %v9992 = vunpack.c.l.b16 %v9730
    %v9993 = vunpack.c.h.b16 %v9730
    %v9994 = vunpack.c.l.b16 %v9731
    %v9995 = vunpack.c.h.b16 %v9731
    %v9996 = vunpack.c.l.b16 %v9732
    %v9997 = vunpack.c.h.b16 %v9732
    %v9998 = vunpack.c.l.b16 %v9733
    %v9999 = vunpack.c.h.b16 %v9733
    %v10000 = vunpack.c.l.b16 %v9734
    %v10001 = vunpack.c.h.b16 %v9734
    %v10002 = vunpack.c.l.b16 %v9735
    %v10003 = vunpack.c.h.b16 %v9735
    %v10004 = vunpack.c.l.b16 %v9736
    %v10005 = vunpack.c.h.b16 %v9736
    %v10006 = vunpack.c.l.b16 %v9737
    %v10007 = vunpack.c.h.b16 %v9737
    %v10008 = vunpack.c.l.b16 %v9738
    %v10009 = vunpack.c.h.b16 %v9738
    %v10010 = vpack.c.b16 %v9852, %v9850
    %v10011 = vpack.c.b16 %v9853, %v9851
    %v10012 = vpack.c.b16 %v9856, %v9854
    %v10013 = vpack.c.b16 %v9857, %v9855
    %v10014 = vpack.c.b16 %v9860, %v9858
    %v10015 = vpack.c.b16 %v9861, %v9859
    %v10016 = vpack.c.b16 %v9864, %v9862
    %v10017 = vpack.c.b16 %v9865, %v9863
    %v10018 = vpack.c.b16 %v9868, %v9866
    %v10019 = vpack.c.b16 %v9869, %v9867
    %v10020 = vpack.c.b16 %v9872, %v9870
    %v10021 = vpack.c.b16 %v9873, %v9871
    %v10022 = vpack.c.b16 %v9876, %v9874
    %v10023 = vpack.c.b16 %v9877, %v9875
    %v10024 = vpack.c.b16 %v9880, %v9878
    %v10025 = vpack.c.b16 %v9881, %v9879
    %v10026 = vpack.c.b16 %v9884, %v9882
    %v10027 = vpack.c.b16 %v9885, %v9883
    %v10028 = vpack.c.b16 %v9888, %v9886
    %v10029 = vpack.c.b16 %v9889, %v9887
    %v10030 = vpack.c.b16 %v9892, %v9890
    %v10031 = vpack.c.b16 %v9893, %v9891
    %v10032 = vpack.c.b16 %v9896, %v9894
    %v10033 = vpack.c.b16 %v9897, %v9895
    %v10034 = vpack.c.b16 %v9900, %v9898
    %v10035 = vpack.c.b16 %v9901, %v9899
    %v10036 = vpack.c.b16 %v9904, %v9902
    %v10037 = vpack.c.b16 %v9905, %v9903
    %v10038 = vpack.c.b16 %v9908, %v9906
    %v10039 = vpack.c.b16 %v9909, %v9907
    %v10040 = vpack.c.b16 %v9912, %v9910
    %v10041 = vpack.c.b16 %v9913, %v9911
    %v10042 = vpack.c.b16 %v9916, %v9914
    %v10043 = vpack.c.b16 %v9917, %v9915
    %v10044 = vpack.c.b16 %v9920, %v9918
    %v10045 = vpack.c.b16 %v9921, %v9919
    %v10046 = vpack.c.b16 %v9924, %v9922
    %v10047 = vpack.c.b16 %v9925, %v9923
    %v10048 = vpack.c.b16 %v9928, %v9926
    %v10049 = vpack.c.b16 %v9929, %v9927
    %v10050 = vpack.c.b16 %v9932, %v9930
    %v10051 = vpack.c.b16 %v9933, %v9931
    %v10052 = vpack.c.b16 %v9936, %v9934
    %v10053 = vpack.c.b16 %v9937, %v9935
    %v10054 = vpack.c.b16 %v9940, %v9938
    %v10055 = vpack.c.b16 %v9941, %v9939
    %v10056 = vpack.c.b16 %v9944, %v9942
    %v10057 = vpack.c.b16 %v9945, %v9943
    %v10058 = vpack.c.b16 %v9948, %v9946
    %v10059 = vpack.c.b16 %v9949, %v9947
    %v10060 = vpack.c.b16 %v9952, %v9950
    %v10061 = vpack.c.b16 %v9953, %v9951
    %v10062 = vpack.c.b16 %v9956, %v9954
    %v10063 = vpack.c.b16 %v9957, %v9955
    %v10064 = vpack.c.b16 %v9960, %v9958
    %v10065 = vpack.c.b16 %v9961, %v9959
    %v10066 = vpack.c.b16 %v9964, %v9962
    %v10067 = vpack.c.b16 %v9965, %v9963
    %v10068 = vpack.c.b16 %v9968, %v9966
    %v10069 = vpack.c.b16 %v9969, %v9967
    %v10070 = vpack.c.b16 %v9972, %v9970
    %v10071 = vpack.c.b16 %v9973, %v9971
    %v10072 = vpack.c.b16 %v9976, %v9974
    %v10073 = vpack.c.b16 %v9977, %v9975
    %v10074 = vpack.c.b16 %v9980, %v9978
    %v10075 = vpack.c.b16 %v9981, %v9979
    %v10076 = vpack.c.b16 %v9984, %v9982
    %v10077 = vpack.c.b16 %v9985, %v9983
    %v10078 = vpack.c.b16 %v9988, %v9986
    %v10079 = vpack.c.b16 %v9989, %v9987
    %v10080 = vpack.c.b16 %v9992, %v9990
    %v10081 = vpack.c.b16 %v9993, %v9991
    %v10082 = vpack.c.b16 %v9996, %v9994
    %v10083 = vpack.c.b16 %v9997, %v9995
    %v10084 = vpack.c.b16 %v10000, %v9998
    %v10085 = vpack.c.b16 %v10001, %v9999
    %v10086 = vpack.c.b16 %v10004, %v10002
    %v10087 = vpack.c.b16 %v10005, %v10003
    %v10088 = vpack.c.b16 %v10008, %v10006
    %v10089 = vpack.c.b16 %v10009, %v10007
    %10170 = vmatprep.subr.bf16.mxu0 %v10011
    %10171 = vmatpush1.bf16.msra.mxu0 %v10010
    %10172 = vmatprep.subr.bf16.mxu0 %v10013
    %10173 = vmatpush1.bf16.msra.mxu0 %v10012
    %10174 = vmatprep.subr.bf16.mxu0 %v10015
    %10175 = vmatpush1.bf16.msra.mxu0 %v10014
    %10176 = vmatprep.subr.bf16.mxu0 %v10017
    %10177 = vmatpush1.bf16.msra.mxu0 %v10016
    %10178 = vmatprep.subr.bf16.mxu0 %v10019
    %10179 = vmatpush1.bf16.msra.mxu0 %v10018
    %10180 = vmatprep.subr.bf16.mxu0 %v10021
    %10181 = vmatpush1.bf16.msra.mxu0 %v10020
    %10182 = vmatprep.subr.bf16.mxu0 %v10023
    %10183 = vmatpush1.bf16.msra.mxu0 %v10022
    %10184 = vmatprep.subr.bf16.mxu0 %v10025
    %10185 = vmatpush1.bf16.msra.mxu0 %v10024
    %10186 = vmatprep.subr.bf16.mxu0 %v10027
    %10187 = vmatpush1.bf16.msra.mxu0 %v10026
    %10188 = vmatprep.subr.bf16.mxu0 %v10029
    %10189 = vmatpush1.bf16.msra.mxu0 %v10028
    %10190 = vmatprep.subr.bf16.mxu0 %v10031
    %10191 = vmatpush1.bf16.msra.mxu0 %v10030
    %10192 = vmatprep.subr.bf16.mxu0 %v10033
    %10193 = vmatpush1.bf16.msra.mxu0 %v10032
    %10194 = vmatprep.subr.bf16.mxu0 %v10035
    %10195 = vmatpush1.bf16.msra.mxu0 %v10034
    %10196 = vmatprep.subr.bf16.mxu0 %v10037
    %10197 = vmatpush1.bf16.msra.mxu0 %v10036
    %10198 = vmatprep.subr.bf16.mxu0 %v10039
    %10199 = vmatpush1.bf16.msra.mxu0 %v10038
    %10200 = vmatprep.subr.bf16.mxu0 %v10041
    %10201 = vmatpush1.bf16.msra.mxu0 %v10040
    %10202 = vmatprep.mubr.bf16.mxu0 %v9761
    %10203 = vmatmul.mubr.bf16.gmra.mrb[0].mxu0 %v9760
    %v10204 = vpop.f32.mrb[0].mxu0
    %v10205 = vadd.f32 0.0, %v10204
    %v10206 = vpop.f32.mrb[0].mxu0
    %v10207 = vadd.f32 0.0, %v10206
    %v10208 = vpop.f32.mrb[0].mxu0
    %v10209 = vadd.f32 0.0, %v10208
    %v10210 = vpop.f32.mrb[0].mxu0
    %v10211 = vadd.f32 0.0, %v10210
    %10212 = vdwg.mxu0
    %10213 = vmatprep.subr.bf16.mxu0 %v10043
    %10214 = vmatpush1.bf16.msra.mxu0 %v10042
    %10215 = vmatprep.subr.bf16.mxu0 %v10045
    %10216 = vmatpush1.bf16.msra.mxu0 %v10044
    %10217 = vmatprep.subr.bf16.mxu0 %v10047
    %10218 = vmatpush1.bf16.msra.mxu0 %v10046
    %10219 = vmatprep.subr.bf16.mxu0 %v10049
    %10220 = vmatpush1.bf16.msra.mxu0 %v10048
    %10221 = vmatprep.subr.bf16.mxu0 %v10051
    %10222 = vmatpush1.bf16.msra.mxu0 %v10050
    %10223 = vmatprep.subr.bf16.mxu0 %v10053
    %10224 = vmatpush1.bf16.msra.mxu0 %v10052
    %10225 = vmatprep.subr.bf16.mxu0 %v10055
    %10226 = vmatpush1.bf16.msra.mxu0 %v10054
    %10227 = vmatprep.subr.bf16.mxu0 %v10057
    %10228 = vmatpush1.bf16.msra.mxu0 %v10056
    %10229 = vmatprep.subr.bf16.mxu0 %v10059
    %10230 = vmatpush1.bf16.msra.mxu0 %v10058
    %10231 = vmatprep.subr.bf16.mxu0 %v10061
    %10232 = vmatpush1.bf16.msra.mxu0 %v10060
    %10233 = vmatprep.subr.bf16.mxu0 %v10063
    %10234 = vmatpush1.bf16.msra.mxu0 %v10062
    %10235 = vmatprep.subr.bf16.mxu0 %v10065
    %10236 = vmatpush1.bf16.msra.mxu0 %v10064
    %10237 = vmatprep.subr.bf16.mxu0 %v10067
    %10238 = vmatpush1.bf16.msra.mxu0 %v10066
    %10239 = vmatprep.subr.bf16.mxu0 %v10069
    %10240 = vmatpush1.bf16.msra.mxu0 %v10068
    %10241 = vmatprep.subr.bf16.mxu0 %v10071
    %10242 = vmatpush1.bf16.msra.mxu0 %v10070
    %10243 = vmatprep.subr.bf16.mxu0 %v10073
    %10244 = vmatpush1.bf16.msra.mxu0 %v10072
    %10245 = vmatprep.mubr.bf16.mxu0 %v9763
    %10246 = vmatmul.mubr.bf16.gmra.mrb[0].mxu0 %v9762
    %v10247 = vpop.f32.mrb[0].mxu0
    %v10248 = vadd.f32 %v10205, %v10247
    %v10249 = vpop.f32.mrb[0].mxu0
    %v10250 = vadd.f32 %v10207, %v10249
    %v10251 = vpop.f32.mrb[0].mxu0
    %v10252 = vadd.f32 %v10209, %v10251
    %v10253 = vpop.f32.mrb[0].mxu0
    %v10254 = vadd.f32 %v10211, %v10253
    %10255 = vdwg.mxu0
    %10256 = vmatprep.subr.bf16.mxu0 %v10075
    %10257 = vmatpush1.bf16.msra.mxu0 %v10074
    %10258 = vmatprep.subr.bf16.mxu0 %v10077
    %10259 = vmatpush1.bf16.msra.mxu0 %v10076
    %10260 = vmatprep.subr.bf16.mxu0 %v10079
    %10261 = vmatpush1.bf16.msra.mxu0 %v10078
    %10262 = vmatprep.subr.bf16.mxu0 %v10081
    %10263 = vmatpush1.bf16.msra.mxu0 %v10080
    %10264 = vmatprep.subr.bf16.mxu0 %v10083
    %10265 = vmatpush1.bf16.msra.mxu0 %v10082
    %10266 = vmatprep.subr.bf16.mxu0 %v10085
    %10267 = vmatpush1.bf16.msra.mxu0 %v10084
    %10268 = vmatprep.subr.bf16.mxu0 %v10087
    %10269 = vmatpush1.bf16.msra.mxu0 %v10086
    %10270 = vmatprep.subr.bf16.mxu0 %v10089
    %10271 = vmatpush1.bf16.msra.mxu0 %v10088
    %10272 = vmatprep.subr.bf16.mxu0 0
    %10273 = vmatpush1.bf16.msra.mxu0 0
    %10274 = vmatprep.subr.bf16.mxu0 0
    %10275 = vmatpush1.bf16.msra.mxu0 0
    %10276 = vmatprep.subr.bf16.mxu0 0
    %10277 = vmatpush1.bf16.msra.mxu0 0
    %10278 = vmatprep.subr.bf16.mxu0 0
    %10279 = vmatpush1.bf16.msra.mxu0 0
    %10280 = vmatprep.subr.bf16.mxu0 0
    %10281 = vmatpush1.bf16.msra.mxu0 0
    %10282 = vmatprep.subr.bf16.mxu0 0
    %10283 = vmatpush1.bf16.msra.mxu0 0
    %10284 = vmatprep.subr.bf16.mxu0 0
    %10285 = vmatpush1.bf16.msra.mxu0 0
    %10286 = vmatprep.subr.bf16.mxu0 0
    %10287 = vmatpush1.bf16.msra.mxu0 0
    %10288 = vmatprep.mubr.bf16.mxu0 0
    %10289 = vmatmul.mubr.bf16.gmra.mrb[0].mxu0 %v9764
    %v10290 = vpop.f32.mrb[0].mxu0
    %v10291 = vadd.f32 %v10248, %v10290
    %v10292 = vpop.f32.mrb[0].mxu0
    %v10293 = vadd.f32 %v10250, %v10292
    %v10294 = vpop.f32.mrb[0].mxu0
    %v10295 = vadd.f32 %v10252, %v10294
    %v10296 = vpop.f32.mrb[0].mxu0
    %v10297 = vadd.f32 %v10254, %v10296
    %10298 = vdwg.mxu0
    %v10299 = vadd.f32 %v9648, %v10291
    %v10300 = vadd.f32 %v9649, %v10293
    %v10301 = vadd.f32 %v9650, %v10295
    %v10302 = vadd.f32 %v9651, %v10297
    %v10303 = vld [vmem:[%s8344] sm:$0xee]
    %v10304 = vld [vmem:[%s8344 + $0x8] sm:$0xee]
    %v10305 = vld [vmem:[%s8344 + $0x10] sm:$0xe]
    %v10306 = vld [vmem:[%s8344 + $0x14] sm:$0xff]
    %v10307 = vld [vmem:[%s8344 + $0x1c] sm:$0xff]
    %v10308 = vld [vmem:[%s8344 + $0x24] sm:$0xf]
    %s10309 = scalar_lea.vmem %s5, 1920
    %v10310 = vld [vmem:[%s10309] sm:$0xff]
    %v10311 = vld [vmem:[%s10309 + $0x8] sm:$0xff]
    %v10312 = vld [vmem:[%s10309 + $0x10] sm:$0xff]
    %v10313 = vld [vmem:[%s10309 + $0x18] sm:$0xff]
    %v10314 = vld [vmem:[%s10309 + $0x20] sm:$0xff]
    %v10315 = vld [vmem:[%s10309 + $0x28] sm:$0xff]
    %v10316 = vld [vmem:[%s10309 + $0x30] sm:$0xff]
    %v10317 = vld [vmem:[%s10309 + $0x38] sm:$0xff]
    %v10318 = vld [vmem:[%s10309 + $0x40] sm:$0xff]
    %v10319 = vld [vmem:[%s10309 + $0x48] sm:$0xff]
    %v10320 = vld [vmem:[%s10309 + $0x50] sm:$0xff]
    %v10321 = vld [vmem:[%s10309 + $0x58] sm:$0xff]
    %v10322 = vld [vmem:[%s10309 + $0x60] sm:$0xff]
    %v10323 = vld [vmem:[%s10309 + $0x68] sm:$0xff]
    %v10324 = vld [vmem:[%s10309 + $0x70] sm:$0xff]
    %v10325 = vld [vmem:[%s10309 + $0x78] sm:$0xff]
    %v10326 = vld [vmem:[%s10309 + $0x80] sm:$0xff]
    %v10327 = vld [vmem:[%s10309 + $0x88] sm:$0xff]
    %v10328 = vld [vmem:[%s10309 + $0x90] sm:$0xff]
    %v10329 = vld [vmem:[%s10309 + $0x98] sm:$0xff]
    %v10330 = vld [vmem:[%s10309 + $0xa0] sm:$0xff]
    %v10331 = vld [vmem:[%s10309 + $0xa8] sm:$0xff]
    %v10332 = vld [vmem:[%s10309 + $0xb0] sm:$0xff]
    %v10333 = vld [vmem:[%s10309 + $0xb8] sm:$0xff]
    %v10334 = vld [vmem:[%s10309 + $0xc0] sm:$0xff]
    %v10335 = vld [vmem:[%s10309 + $0xc8] sm:$0xff]
    %v10336 = vld [vmem:[%s10309 + $0xd0] sm:$0xff]
    %v10337 = vld [vmem:[%s10309 + $0xd8] sm:$0xff]
    %v10338 = vld [vmem:[%s10309 + $0xe0] sm:$0xff]
    %v10339 = vld [vmem:[%s10309 + $0xe8] sm:$0xff]
    %v10340 = vld [vmem:[%s10309 + $0xf0] sm:$0xff]
    %v10341 = vld [vmem:[%s10309 + $0xf8] sm:$0xff]
    %v10342 = vld [vmem:[%s10309 + $0x100] sm:$0xff]
    %v10343 = vld [vmem:[%s10309 + $0x108] sm:$0xff]
    %v10344 = vld [vmem:[%s10309 + $0x110] sm:$0xff]
    %v10345 = vld [vmem:[%s10309 + $0x118] sm:$0xff]
    %v10346 = vld [vmem:[%s10309 + $0x120] sm:$0xff]
    %v10347 = vld [vmem:[%s10309 + $0x128] sm:$0xff]
    %v10348 = vld [vmem:[%s10309 + $0x130] sm:$0xff]
    %v10349 = vld [vmem:[%s10309 + $0x138] sm:$0xff]
    %v10350 = vld [vmem:[%s10309 + $0x140] sm:$0xff]
    %v10351 = vld [vmem:[%s10309 + $0x148] sm:$0xff]
    %v10352 = vld [vmem:[%s10309 + $0x150] sm:$0xff]
    %v10353 = vld [vmem:[%s10309 + $0x158] sm:$0xff]
    %v10354 = vld [vmem:[%s10309 + $0x160] sm:$0xff]
    %v10355 = vld [vmem:[%s10309 + $0x168] sm:$0xff]
    %v10356 = vld [vmem:[%s10309 + $0x170] sm:$0xff]
    %v10357 = vld [vmem:[%s10309 + $0x178] sm:$0xff]
    %v10358 = vld [vmem:[%s10309 + $0x180] sm:$0xff]
    %v10359 = vld [vmem:[%s10309 + $0x188] sm:$0xff]
    %v10360 = vld [vmem:[%s10309 + $0x190] sm:$0xff]
    %v10361 = vld [vmem:[%s10309 + $0x198] sm:$0xff]
    %v10362 = vld [vmem:[%s10309 + $0x1a0] sm:$0xff]
    %v10363 = vld [vmem:[%s10309 + $0x1a8] sm:$0xff]
    %v10364 = vld [vmem:[%s10309 + $0x1b0] sm:$0xff]
    %v10365 = vld [vmem:[%s10309 + $0x1b8] sm:$0xff]
    %v10366 = vld [vmem:[%s10309 + $0x1c0] sm:$0xff]
    %v10367 = vld [vmem:[%s10309 + $0x1c8] sm:$0xff]
    %v10368 = vld [vmem:[%s10309 + $0x1d0] sm:$0xff]
    %v10369 = vld [vmem:[%s10309 + $0x1d8] sm:$0xff]
    %v10370 = vld [vmem:[%s10309 + $0x1e0] sm:$0xff]
    %v10371 = vld [vmem:[%s10309 + $0x1e8] sm:$0xff]
    %v10372 = vld [vmem:[%s10309 + $0x1f0] sm:$0xff]
    %v10373 = vld [vmem:[%s10309 + $0x1f8] sm:$0xff]
    %v10374 = vld [vmem:[%s10309 + $0x200] sm:$0xff]
    %v10375 = vld [vmem:[%s10309 + $0x208] sm:$0xff]
    %v10376 = vld [vmem:[%s10309 + $0x210] sm:$0xff]
    %v10377 = vld [vmem:[%s10309 + $0x218] sm:$0xff]
    %v10378 = vld [vmem:[%s10309 + $0x220] sm:$0xff]
    %v10379 = vld [vmem:[%s10309 + $0x228] sm:$0xff]
    %v10380 = vld [vmem:[%s10309 + $0x230] sm:$0xff]
    %v10381 = vld [vmem:[%s10309 + $0x238] sm:$0xff]
    %v10382 = vld [vmem:[%s10309 + $0x240] sm:$0xff]
    %v10383 = vld [vmem:[%s10309 + $0x248] sm:$0xff]
    %v10384 = vld [vmem:[%s10309 + $0x250] sm:$0xff]
    %v10385 = vld [vmem:[%s10309 + $0x258] sm:$0xff]
    %v10386 = vld [vmem:[%s10309 + $0x260] sm:$0xff]
    %v10387 = vld [vmem:[%s10309 + $0x268] sm:$0xff]
    %v10388 = vld [vmem:[%s10309 + $0x270] sm:$0xff]
    %v10389 = vld [vmem:[%s10309 + $0x278] sm:$0xff]
    %v10396 = vunpack.c.l.b16 %v10303
    %v10397 = vunpack.c.h.b16 %v10303
    %v10398 = vunpack.c.l.b16 %v10304
    %v10399 = vunpack.c.h.b16 %v10304
    %v10400 = vunpack.c.l.b16 %v10305
    %v10401 = vunpack.c.l.b16 %v10306
    %v10402 = vunpack.c.h.b16 %v10306
    %v10403 = vunpack.c.l.b16 %v10307
    %v10404 = vunpack.c.h.b16 %v10307
    %v10405 = vunpack.c.l.b16 %v10308
    %v10406 = vpack.c.b16 %v10401, %v10396
    %v10407 = vpack.c.b16 %v10402, %v10397
    %v10408 = vpack.c.b16 %v10403, %v10398
    %v10409 = vpack.c.b16 %v10404, %v10399
    %v10410 = vpack.c.b16 %v10405, %v10400
    %v10411 = vrot.slane %v10406, 1
    %v10412 = vrot.slane %v10407, 1
    %v10413 = vrot.slane %v10408, 1
    %v10414 = vrot.slane %v10409, 1
    %v10415 = vrot.slane %v10410, 1
    %v10501 = vunpack.c.l.b16 %v10310
    %v10502 = vunpack.c.h.b16 %v10310
    %v10503 = vunpack.c.l.b16 %v10311
    %v10504 = vunpack.c.h.b16 %v10311
    %v10505 = vunpack.c.l.b16 %v10312
    %v10506 = vunpack.c.h.b16 %v10312
    %v10507 = vunpack.c.l.b16 %v10313
    %v10508 = vunpack.c.h.b16 %v10313
    %v10509 = vunpack.c.l.b16 %v10314
    %v10510 = vunpack.c.h.b16 %v10314
    %v10511 = vunpack.c.l.b16 %v10315
    %v10512 = vunpack.c.h.b16 %v10315
    %v10513 = vunpack.c.l.b16 %v10316
    %v10514 = vunpack.c.h.b16 %v10316
    %v10515 = vunpack.c.l.b16 %v10317
    %v10516 = vunpack.c.h.b16 %v10317
    %v10517 = vunpack.c.l.b16 %v10318
    %v10518 = vunpack.c.h.b16 %v10318
    %v10519 = vunpack.c.l.b16 %v10319
    %v10520 = vunpack.c.h.b16 %v10319
    %v10521 = vunpack.c.l.b16 %v10320
    %v10522 = vunpack.c.h.b16 %v10320
    %v10523 = vunpack.c.l.b16 %v10321
    %v10524 = vunpack.c.h.b16 %v10321
    %v10525 = vunpack.c.l.b16 %v10322
    %v10526 = vunpack.c.h.b16 %v10322
    %v10527 = vunpack.c.l.b16 %v10323
    %v10528 = vunpack.c.h.b16 %v10323
    %v10529 = vunpack.c.l.b16 %v10324
    %v10530 = vunpack.c.h.b16 %v10324
    %v10531 = vunpack.c.l.b16 %v10325
    %v10532 = vunpack.c.h.b16 %v10325
    %v10533 = vunpack.c.l.b16 %v10326
    %v10534 = vunpack.c.h.b16 %v10326
    %v10535 = vunpack.c.l.b16 %v10327
    %v10536 = vunpack.c.h.b16 %v10327
    %v10537 = vunpack.c.l.b16 %v10328
    %v10538 = vunpack.c.h.b16 %v10328
    %v10539 = vunpack.c.l.b16 %v10329
    %v10540 = vunpack.c.h.b16 %v10329
    %v10541 = vunpack.c.l.b16 %v10330
    %v10542 = vunpack.c.h.b16 %v10330
    %v10543 = vunpack.c.l.b16 %v10331
    %v10544 = vunpack.c.h.b16 %v10331
    %v10545 = vunpack.c.l.b16 %v10332
    %v10546 = vunpack.c.h.b16 %v10332
    %v10547 = vunpack.c.l.b16 %v10333
    %v10548 = vunpack.c.h.b16 %v10333
    %v10549 = vunpack.c.l.b16 %v10334
    %v10550 = vunpack.c.h.b16 %v10334
    %v10551 = vunpack.c.l.b16 %v10335
    %v10552 = vunpack.c.h.b16 %v10335
    %v10553 = vunpack.c.l.b16 %v10336
    %v10554 = vunpack.c.h.b16 %v10336
    %v10555 = vunpack.c.l.b16 %v10337
    %v10556 = vunpack.c.h.b16 %v10337
    %v10557 = vunpack.c.l.b16 %v10338
    %v10558 = vunpack.c.h.b16 %v10338
    %v10559 = vunpack.c.l.b16 %v10339
    %v10560 = vunpack.c.h.b16 %v10339
    %v10561 = vunpack.c.l.b16 %v10340
    %v10562 = vunpack.c.h.b16 %v10340
    %v10563 = vunpack.c.l.b16 %v10341
    %v10564 = vunpack.c.h.b16 %v10341
    %v10565 = vunpack.c.l.b16 %v10342
    %v10566 = vunpack.c.h.b16 %v10342
    %v10567 = vunpack.c.l.b16 %v10343
    %v10568 = vunpack.c.h.b16 %v10343
    %v10569 = vunpack.c.l.b16 %v10344
    %v10570 = vunpack.c.h.b16 %v10344
    %v10571 = vunpack.c.l.b16 %v10345
    %v10572 = vunpack.c.h.b16 %v10345
    %v10573 = vunpack.c.l.b16 %v10346
    %v10574 = vunpack.c.h.b16 %v10346
    %v10575 = vunpack.c.l.b16 %v10347
    %v10576 = vunpack.c.h.b16 %v10347
    %v10577 = vunpack.c.l.b16 %v10348
    %v10578 = vunpack.c.h.b16 %v10348
    %v10579 = vunpack.c.l.b16 %v10349
    %v10580 = vunpack.c.h.b16 %v10349
    %v10581 = vunpack.c.l.b16 %v10350
    %v10582 = vunpack.c.h.b16 %v10350
    %v10583 = vunpack.c.l.b16 %v10351
    %v10584 = vunpack.c.h.b16 %v10351
    %v10585 = vunpack.c.l.b16 %v10352
    %v10586 = vunpack.c.h.b16 %v10352
    %v10587 = vunpack.c.l.b16 %v10353
    %v10588 = vunpack.c.h.b16 %v10353
    %v10589 = vunpack.c.l.b16 %v10354
    %v10590 = vunpack.c.h.b16 %v10354
    %v10591 = vunpack.c.l.b16 %v10355
    %v10592 = vunpack.c.h.b16 %v10355
    %v10593 = vunpack.c.l.b16 %v10356
    %v10594 = vunpack.c.h.b16 %v10356
    %v10595 = vunpack.c.l.b16 %v10357
    %v10596 = vunpack.c.h.b16 %v10357
    %v10597 = vunpack.c.l.b16 %v10358
    %v10598 = vunpack.c.h.b16 %v10358
    %v10599 = vunpack.c.l.b16 %v10359
    %v10600 = vunpack.c.h.b16 %v10359
    %v10601 = vunpack.c.l.b16 %v10360
    %v10602 = vunpack.c.h.b16 %v10360
    %v10603 = vunpack.c.l.b16 %v10361
    %v10604 = vunpack.c.h.b16 %v10361
    %v10605 = vunpack.c.l.b16 %v10362
    %v10606 = vunpack.c.h.b16 %v10362
    %v10607 = vunpack.c.l.b16 %v10363
    %v10608 = vunpack.c.h.b16 %v10363
    %v10609 = vunpack.c.l.b16 %v10364
    %v10610 = vunpack.c.h.b16 %v10364
    %v10611 = vunpack.c.l.b16 %v10365
    %v10612 = vunpack.c.h.b16 %v10365
    %v10613 = vunpack.c.l.b16 %v10366
    %v10614 = vunpack.c.h.b16 %v10366
    %v10615 = vunpack.c.l.b16 %v10367
    %v10616 = vunpack.c.h.b16 %v10367
    %v10617 = vunpack.c.l.b16 %v10368
    %v10618 = vunpack.c.h.b16 %v10368
    %v10619 = vunpack.c.l.b16 %v10369
    %v10620 = vunpack.c.h.b16 %v10369
    %v10621 = vunpack.c.l.b16 %v10370
    %v10622 = vunpack.c.h.b16 %v10370
    %v10623 = vunpack.c.l.b16 %v10371
    %v10624 = vunpack.c.h.b16 %v10371
    %v10625 = vunpack.c.l.b16 %v10372
    %v10626 = vunpack.c.h.b16 %v10372
    %v10627 = vunpack.c.l.b16 %v10373
    %v10628 = vunpack.c.h.b16 %v10373
    %v10629 = vunpack.c.l.b16 %v10374
    %v10630 = vunpack.c.h.b16 %v10374
    %v10631 = vunpack.c.l.b16 %v10375
    %v10632 = vunpack.c.h.b16 %v10375
    %v10633 = vunpack.c.l.b16 %v10376
    %v10634 = vunpack.c.h.b16 %v10376
    %v10635 = vunpack.c.l.b16 %v10377
    %v10636 = vunpack.c.h.b16 %v10377
    %v10637 = vunpack.c.l.b16 %v10378
    %v10638 = vunpack.c.h.b16 %v10378
    %v10639 = vunpack.c.l.b16 %v10379
    %v10640 = vunpack.c.h.b16 %v10379
    %v10641 = vunpack.c.l.b16 %v10380
    %v10642 = vunpack.c.h.b16 %v10380
    %v10643 = vunpack.c.l.b16 %v10381
    %v10644 = vunpack.c.h.b16 %v10381
    %v10645 = vunpack.c.l.b16 %v10382
    %v10646 = vunpack.c.h.b16 %v10382
    %v10647 = vunpack.c.l.b16 %v10383
    %v10648 = vunpack.c.h.b16 %v10383
    %v10649 = vunpack.c.l.b16 %v10384
    %v10650 = vunpack.c.h.b16 %v10384
    %v10651 = vunpack.c.l.b16 %v10385
    %v10652 = vunpack.c.h.b16 %v10385
    %v10653 = vunpack.c.l.b16 %v10386
    %v10654 = vunpack.c.h.b16 %v10386
    %v10655 = vunpack.c.l.b16 %v10387
    %v10656 = vunpack.c.h.b16 %v10387
    %v10657 = vunpack.c.l.b16 %v10388
    %v10658 = vunpack.c.h.b16 %v10388
    %v10659 = vunpack.c.l.b16 %v10389
    %v10660 = vunpack.c.h.b16 %v10389
    %v10661 = vpack.c.b16 %v10503, %v10501
    %v10662 = vpack.c.b16 %v10504, %v10502
    %v10663 = vpack.c.b16 %v10507, %v10505
    %v10664 = vpack.c.b16 %v10508, %v10506
    %v10665 = vpack.c.b16 %v10511, %v10509
    %v10666 = vpack.c.b16 %v10512, %v10510
    %v10667 = vpack.c.b16 %v10515, %v10513
    %v10668 = vpack.c.b16 %v10516, %v10514
    %v10669 = vpack.c.b16 %v10519, %v10517
    %v10670 = vpack.c.b16 %v10520, %v10518
    %v10671 = vpack.c.b16 %v10523, %v10521
    %v10672 = vpack.c.b16 %v10524, %v10522
    %v10673 = vpack.c.b16 %v10527, %v10525
    %v10674 = vpack.c.b16 %v10528, %v10526
    %v10675 = vpack.c.b16 %v10531, %v10529
    %v10676 = vpack.c.b16 %v10532, %v10530
    %v10677 = vpack.c.b16 %v10535, %v10533
    %v10678 = vpack.c.b16 %v10536, %v10534
    %v10679 = vpack.c.b16 %v10539, %v10537
    %v10680 = vpack.c.b16 %v10540, %v10538
    %v10681 = vpack.c.b16 %v10543, %v10541
    %v10682 = vpack.c.b16 %v10544, %v10542
    %v10683 = vpack.c.b16 %v10547, %v10545
    %v10684 = vpack.c.b16 %v10548, %v10546
    %v10685 = vpack.c.b16 %v10551, %v10549
    %v10686 = vpack.c.b16 %v10552, %v10550
    %v10687 = vpack.c.b16 %v10555, %v10553
    %v10688 = vpack.c.b16 %v10556, %v10554
    %v10689 = vpack.c.b16 %v10559, %v10557
    %v10690 = vpack.c.b16 %v10560, %v10558
    %v10691 = vpack.c.b16 %v10563, %v10561
    %v10692 = vpack.c.b16 %v10564, %v10562
    %v10693 = vpack.c.b16 %v10567, %v10565
    %v10694 = vpack.c.b16 %v10568, %v10566
    %v10695 = vpack.c.b16 %v10571, %v10569
    %v10696 = vpack.c.b16 %v10572, %v10570
    %v10697 = vpack.c.b16 %v10575, %v10573
    %v10698 = vpack.c.b16 %v10576, %v10574
    %v10699 = vpack.c.b16 %v10579, %v10577
    %v10700 = vpack.c.b16 %v10580, %v10578
    %v10701 = vpack.c.b16 %v10583, %v10581
    %v10702 = vpack.c.b16 %v10584, %v10582
    %v10703 = vpack.c.b16 %v10587, %v10585
    %v10704 = vpack.c.b16 %v10588, %v10586
    %v10705 = vpack.c.b16 %v10591, %v10589
    %v10706 = vpack.c.b16 %v10592, %v10590
    %v10707 = vpack.c.b16 %v10595, %v10593
    %v10708 = vpack.c.b16 %v10596, %v10594
    %v10709 = vpack.c.b16 %v10599, %v10597
    %v10710 = vpack.c.b16 %v10600, %v10598
    %v10711 = vpack.c.b16 %v10603, %v10601
    %v10712 = vpack.c.b16 %v10604, %v10602
    %v10713 = vpack.c.b16 %v10607, %v10605
    %v10714 = vpack.c.b16 %v10608, %v10606
    %v10715 = vpack.c.b16 %v10611, %v10609
    %v10716 = vpack.c.b16 %v10612, %v10610
    %v10717 = vpack.c.b16 %v10615, %v10613
    %v10718 = vpack.c.b16 %v10616, %v10614
    %v10719 = vpack.c.b16 %v10619, %v10617
    %v10720 = vpack.c.b16 %v10620, %v10618
    %v10721 = vpack.c.b16 %v10623, %v10621
    %v10722 = vpack.c.b16 %v10624, %v10622
    %v10723 = vpack.c.b16 %v10627, %v10625
    %v10724 = vpack.c.b16 %v10628, %v10626
    %v10725 = vpack.c.b16 %v10631, %v10629
    %v10726 = vpack.c.b16 %v10632, %v10630
    %v10727 = vpack.c.b16 %v10635, %v10633
    %v10728 = vpack.c.b16 %v10636, %v10634
    %v10729 = vpack.c.b16 %v10639, %v10637
    %v10730 = vpack.c.b16 %v10640, %v10638
    %v10731 = vpack.c.b16 %v10643, %v10641
    %v10732 = vpack.c.b16 %v10644, %v10642
    %v10733 = vpack.c.b16 %v10647, %v10645
    %v10734 = vpack.c.b16 %v10648, %v10646
    %v10735 = vpack.c.b16 %v10651, %v10649
    %v10736 = vpack.c.b16 %v10652, %v10650
    %v10737 = vpack.c.b16 %v10655, %v10653
    %v10738 = vpack.c.b16 %v10656, %v10654
    %v10739 = vpack.c.b16 %v10659, %v10657
    %v10740 = vpack.c.b16 %v10660, %v10658
    %10821 = vmatprep.subr.bf16.mxu0 %v10662
    %10822 = vmatpush1.bf16.msra.mxu0 %v10661
    %10823 = vmatprep.subr.bf16.mxu0 %v10664
    %10824 = vmatpush1.bf16.msra.mxu0 %v10663
    %10825 = vmatprep.subr.bf16.mxu0 %v10666
    %10826 = vmatpush1.bf16.msra.mxu0 %v10665
    %10827 = vmatprep.subr.bf16.mxu0 %v10668
    %10828 = vmatpush1.bf16.msra.mxu0 %v10667
    %10829 = vmatprep.subr.bf16.mxu0 %v10670
    %10830 = vmatpush1.bf16.msra.mxu0 %v10669
    %10831 = vmatprep.subr.bf16.mxu0 %v10672
    %10832 = vmatpush1.bf16.msra.mxu0 %v10671
    %10833 = vmatprep.subr.bf16.mxu0 %v10674
    %10834 = vmatpush1.bf16.msra.mxu0 %v10673
    %10835 = vmatprep.subr.bf16.mxu0 %v10676
    %10836 = vmatpush1.bf16.msra.mxu0 %v10675
    %10837 = vmatprep.subr.bf16.mxu0 %v10678
    %10838 = vmatpush1.bf16.msra.mxu0 %v10677
    %10839 = vmatprep.subr.bf16.mxu0 %v10680
    %10840 = vmatpush1.bf16.msra.mxu0 %v10679
    %10841 = vmatprep.subr.bf16.mxu0 %v10682
    %10842 = vmatpush1.bf16.msra.mxu0 %v10681
    %10843 = vmatprep.subr.bf16.mxu0 %v10684
    %10844 = vmatpush1.bf16.msra.mxu0 %v10683
    %10845 = vmatprep.subr.bf16.mxu0 %v10686
    %10846 = vmatpush1.bf16.msra.mxu0 %v10685
    %10847 = vmatprep.subr.bf16.mxu0 %v10688
    %10848 = vmatpush1.bf16.msra.mxu0 %v10687
    %10849 = vmatprep.subr.bf16.mxu0 %v10690
    %10850 = vmatpush1.bf16.msra.mxu0 %v10689
    %10851 = vmatprep.subr.bf16.mxu0 %v10692
    %10852 = vmatpush1.bf16.msra.mxu0 %v10691
    %10853 = vmatprep.mubr.bf16.mxu0 %v10412
    %10854 = vmatmul.mubr.bf16.gmra.mrb[0].mxu0 %v10411
    %v10855 = vpop.f32.mrb[0].mxu0
    %v10856 = vadd.f32 0.0, %v10855
    %v10857 = vpop.f32.mrb[0].mxu0
    %v10858 = vadd.f32 0.0, %v10857
    %v10859 = vpop.f32.mrb[0].mxu0
    %v10860 = vadd.f32 0.0, %v10859
    %v10861 = vpop.f32.mrb[0].mxu0
    %v10862 = vadd.f32 0.0, %v10861
    %10863 = vdwg.mxu0
    %10864 = vmatprep.subr.bf16.mxu0 %v10694
    %10865 = vmatpush1.bf16.msra.mxu0 %v10693
    %10866 = vmatprep.subr.bf16.mxu0 %v10696
    %10867 = vmatpush1.bf16.msra.mxu0 %v10695
    %10868 = vmatprep.subr.bf16.mxu0 %v10698
    %10869 = vmatpush1.bf16.msra.mxu0 %v10697
    %10870 = vmatprep.subr.bf16.mxu0 %v10700
    %10871 = vmatpush1.bf16.msra.mxu0 %v10699
    %10872 = vmatprep.subr.bf16.mxu0 %v10702
    %10873 = vmatpush1.bf16.msra.mxu0 %v10701
    %10874 = vmatprep.subr.bf16.mxu0 %v10704
    %10875 = vmatpush1.bf16.msra.mxu0 %v10703
    %10876 = vmatprep.subr.bf16.mxu0 %v10706
    %10877 = vmatpush1.bf16.msra.mxu0 %v10705
    %10878 = vmatprep.subr.bf16.mxu0 %v10708
    %10879 = vmatpush1.bf16.msra.mxu0 %v10707
    %10880 = vmatprep.subr.bf16.mxu0 %v10710
    %10881 = vmatpush1.bf16.msra.mxu0 %v10709
    %10882 = vmatprep.subr.bf16.mxu0 %v10712
    %10883 = vmatpush1.bf16.msra.mxu0 %v10711
    %10884 = vmatprep.subr.bf16.mxu0 %v10714
    %10885 = vmatpush1.bf16.msra.mxu0 %v10713
    %10886 = vmatprep.subr.bf16.mxu0 %v10716
    %10887 = vmatpush1.bf16.msra.mxu0 %v10715
    %10888 = vmatprep.subr.bf16.mxu0 %v10718
    %10889 = vmatpush1.bf16.msra.mxu0 %v10717
    %10890 = vmatprep.subr.bf16.mxu0 %v10720
    %10891 = vmatpush1.bf16.msra.mxu0 %v10719
    %10892 = vmatprep.subr.bf16.mxu0 %v10722
    %10893 = vmatpush1.bf16.msra.mxu0 %v10721
    %10894 = vmatprep.subr.bf16.mxu0 %v10724
    %10895 = vmatpush1.bf16.msra.mxu0 %v10723
    %10896 = vmatprep.mubr.bf16.mxu0 %v10414
    %10897 = vmatmul.mubr.bf16.gmra.mrb[0].mxu0 %v10413
    %v10898 = vpop.f32.mrb[0].mxu0
    %v10899 = vadd.f32 %v10856, %v10898
    %v10900 = vpop.f32.mrb[0].mxu0
    %v10901 = vadd.f32 %v10858, %v10900
    %v10902 = vpop.f32.mrb[0].mxu0
    %v10903 = vadd.f32 %v10860, %v10902
    %v10904 = vpop.f32.mrb[0].mxu0
    %v10905 = vadd.f32 %v10862, %v10904
    %10906 = vdwg.mxu0
    %10907 = vmatprep.subr.bf16.mxu0 %v10726
    %10908 = vmatpush1.bf16.msra.mxu0 %v10725
    %10909 = vmatprep.subr.bf16.mxu0 %v10728
    %10910 = vmatpush1.bf16.msra.mxu0 %v10727
    %10911 = vmatprep.subr.bf16.mxu0 %v10730
    %10912 = vmatpush1.bf16.msra.mxu0 %v10729
    %10913 = vmatprep.subr.bf16.mxu0 %v10732
    %10914 = vmatpush1.bf16.msra.mxu0 %v10731
    %10915 = vmatprep.subr.bf16.mxu0 %v10734
    %10916 = vmatpush1.bf16.msra.mxu0 %v10733
    %10917 = vmatprep.subr.bf16.mxu0 %v10736
    %10918 = vmatpush1.bf16.msra.mxu0 %v10735
    %10919 = vmatprep.subr.bf16.mxu0 %v10738
    %10920 = vmatpush1.bf16.msra.mxu0 %v10737
    %10921 = vmatprep.subr.bf16.mxu0 %v10740
    %10922 = vmatpush1.bf16.msra.mxu0 %v10739
    %10923 = vmatprep.subr.bf16.mxu0 0
    %10924 = vmatpush1.bf16.msra.mxu0 0
    %10925 = vmatprep.subr.bf16.mxu0 0
    %10926 = vmatpush1.bf16.msra.mxu0 0
    %10927 = vmatprep.subr.bf16.mxu0 0
    %10928 = vmatpush1.bf16.msra.mxu0 0
    %10929 = vmatprep.subr.bf16.mxu0 0
    %10930 = vmatpush1.bf16.msra.mxu0 0
    %10931 = vmatprep.subr.bf16.mxu0 0
    %10932 = vmatpush1.bf16.msra.mxu0 0
    %10933 = vmatprep.subr.bf16.mxu0 0
    %10934 = vmatpush1.bf16.msra.mxu0 0
    %10935 = vmatprep.subr.bf16.mxu0 0
    %10936 = vmatpush1.bf16.msra.mxu0 0
    %10937 = vmatprep.subr.bf16.mxu0 0
    %10938 = vmatpush1.bf16.msra.mxu0 0
    %10939 = vmatprep.mubr.bf16.mxu0 0
    %10940 = vmatmul.mubr.bf16.gmra.mrb[0].mxu0 %v10415
    %v10941 = vpop.f32.mrb[0].mxu0
    %v10942 = vadd.f32 %v10899, %v10941
    %v10943 = vpop.f32.mrb[0].mxu0
    %v10944 = vadd.f32 %v10901, %v10943
    %v10945 = vpop.f32.mrb[0].mxu0
    %v10946 = vadd.f32 %v10903, %v10945
    %v10947 = vpop.f32.mrb[0].mxu0
    %v10948 = vadd.f32 %v10905, %v10947
    %10949 = vdwg.mxu0
    %v10950 = vadd.f32 %v10299, %v10942
    %v10951 = vadd.f32 %v10300, %v10944
    %v10952 = vadd.f32 %v10301, %v10946
    %v10953 = vadd.f32 %v10302, %v10948
    %v10954 = vld [vmem:[#allocation3] sm:$0xcc]
    %v10955 = vld [vmem:[#allocation3 + $0x8] sm:$0xcc]
    %v10956 = vld [vmem:[#allocation3 + $0x10] sm:$0xc]
    %v10957 = vld [vmem:[#allocation3 + $0x14] sm:$0xff]
    %v10958 = vld [vmem:[#allocation3 + $0x1c] sm:$0xff]
    %v10959 = vld [vmem:[#allocation3 + $0x24] sm:$0xf]
    %v10960 = vld [vmem:[#allocation3 + $0x28] sm:$0x11]
    %v10961 = vld [vmem:[#allocation3 + $0x30] sm:$0x11]
    %v10962 = vld [vmem:[#allocation3 + $0x38] sm:$0x1]
    %s10963 = scalar_lea.vmem %s5, 2560
    %v10964 = vld [vmem:[%s10963] sm:$0xff]
    %v10965 = vld [vmem:[%s10963 + $0x8] sm:$0xff]
    %v10966 = vld [vmem:[%s10963 + $0x10] sm:$0xff]
    %v10967 = vld [vmem:[%s10963 + $0x18] sm:$0xff]
    %v10968 = vld [vmem:[%s10963 + $0x20] sm:$0xff]
    %v10969 = vld [vmem:[%s10963 + $0x28] sm:$0xff]
    %v10970 = vld [vmem:[%s10963 + $0x30] sm:$0xff]
    %v10971 = vld [vmem:[%s10963 + $0x38] sm:$0xff]
    %v10972 = vld [vmem:[%s10963 + $0x40] sm:$0xff]
    %v10973 = vld [vmem:[%s10963 + $0x48] sm:$0xff]
    %v10974 = vld [vmem:[%s10963 + $0x50] sm:$0xff]
    %v10975 = vld [vmem:[%s10963 + $0x58] sm:$0xff]
    %v10976 = vld [vmem:[%s10963 + $0x60] sm:$0xff]
    %v10977 = vld [vmem:[%s10963 + $0x68] sm:$0xff]
    %v10978 = vld [vmem:[%s10963 + $0x70] sm:$0xff]
    %v10979 = vld [vmem:[%s10963 + $0x78] sm:$0xff]
    %v10980 = vld [vmem:[%s10963 + $0x80] sm:$0xff]
    %v10981 = vld [vmem:[%s10963 + $0x88] sm:$0xff]
    %v10982 = vld [vmem:[%s10963 + $0x90] sm:$0xff]
    %v10983 = vld [vmem:[%s10963 + $0x98] sm:$0xff]
    %v10984 = vld [vmem:[%s10963 + $0xa0] sm:$0xff]
    %v10985 = vld [vmem:[%s10963 + $0xa8] sm:$0xff]
    %v10986 = vld [vmem:[%s10963 + $0xb0] sm:$0xff]
    %v10987 = vld [vmem:[%s10963 + $0xb8] sm:$0xff]
    %v10988 = vld [vmem:[%s10963 + $0xc0] sm:$0xff]
    %v10989 = vld [vmem:[%s10963 + $0xc8] sm:$0xff]
    %v10990 = vld [vmem:[%s10963 + $0xd0] sm:$0xff]
    %v10991 = vld [vmem:[%s10963 + $0xd8] sm:$0xff]
    %v10992 = vld [vmem:[%s10963 + $0xe0] sm:$0xff]
    %v10993 = vld [vmem:[%s10963 + $0xe8] sm:$0xff]
    %v10994 = vld [vmem:[%s10963 + $0xf0] sm:$0xff]
    %v10995 = vld [vmem:[%s10963 + $0xf8] sm:$0xff]
    %v10996 = vld [vmem:[%s10963 + $0x100] sm:$0xff]
    %v10997 = vld [vmem:[%s10963 + $0x108] sm:$0xff]
    %v10998 = vld [vmem:[%s10963 + $0x110] sm:$0xff]
    %v10999 = vld [vmem:[%s10963 + $0x118] sm:$0xff]
    %v11000 = vld [vmem:[%s10963 + $0x120] sm:$0xff]
    %v11001 = vld [vmem:[%s10963 + $0x128] sm:$0xff]
    %v11002 = vld [vmem:[%s10963 + $0x130] sm:$0xff]
    %v11003 = vld [vmem:[%s10963 + $0x138] sm:$0xff]
    %v11004 = vld [vmem:[%s10963 + $0x140] sm:$0xff]
    %v11005 = vld [vmem:[%s10963 + $0x148] sm:$0xff]
    %v11006 = vld [vmem:[%s10963 + $0x150] sm:$0xff]
    %v11007 = vld [vmem:[%s10963 + $0x158] sm:$0xff]
    %v11008 = vld [vmem:[%s10963 + $0x160] sm:$0xff]
    %v11009 = vld [vmem:[%s10963 + $0x168] sm:$0xff]
    %v11010 = vld [vmem:[%s10963 + $0x170] sm:$0xff]
    %v11011 = vld [vmem:[%s10963 + $0x178] sm:$0xff]
    %v11012 = vld [vmem:[%s10963 + $0x180] sm:$0xff]
    %v11013 = vld [vmem:[%s10963 + $0x188] sm:$0xff]
    %v11014 = vld [vmem:[%s10963 + $0x190] sm:$0xff]
    %v11015 = vld [vmem:[%s10963 + $0x198] sm:$0xff]
    %v11016 = vld [vmem:[%s10963 + $0x1a0] sm:$0xff]
    %v11017 = vld [vmem:[%s10963 + $0x1a8] sm:$0xff]
    %v11018 = vld [vmem:[%s10963 + $0x1b0] sm:$0xff]
    %v11019 = vld [vmem:[%s10963 + $0x1b8] sm:$0xff]
    %v11020 = vld [vmem:[%s10963 + $0x1c0] sm:$0xff]
    %v11021 = vld [vmem:[%s10963 + $0x1c8] sm:$0xff]
    %v11022 = vld [vmem:[%s10963 + $0x1d0] sm:$0xff]
    %v11023 = vld [vmem:[%s10963 + $0x1d8] sm:$0xff]
    %v11024 = vld [vmem:[%s10963 + $0x1e0] sm:$0xff]
    %v11025 = vld [vmem:[%s10963 + $0x1e8] sm:$0xff]
    %v11026 = vld [vmem:[%s10963 + $0x1f0] sm:$0xff]
    %v11027 = vld [vmem:[%s10963 + $0x1f8] sm:$0xff]
    %v11028 = vld [vmem:[%s10963 + $0x200] sm:$0xff]
    %v11029 = vld [vmem:[%s10963 + $0x208] sm:$0xff]
    %v11030 = vld [vmem:[%s10963 + $0x210] sm:$0xff]
    %v11031 = vld [vmem:[%s10963 + $0x218] sm:$0xff]
    %v11032 = vld [vmem:[%s10963 + $0x220] sm:$0xff]
    %v11033 = vld [vmem:[%s10963 + $0x228] sm:$0xff]
    %v11034 = vld [vmem:[%s10963 + $0x230] sm:$0xff]
    %v11035 = vld [vmem:[%s10963 + $0x238] sm:$0xff]
    %v11036 = vld [vmem:[%s10963 + $0x240] sm:$0xff]
    %v11037 = vld [vmem:[%s10963 + $0x248] sm:$0xff]
    %v11038 = vld [vmem:[%s10963 + $0x250] sm:$0xff]
    %v11039 = vld [vmem:[%s10963 + $0x258] sm:$0xff]
    %v11040 = vld [vmem:[%s10963 + $0x260] sm:$0xff]
    %v11041 = vld [vmem:[%s10963 + $0x268] sm:$0xff]
    %v11042 = vld [vmem:[%s10963 + $0x270] sm:$0xff]
    %v11043 = vld [vmem:[%s10963 + $0x278] sm:$0xff]
    %v11053 = vunpack.c.l.b16 %v10954
    %v11054 = vunpack.c.h.b16 %v10954
    %v11055 = vunpack.c.l.b16 %v10955
    %v11056 = vunpack.c.h.b16 %v10955
    %v11057 = vunpack.c.l.b16 %v10956
    %v11058 = vunpack.c.l.b16 %v10957
    %v11059 = vunpack.c.h.b16 %v10957
    %v11060 = vunpack.c.l.b16 %v10958
    %v11061 = vunpack.c.h.b16 %v10958
    %v11062 = vunpack.c.l.b16 %v10959
    %v11063 = vunpack.c.l.b16 %v10960
    %v11064 = vunpack.c.h.b16 %v10960
    %v11065 = vunpack.c.l.b16 %v10961
    %v11066 = vunpack.c.h.b16 %v10961
    %v11067 = vunpack.c.l.b16 %v10962
    %v11068 = vpack.c.b16 %v11058, %v11053
    %v11069 = vpack.c.b16 %v11059, %v11054
    %v11070 = vpack.c.b16 %v11060, %v11055
    %v11071 = vpack.c.b16 %v11061, %v11056
    %v11072 = vpack.c.b16 %v11062, %v11057
    %v11073 = vpack.c.b16 %v11063, %v11063
    %v11074 = vpack.c.b16 %v11064, %v11064
    %v11075 = vpack.c.b16 %v11065, %v11065
    %v11076 = vpack.c.b16 %v11066, %v11066
    %v11077 = vpack.c.b16 %v11067, %v11067
    %v11078 = vrot.slane %v11068, 2
    %v11079 = vrot.slane %v11073, 2
    %v11080 = vsel %vm833, %v11078, %v11079
    %v11081 = vrot.slane %v11069, 2
    %v11082 = vrot.slane %v11074, 2
    %v11083 = vsel %vm833, %v11081, %v11082
    %v11084 = vrot.slane %v11070, 2
    %v11085 = vrot.slane %v11075, 2
    %v11086 = vsel %vm833, %v11084, %v11085
    %v11087 = vrot.slane %v11071, 2
    %v11088 = vrot.slane %v11076, 2
    %v11089 = vsel %vm833, %v11087, %v11088
    %v11090 = vrot.slane %v11072, 2
    %v11091 = vrot.slane %v11077, 2
    %v11092 = vsel %vm833, %v11090, %v11091
    %v11178 = vunpack.c.l.b16 %v10964
    %v11179 = vunpack.c.h.b16 %v10964
    %v11180 = vunpack.c.l.b16 %v10965
    %v11181 = vunpack.c.h.b16 %v10965
    %v11182 = vunpack.c.l.b16 %v10966
    %v11183 = vunpack.c.h.b16 %v10966
    %v11184 = vunpack.c.l.b16 %v10967
    %v11185 = vunpack.c.h.b16 %v10967
    %v11186 = vunpack.c.l.b16 %v10968
    %v11187 = vunpack.c.h.b16 %v10968
    %v11188 = vunpack.c.l.b16 %v10969
    %v11189 = vunpack.c.h.b16 %v10969
    %v11190 = vunpack.c.l.b16 %v10970
    %v11191 = vunpack.c.h.b16 %v10970
    %v11192 = vunpack.c.l.b16 %v10971
    %v11193 = vunpack.c.h.b16 %v10971
    %v11194 = vunpack.c.l.b16 %v10972
    %v11195 = vunpack.c.h.b16 %v10972
    %v11196 = vunpack.c.l.b16 %v10973
    %v11197 = vunpack.c.h.b16 %v10973
    %v11198 = vunpack.c.l.b16 %v10974
    %v11199 = vunpack.c.h.b16 %v10974
    %v11200 = vunpack.c.l.b16 %v10975
    %v11201 = vunpack.c.h.b16 %v10975
    %v11202 = vunpack.c.l.b16 %v10976
    %v11203 = vunpack.c.h.b16 %v10976
    %v11204 = vunpack.c.l.b16 %v10977
    %v11205 = vunpack.c.h.b16 %v10977
    %v11206 = vunpack.c.l.b16 %v10978
    %v11207 = vunpack.c.h.b16 %v10978
    %v11208 = vunpack.c.l.b16 %v10979
    %v11209 = vunpack.c.h.b16 %v10979
    %v11210 = vunpack.c.l.b16 %v10980
    %v11211 = vunpack.c.h.b16 %v10980
    %v11212 = vunpack.c.l.b16 %v10981
    %v11213 = vunpack.c.h.b16 %v10981
    %v11214 = vunpack.c.l.b16 %v10982
    %v11215 = vunpack.c.h.b16 %v10982
    %v11216 = vunpack.c.l.b16 %v10983
    %v11217 = vunpack.c.h.b16 %v10983
    %v11218 = vunpack.c.l.b16 %v10984
    %v11219 = vunpack.c.h.b16 %v10984
    %v11220 = vunpack.c.l.b16 %v10985
    %v11221 = vunpack.c.h.b16 %v10985
    %v11222 = vunpack.c.l.b16 %v10986
    %v11223 = vunpack.c.h.b16 %v10986
    %v11224 = vunpack.c.l.b16 %v10987
    %v11225 = vunpack.c.h.b16 %v10987
    %v11226 = vunpack.c.l.b16 %v10988
    %v11227 = vunpack.c.h.b16 %v10988
    %v11228 = vunpack.c.l.b16 %v10989
    %v11229 = vunpack.c.h.b16 %v10989
    %v11230 = vunpack.c.l.b16 %v10990
    %v11231 = vunpack.c.h.b16 %v10990
    %v11232 = vunpack.c.l.b16 %v10991
    %v11233 = vunpack.c.h.b16 %v10991
    %v11234 = vunpack.c.l.b16 %v10992
    %v11235 = vunpack.c.h.b16 %v10992
    %v11236 = vunpack.c.l.b16 %v10993
    %v11237 = vunpack.c.h.b16 %v10993
    %v11238 = vunpack.c.l.b16 %v10994
    %v11239 = vunpack.c.h.b16 %v10994
    %v11240 = vunpack.c.l.b16 %v10995
    %v11241 = vunpack.c.h.b16 %v10995
    %v11242 = vunpack.c.l.b16 %v10996
    %v11243 = vunpack.c.h.b16 %v10996
    %v11244 = vunpack.c.l.b16 %v10997
    %v11245 = vunpack.c.h.b16 %v10997
    %v11246 = vunpack.c.l.b16 %v10998
    %v11247 = vunpack.c.h.b16 %v10998
    %v11248 = vunpack.c.l.b16 %v10999
    %v11249 = vunpack.c.h.b16 %v10999
    %v11250 = vunpack.c.l.b16 %v11000
    %v11251 = vunpack.c.h.b16 %v11000
    %v11252 = vunpack.c.l.b16 %v11001
    %v11253 = vunpack.c.h.b16 %v11001
    %v11254 = vunpack.c.l.b16 %v11002
    %v11255 = vunpack.c.h.b16 %v11002
    %v11256 = vunpack.c.l.b16 %v11003
    %v11257 = vunpack.c.h.b16 %v11003
    %v11258 = vunpack.c.l.b16 %v11004
    %v11259 = vunpack.c.h.b16 %v11004
    %v11260 = vunpack.c.l.b16 %v11005
    %v11261 = vunpack.c.h.b16 %v11005
    %v11262 = vunpack.c.l.b16 %v11006
    %v11263 = vunpack.c.h.b16 %v11006
    %v11264 = vunpack.c.l.b16 %v11007
    %v11265 = vunpack.c.h.b16 %v11007
    %v11266 = vunpack.c.l.b16 %v11008
    %v11267 = vunpack.c.h.b16 %v11008
    %v11268 = vunpack.c.l.b16 %v11009
    %v11269 = vunpack.c.h.b16 %v11009
    %v11270 = vunpack.c.l.b16 %v11010
    %v11271 = vunpack.c.h.b16 %v11010
    %v11272 = vunpack.c.l.b16 %v11011
    %v11273 = vunpack.c.h.b16 %v11011
    %v11274 = vunpack.c.l.b16 %v11012
    %v11275 = vunpack.c.h.b16 %v11012
    %v11276 = vunpack.c.l.b16 %v11013
    %v11277 = vunpack.c.h.b16 %v11013
    %v11278 = vunpack.c.l.b16 %v11014
    %v11279 = vunpack.c.h.b16 %v11014
    %v11280 = vunpack.c.l.b16 %v11015
    %v11281 = vunpack.c.h.b16 %v11015
    %v11282 = vunpack.c.l.b16 %v11016
    %v11283 = vunpack.c.h.b16 %v11016
    %v11284 = vunpack.c.l.b16 %v11017
    %v11285 = vunpack.c.h.b16 %v11017
    %v11286 = vunpack.c.l.b16 %v11018
    %v11287 = vunpack.c.h.b16 %v11018
    %v11288 = vunpack.c.l.b16 %v11019
    %v11289 = vunpack.c.h.b16 %v11019
    %v11290 = vunpack.c.l.b16 %v11020
    %v11291 = vunpack.c.h.b16 %v11020
    %v11292 = vunpack.c.l.b16 %v11021
    %v11293 = vunpack.c.h.b16 %v11021
    %v11294 = vunpack.c.l.b16 %v11022
    %v11295 = vunpack.c.h.b16 %v11022
    %v11296 = vunpack.c.l.b16 %v11023
    %v11297 = vunpack.c.h.b16 %v11023
    %v11298 = vunpack.c.l.b16 %v11024
    %v11299 = vunpack.c.h.b16 %v11024
    %v11300 = vunpack.c.l.b16 %v11025
    %v11301 = vunpack.c.h.b16 %v11025
    %v11302 = vunpack.c.l.b16 %v11026
    %v11303 = vunpack.c.h.b16 %v11026
    %v11304 = vunpack.c.l.b16 %v11027
    %v11305 = vunpack.c.h.b16 %v11027
    %v11306 = vunpack.c.l.b16 %v11028
    %v11307 = vunpack.c.h.b16 %v11028
    %v11308 = vunpack.c.l.b16 %v11029
    %v11309 = vunpack.c.h.b16 %v11029
    %v11310 = vunpack.c.l.b16 %v11030
    %v11311 = vunpack.c.h.b16 %v11030
    %v11312 = vunpack.c.l.b16 %v11031
    %v11313 = vunpack.c.h.b16 %v11031
    %v11314 = vunpack.c.l.b16 %v11032
    %v11315 = vunpack.c.h.b16 %v11032
    %v11316 = vunpack.c.l.b16 %v11033
    %v11317 = vunpack.c.h.b16 %v11033
    %v11318 = vunpack.c.l.b16 %v11034
    %v11319 = vunpack.c.h.b16 %v11034
    %v11320 = vunpack.c.l.b16 %v11035
    %v11321 = vunpack.c.h.b16 %v11035
    %v11322 = vunpack.c.l.b16 %v11036
    %v11323 = vunpack.c.h.b16 %v11036
    %v11324 = vunpack.c.l.b16 %v11037
    %v11325 = vunpack.c.h.b16 %v11037
    %v11326 = vunpack.c.l.b16 %v11038
    %v11327 = vunpack.c.h.b16 %v11038
    %v11328 = vunpack.c.l.b16 %v11039
    %v11329 = vunpack.c.h.b16 %v11039
    %v11330 = vunpack.c.l.b16 %v11040
    %v11331 = vunpack.c.h.b16 %v11040
    %v11332 = vunpack.c.l.b16 %v11041
    %v11333 = vunpack.c.h.b16 %v11041
    %v11334 = vunpack.c.l.b16 %v11042
    %v11335 = vunpack.c.h.b16 %v11042
    %v11336 = vunpack.c.l.b16 %v11043
    %v11337 = vunpack.c.h.b16 %v11043
    %v11338 = vpack.c.b16 %v11180, %v11178
    %v11339 = vpack.c.b16 %v11181, %v11179
    %v11340 = vpack.c.b16 %v11184, %v11182
    %v11341 = vpack.c.b16 %v11185, %v11183
    %v11342 = vpack.c.b16 %v11188, %v11186
    %v11343 = vpack.c.b16 %v11189, %v11187
    %v11344 = vpack.c.b16 %v11192, %v11190
    %v11345 = vpack.c.b16 %v11193, %v11191
    %v11346 = vpack.c.b16 %v11196, %v11194
    %v11347 = vpack.c.b16 %v11197, %v11195
    %v11348 = vpack.c.b16 %v11200, %v11198
    %v11349 = vpack.c.b16 %v11201, %v11199
    %v11350 = vpack.c.b16 %v11204, %v11202
    %v11351 = vpack.c.b16 %v11205, %v11203
    %v11352 = vpack.c.b16 %v11208, %v11206
    %v11353 = vpack.c.b16 %v11209, %v11207
    %v11354 = vpack.c.b16 %v11212, %v11210
    %v11355 = vpack.c.b16 %v11213, %v11211
    %v11356 = vpack.c.b16 %v11216, %v11214
    %v11357 = vpack.c.b16 %v11217, %v11215
    %v11358 = vpack.c.b16 %v11220, %v11218
    %v11359 = vpack.c.b16 %v11221, %v11219
    %v11360 = vpack.c.b16 %v11224, %v11222
    %v11361 = vpack.c.b16 %v11225, %v11223
    %v11362 = vpack.c.b16 %v11228, %v11226
    %v11363 = vpack.c.b16 %v11229, %v11227
    %v11364 = vpack.c.b16 %v11232, %v11230
    %v11365 = vpack.c.b16 %v11233, %v11231
    %v11366 = vpack.c.b16 %v11236, %v11234
    %v11367 = vpack.c.b16 %v11237, %v11235
    %v11368 = vpack.c.b16 %v11240, %v11238
    %v11369 = vpack.c.b16 %v11241, %v11239
    %v11370 = vpack.c.b16 %v11244, %v11242
    %v11371 = vpack.c.b16 %v11245, %v11243
    %v11372 = vpack.c.b16 %v11248, %v11246
    %v11373 = vpack.c.b16 %v11249, %v11247
    %v11374 = vpack.c.b16 %v11252, %v11250
    %v11375 = vpack.c.b16 %v11253, %v11251
    %v11376 = vpack.c.b16 %v11256, %v11254
    %v11377 = vpack.c.b16 %v11257, %v11255
    %v11378 = vpack.c.b16 %v11260, %v11258
    %v11379 = vpack.c.b16 %v11261, %v11259
    %v11380 = vpack.c.b16 %v11264, %v11262
    %v11381 = vpack.c.b16 %v11265, %v11263
    %v11382 = vpack.c.b16 %v11268, %v11266
    %v11383 = vpack.c.b16 %v11269, %v11267
    %v11384 = vpack.c.b16 %v11272, %v11270
    %v11385 = vpack.c.b16 %v11273, %v11271
    %v11386 = vpack.c.b16 %v11276, %v11274
    %v11387 = vpack.c.b16 %v11277, %v11275
    %v11388 = vpack.c.b16 %v11280, %v11278
    %v11389 = vpack.c.b16 %v11281, %v11279
    %v11390 = vpack.c.b16 %v11284, %v11282
    %v11391 = vpack.c.b16 %v11285, %v11283
    %v11392 = vpack.c.b16 %v11288, %v11286
    %v11393 = vpack.c.b16 %v11289, %v11287
    %v11394 = vpack.c.b16 %v11292, %v11290
    %v11395 = vpack.c.b16 %v11293, %v11291
    %v11396 = vpack.c.b16 %v11296, %v11294
    %v11397 = vpack.c.b16 %v11297, %v11295
    %v11398 = vpack.c.b16 %v11300, %v11298
    %v11399 = vpack.c.b16 %v11301, %v11299
    %v11400 = vpack.c.b16 %v11304, %v11302
    %v11401 = vpack.c.b16 %v11305, %v11303
    %v11402 = vpack.c.b16 %v11308, %v11306
    %v11403 = vpack.c.b16 %v11309, %v11307
    %v11404 = vpack.c.b16 %v11312, %v11310
    %v11405 = vpack.c.b16 %v11313, %v11311
    %v11406 = vpack.c.b16 %v11316, %v11314
    %v11407 = vpack.c.b16 %v11317, %v11315
    %v11408 = vpack.c.b16 %v11320, %v11318
    %v11409 = vpack.c.b16 %v11321, %v11319
    %v11410 = vpack.c.b16 %v11324, %v11322
    %v11411 = vpack.c.b16 %v11325, %v11323
    %v11412 = vpack.c.b16 %v11328, %v11326
    %v11413 = vpack.c.b16 %v11329, %v11327
    %v11414 = vpack.c.b16 %v11332, %v11330
    %v11415 = vpack.c.b16 %v11333, %v11331
    %v11416 = vpack.c.b16 %v11336, %v11334
    %v11417 = vpack.c.b16 %v11337, %v11335
    %11498 = vmatprep.subr.bf16.mxu0 %v11339
    %11499 = vmatpush1.bf16.msra.mxu0 %v11338
    %11500 = vmatprep.subr.bf16.mxu0 %v11341
    %11501 = vmatpush1.bf16.msra.mxu0 %v11340
    %11502 = vmatprep.subr.bf16.mxu0 %v11343
    %11503 = vmatpush1.bf16.msra.mxu0 %v11342
    %11504 = vmatprep.subr.bf16.mxu0 %v11345
    %11505 = vmatpush1.bf16.msra.mxu0 %v11344
    %11506 = vmatprep.subr.bf16.mxu0 %v11347
    %11507 = vmatpush1.bf16.msra.mxu0 %v11346
    %11508 = vmatprep.subr.bf16.mxu0 %v11349
    %11509 = vmatpush1.bf16.msra.mxu0 %v11348
    %11510 = vmatprep.subr.bf16.mxu0 %v11351
    %11511 = vmatpush1.bf16.msra.mxu0 %v11350
    %11512 = vmatprep.subr.bf16.mxu0 %v11353
    %11513 = vmatpush1.bf16.msra.mxu0 %v11352
    %11514 = vmatprep.subr.bf16.mxu0 %v11355
    %11515 = vmatpush1.bf16.msra.mxu0 %v11354
    %11516 = vmatprep.subr.bf16.mxu0 %v11357
    %11517 = vmatpush1.bf16.msra.mxu0 %v11356
    %11518 = vmatprep.subr.bf16.mxu0 %v11359
    %11519 = vmatpush1.bf16.msra.mxu0 %v11358
    %11520 = vmatprep.subr.bf16.mxu0 %v11361
    %11521 = vmatpush1.bf16.msra.mxu0 %v11360
    %11522 = vmatprep.subr.bf16.mxu0 %v11363
    %11523 = vmatpush1.bf16.msra.mxu0 %v11362
    %11524 = vmatprep.subr.bf16.mxu0 %v11365
    %11525 = vmatpush1.bf16.msra.mxu0 %v11364
    %11526 = vmatprep.subr.bf16.mxu0 %v11367
    %11527 = vmatpush1.bf16.msra.mxu0 %v11366
    %11528 = vmatprep.subr.bf16.mxu0 %v11369
    %11529 = vmatpush1.bf16.msra.mxu0 %v11368
    %11530 = vmatprep.mubr.bf16.mxu0 %v11083
    %11531 = vmatmul.mubr.bf16.gmra.mrb[0].mxu0 %v11080
    %v11532 = vpop.f32.mrb[0].mxu0
    %v11533 = vadd.f32 0.0, %v11532
    %v11534 = vpop.f32.mrb[0].mxu0
    %v11535 = vadd.f32 0.0, %v11534
    %v11536 = vpop.f32.mrb[0].mxu0
    %v11537 = vadd.f32 0.0, %v11536
    %v11538 = vpop.f32.mrb[0].mxu0
    %v11539 = vadd.f32 0.0, %v11538
    %11540 = vdwg.mxu0
    %11541 = vmatprep.subr.bf16.mxu0 %v11371
    %11542 = vmatpush1.bf16.msra.mxu0 %v11370
    %11543 = vmatprep.subr.bf16.mxu0 %v11373
    %11544 = vmatpush1.bf16.msra.mxu0 %v11372
    %11545 = vmatprep.subr.bf16.mxu0 %v11375
    %11546 = vmatpush1.bf16.msra.mxu0 %v11374
    %11547 = vmatprep.subr.bf16.mxu0 %v11377
    %11548 = vmatpush1.bf16.msra.mxu0 %v11376
    %11549 = vmatprep.subr.bf16.mxu0 %v11379
    %11550 = vmatpush1.bf16.msra.mxu0 %v11378
    %11551 = vmatprep.subr.bf16.mxu0 %v11381
    %11552 = vmatpush1.bf16.msra.mxu0 %v11380
    %11553 = vmatprep.subr.bf16.mxu0 %v11383
    %11554 = vmatpush1.bf16.msra.mxu0 %v11382
    %11555 = vmatprep.subr.bf16.mxu0 %v11385
    %11556 = vmatpush1.bf16.msra.mxu0 %v11384
    %11557 = vmatprep.subr.bf16.mxu0 %v11387
    %11558 = vmatpush1.bf16.msra.mxu0 %v11386
    %11559 = vmatprep.subr.bf16.mxu0 %v11389
    %11560 = vmatpush1.bf16.msra.mxu0 %v11388
    %11561 = vmatprep.subr.bf16.mxu0 %v11391
    %11562 = vmatpush1.bf16.msra.mxu0 %v11390
    %11563 = vmatprep.subr.bf16.mxu0 %v11393
    %11564 = vmatpush1.bf16.msra.mxu0 %v11392
    %11565 = vmatprep.subr.bf16.mxu0 %v11395
    %11566 = vmatpush1.bf16.msra.mxu0 %v11394
    %11567 = vmatprep.subr.bf16.mxu0 %v11397
    %11568 = vmatpush1.bf16.msra.mxu0 %v11396
    %11569 = vmatprep.subr.bf16.mxu0 %v11399
    %11570 = vmatpush1.bf16.msra.mxu0 %v11398
    %11571 = vmatprep.subr.bf16.mxu0 %v11401
    %11572 = vmatpush1.bf16.msra.mxu0 %v11400
    %11573 = vmatprep.mubr.bf16.mxu0 %v11089
    %11574 = vmatmul.mubr.bf16.gmra.mrb[0].mxu0 %v11086
    %v11575 = vpop.f32.mrb[0].mxu0
    %v11576 = vadd.f32 %v11533, %v11575
    %v11577 = vpop.f32.mrb[0].mxu0
    %v11578 = vadd.f32 %v11535, %v11577
    %v11579 = vpop.f32.mrb[0].mxu0
    %v11580 = vadd.f32 %v11537, %v11579
    %v11581 = vpop.f32.mrb[0].mxu0
    %v11582 = vadd.f32 %v11539, %v11581
    %11583 = vdwg.mxu0
    %11584 = vmatprep.subr.bf16.mxu0 %v11403
    %11585 = vmatpush1.bf16.msra.mxu0 %v11402
    %11586 = vmatprep.subr.bf16.mxu0 %v11405
    %11587 = vmatpush1.bf16.msra.mxu0 %v11404
    %11588 = vmatprep.subr.bf16.mxu0 %v11407
    %11589 = vmatpush1.bf16.msra.mxu0 %v11406
    %11590 = vmatprep.subr.bf16.mxu0 %v11409
    %11591 = vmatpush1.bf16.msra.mxu0 %v11408
    %11592 = vmatprep.subr.bf16.mxu0 %v11411
    %11593 = vmatpush1.bf16.msra.mxu0 %v11410
    %11594 = vmatprep.subr.bf16.mxu0 %v11413
    %11595 = vmatpush1.bf16.msra.mxu0 %v11412
    %11596 = vmatprep.subr.bf16.mxu0 %v11415
    %11597 = vmatpush1.bf16.msra.mxu0 %v11414
    %11598 = vmatprep.subr.bf16.mxu0 %v11417
    %11599 = vmatpush1.bf16.msra.mxu0 %v11416
    %11600 = vmatprep.subr.bf16.mxu0 0
    %11601 = vmatpush1.bf16.msra.mxu0 0
    %11602 = vmatprep.subr.bf16.mxu0 0
    %11603 = vmatpush1.bf16.msra.mxu0 0
    %11604 = vmatprep.subr.bf16.mxu0 0
    %11605 = vmatpush1.bf16.msra.mxu0 0
    %11606 = vmatprep.subr.bf16.mxu0 0
    %11607 = vmatpush1.bf16.msra.mxu0 0
    %11608 = vmatprep.subr.bf16.mxu0 0
    %11609 = vmatpush1.bf16.msra.mxu0 0
    %11610 = vmatprep.subr.bf16.mxu0 0
    %11611 = vmatpush1.bf16.msra.mxu0 0
    %11612 = vmatprep.subr.bf16.mxu0 0
    %11613 = vmatpush1.bf16.msra.mxu0 0
    %11614 = vmatprep.subr.bf16.mxu0 0
    %11615 = vmatpush1.bf16.msra.mxu0 0
    %11616 = vmatprep.mubr.bf16.mxu0 0
    %11617 = vmatmul.mubr.bf16.gmra.mrb[0].mxu0 %v11092
    %v11618 = vpop.f32.mrb[0].mxu0
    %v11619 = vadd.f32 %v11576, %v11618
    %v11620 = vpop.f32.mrb[0].mxu0
    %v11621 = vadd.f32 %v11578, %v11620
    %v11622 = vpop.f32.mrb[0].mxu0
    %v11623 = vadd.f32 %v11580, %v11622
    %v11624 = vpop.f32.mrb[0].mxu0
    %v11625 = vadd.f32 %v11582, %v11624
    %11626 = vdwg.mxu0
    %v11627 = vadd.f32 %v10950, %v11619
    %v11628 = vadd.f32 %v10951, %v11621
    %v11629 = vadd.f32 %v10952, %v11623
    %v11630 = vadd.f32 %v10953, %v11625
    %v11631 = vmax.f32 %v11627, 0.0
    %v11632 = vmax.f32 %v11628, 0.0
    %v11633 = vmax.f32 %v11629, 0.0
    %v11634 = vmax.f32 %v11630, 0.0
    %v11637 = vrot.slane %v11631, 2
    %v11638 = vrot.slane %v11632, 2
    %11639 = vrot.lane.b32.xlu0 %v11637, 96
    %v11640 = vpop.permute.xlu0 %11639
    %11641 = vrot.lane.b32.xlu0 %v11638, 96
    %v11642 = vpop.permute.xlu0 %11641
    %vm11643 = vcmask 785408
    %v11644 = vsel %vm11643, %v11640, %v11642
    %v11648 = vrot.slane %v11631, 4
    %v11649 = vrot.slane %v11632, 4
    %11650 = vrot.lane.b32.xlu0 %v11648, 64
    %v11651 = vpop.permute.xlu0 %11650
    %11652 = vrot.lane.b32.xlu0 %v11649, 64
    %v11653 = vpop.permute.xlu0 %11652
    %vm11654 = vcmask 523264
    %v11655 = vsel %vm11654, %v11651, %v11653
    %v11659 = vrot.slane %v11631, 6
    %v11660 = vrot.slane %v11632, 6
    %11661 = vrot.lane.b32.xlu0 %v11659, 32
    %v11662 = vpop.permute.xlu0 %11661
    %11663 = vrot.lane.b32.xlu0 %v11660, 32
    %v11664 = vpop.permute.xlu0 %11663
    %v11665 = vsel %vm118, %v11662, %v11664
    %v11670 = vrot.slane %v11633, 2
    %v11671 = vrot.slane %v11634, 2
    %11672 = vrot.lane.b32.xlu0 %v11670, 96
    %v11673 = vpop.permute.xlu0 %11672
    %11674 = vrot.lane.b32.xlu0 %v11671, 96
    %v11675 = vpop.permute.xlu0 %11674
    %v11676 = vsel %vm11643, %v11673, %v11675
    %v11680 = vrot.slane %v11633, 4
    %v11681 = vrot.slane %v11634, 4
    %11682 = vrot.lane.b32.xlu0 %v11680, 64
    %v11683 = vpop.permute.xlu0 %11682
    %11684 = vrot.lane.b32.xlu0 %v11681, 64
    %v11685 = vpop.permute.xlu0 %11684
    %v11686 = vsel %vm11654, %v11683, %v11685
    %v11690 = vsel %vm11643, %v11632, %v11640
    %v11691 = vsel %vm11654, %v11642, %v11651
    %v11692 = vsel %vm118, %v11653, %v11662
    %v11693 = vsel %vm11643, %v11634, %v11673
    %v11694 = vsel %vm11654, %v11675, %v11683
    %v11695 = vpack.c.bf16 %v11631, %v11631
    %v11696 = vpack.c.bf16 %v11690, %v11690
    %v11697 = vpack.c.bf16 %v11644, %v11644
    %v11698 = vpack.c.bf16 %v11691, %v11691
    %v11699 = vpack.c.bf16 %v11655, %v11655
    %v11700 = vpack.c.bf16 %v11692, %v11692
    %v11701 = vpack.c.bf16 %v11665, %v11665
    %v11702 = vpack.c.bf16 %v11633, %v11633
    %v11703 = vpack.c.bf16 %v11693, %v11693
    %v11704 = vpack.c.bf16 %v11676, %v11676
    %v11705 = vpack.c.bf16 %v11694, %v11694
    %v11706 = vpack.c.bf16 %v11686, %v11686
    %v11707 = vpack.c.bf16 %v11685, %v11685
    %v11708 = vld [vmem:[%s7] sm:$0xf]
    %v11709 = vld [vmem:[%s7 + $0x4] sm:$0xf]
    %v11710 = vld [vmem:[%s7 + $0x8] sm:$0xf]
    %v11711 = vld [vmem:[%s7 + $0xc] sm:$0xf]
    %v11712 = vld [vmem:[%s7 + $0x10] sm:$0xf]
    %v11713 = vld [vmem:[%s7 + $0x14] sm:$0xf]
    %v11714 = vld [vmem:[%s7 + $0x18] sm:$0xf]
    %v11715 = vld [vmem:[%s7 + $0x1c] sm:$0xf]
    %v11716 = vld [vmem:[%s7 + $0x20] sm:$0xf]
    %v11717 = vld [vmem:[%s7 + $0x24] sm:$0xf]
    %v11718 = vld [vmem:[%s7 + $0x28] sm:$0xf]
    %v11719 = vld [vmem:[%s7 + $0x2c] sm:$0xf]
    %v11720 = vld [vmem:[%s7 + $0x30] sm:$0xf]
    %v11721 = vld [vmem:[%s7 + $0x34] sm:$0xf]
    %v11722 = vld [vmem:[%s7 + $0x38] sm:$0xf]
    %v11723 = vld [vmem:[%s7 + $0x3c] sm:$0xf]
    %v11724 = vld [vmem:[%s7 + $0x40] sm:$0xf]
    %v11725 = vld [vmem:[%s7 + $0x44] sm:$0xf]
    %v11726 = vld [vmem:[%s7 + $0x48] sm:$0xf]
    %v11727 = vld [vmem:[%s7 + $0x4c] sm:$0xf]
    %v11728 = vld [vmem:[%s7 + $0x50] sm:$0xf]
    %v11729 = vld [vmem:[%s7 + $0x54] sm:$0xf]
    %v11730 = vld [vmem:[%s7 + $0x58] sm:$0xf]
    %v11731 = vld [vmem:[%s7 + $0x5c] sm:$0xf]
    %v11732 = vld [vmem:[%s7 + $0x60] sm:$0xf]
    %v11733 = vld [vmem:[%s7 + $0x64] sm:$0xf]
    %v11734 = vld [vmem:[%s7 + $0x68] sm:$0xf]
    %v11735 = vld [vmem:[%s7 + $0x6c] sm:$0xf]
    %v11736 = vld [vmem:[%s7 + $0x70] sm:$0xf]
    %v11737 = vld [vmem:[%s7 + $0x74] sm:$0xf]
    %v11738 = vld [vmem:[%s7 + $0x78] sm:$0xf]
    %v11739 = vld [vmem:[%s7 + $0x7c] sm:$0xf]
    %v11740 = vld [vmem:[%s7 + $0x80] sm:$0xf]
    %v11741 = vld [vmem:[%s7 + $0x84] sm:$0xf]
    %v11742 = vld [vmem:[%s7 + $0x88] sm:$0xf]
    %v11743 = vld [vmem:[%s7 + $0x8c] sm:$0xf]
    %v11744 = vld [vmem:[%s7 + $0x90] sm:$0xf]
    %v11745 = vld [vmem:[%s7 + $0x94] sm:$0xf]
    %v11746 = vld [vmem:[%s7 + $0x98] sm:$0xf]
    %v11747 = vld [vmem:[%s7 + $0x9c] sm:$0xf]
    %v11748 = vld [vmem:[%s7 + $0xa0] sm:$0xf]
    %v11749 = vld [vmem:[%s7 + $0xa4] sm:$0xf]
    %v11750 = vld [vmem:[%s7 + $0xa8] sm:$0xf]
    %v11751 = vld [vmem:[%s7 + $0xac] sm:$0xf]
    %v11752 = vld [vmem:[%s7 + $0xb0] sm:$0xf]
    %v11753 = vld [vmem:[%s7 + $0xb4] sm:$0xf]
    %v11754 = vld [vmem:[%s7 + $0xb8] sm:$0xf]
    %v11755 = vld [vmem:[%s7 + $0xbc] sm:$0xf]
    %v11756 = vld [vmem:[%s7 + $0xc0] sm:$0xf]
    %v11757 = vld [vmem:[%s7 + $0xc4] sm:$0xf]
    %v11758 = vld [vmem:[%s7 + $0xc8] sm:$0xf]
    %v11759 = vld [vmem:[%s7 + $0xcc] sm:$0xf]
    %v11760 = vld [vmem:[%s7 + $0xd0] sm:$0xf]
    %v11761 = vld [vmem:[%s7 + $0xd4] sm:$0xf]
    %v11762 = vld [vmem:[%s7 + $0xd8] sm:$0xf]
    %v11763 = vld [vmem:[%s7 + $0xdc] sm:$0xf]
    %v11764 = vld [vmem:[%s7 + $0xe0] sm:$0xf]
    %v11765 = vld [vmem:[%s7 + $0xe4] sm:$0xf]
    %v11766 = vld [vmem:[%s7 + $0xe8] sm:$0xf]
    %v11767 = vld [vmem:[%s7 + $0xec] sm:$0xf]
    %v11768 = vld [vmem:[%s7 + $0xf0] sm:$0xf]
    %v11769 = vld [vmem:[%s7 + $0xf4] sm:$0xf]
    %v11770 = vld [vmem:[%s7 + $0xf8] sm:$0xf]
    %v11771 = vld [vmem:[%s7 + $0xfc] sm:$0xf]
    %v11772 = vld [vmem:[%s7 + $0x100] sm:$0xf]
    %v11773 = vld [vmem:[%s7 + $0x104] sm:$0xf]
    %v11774 = vld [vmem:[%s7 + $0x108] sm:$0xf]
    %v11775 = vld [vmem:[%s7 + $0x10c] sm:$0xf]
    %v11776 = vld [vmem:[%s7 + $0x110] sm:$0xf]
    %v11777 = vld [vmem:[%s7 + $0x114] sm:$0xf]
    %v11778 = vld [vmem:[%s7 + $0x118] sm:$0xf]
    %v11779 = vld [vmem:[%s7 + $0x11c] sm:$0xf]
    %v11780 = vld [vmem:[%s7 + $0x120] sm:$0xf]
    %v11781 = vld [vmem:[%s7 + $0x124] sm:$0xf]
    %v11782 = vld [vmem:[%s7 + $0x128] sm:$0xf]
    %v11783 = vld [vmem:[%s7 + $0x12c] sm:$0xf]
    %v11784 = vld [vmem:[%s7 + $0x130] sm:$0xf]
    %v11785 = vld [vmem:[%s7 + $0x134] sm:$0xf]
    %v11786 = vld [vmem:[%s7 + $0x138] sm:$0xf]
    %v11787 = vld [vmem:[%s7 + $0x13c] sm:$0xf]
    %v11788 = vld [vmem:[%s7 + $0x140] sm:$0xf]
    %v11789 = vld [vmem:[%s7 + $0x144] sm:$0xf]
    %v11790 = vld [vmem:[%s7 + $0x148] sm:$0xf]
    %v11791 = vld [vmem:[%s7 + $0x14c] sm:$0xf]
    %v11792 = vld [vmem:[%s7 + $0x150] sm:$0xf]
    %v11793 = vld [vmem:[%s7 + $0x154] sm:$0xf]
    %v11794 = vld [vmem:[%s7 + $0x158] sm:$0xf]
    %v11795 = vld [vmem:[%s7 + $0x15c] sm:$0xf]
    %v11796 = vld [vmem:[%s7 + $0x160] sm:$0xf]
    %v11797 = vld [vmem:[%s7 + $0x164] sm:$0xf]
    %v11798 = vld [vmem:[%s7 + $0x168] sm:$0xf]
    %v11799 = vld [vmem:[%s7 + $0x16c] sm:$0xf]
    %v11800 = vld [vmem:[%s7 + $0x170] sm:$0xf]
    %v11801 = vld [vmem:[%s7 + $0x174] sm:$0xf]
    %v11802 = vld [vmem:[%s7 + $0x178] sm:$0xf]
    %v11803 = vld [vmem:[%s7 + $0x17c] sm:$0xf]
    %v11804 = vld [vmem:[%s7 + $0x180] sm:$0xf]
    %v11805 = vld [vmem:[%s7 + $0x184] sm:$0xf]
    %v11806 = vld [vmem:[%s7 + $0x188] sm:$0xf]
    %v11807 = vld [vmem:[%s7 + $0x18c] sm:$0xf]
    %v11808 = vld [vmem:[%s7 + $0x190] sm:$0xf]
    %v11809 = vld [vmem:[%s7 + $0x194] sm:$0xf]
    %v11810 = vld [vmem:[%s7 + $0x198] sm:$0xf]
    %v11811 = vld [vmem:[%s7 + $0x19c] sm:$0xf]
    %v11812 = vld [vmem:[%s7 + $0x1a0] sm:$0xf]
    %v11813 = vld [vmem:[%s7 + $0x1a4] sm:$0xf]
    %v11814 = vld [vmem:[%s7 + $0x1a8] sm:$0xf]
    %v11815 = vld [vmem:[%s7 + $0x1ac] sm:$0xf]
    %v11816 = vld [vmem:[%s7 + $0x1b0] sm:$0xf]
    %v11817 = vld [vmem:[%s7 + $0x1b4] sm:$0xf]
    %v11818 = vld [vmem:[%s7 + $0x1b8] sm:$0xf]
    %v11819 = vld [vmem:[%s7 + $0x1bc] sm:$0xf]
    %v11820 = vld [vmem:[%s7 + $0x1c0] sm:$0xf]
    %v11821 = vld [vmem:[%s7 + $0x1c4] sm:$0xf]
    %v11822 = vld [vmem:[%s7 + $0x1c8] sm:$0xf]
    %v11823 = vld [vmem:[%s7 + $0x1cc] sm:$0xf]
    %v11824 = vld [vmem:[%s7 + $0x1d0] sm:$0xf]
    %v11825 = vld [vmem:[%s7 + $0x1d4] sm:$0xf]
    %v11826 = vld [vmem:[%s7 + $0x1d8] sm:$0xf]
    %v11827 = vld [vmem:[%s7 + $0x1dc] sm:$0xf]
    %v11828 = vld [vmem:[%s7 + $0x1e0] sm:$0xf]
    %v11829 = vld [vmem:[%s7 + $0x1e4] sm:$0xf]
    %v11830 = vld [vmem:[%s7 + $0x1e8] sm:$0xf]
    %v11831 = vld [vmem:[%s7 + $0x1ec] sm:$0xf]
    %v11832 = vld [vmem:[%s7 + $0x1f0] sm:$0xf]
    %v11833 = vld [vmem:[%s7 + $0x1f4] sm:$0xf]
    %v11834 = vld [vmem:[%s7 + $0x1f8] sm:$0xf]
    %v11835 = vld [vmem:[%s7 + $0x1fc] sm:$0xf]
    %v11836 = vld [vmem:[%s7 + $0x200] sm:$0xf]
    %v11837 = vld [vmem:[%s7 + $0x204] sm:$0xf]
    %v11838 = vld [vmem:[%s7 + $0x208] sm:$0xf]
    %v11839 = vld [vmem:[%s7 + $0x20c] sm:$0xf]
    %v11840 = vld [vmem:[%s7 + $0x210] sm:$0xf]
    %v11841 = vld [vmem:[%s7 + $0x214] sm:$0xf]
    %v11842 = vld [vmem:[%s7 + $0x218] sm:$0xf]
    %v11843 = vld [vmem:[%s7 + $0x21c] sm:$0xf]
    %v11844 = vld [vmem:[%s7 + $0x220] sm:$0xf]
    %v11845 = vld [vmem:[%s7 + $0x224] sm:$0xf]
    %v11846 = vld [vmem:[%s7 + $0x228] sm:$0xf]
    %v11847 = vld [vmem:[%s7 + $0x22c] sm:$0xf]
    %v11848 = vld [vmem:[%s7 + $0x230] sm:$0xf]
    %v11849 = vld [vmem:[%s7 + $0x234] sm:$0xf]
    %v11850 = vld [vmem:[%s7 + $0x238] sm:$0xf]
    %v11851 = vld [vmem:[%s7 + $0x23c] sm:$0xf]
    %v11852 = vld [vmem:[%s7 + $0x240] sm:$0xf]
    %v11853 = vld [vmem:[%s7 + $0x244] sm:$0xf]
    %v11854 = vld [vmem:[%s7 + $0x248] sm:$0xf]
    %v11855 = vld [vmem:[%s7 + $0x24c] sm:$0xf]
    %v11856 = vld [vmem:[%s7 + $0x250] sm:$0xf]
    %v11857 = vld [vmem:[%s7 + $0x254] sm:$0xf]
    %v11858 = vld [vmem:[%s7 + $0x258] sm:$0xf]
    %v11859 = vld [vmem:[%s7 + $0x25c] sm:$0xf]
    %v11860 = vld [vmem:[%s7 + $0x260] sm:$0xf]
    %v11861 = vld [vmem:[%s7 + $0x264] sm:$0xf]
    %v11862 = vld [vmem:[%s7 + $0x268] sm:$0xf]
    %v11863 = vld [vmem:[%s7 + $0x26c] sm:$0xf]
    %v11864 = vld [vmem:[%s7 + $0x270] sm:$0xf]
    %v11865 = vld [vmem:[%s7 + $0x274] sm:$0xf]
    %v11866 = vld [vmem:[%s7 + $0x278] sm:$0xf]
    %v11867 = vld [vmem:[%s7 + $0x27c] sm:$0xf]
    %v11868 = vld [vmem:[%s7 + $0x280] sm:$0xf]
    %v11869 = vld [vmem:[%s7 + $0x284] sm:$0xf]
    %v11870 = vld [vmem:[%s7 + $0x288] sm:$0xf]
    %v11871 = vld [vmem:[%s7 + $0x28c] sm:$0xf]
    %v11872 = vld [vmem:[%s7 + $0x290] sm:$0xf]
    %v11873 = vld [vmem:[%s7 + $0x294] sm:$0xf]
    %v11874 = vld [vmem:[%s7 + $0x298] sm:$0xf]
    %v11875 = vld [vmem:[%s7 + $0x29c] sm:$0xf]
    %v11876 = vld [vmem:[%s7 + $0x2a0] sm:$0xf]
    %v11877 = vld [vmem:[%s7 + $0x2a4] sm:$0xf]
    %v11878 = vld [vmem:[%s7 + $0x2a8] sm:$0xf]
    %v11879 = vld [vmem:[%s7 + $0x2ac] sm:$0xf]
    %v11880 = vld [vmem:[%s7 + $0x2b0] sm:$0xf]
    %v11881 = vld [vmem:[%s7 + $0x2b4] sm:$0xf]
    %v11882 = vld [vmem:[%s7 + $0x2b8] sm:$0xf]
    %v11883 = vld [vmem:[%s7 + $0x2bc] sm:$0xf]
    %v11884 = vld [vmem:[%s7 + $0x2c0] sm:$0xf]
    %v11885 = vld [vmem:[%s7 + $0x2c4] sm:$0xf]
    %v11886 = vld [vmem:[%s7 + $0x2c8] sm:$0xf]
    %v11887 = vld [vmem:[%s7 + $0x2cc] sm:$0xf]
    %v11888 = vld [vmem:[%s7 + $0x2d0] sm:$0xf]
    %v11889 = vld [vmem:[%s7 + $0x2d4] sm:$0xf]
    %v11890 = vld [vmem:[%s7 + $0x2d8] sm:$0xf]
    %v11891 = vld [vmem:[%s7 + $0x2dc] sm:$0xf]
    %v11892 = vld [vmem:[%s7 + $0x2e0] sm:$0xf]
    %v11893 = vld [vmem:[%s7 + $0x2e4] sm:$0xf]
    %v11894 = vld [vmem:[%s7 + $0x2e8] sm:$0xf]
    %v11895 = vld [vmem:[%s7 + $0x2ec] sm:$0xf]
    %v11896 = vld [vmem:[%s7 + $0x2f0] sm:$0xf]
    %v11897 = vld [vmem:[%s7 + $0x2f4] sm:$0xf]
    %v11898 = vld [vmem:[%s7 + $0x2f8] sm:$0xf]
    %v11899 = vld [vmem:[%s7 + $0x2fc] sm:$0xf]
    %v11900 = vld [vmem:[%s7 + $0x300] sm:$0xf]
    %v11901 = vld [vmem:[%s7 + $0x304] sm:$0xf]
    %v11902 = vld [vmem:[%s7 + $0x308] sm:$0xf]
    %v11903 = vld [vmem:[%s7 + $0x30c] sm:$0xf]
    %v11904 = vld [vmem:[%s8] sm:$0x1]
    %v11906 = vlaneseq
    %v11907 = vshrl.u32 %v11906, 7
    %v11908 = vsub.s32 0, %v11907
    %v11909 = vrot.slane %v11904, %v11908
    %v12107 = vunpack.c.l.b16 %v11708
    %v12108 = vunpack.c.l.b16 %v11709
    %v12109 = vunpack.c.l.b16 %v11710
    %v12110 = vunpack.c.l.b16 %v11711
    %v12111 = vunpack.c.l.b16 %v11712
    %v12112 = vunpack.c.l.b16 %v11713
    %v12113 = vunpack.c.l.b16 %v11714
    %v12114 = vunpack.c.l.b16 %v11715
    %v12115 = vunpack.c.l.b16 %v11716
    %v12116 = vunpack.c.l.b16 %v11717
    %v12117 = vunpack.c.l.b16 %v11718
    %v12118 = vunpack.c.l.b16 %v11719
    %v12119 = vunpack.c.l.b16 %v11720
    %v12120 = vunpack.c.l.b16 %v11721
    %v12121 = vunpack.c.l.b16 %v11722
    %v12122 = vunpack.c.l.b16 %v11723
    %v12123 = vunpack.c.l.b16 %v11724
    %v12124 = vunpack.c.l.b16 %v11725
    %v12125 = vunpack.c.l.b16 %v11726
    %v12126 = vunpack.c.l.b16 %v11727
    %v12127 = vunpack.c.l.b16 %v11728
    %v12128 = vunpack.c.l.b16 %v11729
    %v12129 = vunpack.c.l.b16 %v11730
    %v12130 = vunpack.c.l.b16 %v11731
    %v12131 = vunpack.c.l.b16 %v11732
    %v12132 = vunpack.c.l.b16 %v11733
    %v12133 = vunpack.c.l.b16 %v11734
    %v12134 = vunpack.c.l.b16 %v11735
    %v12135 = vunpack.c.l.b16 %v11736
    %v12136 = vunpack.c.l.b16 %v11737
    %v12137 = vunpack.c.l.b16 %v11738
    %v12138 = vunpack.c.l.b16 %v11739
    %v12139 = vunpack.c.l.b16 %v11740
    %v12140 = vunpack.c.l.b16 %v11741
    %v12141 = vunpack.c.l.b16 %v11742
    %v12142 = vunpack.c.l.b16 %v11743
    %v12143 = vunpack.c.l.b16 %v11744
    %v12144 = vunpack.c.l.b16 %v11745
    %v12145 = vunpack.c.l.b16 %v11746
    %v12146 = vunpack.c.l.b16 %v11747
    %v12147 = vunpack.c.l.b16 %v11748
    %v12148 = vunpack.c.l.b16 %v11749
    %v12149 = vunpack.c.l.b16 %v11750
    %v12150 = vunpack.c.l.b16 %v11751
    %v12151 = vunpack.c.l.b16 %v11752
    %v12152 = vunpack.c.l.b16 %v11753
    %v12153 = vunpack.c.l.b16 %v11754
    %v12154 = vunpack.c.l.b16 %v11755
    %v12155 = vunpack.c.l.b16 %v11756
    %v12156 = vunpack.c.l.b16 %v11757
    %v12157 = vunpack.c.l.b16 %v11758
    %v12158 = vunpack.c.l.b16 %v11759
    %v12159 = vunpack.c.l.b16 %v11760
    %v12160 = vunpack.c.l.b16 %v11761
    %v12161 = vunpack.c.l.b16 %v11762
    %v12162 = vunpack.c.l.b16 %v11763
    %v12163 = vunpack.c.l.b16 %v11764
    %v12164 = vunpack.c.l.b16 %v11765
    %v12165 = vunpack.c.l.b16 %v11766
    %v12166 = vunpack.c.l.b16 %v11767
    %v12167 = vunpack.c.l.b16 %v11768
    %v12168 = vunpack.c.l.b16 %v11769
    %v12169 = vunpack.c.l.b16 %v11770
    %v12170 = vunpack.c.l.b16 %v11771
    %v12171 = vunpack.c.l.b16 %v11772
    %v12172 = vunpack.c.l.b16 %v11773
    %v12173 = vunpack.c.l.b16 %v11774
    %v12174 = vunpack.c.l.b16 %v11775
    %v12175 = vunpack.c.l.b16 %v11776
    %v12176 = vunpack.c.l.b16 %v11777
    %v12177 = vunpack.c.l.b16 %v11778
    %v12178 = vunpack.c.l.b16 %v11779
    %v12179 = vunpack.c.l.b16 %v11780
    %v12180 = vunpack.c.l.b16 %v11781
    %v12181 = vunpack.c.l.b16 %v11782
    %v12182 = vunpack.c.l.b16 %v11783
    %v12183 = vunpack.c.l.b16 %v11784
    %v12184 = vunpack.c.l.b16 %v11785
    %v12185 = vunpack.c.l.b16 %v11786
    %v12186 = vunpack.c.l.b16 %v11787
    %v12187 = vunpack.c.l.b16 %v11788
    %v12188 = vunpack.c.l.b16 %v11789
    %v12189 = vunpack.c.l.b16 %v11790
    %v12190 = vunpack.c.l.b16 %v11791
    %v12191 = vunpack.c.l.b16 %v11792
    %v12192 = vunpack.c.l.b16 %v11793
    %v12193 = vunpack.c.l.b16 %v11794
    %v12194 = vunpack.c.l.b16 %v11795
    %v12195 = vunpack.c.l.b16 %v11796
    %v12196 = vunpack.c.l.b16 %v11797
    %v12197 = vunpack.c.l.b16 %v11798
    %v12198 = vunpack.c.l.b16 %v11799
    %v12199 = vunpack.c.l.b16 %v11800
    %v12200 = vunpack.c.l.b16 %v11801
    %v12201 = vunpack.c.l.b16 %v11802
    %v12202 = vunpack.c.l.b16 %v11803
    %v12203 = vunpack.c.l.b16 %v11804
    %v12204 = vunpack.c.l.b16 %v11805
    %v12205 = vunpack.c.l.b16 %v11806
    %v12206 = vunpack.c.l.b16 %v11807
    %v12207 = vunpack.c.l.b16 %v11808
    %v12208 = vunpack.c.l.b16 %v11809
    %v12209 = vunpack.c.l.b16 %v11810
    %v12210 = vunpack.c.l.b16 %v11811
    %v12211 = vunpack.c.l.b16 %v11812
    %v12212 = vunpack.c.l.b16 %v11813
    %v12213 = vunpack.c.l.b16 %v11814
    %v12214 = vunpack.c.l.b16 %v11815
    %v12215 = vunpack.c.l.b16 %v11816
    %v12216 = vunpack.c.l.b16 %v11817
    %v12217 = vunpack.c.l.b16 %v11818
    %v12218 = vunpack.c.l.b16 %v11819
    %v12219 = vunpack.c.l.b16 %v11820
    %v12220 = vunpack.c.l.b16 %v11821
    %v12221 = vunpack.c.l.b16 %v11822
    %v12222 = vunpack.c.l.b16 %v11823
    %v12223 = vunpack.c.l.b16 %v11824
    %v12224 = vunpack.c.l.b16 %v11825
    %v12225 = vunpack.c.l.b16 %v11826
    %v12226 = vunpack.c.l.b16 %v11827
    %v12227 = vunpack.c.l.b16 %v11828
    %v12228 = vunpack.c.l.b16 %v11829
    %v12229 = vunpack.c.l.b16 %v11830
    %v12230 = vunpack.c.l.b16 %v11831
    %v12231 = vunpack.c.l.b16 %v11832
    %v12232 = vunpack.c.l.b16 %v11833
    %v12233 = vunpack.c.l.b16 %v11834
    %v12234 = vunpack.c.l.b16 %v11835
    %v12235 = vunpack.c.l.b16 %v11836
    %v12236 = vunpack.c.l.b16 %v11837
    %v12237 = vunpack.c.l.b16 %v11838
    %v12238 = vunpack.c.l.b16 %v11839
    %v12239 = vunpack.c.l.b16 %v11840
    %v12240 = vunpack.c.l.b16 %v11841
    %v12241 = vunpack.c.l.b16 %v11842
    %v12242 = vunpack.c.l.b16 %v11843
    %v12243 = vunpack.c.l.b16 %v11844
    %v12244 = vunpack.c.l.b16 %v11845
    %v12245 = vunpack.c.l.b16 %v11846
    %v12246 = vunpack.c.l.b16 %v11847
    %v12247 = vunpack.c.l.b16 %v11848
    %v12248 = vunpack.c.l.b16 %v11849
    %v12249 = vunpack.c.l.b16 %v11850
    %v12250 = vunpack.c.l.b16 %v11851
    %v12251 = vunpack.c.l.b16 %v11852
    %v12252 = vunpack.c.l.b16 %v11853
    %v12253 = vunpack.c.l.b16 %v11854
    %v12254 = vunpack.c.l.b16 %v11855
    %v12255 = vunpack.c.l.b16 %v11856
    %v12256 = vunpack.c.l.b16 %v11857
    %v12257 = vunpack.c.l.b16 %v11858
    %v12258 = vunpack.c.l.b16 %v11859
    %v12259 = vunpack.c.l.b16 %v11860
    %v12260 = vunpack.c.l.b16 %v11861
    %v12261 = vunpack.c.l.b16 %v11862
    %v12262 = vunpack.c.l.b16 %v11863
    %v12263 = vunpack.c.l.b16 %v11864
    %v12264 = vunpack.c.l.b16 %v11865
    %v12265 = vunpack.c.l.b16 %v11866
    %v12266 = vunpack.c.l.b16 %v11867
    %v12267 = vunpack.c.l.b16 %v11868
    %v12268 = vunpack.c.l.b16 %v11869
    %v12269 = vunpack.c.l.b16 %v11870
    %v12270 = vunpack.c.l.b16 %v11871
    %v12271 = vunpack.c.l.b16 %v11872
    %v12272 = vunpack.c.l.b16 %v11873
    %v12273 = vunpack.c.l.b16 %v11874
    %v12274 = vunpack.c.l.b16 %v11875
    %v12275 = vunpack.c.l.b16 %v11876
    %v12276 = vunpack.c.l.b16 %v11877
    %v12277 = vunpack.c.l.b16 %v11878
    %v12278 = vunpack.c.l.b16 %v11879
    %v12279 = vunpack.c.l.b16 %v11880
    %v12280 = vunpack.c.l.b16 %v11881
    %v12281 = vunpack.c.l.b16 %v11882
    %v12282 = vunpack.c.l.b16 %v11883
    %v12283 = vunpack.c.l.b16 %v11884
    %v12284 = vunpack.c.l.b16 %v11885
    %v12285 = vunpack.c.l.b16 %v11886
    %v12286 = vunpack.c.l.b16 %v11887
    %v12287 = vunpack.c.l.b16 %v11888
    %v12288 = vunpack.c.l.b16 %v11889
    %v12289 = vunpack.c.l.b16 %v11890
    %v12290 = vunpack.c.l.b16 %v11891
    %v12291 = vunpack.c.l.b16 %v11892
    %v12292 = vunpack.c.l.b16 %v11893
    %v12293 = vunpack.c.l.b16 %v11894
    %v12294 = vunpack.c.l.b16 %v11895
    %v12295 = vunpack.c.l.b16 %v11896
    %v12296 = vunpack.c.l.b16 %v11897
    %v12297 = vunpack.c.l.b16 %v11898
    %v12298 = vunpack.c.l.b16 %v11899
    %v12299 = vunpack.c.l.b16 %v11900
    %v12300 = vunpack.c.l.b16 %v11901
    %v12301 = vunpack.c.l.b16 %v11902
    %v12302 = vunpack.c.l.b16 %v11903
    %v12303 = vpack.c.b16 %v12108, %v12107
    %v12304 = vpack.c.b16 %v12110, %v12109
    %v12305 = vpack.c.b16 %v12112, %v12111
    %v12306 = vpack.c.b16 %v12114, %v12113
    %v12307 = vpack.c.b16 %v12116, %v12115
    %v12308 = vpack.c.b16 %v12118, %v12117
    %v12309 = vpack.c.b16 %v12120, %v12119
    %v12310 = vpack.c.b16 %v12122, %v12121
    %v12311 = vpack.c.b16 %v12124, %v12123
    %v12312 = vpack.c.b16 %v12126, %v12125
    %v12313 = vpack.c.b16 %v12128, %v12127
    %v12314 = vpack.c.b16 %v12130, %v12129
    %v12315 = vpack.c.b16 %v12132, %v12131
    %v12316 = vpack.c.b16 %v12134, %v12133
    %v12317 = vpack.c.b16 %v12136, %v12135
    %v12318 = vpack.c.b16 %v12138, %v12137
    %v12319 = vpack.c.b16 %v12140, %v12139
    %v12320 = vpack.c.b16 %v12142, %v12141
    %v12321 = vpack.c.b16 %v12144, %v12143
    %v12322 = vpack.c.b16 %v12146, %v12145
    %v12323 = vpack.c.b16 %v12148, %v12147
    %v12324 = vpack.c.b16 %v12150, %v12149
    %v12325 = vpack.c.b16 %v12152, %v12151
    %v12326 = vpack.c.b16 %v12154, %v12153
    %v12327 = vpack.c.b16 %v12156, %v12155
    %v12328 = vpack.c.b16 %v12158, %v12157
    %v12329 = vpack.c.b16 %v12160, %v12159
    %v12330 = vpack.c.b16 %v12162, %v12161
    %v12331 = vpack.c.b16 %v12164, %v12163
    %v12332 = vpack.c.b16 %v12166, %v12165
    %v12333 = vpack.c.b16 %v12168, %v12167
    %v12334 = vpack.c.b16 %v12170, %v12169
    %v12335 = vpack.c.b16 %v12172, %v12171
    %v12336 = vpack.c.b16 %v12174, %v12173
    %v12337 = vpack.c.b16 %v12176, %v12175
    %v12338 = vpack.c.b16 %v12178, %v12177
    %v12339 = vpack.c.b16 %v12180, %v12179
    %v12340 = vpack.c.b16 %v12182, %v12181
    %v12341 = vpack.c.b16 %v12184, %v12183
    %v12342 = vpack.c.b16 %v12186, %v12185
    %v12343 = vpack.c.b16 %v12188, %v12187
    %v12344 = vpack.c.b16 %v12190, %v12189
    %v12345 = vpack.c.b16 %v12192, %v12191
    %v12346 = vpack.c.b16 %v12194, %v12193
    %v12347 = vpack.c.b16 %v12196, %v12195
    %v12348 = vpack.c.b16 %v12198, %v12197
    %v12349 = vpack.c.b16 %v12200, %v12199
    %v12350 = vpack.c.b16 %v12202, %v12201
    %v12351 = vpack.c.b16 %v12204, %v12203
    %v12352 = vpack.c.b16 %v12206, %v12205
    %v12353 = vpack.c.b16 %v12208, %v12207
    %v12354 = vpack.c.b16 %v12210, %v12209
    %v12355 = vpack.c.b16 %v12212, %v12211
    %v12356 = vpack.c.b16 %v12214, %v12213
    %v12357 = vpack.c.b16 %v12216, %v12215
    %v12358 = vpack.c.b16 %v12218, %v12217
    %v12359 = vpack.c.b16 %v12220, %v12219
    %v12360 = vpack.c.b16 %v12222, %v12221
    %v12361 = vpack.c.b16 %v12224, %v12223
    %v12362 = vpack.c.b16 %v12226, %v12225
    %v12363 = vpack.c.b16 %v12228, %v12227
    %v12364 = vpack.c.b16 %v12230, %v12229
    %v12365 = vpack.c.b16 %v12232, %v12231
    %v12366 = vpack.c.b16 %v12234, %v12233
    %v12367 = vpack.c.b16 %v12236, %v12235
    %v12368 = vpack.c.b16 %v12238, %v12237
    %v12369 = vpack.c.b16 %v12240, %v12239
    %v12370 = vpack.c.b16 %v12242, %v12241
    %v12371 = vpack.c.b16 %v12244, %v12243
    %v12372 = vpack.c.b16 %v12246, %v12245
    %v12373 = vpack.c.b16 %v12248, %v12247
    %v12374 = vpack.c.b16 %v12250, %v12249
    %v12375 = vpack.c.b16 %v12252, %v12251
    %v12376 = vpack.c.b16 %v12254, %v12253
    %v12377 = vpack.c.b16 %v12256, %v12255
    %v12378 = vpack.c.b16 %v12258, %v12257
    %v12379 = vpack.c.b16 %v12260, %v12259
    %v12380 = vpack.c.b16 %v12262, %v12261
    %v12381 = vpack.c.b16 %v12264, %v12263
    %v12382 = vpack.c.b16 %v12266, %v12265
    %v12383 = vpack.c.b16 %v12268, %v12267
    %v12384 = vpack.c.b16 %v12270, %v12269
    %v12385 = vpack.c.b16 %v12272, %v12271
    %v12386 = vpack.c.b16 %v12274, %v12273
    %v12387 = vpack.c.b16 %v12276, %v12275
    %v12388 = vpack.c.b16 %v12278, %v12277
    %v12389 = vpack.c.b16 %v12280, %v12279
    %v12390 = vpack.c.b16 %v12282, %v12281
    %v12391 = vpack.c.b16 %v12284, %v12283
    %v12392 = vpack.c.b16 %v12286, %v12285
    %v12393 = vpack.c.b16 %v12288, %v12287
    %v12394 = vpack.c.b16 %v12290, %v12289
    %v12395 = vpack.c.b16 %v12292, %v12291
    %v12396 = vpack.c.b16 %v12294, %v12293
    %v12397 = vpack.c.b16 %v12296, %v12295
    %v12398 = vpack.c.b16 %v12298, %v12297
    %v12399 = vpack.c.b16 %v12300, %v12299
    %v12400 = vpack.c.b16 %v12302, %v12301
    %v12500 = vsel %vm118, %v11707, 0
    %12502 = vmatprep.subr.bf16.mxu0 0
    %12503 = vmatpush1.bf16.msra.mxu0 %v12303
    %12504 = vmatprep.subr.bf16.mxu0 0
    %12505 = vmatpush1.bf16.msra.mxu0 %v12304
    %12506 = vmatprep.subr.bf16.mxu0 0
    %12507 = vmatpush1.bf16.msra.mxu0 %v12305
    %12508 = vmatprep.subr.bf16.mxu0 0
    %12509 = vmatpush1.bf16.msra.mxu0 %v12306
    %12510 = vmatprep.subr.bf16.mxu0 0
    %12511 = vmatpush1.bf16.msra.mxu0 %v12307
    %12512 = vmatprep.subr.bf16.mxu0 0
    %12513 = vmatpush1.bf16.msra.mxu0 %v12308
    %12514 = vmatprep.subr.bf16.mxu0 0
    %12515 = vmatpush1.bf16.msra.mxu0 %v12309
    %12516 = vmatprep.subr.bf16.mxu0 0
    %12517 = vmatpush1.bf16.msra.mxu0 %v12310
    %12518 = vmatprep.subr.bf16.mxu0 0
    %12519 = vmatpush1.bf16.msra.mxu0 %v12311
    %12520 = vmatprep.subr.bf16.mxu0 0
    %12521 = vmatpush1.bf16.msra.mxu0 %v12312
    %12522 = vmatprep.subr.bf16.mxu0 0
    %12523 = vmatpush1.bf16.msra.mxu0 %v12313
    %12524 = vmatprep.subr.bf16.mxu0 0
    %12525 = vmatpush1.bf16.msra.mxu0 %v12314
    %12526 = vmatprep.subr.bf16.mxu0 0
    %12527 = vmatpush1.bf16.msra.mxu0 %v12315
    %12528 = vmatprep.subr.bf16.mxu0 0
    %12529 = vmatpush1.bf16.msra.mxu0 %v12316
    %12530 = vmatprep.subr.bf16.mxu0 0
    %12531 = vmatpush1.bf16.msra.mxu0 %v12317
    %12532 = vmatprep.subr.bf16.mxu0 0
    %12533 = vmatpush1.bf16.msra.mxu0 %v12318
    %12534 = vmatprep.mubr.bf16.mxu0 %v11696
    %12535 = vmatmul.mubr.bf16.gmra.mrb[0].mxu0 %v11695
    %v12536 = vpop.f32.mrb[0].mxu0
    %v12537 = vadd.f32 %v11909, %v12536
    %v12538 = vpop.f32.mrb[0].mxu0
    %v12539 = vpop.f32.mrb[0].mxu0
    %v12540 = vpop.f32.mrb[0].mxu0
    %12541 = vdwg.mxu0
    %12542 = vmatprep.subr.bf16.mxu0 0
    %12543 = vmatpush1.bf16.msra.mxu0 %v12319
    %12544 = vmatprep.subr.bf16.mxu0 0
    %12545 = vmatpush1.bf16.msra.mxu0 %v12320
    %12546 = vmatprep.subr.bf16.mxu0 0
    %12547 = vmatpush1.bf16.msra.mxu0 %v12321
    %12548 = vmatprep.subr.bf16.mxu0 0
    %12549 = vmatpush1.bf16.msra.mxu0 %v12322
    %12550 = vmatprep.subr.bf16.mxu0 0
    %12551 = vmatpush1.bf16.msra.mxu0 %v12323
    %12552 = vmatprep.subr.bf16.mxu0 0
    %12553 = vmatpush1.bf16.msra.mxu0 %v12324
    %12554 = vmatprep.subr.bf16.mxu0 0
    %12555 = vmatpush1.bf16.msra.mxu0 %v12325
    %12556 = vmatprep.subr.bf16.mxu0 0
    %12557 = vmatpush1.bf16.msra.mxu0 %v12326
    %12558 = vmatprep.subr.bf16.mxu0 0
    %12559 = vmatpush1.bf16.msra.mxu0 %v12327
    %12560 = vmatprep.subr.bf16.mxu0 0
    %12561 = vmatpush1.bf16.msra.mxu0 %v12328
    %12562 = vmatprep.subr.bf16.mxu0 0
    %12563 = vmatpush1.bf16.msra.mxu0 %v12329
    %12564 = vmatprep.subr.bf16.mxu0 0
    %12565 = vmatpush1.bf16.msra.mxu0 %v12330
    %12566 = vmatprep.subr.bf16.mxu0 0
    %12567 = vmatpush1.bf16.msra.mxu0 %v12331
    %12568 = vmatprep.subr.bf16.mxu0 0
    %12569 = vmatpush1.bf16.msra.mxu0 %v12332
    %12570 = vmatprep.subr.bf16.mxu0 0
    %12571 = vmatpush1.bf16.msra.mxu0 %v12333
    %12572 = vmatprep.subr.bf16.mxu0 0
    %12573 = vmatpush1.bf16.msra.mxu0 %v12334
    %12574 = vmatprep.mubr.bf16.mxu0 %v11698
    %12575 = vmatmul.mubr.bf16.gmra.mrb[0].mxu0 %v11697
    %v12576 = vpop.f32.mrb[0].mxu0
    %v12577 = vadd.f32 %v12537, %v12576
    %v12578 = vpop.f32.mrb[0].mxu0
    %v12579 = vpop.f32.mrb[0].mxu0
    %v12580 = vpop.f32.mrb[0].mxu0
    %12581 = vdwg.mxu0
    %12582 = vmatprep.subr.bf16.mxu0 0
    %12583 = vmatpush1.bf16.msra.mxu0 %v12335
    %12584 = vmatprep.subr.bf16.mxu0 0
    %12585 = vmatpush1.bf16.msra.mxu0 %v12336
    %12586 = vmatprep.subr.bf16.mxu0 0
    %12587 = vmatpush1.bf16.msra.mxu0 %v12337
    %12588 = vmatprep.subr.bf16.mxu0 0
    %12589 = vmatpush1.bf16.msra.mxu0 %v12338
    %12590 = vmatprep.subr.bf16.mxu0 0
    %12591 = vmatpush1.bf16.msra.mxu0 %v12339
    %12592 = vmatprep.subr.bf16.mxu0 0
    %12593 = vmatpush1.bf16.msra.mxu0 %v12340
    %12594 = vmatprep.subr.bf16.mxu0 0
    %12595 = vmatpush1.bf16.msra.mxu0 %v12341
    %12596 = vmatprep.subr.bf16.mxu0 0
    %12597 = vmatpush1.bf16.msra.mxu0 %v12342
    %12598 = vmatprep.subr.bf16.mxu0 0
    %12599 = vmatpush1.bf16.msra.mxu0 %v12343
    %12600 = vmatprep.subr.bf16.mxu0 0
    %12601 = vmatpush1.bf16.msra.mxu0 %v12344
    %12602 = vmatprep.subr.bf16.mxu0 0
    %12603 = vmatpush1.bf16.msra.mxu0 %v12345
    %12604 = vmatprep.subr.bf16.mxu0 0
    %12605 = vmatpush1.bf16.msra.mxu0 %v12346
    %12606 = vmatprep.subr.bf16.mxu0 0
    %12607 = vmatpush1.bf16.msra.mxu0 %v12347
    %12608 = vmatprep.subr.bf16.mxu0 0
    %12609 = vmatpush1.bf16.msra.mxu0 %v12348
    %12610 = vmatprep.subr.bf16.mxu0 0
    %12611 = vmatpush1.bf16.msra.mxu0 %v12349
    %12612 = vmatprep.subr.bf16.mxu0 0
    %12613 = vmatpush1.bf16.msra.mxu0 %v12350
    %12614 = vmatprep.mubr.bf16.mxu0 %v11700
    %12615 = vmatmul.mubr.bf16.gmra.mrb[0].mxu0 %v11699
    %v12616 = vpop.f32.mrb[0].mxu0
    %v12617 = vadd.f32 %v12577, %v12616
    %v12618 = vpop.f32.mrb[0].mxu0
    %v12619 = vpop.f32.mrb[0].mxu0
    %v12620 = vpop.f32.mrb[0].mxu0
    %12621 = vdwg.mxu0
    %12622 = vmatprep.subr.bf16.mxu0 0
    %12623 = vmatpush1.bf16.msra.mxu0 %v12351
    %12624 = vmatprep.subr.bf16.mxu0 0
    %12625 = vmatpush1.bf16.msra.mxu0 %v12352
    %12626 = vmatprep.subr.bf16.mxu0 0
    %12627 = vmatpush1.bf16.msra.mxu0 %v12353
    %12628 = vmatprep.subr.bf16.mxu0 0
    %12629 = vmatpush1.bf16.msra.mxu0 %v12354
    %12630 = vmatprep.subr.bf16.mxu0 0
    %12631 = vmatpush1.bf16.msra.mxu0 %v12355
    %12632 = vmatprep.subr.bf16.mxu0 0
    %12633 = vmatpush1.bf16.msra.mxu0 %v12356
    %12634 = vmatprep.subr.bf16.mxu0 0
    %12635 = vmatpush1.bf16.msra.mxu0 %v12357
    %12636 = vmatprep.subr.bf16.mxu0 0
    %12637 = vmatpush1.bf16.msra.mxu0 %v12358
    %12638 = vmatprep.subr.bf16.mxu0 0
    %12639 = vmatpush1.bf16.msra.mxu0 %v12359
    %12640 = vmatprep.subr.bf16.mxu0 0
    %12641 = vmatpush1.bf16.msra.mxu0 %v12360
    %12642 = vmatprep.subr.bf16.mxu0 0
    %12643 = vmatpush1.bf16.msra.mxu0 %v12361
    %12644 = vmatprep.subr.bf16.mxu0 0
    %12645 = vmatpush1.bf16.msra.mxu0 %v12362
    %12646 = vmatprep.subr.bf16.mxu0 0
    %12647 = vmatpush1.bf16.msra.mxu0 %v12363
    %12648 = vmatprep.subr.bf16.mxu0 0
    %12649 = vmatpush1.bf16.msra.mxu0 %v12364
    %12650 = vmatprep.subr.bf16.mxu0 0
    %12651 = vmatpush1.bf16.msra.mxu0 %v12365
    %12652 = vmatprep.subr.bf16.mxu0 0
    %12653 = vmatpush1.bf16.msra.mxu0 %v12366
    %12654 = vmatprep.mubr.bf16.mxu0 %v11702
    %12655 = vmatmul.mubr.bf16.gmra.mrb[0].mxu0 %v11701
    %v12656 = vpop.f32.mrb[0].mxu0
    %v12657 = vadd.f32 %v12617, %v12656
    %v12658 = vpop.f32.mrb[0].mxu0
    %v12659 = vpop.f32.mrb[0].mxu0
    %v12660 = vpop.f32.mrb[0].mxu0
    %12661 = vdwg.mxu0
    %12662 = vmatprep.subr.bf16.mxu0 0
    %12663 = vmatpush1.bf16.msra.mxu0 %v12367
    %12664 = vmatprep.subr.bf16.mxu0 0
    %12665 = vmatpush1.bf16.msra.mxu0 %v12368
    %12666 = vmatprep.subr.bf16.mxu0 0
    %12667 = vmatpush1.bf16.msra.mxu0 %v12369
    %12668 = vmatprep.subr.bf16.mxu0 0
    %12669 = vmatpush1.bf16.msra.mxu0 %v12370
    %12670 = vmatprep.subr.bf16.mxu0 0
    %12671 = vmatpush1.bf16.msra.mxu0 %v12371
    %12672 = vmatprep.subr.bf16.mxu0 0
    %12673 = vmatpush1.bf16.msra.mxu0 %v12372
    %12674 = vmatprep.subr.bf16.mxu0 0
    %12675 = vmatpush1.bf16.msra.mxu0 %v12373
    %12676 = vmatprep.subr.bf16.mxu0 0
    %12677 = vmatpush1.bf16.msra.mxu0 %v12374
    %12678 = vmatprep.subr.bf16.mxu0 0
    %12679 = vmatpush1.bf16.msra.mxu0 %v12375
    %12680 = vmatprep.subr.bf16.mxu0 0
    %12681 = vmatpush1.bf16.msra.mxu0 %v12376
    %12682 = vmatprep.subr.bf16.mxu0 0
    %12683 = vmatpush1.bf16.msra.mxu0 %v12377
    %12684 = vmatprep.subr.bf16.mxu0 0
    %12685 = vmatpush1.bf16.msra.mxu0 %v12378
    %12686 = vmatprep.subr.bf16.mxu0 0
    %12687 = vmatpush1.bf16.msra.mxu0 %v12379
    %12688 = vmatprep.subr.bf16.mxu0 0
    %12689 = vmatpush1.bf16.msra.mxu0 %v12380
    %12690 = vmatprep.subr.bf16.mxu0 0
    %12691 = vmatpush1.bf16.msra.mxu0 %v12381
    %12692 = vmatprep.subr.bf16.mxu0 0
    %12693 = vmatpush1.bf16.msra.mxu0 %v12382
    %12694 = vmatprep.mubr.bf16.mxu0 %v11704
    %12695 = vmatmul.mubr.bf16.gmra.mrb[0].mxu0 %v11703
    %v12696 = vpop.f32.mrb[0].mxu0
    %v12697 = vadd.f32 %v12657, %v12696
    %v12698 = vpop.f32.mrb[0].mxu0
    %v12699 = vpop.f32.mrb[0].mxu0
    %v12700 = vpop.f32.mrb[0].mxu0
    %12701 = vdwg.mxu0
    %12702 = vmatprep.subr.bf16.mxu0 0
    %12703 = vmatpush1.bf16.msra.mxu0 %v12383
    %12704 = vmatprep.subr.bf16.mxu0 0
    %12705 = vmatpush1.bf16.msra.mxu0 %v12384
    %12706 = vmatprep.subr.bf16.mxu0 0
    %12707 = vmatpush1.bf16.msra.mxu0 %v12385
    %12708 = vmatprep.subr.bf16.mxu0 0
    %12709 = vmatpush1.bf16.msra.mxu0 %v12386
    %12710 = vmatprep.subr.bf16.mxu0 0
    %12711 = vmatpush1.bf16.msra.mxu0 %v12387
    %12712 = vmatprep.subr.bf16.mxu0 0
    %12713 = vmatpush1.bf16.msra.mxu0 %v12388
    %12714 = vmatprep.subr.bf16.mxu0 0
    %12715 = vmatpush1.bf16.msra.mxu0 %v12389
    %12716 = vmatprep.subr.bf16.mxu0 0
    %12717 = vmatpush1.bf16.msra.mxu0 %v12390
    %12718 = vmatprep.subr.bf16.mxu0 0
    %12719 = vmatpush1.bf16.msra.mxu0 %v12391
    %12720 = vmatprep.subr.bf16.mxu0 0
    %12721 = vmatpush1.bf16.msra.mxu0 %v12392
    %12722 = vmatprep.subr.bf16.mxu0 0
    %12723 = vmatpush1.bf16.msra.mxu0 %v12393
    %12724 = vmatprep.subr.bf16.mxu0 0
    %12725 = vmatpush1.bf16.msra.mxu0 %v12394
    %12726 = vmatprep.subr.bf16.mxu0 0
    %12727 = vmatpush1.bf16.msra.mxu0 %v12395
    %12728 = vmatprep.subr.bf16.mxu0 0
    %12729 = vmatpush1.bf16.msra.mxu0 %v12396
    %12730 = vmatprep.subr.bf16.mxu0 0
    %12731 = vmatpush1.bf16.msra.mxu0 %v12397
    %12732 = vmatprep.subr.bf16.mxu0 0
    %12733 = vmatpush1.bf16.msra.mxu0 %v12398
    %12734 = vmatprep.mubr.bf16.mxu0 %v11706
    %12735 = vmatmul.mubr.bf16.gmra.mrb[0].mxu0 %v11705
    %v12736 = vpop.f32.mrb[0].mxu0
    %v12737 = vadd.f32 %v12697, %v12736
    %v12738 = vpop.f32.mrb[0].mxu0
    %v12739 = vpop.f32.mrb[0].mxu0
    %v12740 = vpop.f32.mrb[0].mxu0
    %12741 = vdwg.mxu0
    %12742 = vmatprep.subr.bf16.mxu0 0
    %12743 = vmatpush1.bf16.msra.mxu0 %v12399
    %12744 = vmatprep.subr.bf16.mxu0 0
    %12745 = vmatpush1.bf16.msra.mxu0 %v12400
    %12746 = vmatprep.subr.bf16.mxu0 0
    %12747 = vmatpush1.bf16.msra.mxu0 0
    %12748 = vmatprep.subr.bf16.mxu0 0
    %12749 = vmatpush1.bf16.msra.mxu0 0
    %12750 = vmatprep.subr.bf16.mxu0 0
    %12751 = vmatpush1.bf16.msra.mxu0 0
    %12752 = vmatprep.subr.bf16.mxu0 0
    %12753 = vmatpush1.bf16.msra.mxu0 0
    %12754 = vmatprep.subr.bf16.mxu0 0
    %12755 = vmatpush1.bf16.msra.mxu0 0
    %12756 = vmatprep.subr.bf16.mxu0 0
    %12757 = vmatpush1.bf16.msra.mxu0 0
    %12758 = vmatprep.subr.bf16.mxu0 0
    %12759 = vmatpush1.bf16.msra.mxu0 0
    %12760 = vmatprep.subr.bf16.mxu0 0
    %12761 = vmatpush1.bf16.msra.mxu0 0
    %12762 = vmatprep.subr.bf16.mxu0 0
    %12763 = vmatpush1.bf16.msra.mxu0 0
    %12764 = vmatprep.subr.bf16.mxu0 0
    %12765 = vmatpush1.bf16.msra.mxu0 0
    %12766 = vmatprep.subr.bf16.mxu0 0
    %12767 = vmatpush1.bf16.msra.mxu0 0
    %12768 = vmatprep.subr.bf16.mxu0 0
    %12769 = vmatpush1.bf16.msra.mxu0 0
    %12770 = vmatprep.subr.bf16.mxu0 0
    %12771 = vmatpush1.bf16.msra.mxu0 0
    %12772 = vmatprep.subr.bf16.mxu0 0
    %12773 = vmatpush1.bf16.msra.mxu0 0
    %12774 = vmatprep.mubr.bf16.mxu0 0
    %12775 = vmatmul.mubr.bf16.gmra.mrb[0].mxu0 %v12500
    %v12776 = vpop.f32.mrb[0].mxu0
    %v12777 = vadd.f32 %v12737, %v12776
    %v12778 = vpop.f32.mrb[0].mxu0
    %v12779 = vpop.f32.mrb[0].mxu0
    %v12780 = vpop.f32.mrb[0].mxu0
    %12781 = vdwg.mxu0
    %12782 = vst [vmem:[#allocation4] sm:$0x3] %v12777
    // Predicated region
    $region38: #{simple_cnn_forward.1} parent=1 // pred_check
      _
    $region39: #{simple_cnn_forward.1} parent=1 // pred_check_branch
      %12784 = sbr.rel (0) target = $region41
    $region40: #{simple_cnn_forward.1} parent=1 // pred_region
      %s12786 = ssub.s32 32, 32
      %12787 = vsyncadd [#allocation5], %s12786
      %s12789 = sshll.u32 [#allocation4], 4
      %s12790 = int_to_ptr.vmem [resolvable:$true] %s12789
      %12792 = dma.vmem_to_hbm [thread:$0]  %s12790, 32, %s9, [#allocation5]
    $region41: #{simple_cnn_forward.1} parent=1 // pred_fallthru
      _
    // Predicated region
    $region42: #{simple_cnn_forward.1} parent=1 // pred_check
      _
    $region43: #{simple_cnn_forward.1} parent=1 // pred_check_branch
      %12794 = sbr.rel (0) target = $region45
    $region44: #{simple_cnn_forward.1} parent=1 // pred_region
      %12795 = dma.done [#allocation5], 32
    $region45: #{simple_cnn_forward.1} parent=1 // pred_fallthru
      _
    %12796 = vsyncpa [#allocation5], 1

</llo_original>
